<compile_context>
chip_gen: v7x
topology: tpu7x:2x2x1
jax: 0.10.0
libtpu: 0.0.40
codegen_flags: <defaults>
</compile_context>

<pallas_src>
import functools

import jax
import jax.numpy as jnp
from jax.experimental import pallas as pl
from jax.experimental.pallas import tpu as pltpu

ACT_DTYPE = jnp.bfloat16  # HBM activation dtype (f32 accumulation in-kernel)


# ----------------------------------------------------------------------------
# hardware-aware sizing helpers
# ----------------------------------------------------------------------------
def _vmem_capacity():
    try:
        info = pltpu.get_tpu_info()
        return int(getattr(info, "vmem_capacity_bytes", 0) or (64 << 20))
    except Exception:
        return 64 << 20  # v7x-safe fallback (also fine under interpret mode)


_VMEM_CAP = _vmem_capacity()
_VMEM_LIMIT = min(int(_VMEM_CAP * 3 // 4), 96 << 20)   # 48 MiB on v7x, 96 MiB on v5e/v6e
_TILE_BUDGET = _VMEM_LIMIT // 3


def _mosaic_params(n_axes):
    return pltpu.CompilerParams(
        dimension_semantics=("parallel",) * n_axes,
        vmem_limit_bytes=_VMEM_LIMIT,
    )


def _spatial_tile(M, H, W, bpp, budget):
    """Pixels per tile for the kernels containing the 3x3 depthwise taps.
    Tiles hold whole images so the roll-based reflect taps never mix samples."""
    hw = H * W
    if hw % 128 != 0:
        # TODO(synk): H-row tiling with a 2-row halo (element-offset index_map or a
        # manual halo DMA) for resolutions whose H*W is not lane-aligned / too big.
        return M
    n_img = M // hw
    if n_img == 1:
        return hw
    for k in range(n_img // 2, 0, -1):       # keep >=2 grid steps (v7x megacore)
        if n_img % k == 0 and k * hw * bpp <= budget:
            return k * hw
    return hw


def _lane_tile(M, bpp, budget):
    for tm in (8192, 4096, 2048, 1024, 512, 256, 128):
        if M % tm == 0 and M // tm >= 2 and tm * bpp <= budget:
            return tm
    return M


def _boundary_code(H, W, n_img):
    """(1, n_img*H*W) int32 bit-code: bit0 w==0, bit1 w==W-1, bit2 h==0, bit3 h==H-1."""
    w = jnp.arange(W, dtype=jnp.int32)[None, :]
    h = jnp.arange(H, dtype=jnp.int32)[:, None]
    code = ((w == 0) * 1 + (w == W - 1) * 2 + (h == 0) * 4 + (h == H - 1) * 8)
    return jnp.tile(code.astype(jnp.int32).reshape(1, H * W), (1, n_img))


# ----------------------------------------------------------------------------
# in-kernel reflect-padded 3x3 taps (XLU lane rotations, non-negative shifts)
# ----------------------------------------------------------------------------
def _store_reflect_taps(x, w_first, w_last, h_first, h_last, *, W, stack_ref, base):
    """Write all 9 reflect-padded 3x3 taps of x (rows=channels, cols=n*H*W pixels)
    into rows [base*Cr : (base+9)*Cr] of the VMEM tap stack.  Tap index is
    3*ky + kx for the value at offset (ky-1, kx-1)."""
    cr, tm = x.shape
    rn1 = pltpu.roll(x, shift=tm - 1, axis=1)   # value at w+1
    rp1 = pltpu.roll(x, shift=1, axis=1)        # value at w-1
    col = [
        jnp.where(w_first, rn1, rp1),           # dx = -1 (reflect at w == 0)
        x,                                      # dx =  0
        jnp.where(w_last, rp1, rn1),            # dx = +1 (reflect at w == W-1)
    ]
    for dxi, c in enumerate(col):
        rnW = pltpu.roll(c, shift=tm - W, axis=1)   # value at h+1
        rpW = pltpu.roll(c, shift=W, axis=1)        # value at h-1
        up = jnp.where(h_first, rnW, rpW)           # dy = -1
        dn = jnp.where(h_last, rpW, rnW)            # dy = +1
        k0 = base + 0 * 3 + dxi
        k1 = base + 1 * 3 + dxi
        k2 = base + 2 * 3 + dxi
        stack_ref[k0 * cr:(k0 + 1) * cr, :] = up
        stack_ref[k1 * cr:(k1 + 1) * cr, :] = c
        stack_ref[k2 * cr:(k2 + 1) * cr, :] = dn


# ----------------------------------------------------------------------------
# Pallas kernels
# ----------------------------------------------------------------------------
def _in_local_kernel(xl_ref, xg_ref, m_ref, wl_ref, tl_ref, wg_ref, tg_ref,
                     wc1_ref, tc1_ref, wt_ref, to_ref, *rest, H, W, relu, add_res):
    """Fused: l_in_conv, g_in_conv, SpectralTransform.conv1 and the full local
    output branch (sep_l2l + sep_g2l + pointwise + BN + act [+ residual])."""
    if add_res:
        res_ref, ol_ref, xlr_ref, y_ref, stack_ref = rest
    else:
        ol_ref, xlr_ref, y_ref, stack_ref = rest

    # input 1x1 convs (+folded BN) + ReLU; bf16 x bf16 -> f32 accumulation
    xl_r = jnp.maximum(
        jnp.dot(wl_ref[...], xl_ref[...], preferred_element_type=jnp.float32)
        + tl_ref[...], 0.0)
    xg_r = jnp.maximum(
        jnp.dot(wg_ref[...], xg_ref[...], preferred_element_type=jnp.float32)
        + tg_ref[...], 0.0)

    # SpectralTransform.conv1 (1x1 + BN + ReLU)
    y = jnp.maximum(
        jnp.dot(wc1_ref[...], xg_r, preferred_element_type=jnp.float32)
        + tc1_ref[...], 0.0)

    # reflect-padded 3x3 taps of both reduced streams, stacked on the K axis
    code = m_ref[...]
    masks = tuple((code & b) != 0 for b in (1, 2, 4, 8))
    _store_reflect_taps(xl_r, *masks, W=W, stack_ref=stack_ref, base=0)
    _store_reflect_taps(xg_r, *masks, W=W, stack_ref=stack_ref, base=9)

    # single fused (depthwise x pointwise x out-conv x BN) GEMM, K = 18*Cr
    out = jnp.dot(wt_ref[...], stack_ref[...],
                  preferred_element_type=jnp.float32) + to_ref[...]
    if relu:
        out = jnp.maximum(out, 0.0)
    if add_res:
        out = out + res_ref[...].astype(jnp.float32)

    ol_ref[...] = out.astype(ol_ref.dtype)
    xlr_ref[...] = xl_r.astype(xlr_ref.dtype)
    y_ref[...] = y


def _fu_kernel(r_ref, i_ref, wrr_ref, wri_ref, wir_ref, wii_ref, tr_ref, ti_ref,
               zr_ref, zi_ref):
    """FourierUnit 1x1 conv (+ folded BN) + ReLU on the spectrum, quadrant form."""
    r = r_ref[...]
    i = i_ref[...]
    zr = (jnp.dot(wrr_ref[...], r, preferred_element_type=jnp.float32)
          + jnp.dot(wri_ref[...], i, preferred_element_type=jnp.float32)
          + tr_ref[...])
    zi = (jnp.dot(wir_ref[...], r, preferred_element_type=jnp.float32)
          + jnp.dot(wii_ref[...], i, preferred_element_type=jnp.float32)
          + ti_ref[...])
    zr_ref[...] = jnp.maximum(zr, 0.0)
    zi_ref[...] = jnp.maximum(zi, 0.0)


def _out_global_kernel(xlr_ref, y_ref, fu_ref, m_ref, wt_ref, wyc_ref, to_ref,
                       *rest, H, W, relu, add_res):
    """out_xg = act(bn(pw(sep_l2g(xl_r) + conv2(y + fourier_out)))) [+ residual]."""
    if add_res:
        res_ref, og_ref, stack_ref = rest
    else:
        og_ref, stack_ref = rest

    x = xlr_ref[...].astype(jnp.float32)
    code = m_ref[...]
    masks = tuple((code & b) != 0 for b in (1, 2, 4, 8))
    _store_reflect_taps(x, *masks, W=W, stack_ref=stack_ref, base=0)

    out = jnp.dot(wt_ref[...], stack_ref[...], preferred_element_type=jnp.float32)
    out = out + jnp.dot(wyc_ref[...], y_ref[...] + fu_ref[...],
                        preferred_element_type=jnp.float32)
    out = out + to_ref[...]
    if relu:
        out = jnp.maximum(out, 0.0)
    if add_res:
        out = out + res_ref[...].astype(jnp.float32)
    og_ref[...] = out.astype(og_ref.dtype)


# ----------------------------------------------------------------------------
# pallas_call wrappers
# ----------------------------------------------------------------------------
def _call_in_local(xl, xg, code, fp, *, H, W, TMS, relu, res):
    C, M = xl.shape
    Cr = fp["wl"].shape[0]
    Cf = fp["wc1"].shape[0]
    Co = fp["wtapL"].shape[0]
    tile = lambda i: (0, i)
    const = lambda i: (0, 0)
    in_specs = [pl.BlockSpec((C, TMS), tile),
                pl.BlockSpec((C, TMS), tile),
                pl.BlockSpec((1, TMS), const),
                pl.BlockSpec((Cr, C), const),
                pl.BlockSpec((Cr, 1), const),
                pl.BlockSpec((Cr, C), const),
                pl.BlockSpec((Cr, 1), const),
                pl.BlockSpec((Cf, Cr), const),
                pl.BlockSpec((Cf, 1), const),
                pl.BlockSpec((Co, 18 * Cr), const),
                pl.BlockSpec((Co, 1), const)]
    args = [xl, xg, code, fp["wl"], fp["tl"], fp["wg"], fp["tg"],
            fp["wc1"], fp["tc1"], fp["wtapL"], fp["toL"]]
    if res is not None:
        in_specs.append(pl.BlockSpec((Co, TMS), tile))
        args.append(res)
    kern = functools.partial(_in_local_kernel, H=H, W=W, relu=relu,
                             add_res=res is not None)
    return pl.pallas_call(
        kern,
        out_shape=(jax.ShapeDtypeStruct((Co, M), ACT_DTYPE),
                   jax.ShapeDtypeStruct((Cr, M), ACT_DTYPE),
                   jax.ShapeDtypeStruct((Cf, M), jnp.float32)),
        grid_spec=pltpu.PrefetchScalarGridSpec(
            num_scalar_prefetch=0, grid=(M // TMS,),
            in_specs=in_specs,
            out_specs=[pl.BlockSpec((Co, TMS), tile),
                       pl.BlockSpec((Cr, TMS), tile),
                       pl.BlockSpec((Cf, TMS), tile)],
            scratch_shapes=[pltpu.VMEM((18 * Cr, TMS), jnp.float32)]),
        compiler_params=_mosaic_params(1),
    )(*args)


def _call_fu(Fr, Fi, fp):
    Cf, Mfp = Fr.shape
    TF = _lane_tile(Mfp, bpp=16 * Cf, budget=_TILE_BUDGET)
    tile = lambda i: (0, i)
    const = lambda i: (0, 0)
    return pl.pallas_call(
        _fu_kernel,
        out_shape=(jax.ShapeDtypeStruct((Cf, Mfp), jnp.float32),
                   jax.ShapeDtypeStruct((Cf, Mfp), jnp.float32)),
        grid_spec=pltpu.PrefetchScalarGridSpec(
            num_scalar_prefetch=0, grid=(Mfp // TF,),
            in_specs=[pl.BlockSpec((Cf, TF), tile),
                      pl.BlockSpec((Cf, TF), tile),
                      pl.BlockSpec((Cf, Cf), const),
                      pl.BlockSpec((Cf, Cf), const),
                      pl.BlockSpec((Cf, Cf), const),
                      pl.BlockSpec((Cf, Cf), const),
                      pl.BlockSpec((Cf, 1), const),
                      pl.BlockSpec((Cf, 1), const)],
            out_specs=[pl.BlockSpec((Cf, TF), tile),
                       pl.BlockSpec((Cf, TF), tile)]),
        compiler_params=_mosaic_params(1),
    )(Fr, Fi, fp["wrr"], fp["wri"], fp["wir"], fp["wii"], fp["tr"], fp["ti"])


def _call_out_global(xlr, y, fu, code, fp, *, H, W, TMS, relu, res):
    Cr, M = xlr.shape
    Cf = y.shape[0]
    Co = fp["wtapG"].shape[0]
    tile = lambda i: (0, i)
    const = lambda i: (0, 0)
    in_specs = [pl.BlockSpec((Cr, TMS), tile),
                pl.BlockSpec((Cf, TMS), tile),
                pl.BlockSpec((Cf, TMS), tile),
                pl.BlockSpec((1, TMS), const),
                pl.BlockSpec((Co, 9 * Cr), const),
                pl.BlockSpec((Co, Cf), const),
                pl.BlockSpec((Co, 1), const)]
    args = [xlr, y, fu, code, fp["wtapG"], fp["wyc"], fp["toG"]]
    if res is not None:
        in_specs.append(pl.BlockSpec((Co, TMS), tile))
        args.append(res)
    kern = functools.partial(_out_global_kernel, H=H, W=W, relu=relu,
                             add_res=res is not None)
    return pl.pallas_call(
        kern,
        out_shape=jax.ShapeDtypeStruct((Co, M), ACT_DTYPE),
        grid_spec=pltpu.PrefetchScalarGridSpec(
            num_scalar_prefetch=0, grid=(M // TMS,),
            in_specs=in_specs,
            out_specs=pl.BlockSpec((Co, TMS), tile),
            scratch_shapes=[pltpu.VMEM((9 * Cr, TMS), jnp.float32)]),
        compiler_params=_mosaic_params(1),
    )(*args)


# ----------------------------------------------------------------------------
# module forward (glue in plain JAX, compute in Pallas kernels)
# ----------------------------------------------------------------------------
def _lffc_forward(x_l, x_g, code, fp, *, N, H, W, TMS, out_act,
                  res_l=None, res_g=None):
    """NoFusionLFFC forward on channel-major (C, N*H*W) bf16 streams."""
    M = x_l.shape[1]

    # [A] in-convs + SpectralTransform.conv1 + full local output branch
    out_l, xl_r, y = _call_in_local(x_l, x_g, code, fp, H=H, W=W, TMS=TMS,
                                    relu=out_act, res=res_l)
    Cf = y.shape[0]

    # FourierUnit: FFTs in XLA, spectrum 1x1 conv in Pallas (quadrant form).
    # TODO(synk): FFT has no Pallas primitive; jnp.fft stays in the wrapper.
    Wf = W // 2 + 1
    Mf = N * H * Wf
    F = jnp.fft.rfft2(y.reshape(Cf, N, H, W), axes=(2, 3), norm="ortho")
    Fr = F.real.reshape(Cf, Mf)
    Fi = F.imag.reshape(Cf, Mf)
    Mfp = -(-Mf // 128) * 128                          # lane-dense spectral axis
    if Mfp != Mf:
        Fr = jnp.pad(Fr, ((0, 0), (0, Mfp - Mf)))
        Fi = jnp.pad(Fi, ((0, 0), (0, Mfp - Mf)))
    zr, zi = _call_fu(Fr, Fi, fp)                      # [B]
    zr = zr[:, :Mf].reshape(Cf, N, H, Wf)
    zi = zi[:, :Mf].reshape(Cf, N, H, Wf)
    fu = jnp.fft.irfft2(zr + 1j * zi, s=(H, W), axes=(2, 3), norm="ortho")
    fu = fu.reshape(Cf, M).astype(jnp.float32)

    # [C] global output branch
    out_g = _call_out_global(xl_r, y, fu, code, fp, H=H, W=W, TMS=TMS,
                             relu=out_act, res=res_g)
    return out_l, out_g


def two_stream_lffc_resnet_block_cm(xl, xg, params, *, N, H, W):
    """Channel-major ((C, N*H*W), bf16) in/out.  Use this entry point when
    chaining blocks so the NCHW layout conversion is not paid per block."""
    C, M = xl.shape
    fp1 = params["conv1"]
    Cr = fp1["wl"].shape[0]
    Cf = fp1["wc1"].shape[0]
    # conservative per-pixel working-set estimate of the fused in+local kernel
    # (bf16 streams double-buffered + f32 tap-stack scratch + live-tap headroom)
    bpp = 2 * 2 * (4 * C + Cr) + 4 * (Cf + 2 * 18 * Cr)
    TMS = _spatial_tile(M, H, W, bpp, _TILE_BUDGET)
    code = _boundary_code(H, W, TMS // (H * W))

    y_l, y_g = _lffc_forward(xl, xg, code, fp1, N=N, H=H, W=W, TMS=TMS,
                             out_act=True)
    # the residual add of the ResNet block is folded into LFFC2's output kernels
    z_l, z_g = _lffc_forward(y_l, y_g, code, params["conv2"], N=N, H=H, W=W,
                             TMS=TMS, out_act=False, res_l=xl, res_g=xg)
    return z_l, z_g


def two_stream_lffc_resnet_block(x_l_nchw, x_g_nchw, params):
    """TwoStreamLFFCResNetBlock forward.  Inputs/outputs NCHW f32 like PyTorch."""
    N, C, H, W = x_l_nchw.shape
    M = N * H * W
    xl = jnp.transpose(x_l_nchw, (1, 0, 2, 3)).reshape(C, M).astype(ACT_DTYPE)
    xg = jnp.transpose(x_g_nchw, (1, 0, 2, 3)).reshape(C, M).astype(ACT_DTYPE)
    z_l, z_g = two_stream_lffc_resnet_block_cm(xl, xg, params, N=N, H=H, W=W)
    out_l = jnp.transpose(z_l.reshape(C, N, H, W), (1, 0, 2, 3)).astype(jnp.float32)
    out_g = jnp.transpose(z_g.reshape(C, N, H, W), (1, 0, 2, 3)).astype(jnp.float32)
    return out_l, out_g


# ----------------------------------------------------------------------------
# deterministic synthetic parameters (raw, PyTorch-equivalent structure)
# ----------------------------------------------------------------------------
def _kaiming(key, shape, fan_in):
    return jax.random.normal(key, shape, jnp.float32) * jnp.sqrt(2.0 / fan_in)


def _bn_fold(key, c, eps=1e-5):
    k1, k2 = jax.random.split(key)
    gamma = 1.0 + 0.1 * jax.random.normal(k1, (c,), jnp.float32)
    beta = 0.05 * jax.random.normal(k2, (c,), jnp.float32)
    running_mean = jnp.zeros((c,), jnp.float32)
    running_var = jnp.ones((c,), jnp.float32)
    scale = gamma / jnp.sqrt(running_var + eps)
    shift = beta - running_mean * scale
    return scale, shift


def make_sep_params(key, cin, cout):
    k1, k2, k3, k4 = jax.random.split(key, 4)
    return {
        "dw": _kaiming(k1, (cin, 3, 3), 9),
        "dwb": 0.02 * jax.random.normal(k2, (cin,), jnp.float32),
        "pw": _kaiming(k3, (cout, cin), cin),
        "pwb": 0.02 * jax.random.normal(k4, (cout,), jnp.float32),
    }


def make_lffc_params(key, C, Cr, Cf):
    ks = jax.random.split(key, 20)
    p = {}
    p["li_w"] = _kaiming(ks[0], (Cr, C), C)
    p["li_b"] = 0.02 * jax.random.normal(ks[1], (Cr,), jnp.float32)
    p["li_s"], p["li_t"] = _bn_fold(ks[2], Cr)
    p["gi_w"] = _kaiming(ks[3], (Cr, C), C)
    p["gi_b"] = 0.02 * jax.random.normal(ks[4], (Cr,), jnp.float32)
    p["gi_s"], p["gi_t"] = _bn_fold(ks[5], Cr)
    p["l2l"] = make_sep_params(ks[6], Cr, Cr)
    p["l2g"] = make_sep_params(ks[7], Cr, Cr)
    p["g2l"] = make_sep_params(ks[8], Cr, Cr)
    st = {}
    st["c1_w"] = _kaiming(ks[9], (Cf, Cr), Cr)
    st["c1_s"], st["c1_t"] = _bn_fold(ks[10], Cf)
    st["fu_w"] = _kaiming(ks[11], (2 * Cf, 2 * Cf), 2 * Cf)
    st["fu_s"], st["fu_t"] = _bn_fold(ks[12], 2 * Cf)
    st["c2_w"] = _kaiming(ks[13], (Cr, Cf), Cf)
    p["st"] = st
    p["oL_w"] = _kaiming(ks[14], (C, Cr), Cr)
    p["oL_b"] = 0.02 * jax.random.normal(ks[15], (C,), jnp.float32)
    p["oL_s"], p["oL_t"] = _bn_fold(ks[16], C)
    p["oG_w"] = _kaiming(ks[17], (C, Cr), Cr)
    p["oG_b"] = 0.02 * jax.random.normal(ks[18], (C,), jnp.float32)
    p["oG_s"], p["oG_t"] = _bn_fold(ks[19], C)
    return p


# ----------------------------------------------------------------------------
# parameter folding (conv bias + BN scale/shift + depthwise->pointwise->out fold)
# ----------------------------------------------------------------------------
def _fold_sep(sep):
    """SeperableConv: fold the 3x3 depthwise into 9 per-tap pointwise matrices
    a[3*ky+kx] (Cout, Cin) and an effective bias b = Wpw @ b_dw + b_pw."""
    wd, bd, wp, bp = sep["dw"], sep["dwb"], sep["pw"], sep["pwb"]
    a = jnp.stack([wp * wd[:, ky, kx][None, :]
                   for ky in range(3) for kx in range(3)], axis=0)
    b = wp @ bd + bp
    return a, b


def fold_lffc_params(p):
    """Fold conv biases, inference-mode BN and the output pointwise convs into
    effective weights / shifts; build the single concatenated tap matrices."""
    f = {}
    f["wl"] = (p["li_s"][:, None] * p["li_w"]).astype(ACT_DTYPE)
    f["tl"] = (p["li_s"] * p["li_b"] + p["li_t"])[:, None]
    f["wg"] = (p["gi_s"][:, None] * p["gi_w"]).astype(ACT_DTYPE)
    f["tg"] = (p["gi_s"] * p["gi_b"] + p["gi_t"])[:, None]

    st = p["st"]
    f["wc1"] = st["c1_s"][:, None] * st["c1_w"]
    f["tc1"] = st["c1_t"][:, None]
    Cf = st["c1_w"].shape[0]
    wfu = st["fu_s"][:, None] * st["fu_w"]          # (2Cf, 2Cf), rows/cols = [real|imag]
    f["wrr"], f["wri"] = wfu[:Cf, :Cf], wfu[:Cf, Cf:]
    f["wir"], f["wii"] = wfu[Cf:, :Cf], wfu[Cf:, Cf:]
    f["tr"] = st["fu_t"][:Cf, None]
    f["ti"] = st["fu_t"][Cf:, None]

    a_l2l, b_l2l = _fold_sep(p["l2l"])
    a_g2l, b_g2l = _fold_sep(p["g2l"])
    a_l2g, b_l2g = _fold_sep(p["l2g"])
    woL = p["oL_s"][:, None] * p["oL_w"]            # (C, Cr) out conv with BN folded
    woG = p["oG_s"][:, None] * p["oG_w"]
    # single concatenated tap weights: columns ordered [l2l taps 0..8 | g2l taps 0..8]
    f["wtapL"] = jnp.concatenate([woL @ a_l2l[k] for k in range(9)]
                                 + [woL @ a_g2l[k] for k in range(9)], axis=1)
    f["toL"] = (p["oL_s"] * (p["oL_w"] @ (b_l2l + b_g2l) + p["oL_b"])
                + p["oL_t"])[:, None]
    f["wtapG"] = jnp.concatenate([woG @ a_l2g[k] for k in range(9)], axis=1)
    f["wyc"] = woG @ st["c2_w"]                     # out conv folded into ST.conv2
    f["toG"] = (p["oG_s"] * (p["oG_w"] @ b_l2g + p["oG_b"]) + p["oG_t"])[:, None]
    return f


# ----------------------------------------------------------------------------
if __name__ == "__main__":
    # dim = 16 -> each stream carries dim//2 = 8 channels (ratio_g_in = 0.5).
    dim, N, H, W = 16, 2, 16, 16
    C = dim // 2          # channels per stream
    Cr = C // 2           # nc_reduce = 2
    Cf = Cr // 2          # SpectralTransform inner channels

    key = jax.random.PRNGKey(0)
    k_xl, k_xg, k_p1, k_p2 = jax.random.split(key, 4)
    x_l = jax.random.normal(k_xl, (N, C, H, W), jnp.float32)   # NCHW
    x_g = jax.random.normal(k_xg, (N, C, H, W), jnp.float32)   # NCHW

    params = {
        "conv1": fold_lffc_params(make_lffc_params(k_p1, C, Cr, Cf)),  # out_act=True
        "conv2": fold_lffc_params(make_lffc_params(k_p2, C, Cr, Cf)),  # out_act=False
    }

    fwd = jax.jit(functools.partial(two_stream_lffc_resnet_block, params=params))
    out_l, out_g = fwd(x_l, x_g)
    jax.block_until_ready((out_l, out_g))
    assert out_l.shape == (N, C, H, W) and out_g.shape == (N, C, H, W)
    assert bool(jnp.isfinite(out_l).all()) and bool(jnp.isfinite(out_g).all())
    print("KERNEL_OK")
</pallas_src>

<mosaic_0001>
module attributes {stable_mosaic.version = 11 : i64} {
  func.func @_in_local_kernel(%arg0: i32, %arg1: memref<8x256xbf16, #tpu.memory_space<vmem>>, %arg2: memref<8x256xbf16, #tpu.memory_space<vmem>>, %arg3: memref<1x256xi32, #tpu.memory_space<vmem>>, %arg4: memref<4x8xbf16, #tpu.memory_space<vmem>>, %arg5: memref<4x1xf32, #tpu.memory_space<vmem>>, %arg6: memref<4x8xbf16, #tpu.memory_space<vmem>>, %arg7: memref<4x1xf32, #tpu.memory_space<vmem>>, %arg8: memref<2x4xf32, #tpu.memory_space<vmem>>, %arg9: memref<2x1xf32, #tpu.memory_space<vmem>>, %arg10: memref<8x72xf32, #tpu.memory_space<vmem>>, %arg11: memref<8x1xf32, #tpu.memory_space<vmem>>, %arg12: memref<8x256xbf16, #tpu.memory_space<vmem>>, %arg13: memref<4x256xbf16, #tpu.memory_space<vmem>>, %arg14: memref<2x256xf32, #tpu.memory_space<vmem>>, %arg15: memref<72x256xf32, #tpu.memory_space<vmem>>) attributes {dimension_semantics = [#tpu.dimension_semantics<parallel>], iteration_bounds = array<i64: 2>, scalar_prefetch = 0 : i64, scratch_operands = 1 : i64, tpu.core_type = #tpu.core_type<tc>, window_params = [{transform_indices = @transform_0, window_bounds = array<i64: 8, 256>}, {transform_indices = @transform_1, window_bounds = array<i64: 8, 256>}, {pipeline_mode = #tpu.pipeline_mode<synchronous>, transform_indices = @transform_2, window_bounds = array<i64: 1, 256>}, {pipeline_mode = #tpu.pipeline_mode<synchronous>, transform_indices = @transform_3, window_bounds = array<i64: 4, 8>}, {pipeline_mode = #tpu.pipeline_mode<synchronous>, transform_indices = @transform_4, window_bounds = array<i64: 4, 1>}, {pipeline_mode = #tpu.pipeline_mode<synchronous>, transform_indices = @transform_5, window_bounds = array<i64: 4, 8>}, {pipeline_mode = #tpu.pipeline_mode<synchronous>, transform_indices = @transform_6, window_bounds = array<i64: 4, 1>}, {pipeline_mode = #tpu.pipeline_mode<synchronous>, transform_indices = @transform_7, window_bounds = array<i64: 2, 4>}, {pipeline_mode = #tpu.pipeline_mode<synchronous>, transform_indices = @transform_8, window_bounds = array<i64: 2, 1>}, {pipeline_mode = #tpu.pipeline_mode<synchronous>, transform_indices = @transform_9, window_bounds = array<i64: 8, 72>}, {pipeline_mode = #tpu.pipeline_mode<synchronous>, transform_indices = @transform_10, window_bounds = array<i64: 8, 1>}, {transform_indices = @transform_11, window_bounds = array<i64: 8, 256>}, {transform_indices = @transform_12, window_bounds = array<i64: 4, 256>}, {transform_indices = @transform_13, window_bounds = array<i64: 2, 256>}]} {
    %c0 = arith.constant 0 : index
    %c0_0 = arith.constant 0 : index
    %0 = vector.load %arg4[%c0, %c0_0] : memref<4x8xbf16, #tpu.memory_space<vmem>>, vector<4x8xbf16>
    %c0_1 = arith.constant 0 : index
    %c0_2 = arith.constant 0 : index
    %1 = vector.load %arg1[%c0_1, %c0_2] : memref<8x256xbf16, #tpu.memory_space<vmem>>, vector<8x256xbf16>
    %cst = arith.constant dense<0.000000e+00> : vector<4x256xf32>
    %2 = tpu.matmul %0, %1, %cst {dimension_numbers = #tpu.dot_dimension_numbers<[1], [0], [0], [1], [0, 0, 1, 1], [], []>} : vector<4x8xbf16>, vector<8x256xbf16>, vector<4x256xf32> -> vector<4x256xf32>
    %c0_3 = arith.constant 0 : index
    %c0_4 = arith.constant 0 : index
    %3 = vector.load %arg5[%c0_3, %c0_4] : memref<4x1xf32, #tpu.memory_space<vmem>>, vector<4x1xf32>
    %4 = vector.broadcast %3 : vector<4x1xf32> to vector<4x256xf32>
    %5 = arith.addf %2, %4 : vector<4x256xf32>
    %cst_5 = arith.constant 0.000000e+00 : f32
    %6 = vector.broadcast %cst_5 : f32 to vector<4x256xf32>
    %7 = arith.maximumf %5, %6 : vector<4x256xf32>
    %c0_6 = arith.constant 0 : index
    %c0_7 = arith.constant 0 : index
    %8 = vector.load %arg6[%c0_6, %c0_7] : memref<4x8xbf16, #tpu.memory_space<vmem>>, vector<4x8xbf16>
    %c0_8 = arith.constant 0 : index
    %c0_9 = arith.constant 0 : index
    %9 = vector.load %arg2[%c0_8, %c0_9] : memref<8x256xbf16, #tpu.memory_space<vmem>>, vector<8x256xbf16>
    %cst_10 = arith.constant dense<0.000000e+00> : vector<4x256xf32>
    %10 = tpu.matmul %8, %9, %cst_10 {dimension_numbers = #tpu.dot_dimension_numbers<[1], [0], [0], [1], [0, 0, 1, 1], [], []>} : vector<4x8xbf16>, vector<8x256xbf16>, vector<4x256xf32> -> vector<4x256xf32>
    %c0_11 = arith.constant 0 : index
    %c0_12 = arith.constant 0 : index
    %11 = vector.load %arg7[%c0_11, %c0_12] : memref<4x1xf32, #tpu.memory_space<vmem>>, vector<4x1xf32>
    %12 = vector.broadcast %11 : vector<4x1xf32> to vector<4x256xf32>
    %13 = arith.addf %10, %12 : vector<4x256xf32>
    %cst_13 = arith.constant 0.000000e+00 : f32
    %14 = vector.broadcast %cst_13 : f32 to vector<4x256xf32>
    %15 = arith.maximumf %13, %14 : vector<4x256xf32>
    %c0_14 = arith.constant 0 : index
    %c0_15 = arith.constant 0 : index
    %16 = vector.load %arg8[%c0_14, %c0_15] : memref<2x4xf32, #tpu.memory_space<vmem>>, vector<2x4xf32>
    %cst_16 = arith.constant dense<0.000000e+00> : vector<2x256xf32>
    %17 = tpu.matmul %16, %15, %cst_16 {dimension_numbers = #tpu.dot_dimension_numbers<[1], [0], [0], [1], [0, 0, 1, 1], [], []>} : vector<2x4xf32>, vector<4x256xf32>, vector<2x256xf32> -> vector<2x256xf32>
    %c0_17 = arith.constant 0 : index
    %c0_18 = arith.constant 0 : index
    %18 = vector.load %arg9[%c0_17, %c0_18] : memref<2x1xf32, #tpu.memory_space<vmem>>, vector<2x1xf32>
    %19 = vector.broadcast %18 : vector<2x1xf32> to vector<2x256xf32>
    %20 = arith.addf %17, %19 : vector<2x256xf32>
    %cst_19 = arith.constant 0.000000e+00 : f32
    %21 = vector.broadcast %cst_19 : f32 to vector<2x256xf32>
    %22 = arith.maximumf %20, %21 : vector<2x256xf32>
    %c0_20 = arith.constant 0 : index
    %c0_21 = arith.constant 0 : index
    %23 = vector.load %arg3[%c0_20, %c0_21] : memref<1x256xi32, #tpu.memory_space<vmem>>, vector<1x256xi32>
    %c1_i32 = arith.constant 1 : i32
    %24 = vector.broadcast %c1_i32 : i32 to vector<1x256xi32>
    %25 = arith.andi %23, %24 : vector<1x256xi32>
    %c0_i32 = arith.constant 0 : i32
    %26 = vector.broadcast %c0_i32 : i32 to vector<1x256xi32>
    %27 = arith.cmpi ne, %25, %26 : vector<1x256xi32>
    %c2_i32 = arith.constant 2 : i32
    %28 = vector.broadcast %c2_i32 : i32 to vector<1x256xi32>
    %29 = arith.andi %23, %28 : vector<1x256xi32>
    %c0_i32_22 = arith.constant 0 : i32
    %30 = vector.broadcast %c0_i32_22 : i32 to vector<1x256xi32>
    %31 = arith.cmpi ne, %29, %30 : vector<1x256xi32>
    %c4_i32 = arith.constant 4 : i32
    %32 = vector.broadcast %c4_i32 : i32 to vector<1x256xi32>
    %33 = arith.andi %23, %32 : vector<1x256xi32>
    %c0_i32_23 = arith.constant 0 : i32
    %34 = vector.broadcast %c0_i32_23 : i32 to vector<1x256xi32>
    %35 = arith.cmpi ne, %33, %34 : vector<1x256xi32>
    %c8_i32 = arith.constant 8 : i32
    %36 = vector.broadcast %c8_i32 : i32 to vector<1x256xi32>
    %37 = arith.andi %23, %36 : vector<1x256xi32>
    %c0_i32_24 = arith.constant 0 : i32
    %38 = vector.broadcast %c0_i32_24 : i32 to vector<1x256xi32>
    %39 = arith.cmpi ne, %37, %38 : vector<1x256xi32>
    %c255_i32 = arith.constant 255 : i32
    %40 = tpu.dynamic_rotate %7 by %c255_i32 dim 1 : vector<4x256xf32>, i32 -> vector<4x256xf32>
    %c1_i32_25 = arith.constant 1 : i32
    %41 = tpu.dynamic_rotate %7 by %c1_i32_25 dim 1 : vector<4x256xf32>, i32 -> vector<4x256xf32>
    %42 = vector.shape_cast %27 : vector<1x256xi1> to vector<1x256xi1>
    %43 = vector.broadcast %42 : vector<1x256xi1> to vector<4x256xi1>
    %44 = arith.select %43, %40, %41 : vector<4x256xi1>, vector<4x256xf32>
    %45 = vector.shape_cast %31 : vector<1x256xi1> to vector<1x256xi1>
    %46 = vector.broadcast %45 : vector<1x256xi1> to vector<4x256xi1>
    %47 = arith.select %46, %41, %40 : vector<4x256xi1>, vector<4x256xf32>
    %c240_i32 = arith.constant 240 : i32
    %48 = tpu.dynamic_rotate %44 by %c240_i32 dim 1 : vector<4x256xf32>, i32 -> vector<4x256xf32>
    %c16_i32 = arith.constant 16 : i32
    %49 = tpu.dynamic_rotate %44 by %c16_i32 dim 1 : vector<4x256xf32>, i32 -> vector<4x256xf32>
    %50 = vector.shape_cast %35 : vector<1x256xi1> to vector<1x256xi1>
    %51 = vector.broadcast %50 : vector<1x256xi1> to vector<4x256xi1>
    %52 = arith.select %51, %48, %49 : vector<4x256xi1>, vector<4x256xf32>
    %53 = vector.shape_cast %39 : vector<1x256xi1> to vector<1x256xi1>
    %54 = vector.broadcast %53 : vector<1x256xi1> to vector<4x256xi1>
    %55 = arith.select %54, %49, %48 : vector<4x256xi1>, vector<4x256xf32>
    %c0_26 = arith.constant 0 : index
    %c0_27 = arith.constant 0 : index
    %56 = vector.load %arg15[%c0_26, %c0_27] : memref<72x256xf32, #tpu.memory_space<vmem>>, vector<4x256xf32>
    tpu.vector_store %arg15[%c0_26, %c0_27], %52 {strides = array<i32>} : memref<72x256xf32, #tpu.memory_space<vmem>>, vector<4x256xf32>,
    %c12 = arith.constant 12 : index
    %c0_28 = arith.constant 0 : index
    %57 = vector.load %arg15[%c12, %c0_28] : memref<72x256xf32, #tpu.memory_space<vmem>>, vector<4x256xf32>
    tpu.vector_store %arg15[%c12, %c0_28], %44 {strides = array<i32>} : memref<72x256xf32, #tpu.memory_space<vmem>>, vector<4x256xf32>,
    %c24 = arith.constant 24 : index
    %c0_29 = arith.constant 0 : index
    %58 = vector.load %arg15[%c24, %c0_29] : memref<72x256xf32, #tpu.memory_space<vmem>>, vector<4x256xf32>
    tpu.vector_store %arg15[%c24, %c0_29], %55 {strides = array<i32>} : memref<72x256xf32, #tpu.memory_space<vmem>>, vector<4x256xf32>,
    %c240_i32_30 = arith.constant 240 : i32
    %59 = tpu.dynamic_rotate %7 by %c240_i32_30 dim 1 : vector<4x256xf32>, i32 -> vector<4x256xf32>
    %c16_i32_31 = arith.constant 16 : i32
    %60 = tpu.dynamic_rotate %7 by %c16_i32_31 dim 1 : vector<4x256xf32>, i32 -> vector<4x256xf32>
    %61 = vector.shape_cast %35 : vector<1x256xi1> to vector<1x256xi1>
    %62 = vector.broadcast %61 : vector<1x256xi1> to vector<4x256xi1>
    %63 = arith.select %62, %59, %60 : vector<4x256xi1>, vector<4x256xf32>
    %64 = vector.shape_cast %39 : vector<1x256xi1> to vector<1x256xi1>
    %65 = vector.broadcast %64 : vector<1x256xi1> to vector<4x256xi1>
    %66 = arith.select %65, %60, %59 : vector<4x256xi1>, vector<4x256xf32>
    %c4 = arith.constant 4 : index
    %c0_32 = arith.constant 0 : index
    %67 = vector.load %arg15[%c4, %c0_32] : memref<72x256xf32, #tpu.memory_space<vmem>>, vector<4x256xf32>
    tpu.vector_store %arg15[%c4, %c0_32], %63 {strides = array<i32>} : memref<72x256xf32, #tpu.memory_space<vmem>>, vector<4x256xf32>,
    %c16 = arith.constant 16 : index
    %c0_33 = arith.constant 0 : index
    %68 = vector.load %arg15[%c16, %c0_33] : memref<72x256xf32, #tpu.memory_space<vmem>>, vector<4x256xf32>
    tpu.vector_store %arg15[%c16, %c0_33], %7 {strides = array<i32>} : memref<72x256xf32, #tpu.memory_space<vmem>>, vector<4x256xf32>,
    %c28 = arith.constant 28 : index
    %c0_34 = arith.constant 0 : index
    %69 = vector.load %arg15[%c28, %c0_34] : memref<72x256xf32, #tpu.memory_space<vmem>>, vector<4x256xf32>
    tpu.vector_store %arg15[%c28, %c0_34], %66 {strides = array<i32>} : memref<72x256xf32, #tpu.memory_space<vmem>>, vector<4x256xf32>,
    %c240_i32_35 = arith.constant 240 : i32
    %70 = tpu.dynamic_rotate %47 by %c240_i32_35 dim 1 : vector<4x256xf32>, i32 -> vector<4x256xf32>
    %c16_i32_36 = arith.constant 16 : i32
    %71 = tpu.dynamic_rotate %47 by %c16_i32_36 dim 1 : vector<4x256xf32>, i32 -> vector<4x256xf32>
    %72 = vector.shape_cast %35 : vector<1x256xi1> to vector<1x256xi1>
    %73 = vector.broadcast %72 : vector<1x256xi1> to vector<4x256xi1>
    %74 = arith.select %73, %70, %71 : vector<4x256xi1>, vector<4x256xf32>
    %75 = vector.shape_cast %39 : vector<1x256xi1> to vector<1x256xi1>
    %76 = vector.broadcast %75 : vector<1x256xi1> to vector<4x256xi1>
    %77 = arith.select %76, %71, %70 : vector<4x256xi1>, vector<4x256xf32>
    %c8 = arith.constant 8 : index
    %c0_37 = arith.constant 0 : index
    %78 = vector.load %arg15[%c8, %c0_37] : memref<72x256xf32, #tpu.memory_space<vmem>>, vector<4x256xf32>
    tpu.vector_store %arg15[%c8, %c0_37], %74 {strides = array<i32>} : memref<72x256xf32, #tpu.memory_space<vmem>>, vector<4x256xf32>,
    %c20 = arith.constant 20 : index
    %c0_38 = arith.constant 0 : index
    %79 = vector.load %arg15[%c20, %c0_38] : memref<72x256xf32, #tpu.memory_space<vmem>>, vector<4x256xf32>
    tpu.vector_store %arg15[%c20, %c0_38], %47 {strides = array<i32>} : memref<72x256xf32, #tpu.memory_space<vmem>>, vector<4x256xf32>,
    %c32 = arith.constant 32 : index
    %c0_39 = arith.constant 0 : index
    %80 = vector.load %arg15[%c32, %c0_39] : memref<72x256xf32, #tpu.memory_space<vmem>>, vector<4x256xf32>
    tpu.vector_store %arg15[%c32, %c0_39], %77 {strides = array<i32>} : memref<72x256xf32, #tpu.memory_space<vmem>>, vector<4x256xf32>,
    %c255_i32_40 = arith.constant 255 : i32
    %81 = tpu.dynamic_rotate %15 by %c255_i32_40 dim 1 : vector<4x256xf32>, i32 -> vector<4x256xf32>
    %c1_i32_41 = arith.constant 1 : i32
    %82 = tpu.dynamic_rotate %15 by %c1_i32_41 dim 1 : vector<4x256xf32>, i32 -> vector<4x256xf32>
    %83 = vector.shape_cast %27 : vector<1x256xi1> to vector<1x256xi1>
    %84 = vector.broadcast %83 : vector<1x256xi1> to vector<4x256xi1>
    %85 = arith.select %84, %81, %82 : vector<4x256xi1>, vector<4x256xf32>
    %86 = vector.shape_cast %31 : vector<1x256xi1> to vector<1x256xi1>
    %87 = vector.broadcast %86 : vector<1x256xi1> to vector<4x256xi1>
    %88 = arith.select %87, %82, %81 : vector<4x256xi1>, vector<4x256xf32>
    %c240_i32_42 = arith.constant 240 : i32
    %89 = tpu.dynamic_rotate %85 by %c240_i32_42 dim 1 : vector<4x256xf32>, i32 -> vector<4x256xf32>
    %c16_i32_43 = arith.constant 16 : i32
    %90 = tpu.dynamic_rotate %85 by %c16_i32_43 dim 1 : vector<4x256xf32>, i32 -> vector<4x256xf32>
    %91 = vector.shape_cast %35 : vector<1x256xi1> to vector<1x256xi1>
    %92 = vector.broadcast %91 : vector<1x256xi1> to vector<4x256xi1>
    %93 = arith.select %92, %89, %90 : vector<4x256xi1>, vector<4x256xf32>
    %94 = vector.shape_cast %39 : vector<1x256xi1> to vector<1x256xi1>
    %95 = vector.broadcast %94 : vector<1x256xi1> to vector<4x256xi1>
    %96 = arith.select %95, %90, %89 : vector<4x256xi1>, vector<4x256xf32>
    %c36 = arith.constant 36 : index
    %c0_44 = arith.constant 0 : index
    %97 = vector.load %arg15[%c36, %c0_44] : memref<72x256xf32, #tpu.memory_space<vmem>>, vector<4x256xf32>
    tpu.vector_store %arg15[%c36, %c0_44], %93 {strides = array<i32>} : memref<72x256xf32, #tpu.memory_space<vmem>>, vector<4x256xf32>,
    %c48 = arith.constant 48 : index
    %c0_45 = arith.constant 0 : index
    %98 = vector.load %arg15[%c48, %c0_45] : memref<72x256xf32, #tpu.memory_space<vmem>>, vector<4x256xf32>
    tpu.vector_store %arg15[%c48, %c0_45], %85 {strides = array<i32>} : memref<72x256xf32, #tpu.memory_space<vmem>>, vector<4x256xf32>,
    %c60 = arith.constant 60 : index
    %c0_46 = arith.constant 0 : index
    %99 = vector.load %arg15[%c60, %c0_46] : memref<72x256xf32, #tpu.memory_space<vmem>>, vector<4x256xf32>
    tpu.vector_store %arg15[%c60, %c0_46], %96 {strides = array<i32>} : memref<72x256xf32, #tpu.memory_space<vmem>>, vector<4x256xf32>,
    %c240_i32_47 = arith.constant 240 : i32
    %100 = tpu.dynamic_rotate %15 by %c240_i32_47 dim 1 : vector<4x256xf32>, i32 -> vector<4x256xf32>
    %c16_i32_48 = arith.constant 16 : i32
    %101 = tpu.dynamic_rotate %15 by %c16_i32_48 dim 1 : vector<4x256xf32>, i32 -> vector<4x256xf32>
    %102 = vector.shape_cast %35 : vector<1x256xi1> to vector<1x256xi1>
    %103 = vector.broadcast %102 : vector<1x256xi1> to vector<4x256xi1>
    %104 = arith.select %103, %100, %101 : vector<4x256xi1>, vector<4x256xf32>
    %105 = vector.shape_cast %39 : vector<1x256xi1> to vector<1x256xi1>
    %106 = vector.broadcast %105 : vector<1x256xi1> to vector<4x256xi1>
    %107 = arith.select %106, %101, %100 : vector<4x256xi1>, vector<4x256xf32>
    %c40 = arith.constant 40 : index
    %c0_49 = arith.constant 0 : index
    %108 = vector.load %arg15[%c40, %c0_49] : memref<72x256xf32, #tpu.memory_space<vmem>>, vector<4x256xf32>
    tpu.vector_store %arg15[%c40, %c0_49], %104 {strides = array<i32>} : memref<72x256xf32, #tpu.memory_space<vmem>>, vector<4x256xf32>,
    %c52 = arith.constant 52 : index
    %c0_50 = arith.constant 0 : index
    %109 = vector.load %arg15[%c52, %c0_50] : memref<72x256xf32, #tpu.memory_space<vmem>>, vector<4x256xf32>
    tpu.vector_store %arg15[%c52, %c0_50], %15 {strides = array<i32>} : memref<72x256xf32, #tpu.memory_space<vmem>>, vector<4x256xf32>,
    %c64 = arith.constant 64 : index
    %c0_51 = arith.constant 0 : index
    %110 = vector.load %arg15[%c64, %c0_51] : memref<72x256xf32, #tpu.memory_space<vmem>>, vector<4x256xf32>
    tpu.vector_store %arg15[%c64, %c0_51], %107 {strides = array<i32>} : memref<72x256xf32, #tpu.memory_space<vmem>>, vector<4x256xf32>,
    %c240_i32_52 = arith.constant 240 : i32
    %111 = tpu.dynamic_rotate %88 by %c240_i32_52 dim 1 : vector<4x256xf32>, i32 -> vector<4x256xf32>
    %c16_i32_53 = arith.constant 16 : i32
    %112 = tpu.dynamic_rotate %88 by %c16_i32_53 dim 1 : vector<4x256xf32>, i32 -> vector<4x256xf32>
    %113 = vector.shape_cast %35 : vector<1x256xi1> to vector<1x256xi1>
    %114 = vector.broadcast %113 : vector<1x256xi1> to vector<4x256xi1>
    %115 = arith.select %114, %111, %112 : vector<4x256xi1>, vector<4x256xf32>
    %116 = vector.shape_cast %39 : vector<1x256xi1> to vector<1x256xi1>
    %117 = vector.broadcast %116 : vector<1x256xi1> to vector<4x256xi1>
    %118 = arith.select %117, %112, %111 : vector<4x256xi1>, vector<4x256xf32>
    %c44 = arith.constant 44 : index
    %c0_54 = arith.constant 0 : index
    %119 = vector.load %arg15[%c44, %c0_54] : memref<72x256xf32, #tpu.memory_space<vmem>>, vector<4x256xf32>
    tpu.vector_store %arg15[%c44, %c0_54], %115 {strides = array<i32>} : memref<72x256xf32, #tpu.memory_space<vmem>>, vector<4x256xf32>,
    %c56 = arith.constant 56 : index
    %c0_55 = arith.constant 0 : index
    %120 = vector.load %arg15[%c56, %c0_55] : memref<72x256xf32, #tpu.memory_space<vmem>>, vector<4x256xf32>
    tpu.vector_store %arg15[%c56, %c0_55], %88 {strides = array<i32>} : memref<72x256xf32, #tpu.memory_space<vmem>>, vector<4x256xf32>,
    %c68 = arith.constant 68 : index
    %c0_56 = arith.constant 0 : index
    %121 = vector.load %arg15[%c68, %c0_56] : memref<72x256xf32, #tpu.memory_space<vmem>>, vector<4x256xf32>
    tpu.vector_store %arg15[%c68, %c0_56], %118 {strides = array<i32>} : memref<72x256xf32, #tpu.memory_space<vmem>>, vector<4x256xf32>,
    %c0_57 = arith.constant 0 : index
    %c0_58 = arith.constant 0 : index
    %122 = vector.load %arg10[%c0_57, %c0_58] : memref<8x72xf32, #tpu.memory_space<vmem>>, vector<8x72xf32>
    %c0_59 = arith.constant 0 : index
    %c0_60 = arith.constant 0 : index
    %123 = vector.load %arg15[%c0_59, %c0_60] : memref<72x256xf32, #tpu.memory_space<vmem>>, vector<72x256xf32>
    %cst_61 = arith.constant dense<0.000000e+00> : vector<8x256xf32>
    %124 = tpu.matmul %122, %123, %cst_61 {dimension_numbers = #tpu.dot_dimension_numbers<[1], [0], [0], [1], [0, 0, 1, 1], [], []>} : vector<8x72xf32>, vector<72x256xf32>, vector<8x256xf32> -> vector<8x256xf32>
    %c0_62 = arith.constant 0 : index
    %c0_63 = arith.constant 0 : index
    %125 = vector.load %arg11[%c0_62, %c0_63] : memref<8x1xf32, #tpu.memory_space<vmem>>, vector<8x1xf32>
    %126 = vector.broadcast %125 : vector<8x1xf32> to vector<8x256xf32>
    %127 = arith.addf %124, %126 : vector<8x256xf32>
    %cst_64 = arith.constant 0.000000e+00 : f32
    %128 = vector.broadcast %cst_64 : f32 to vector<8x256xf32>
    %129 = arith.maximumf %127, %128 : vector<8x256xf32>
    %130 = arith.truncf %129 : vector<8x256xf32> to vector<8x256xbf16>
    %c0_65 = arith.constant 0 : index
    %c0_66 = arith.constant 0 : index
    %131 = vector.load %arg12[%c0_65, %c0_66] : memref<8x256xbf16, #tpu.memory_space<vmem>>, vector<8x256xbf16>
    tpu.vector_store %arg12[%c0_65, %c0_66], %130 {strides = array<i32>} : memref<8x256xbf16, #tpu.memory_space<vmem>>, vector<8x256xbf16>,
    %132 = arith.truncf %7 : vector<4x256xf32> to vector<4x256xbf16>
    %c0_67 = arith.constant 0 : index
    %c0_68 = arith.constant 0 : index
    %133 = vector.load %arg13[%c0_67, %c0_68] : memref<4x256xbf16, #tpu.memory_space<vmem>>, vector<4x256xbf16>
    tpu.vector_store %arg13[%c0_67, %c0_68], %132 {strides = array<i32>} : memref<4x256xbf16, #tpu.memory_space<vmem>>, vector<4x256xbf16>,
    %c0_69 = arith.constant 0 : index
    %c0_70 = arith.constant 0 : index
    %134 = vector.load %arg14[%c0_69, %c0_70] : memref<2x256xf32, #tpu.memory_space<vmem>>, vector<2x256xf32>
    tpu.vector_store %arg14[%c0_69, %c0_70], %22 {strides = array<i32>} : memref<2x256xf32, #tpu.memory_space<vmem>>, vector<2x256xf32>,
    return
  }
  func.func @transform_0(%arg0: i32) -> (i32, i32) {
    %c0_i32 = arith.constant 0 : i32
    %c0_i32_0 = arith.constant 0 : i32
    return %c0_i32, %arg0 : i32, i32
  }
  func.func @transform_1(%arg0: i32) -> (i32, i32) {
    %c0_i32 = arith.constant 0 : i32
    %c0_i32_0 = arith.constant 0 : i32
    return %c0_i32, %arg0 : i32, i32
  }
  func.func @transform_2(%arg0: i32) -> (i32, i32) {
    %c0_i32 = arith.constant 0 : i32
    %c0_i32_0 = arith.constant 0 : i32
    %c0_i32_1 = arith.constant 0 : i32
    return %c0_i32, %c0_i32_0 : i32, i32
  }
  func.func @transform_3(%arg0: i32) -> (i32, i32) {
    %c0_i32 = arith.constant 0 : i32
    %c0_i32_0 = arith.constant 0 : i32
    %c0_i32_1 = arith.constant 0 : i32
    return %c0_i32, %c0_i32_0 : i32, i32
  }
  func.func @transform_4(%arg0: i32) -> (i32, i32) {
    %c0_i32 = arith.constant 0 : i32
    %c0_i32_0 = arith.constant 0 : i32
    %c0_i32_1 = arith.constant 0 : i32
    return %c0_i32, %c0_i32_0 : i32, i32
  }
  func.func @transform_5(%arg0: i32) -> (i32, i32) {
    %c0_i32 = arith.constant 0 : i32
    %c0_i32_0 = arith.constant 0 : i32
    %c0_i32_1 = arith.constant 0 : i32
    return %c0_i32, %c0_i32_0 : i32, i32
  }
  func.func @transform_6(%arg0: i32) -> (i32, i32) {
    %c0_i32 = arith.constant 0 : i32
    %c0_i32_0 = arith.constant 0 : i32
    %c0_i32_1 = arith.constant 0 : i32
    return %c0_i32, %c0_i32_0 : i32, i32
  }
  func.func @transform_7(%arg0: i32) -> (i32, i32) {
    %c0_i32 = arith.constant 0 : i32
    %c0_i32_0 = arith.constant 0 : i32
    %c0_i32_1 = arith.constant 0 : i32
    return %c0_i32, %c0_i32_0 : i32, i32
  }
  func.func @transform_8(%arg0: i32) -> (i32, i32) {
    %c0_i32 = arith.constant 0 : i32
    %c0_i32_0 = arith.constant 0 : i32
    %c0_i32_1 = arith.constant 0 : i32
    return %c0_i32, %c0_i32_0 : i32, i32
  }
  func.func @transform_9(%arg0: i32) -> (i32, i32) {
    %c0_i32 = arith.constant 0 : i32
    %c0_i32_0 = arith.constant 0 : i32
    %c0_i32_1 = arith.constant 0 : i32
    return %c0_i32, %c0_i32_0 : i32, i32
  }
  func.func @transform_10(%arg0: i32) -> (i32, i32) {
    %c0_i32 = arith.constant 0 : i32
    %c0_i32_0 = arith.constant 0 : i32
    %c0_i32_1 = arith.constant 0 : i32
    return %c0_i32, %c0_i32_0 : i32, i32
  }
  func.func @transform_11(%arg0: i32) -> (i32, i32) {
    %c0_i32 = arith.constant 0 : i32
    %c0_i32_0 = arith.constant 0 : i32
    return %c0_i32, %arg0 : i32, i32
  }
  func.func @transform_12(%arg0: i32) -> (i32, i32) {
    %c0_i32 = arith.constant 0 : i32
    %c0_i32_0 = arith.constant 0 : i32
    return %c0_i32, %arg0 : i32, i32
  }
  func.func @transform_13(%arg0: i32) -> (i32, i32) {
    %c0_i32 = arith.constant 0 : i32
    %c0_i32_0 = arith.constant 0 : i32
    return %c0_i32, %arg0 : i32, i32
  }
}

module attributes {stable_mosaic.version = 11 : i64} {
  func.func @_fu_kernel(%arg0: i32, %arg1: memref<2x128xf32, #tpu.memory_space<vmem>>, %arg2: memref<2x128xf32, #tpu.memory_space<vmem>>, %arg3: memref<2x2xf32, #tpu.memory_space<vmem>>, %arg4: memref<2x2xf32, #tpu.memory_space<vmem>>, %arg5: memref<2x2xf32, #tpu.memory_space<vmem>>, %arg6: memref<2x2xf32, #tpu.memory_space<vmem>>, %arg7: memref<2x1xf32, #tpu.memory_space<vmem>>, %arg8: memref<2x1xf32, #tpu.memory_space<vmem>>, %arg9: memref<2x128xf32, #tpu.memory_space<vmem>>, %arg10: memref<2x128xf32, #tpu.memory_space<vmem>>) attributes {dimension_semantics = [#tpu.dimension_semantics<parallel>], iteration_bounds = array<i64: 3>, scalar_prefetch = 0 : i64, scratch_operands = 0 : i64, tpu.core_type = #tpu.core_type<tc>, window_params = [{transform_indices = @transform_0, window_bounds = array<i64: 2, 128>}, {transform_indices = @transform_1, window_bounds = array<i64: 2, 128>}, {pipeline_mode = #tpu.pipeline_mode<synchronous>, transform_indices = @transform_2, window_bounds = array<i64: 2, 2>}, {pipeline_mode = #tpu.pipeline_mode<synchronous>, transform_indices = @transform_3, window_bounds = array<i64: 2, 2>}, {pipeline_mode = #tpu.pipeline_mode<synchronous>, transform_indices = @transform_4, window_bounds = array<i64: 2, 2>}, {pipeline_mode = #tpu.pipeline_mode<synchronous>, transform_indices = @transform_5, window_bounds = array<i64: 2, 2>}, {pipeline_mode = #tpu.pipeline_mode<synchronous>, transform_indices = @transform_6, window_bounds = array<i64: 2, 1>}, {pipeline_mode = #tpu.pipeline_mode<synchronous>, transform_indices = @transform_7, window_bounds = array<i64: 2, 1>}, {transform_indices = @transform_8, window_bounds = array<i64: 2, 128>}, {transform_indices = @transform_9, window_bounds = array<i64: 2, 128>}]} {
    %c0 = arith.constant 0 : index
    %c0_0 = arith.constant 0 : index
    %0 = vector.load %arg1[%c0, %c0_0] : memref<2x128xf32, #tpu.memory_space<vmem>>, vector<2x128xf32>
    %c0_1 = arith.constant 0 : index
    %c0_2 = arith.constant 0 : index
    %1 = vector.load %arg2[%c0_1, %c0_2] : memref<2x128xf32, #tpu.memory_space<vmem>>, vector<2x128xf32>
    %c0_3 = arith.constant 0 : index
    %c0_4 = arith.constant 0 : index
    %2 = vector.load %arg3[%c0_3, %c0_4] : memref<2x2xf32, #tpu.memory_space<vmem>>, vector<2x2xf32>
    %cst = arith.constant dense<0.000000e+00> : vector<2x128xf32>
    %3 = tpu.matmul %2, %0, %cst {dimension_numbers = #tpu.dot_dimension_numbers<[1], [0], [0], [1], [0, 0, 1, 1], [], []>} : vector<2x2xf32>, vector<2x128xf32>, vector<2x128xf32> -> vector<2x128xf32>
    %c0_5 = arith.constant 0 : index
    %c0_6 = arith.constant 0 : index
    %4 = vector.load %arg4[%c0_5, %c0_6] : memref<2x2xf32, #tpu.memory_space<vmem>>, vector<2x2xf32>
    %cst_7 = arith.constant dense<0.000000e+00> : vector<2x128xf32>
    %5 = tpu.matmul %4, %1, %cst_7 {dimension_numbers = #tpu.dot_dimension_numbers<[1], [0], [0], [1], [0, 0, 1, 1], [], []>} : vector<2x2xf32>, vector<2x128xf32>, vector<2x128xf32> -> vector<2x128xf32>
    %6 = arith.addf %3, %5 : vector<2x128xf32>
    %c0_8 = arith.constant 0 : index
    %c0_9 = arith.constant 0 : index
    %7 = vector.load %arg7[%c0_8, %c0_9] : memref<2x1xf32, #tpu.memory_space<vmem>>, vector<2x1xf32>
    %8 = vector.broadcast %7 : vector<2x1xf32> to vector<2x128xf32>
    %9 = arith.addf %6, %8 : vector<2x128xf32>
    %c0_10 = arith.constant 0 : index
    %c0_11 = arith.constant 0 : index
    %10 = vector.load %arg5[%c0_10, %c0_11] : memref<2x2xf32, #tpu.memory_space<vmem>>, vector<2x2xf32>
    %cst_12 = arith.constant dense<0.000000e+00> : vector<2x128xf32>
    %11 = tpu.matmul %10, %0, %cst_12 {dimension_numbers = #tpu.dot_dimension_numbers<[1], [0], [0], [1], [0, 0, 1, 1], [], []>} : vector<2x2xf32>, vector<2x128xf32>, vector<2x128xf32> -> vector<2x128xf32>
    %c0_13 = arith.constant 0 : index
    %c0_14 = arith.constant 0 : index
    %12 = vector.load %arg6[%c0_13, %c0_14] : memref<2x2xf32, #tpu.memory_space<vmem>>, vector<2x2xf32>
    %cst_15 = arith.constant dense<0.000000e+00> : vector<2x128xf32>
    %13 = tpu.matmul %12, %1, %cst_15 {dimension_numbers = #tpu.dot_dimension_numbers<[1], [0], [0], [1], [0, 0, 1, 1], [], []>} : vector<2x2xf32>, vector<2x128xf32>, vector<2x128xf32> -> vector<2x128xf32>
    %14 = arith.addf %11, %13 : vector<2x128xf32>
    %c0_16 = arith.constant 0 : index
    %c0_17 = arith.constant 0 : index
    %15 = vector.load %arg8[%c0_16, %c0_17] : memref<2x1xf32, #tpu.memory_space<vmem>>, vector<2x1xf32>
    %16 = vector.broadcast %15 : vector<2x1xf32> to vector<2x128xf32>
    %17 = arith.addf %14, %16 : vector<2x128xf32>
    %cst_18 = arith.constant 0.000000e+00 : f32
    %18 = vector.broadcast %cst_18 : f32 to vector<2x128xf32>
    %19 = arith.maximumf %9, %18 : vector<2x128xf32>
    %c0_19 = arith.constant 0 : index
    %c0_20 = arith.constant 0 : index
    %20 = vector.load %arg9[%c0_19, %c0_20] : memref<2x128xf32, #tpu.memory_space<vmem>>, vector<2x128xf32>
    tpu.vector_store %arg9[%c0_19, %c0_20], %19 {strides = array<i32>} : memref<2x128xf32, #tpu.memory_space<vmem>>, vector<2x128xf32>,
    %cst_21 = arith.constant 0.000000e+00 : f32
    %21 = vector.broadcast %cst_21 : f32 to vector<2x128xf32>
    %22 = arith.maximumf %17, %21 : vector<2x128xf32>
    %c0_22 = arith.constant 0 : index
    %c0_23 = arith.constant 0 : index
    %23 = vector.load %arg10[%c0_22, %c0_23] : memref<2x128xf32, #tpu.memory_space<vmem>>, vector<2x128xf32>
    tpu.vector_store %arg10[%c0_22, %c0_23], %22 {strides = array<i32>} : memref<2x128xf32, #tpu.memory_space<vmem>>, vector<2x128xf32>,
    return
  }
  func.func @transform_0(%arg0: i32) -> (i32, i32) {
    %c0_i32 = arith.constant 0 : i32
    %c0_i32_0 = arith.constant 0 : i32
    return %c0_i32, %arg0 : i32, i32
  }
  func.func @transform_1(%arg0: i32) -> (i32, i32) {
    %c0_i32 = arith.constant 0 : i32
    %c0_i32_0 = arith.constant 0 : i32
    return %c0_i32, %arg0 : i32, i32
  }
  func.func @transform_2(%arg0: i32) -> (i32, i32) {
    %c0_i32 = arith.constant 0 : i32
    %c0_i32_0 = arith.constant 0 : i32
    %c0_i32_1 = arith.constant 0 : i32
    return %c0_i32, %c0_i32_0 : i32, i32
  }
  func.func @transform_3(%arg0: i32) -> (i32, i32) {
    %c0_i32 = arith.constant 0 : i32
    %c0_i32_0 = arith.constant 0 : i32
    %c0_i32_1 = arith.constant 0 : i32
    return %c0_i32, %c0_i32_0 : i32, i32
  }
  func.func @transform_4(%arg0: i32) -> (i32, i32) {
    %c0_i32 = arith.constant 0 : i32
    %c0_i32_0 = arith.constant 0 : i32
    %c0_i32_1 = arith.constant 0 : i32
    return %c0_i32, %c0_i32_0 : i32, i32
  }
  func.func @transform_5(%arg0: i32) -> (i32, i32) {
    %c0_i32 = arith.constant 0 : i32
    %c0_i32_0 = arith.constant 0 : i32
    %c0_i32_1 = arith.constant 0 : i32
    return %c0_i32, %c0_i32_0 : i32, i32
  }
  func.func @transform_6(%arg0: i32) -> (i32, i32) {
    %c0_i32 = arith.constant 0 : i32
    %c0_i32_0 = arith.constant 0 : i32
    %c0_i32_1 = arith.constant 0 : i32
    return %c0_i32, %c0_i32_0 : i32, i32
  }
  func.func @transform_7(%arg0: i32) -> (i32, i32) {
    %c0_i32 = arith.constant 0 : i32
    %c0_i32_0 = arith.constant 0 : i32
    %c0_i32_1 = arith.constant 0 : i32
    return %c0_i32, %c0_i32_0 : i32, i32
  }
  func.func @transform_8(%arg0: i32) -> (i32, i32) {
    %c0_i32 = arith.constant 0 : i32
    %c0_i32_0 = arith.constant 0 : i32
    return %c0_i32, %arg0 : i32, i32
  }
  func.func @transform_9(%arg0: i32) -> (i32, i32) {
    %c0_i32 = arith.constant 0 : i32
    %c0_i32_0 = arith.constant 0 : i32
    return %c0_i32, %arg0 : i32, i32
  }
}

module attributes {stable_mosaic.version = 11 : i64} {
  func.func @_out_global_kernel(%arg0: i32, %arg1: memref<4x256xbf16, #tpu.memory_space<vmem>>, %arg2: memref<2x256xf32, #tpu.memory_space<vmem>>, %arg3: memref<2x256xf32, #tpu.memory_space<vmem>>, %arg4: memref<1x256xi32, #tpu.memory_space<vmem>>, %arg5: memref<8x36xf32, #tpu.memory_space<vmem>>, %arg6: memref<8x2xf32, #tpu.memory_space<vmem>>, %arg7: memref<8x1xf32, #tpu.memory_space<vmem>>, %arg8: memref<8x256xbf16, #tpu.memory_space<vmem>>, %arg9: memref<36x256xf32, #tpu.memory_space<vmem>>) attributes {dimension_semantics = [#tpu.dimension_semantics<parallel>], iteration_bounds = array<i64: 2>, scalar_prefetch = 0 : i64, scratch_operands = 1 : i64, tpu.core_type = #tpu.core_type<tc>, window_params = [{transform_indices = @transform_0, window_bounds = array<i64: 4, 256>}, {transform_indices = @transform_1, window_bounds = array<i64: 2, 256>}, {transform_indices = @transform_2, window_bounds = array<i64: 2, 256>}, {pipeline_mode = #tpu.pipeline_mode<synchronous>, transform_indices = @transform_3, window_bounds = array<i64: 1, 256>}, {pipeline_mode = #tpu.pipeline_mode<synchronous>, transform_indices = @transform_4, window_bounds = array<i64: 8, 36>}, {pipeline_mode = #tpu.pipeline_mode<synchronous>, transform_indices = @transform_5, window_bounds = array<i64: 8, 2>}, {pipeline_mode = #tpu.pipeline_mode<synchronous>, transform_indices = @transform_6, window_bounds = array<i64: 8, 1>}, {transform_indices = @transform_7, window_bounds = array<i64: 8, 256>}]} {
    %c0 = arith.constant 0 : index
    %c0_0 = arith.constant 0 : index
    %0 = vector.load %arg1[%c0, %c0_0] : memref<4x256xbf16, #tpu.memory_space<vmem>>, vector<4x256xbf16>
    %1 = arith.extf %0 : vector<4x256xbf16> to vector<4x256xf32>
    %c0_1 = arith.constant 0 : index
    %c0_2 = arith.constant 0 : index
    %2 = vector.load %arg4[%c0_1, %c0_2] : memref<1x256xi32, #tpu.memory_space<vmem>>, vector<1x256xi32>
    %c1_i32 = arith.constant 1 : i32
    %3 = vector.broadcast %c1_i32 : i32 to vector<1x256xi32>
    %4 = arith.andi %2, %3 : vector<1x256xi32>
    %c0_i32 = arith.constant 0 : i32
    %5 = vector.broadcast %c0_i32 : i32 to vector<1x256xi32>
    %6 = arith.cmpi ne, %4, %5 : vector<1x256xi32>
    %c2_i32 = arith.constant 2 : i32
    %7 = vector.broadcast %c2_i32 : i32 to vector<1x256xi32>
    %8 = arith.andi %2, %7 : vector<1x256xi32>
    %c0_i32_3 = arith.constant 0 : i32
    %9 = vector.broadcast %c0_i32_3 : i32 to vector<1x256xi32>
    %10 = arith.cmpi ne, %8, %9 : vector<1x256xi32>
    %c4_i32 = arith.constant 4 : i32
    %11 = vector.broadcast %c4_i32 : i32 to vector<1x256xi32>
    %12 = arith.andi %2, %11 : vector<1x256xi32>
    %c0_i32_4 = arith.constant 0 : i32
    %13 = vector.broadcast %c0_i32_4 : i32 to vector<1x256xi32>
    %14 = arith.cmpi ne, %12, %13 : vector<1x256xi32>
    %c8_i32 = arith.constant 8 : i32
    %15 = vector.broadcast %c8_i32 : i32 to vector<1x256xi32>
    %16 = arith.andi %2, %15 : vector<1x256xi32>
    %c0_i32_5 = arith.constant 0 : i32
    %17 = vector.broadcast %c0_i32_5 : i32 to vector<1x256xi32>
    %18 = arith.cmpi ne, %16, %17 : vector<1x256xi32>
    %c255_i32 = arith.constant 255 : i32
    %19 = tpu.dynamic_rotate %1 by %c255_i32 dim 1 : vector<4x256xf32>, i32 -> vector<4x256xf32>
    %c1_i32_6 = arith.constant 1 : i32
    %20 = tpu.dynamic_rotate %1 by %c1_i32_6 dim 1 : vector<4x256xf32>, i32 -> vector<4x256xf32>
    %21 = vector.shape_cast %6 : vector<1x256xi1> to vector<1x256xi1>
    %22 = vector.broadcast %21 : vector<1x256xi1> to vector<4x256xi1>
    %23 = arith.select %22, %19, %20 : vector<4x256xi1>, vector<4x256xf32>
    %24 = vector.shape_cast %10 : vector<1x256xi1> to vector<1x256xi1>
    %25 = vector.broadcast %24 : vector<1x256xi1> to vector<4x256xi1>
    %26 = arith.select %25, %20, %19 : vector<4x256xi1>, vector<4x256xf32>
    %c240_i32 = arith.constant 240 : i32
    %27 = tpu.dynamic_rotate %23 by %c240_i32 dim 1 : vector<4x256xf32>, i32 -> vector<4x256xf32>
    %c16_i32 = arith.constant 16 : i32
    %28 = tpu.dynamic_rotate %23 by %c16_i32 dim 1 : vector<4x256xf32>, i32 -> vector<4x256xf32>
    %29 = vector.shape_cast %14 : vector<1x256xi1> to vector<1x256xi1>
    %30 = vector.broadcast %29 : vector<1x256xi1> to vector<4x256xi1>
    %31 = arith.select %30, %27, %28 : vector<4x256xi1>, vector<4x256xf32>
    %32 = vector.shape_cast %18 : vector<1x256xi1> to vector<1x256xi1>
    %33 = vector.broadcast %32 : vector<1x256xi1> to vector<4x256xi1>
    %34 = arith.select %33, %28, %27 : vector<4x256xi1>, vector<4x256xf32>
    %c0_7 = arith.constant 0 : index
    %c0_8 = arith.constant 0 : index
    %35 = vector.load %arg9[%c0_7, %c0_8] : memref<36x256xf32, #tpu.memory_space<vmem>>, vector<4x256xf32>
    tpu.vector_store %arg9[%c0_7, %c0_8], %31 {strides = array<i32>} : memref<36x256xf32, #tpu.memory_space<vmem>>, vector<4x256xf32>,
    %c12 = arith.constant 12 : index
    %c0_9 = arith.constant 0 : index
    %36 = vector.load %arg9[%c12, %c0_9] : memref<36x256xf32, #tpu.memory_space<vmem>>, vector<4x256xf32>
    tpu.vector_store %arg9[%c12, %c0_9], %23 {strides = array<i32>} : memref<36x256xf32, #tpu.memory_space<vmem>>, vector<4x256xf32>,
    %c24 = arith.constant 24 : index
    %c0_10 = arith.constant 0 : index
    %37 = vector.load %arg9[%c24, %c0_10] : memref<36x256xf32, #tpu.memory_space<vmem>>, vector<4x256xf32>
    tpu.vector_store %arg9[%c24, %c0_10], %34 {strides = array<i32>} : memref<36x256xf32, #tpu.memory_space<vmem>>, vector<4x256xf32>,
    %c240_i32_11 = arith.constant 240 : i32
    %38 = tpu.dynamic_rotate %1 by %c240_i32_11 dim 1 : vector<4x256xf32>, i32 -> vector<4x256xf32>
    %c16_i32_12 = arith.constant 16 : i32
    %39 = tpu.dynamic_rotate %1 by %c16_i32_12 dim 1 : vector<4x256xf32>, i32 -> vector<4x256xf32>
    %40 = vector.shape_cast %14 : vector<1x256xi1> to vector<1x256xi1>
    %41 = vector.broadcast %40 : vector<1x256xi1> to vector<4x256xi1>
    %42 = arith.select %41, %38, %39 : vector<4x256xi1>, vector<4x256xf32>
    %43 = vector.shape_cast %18 : vector<1x256xi1> to vector<1x256xi1>
    %44 = vector.broadcast %43 : vector<1x256xi1> to vector<4x256xi1>
    %45 = arith.select %44, %39, %38 : vector<4x256xi1>, vector<4x256xf32>
    %c4 = arith.constant 4 : index
    %c0_13 = arith.constant 0 : index
    %46 = vector.load %arg9[%c4, %c0_13] : memref<36x256xf32, #tpu.memory_space<vmem>>, vector<4x256xf32>
    tpu.vector_store %arg9[%c4, %c0_13], %42 {strides = array<i32>} : memref<36x256xf32, #tpu.memory_space<vmem>>, vector<4x256xf32>,
    %c16 = arith.constant 16 : index
    %c0_14 = arith.constant 0 : index
    %47 = vector.load %arg9[%c16, %c0_14] : memref<36x256xf32, #tpu.memory_space<vmem>>, vector<4x256xf32>
    tpu.vector_store %arg9[%c16, %c0_14], %1 {strides = array<i32>} : memref<36x256xf32, #tpu.memory_space<vmem>>, vector<4x256xf32>,
    %c28 = arith.constant 28 : index
    %c0_15 = arith.constant 0 : index
    %48 = vector.load %arg9[%c28, %c0_15] : memref<36x256xf32, #tpu.memory_space<vmem>>, vector<4x256xf32>
    tpu.vector_store %arg9[%c28, %c0_15], %45 {strides = array<i32>} : memref<36x256xf32, #tpu.memory_space<vmem>>, vector<4x256xf32>,
    %c240_i32_16 = arith.constant 240 : i32
    %49 = tpu.dynamic_rotate %26 by %c240_i32_16 dim 1 : vector<4x256xf32>, i32 -> vector<4x256xf32>
    %c16_i32_17 = arith.constant 16 : i32
    %50 = tpu.dynamic_rotate %26 by %c16_i32_17 dim 1 : vector<4x256xf32>, i32 -> vector<4x256xf32>
    %51 = vector.shape_cast %14 : vector<1x256xi1> to vector<1x256xi1>
    %52 = vector.broadcast %51 : vector<1x256xi1> to vector<4x256xi1>
    %53 = arith.select %52, %49, %50 : vector<4x256xi1>, vector<4x256xf32>
    %54 = vector.shape_cast %18 : vector<1x256xi1> to vector<1x256xi1>
    %55 = vector.broadcast %54 : vector<1x256xi1> to vector<4x256xi1>
    %56 = arith.select %55, %50, %49 : vector<4x256xi1>, vector<4x256xf32>
    %c8 = arith.constant 8 : index
    %c0_18 = arith.constant 0 : index
    %57 = vector.load %arg9[%c8, %c0_18] : memref<36x256xf32, #tpu.memory_space<vmem>>, vector<4x256xf32>
    tpu.vector_store %arg9[%c8, %c0_18], %53 {strides = array<i32>} : memref<36x256xf32, #tpu.memory_space<vmem>>, vector<4x256xf32>,
    %c20 = arith.constant 20 : index
    %c0_19 = arith.constant 0 : index
    %58 = vector.load %arg9[%c20, %c0_19] : memref<36x256xf32, #tpu.memory_space<vmem>>, vector<4x256xf32>
    tpu.vector_store %arg9[%c20, %c0_19], %26 {strides = array<i32>} : memref<36x256xf32, #tpu.memory_space<vmem>>, vector<4x256xf32>,
    %c32 = arith.constant 32 : index
    %c0_20 = arith.constant 0 : index
    %59 = vector.load %arg9[%c32, %c0_20] : memref<36x256xf32, #tpu.memory_space<vmem>>, vector<4x256xf32>
    tpu.vector_store %arg9[%c32, %c0_20], %56 {strides = array<i32>} : memref<36x256xf32, #tpu.memory_space<vmem>>, vector<4x256xf32>,
    %c0_21 = arith.constant 0 : index
    %c0_22 = arith.constant 0 : index
    %60 = vector.load %arg5[%c0_21, %c0_22] : memref<8x36xf32, #tpu.memory_space<vmem>>, vector<8x36xf32>
    %c0_23 = arith.constant 0 : index
    %c0_24 = arith.constant 0 : index
    %61 = vector.load %arg9[%c0_23, %c0_24] : memref<36x256xf32, #tpu.memory_space<vmem>>, vector<36x256xf32>
    %cst = arith.constant dense<0.000000e+00> : vector<8x256xf32>
    %62 = tpu.matmul %60, %61, %cst {dimension_numbers = #tpu.dot_dimension_numbers<[1], [0], [0], [1], [0, 0, 1, 1], [], []>} : vector<8x36xf32>, vector<36x256xf32>, vector<8x256xf32> -> vector<8x256xf32>
    %c0_25 = arith.constant 0 : index
    %c0_26 = arith.constant 0 : index
    %63 = vector.load %arg6[%c0_25, %c0_26] : memref<8x2xf32, #tpu.memory_space<vmem>>, vector<8x2xf32>
    %c0_27 = arith.constant 0 : index
    %c0_28 = arith.constant 0 : index
    %64 = vector.load %arg2[%c0_27, %c0_28] : memref<2x256xf32, #tpu.memory_space<vmem>>, vector<2x256xf32>
    %c0_29 = arith.constant 0 : index
    %c0_30 = arith.constant 0 : index
    %65 = vector.load %arg3[%c0_29, %c0_30] : memref<2x256xf32, #tpu.memory_space<vmem>>, vector<2x256xf32>
    %66 = arith.addf %64, %65 : vector<2x256xf32>
    %cst_31 = arith.constant dense<0.000000e+00> : vector<8x256xf32>
    %67 = tpu.matmul %63, %66, %cst_31 {dimension_numbers = #tpu.dot_dimension_numbers<[1], [0], [0], [1], [0, 0, 1, 1], [], []>} : vector<8x2xf32>, vector<2x256xf32>, vector<8x256xf32> -> vector<8x256xf32>
    %68 = arith.addf %62, %67 : vector<8x256xf32>
    %c0_32 = arith.constant 0 : index
    %c0_33 = arith.constant 0 : index
    %69 = vector.load %arg7[%c0_32, %c0_33] : memref<8x1xf32, #tpu.memory_space<vmem>>, vector<8x1xf32>
    %70 = vector.broadcast %69 : vector<8x1xf32> to vector<8x256xf32>
    %71 = arith.addf %68, %70 : vector<8x256xf32>
    %cst_34 = arith.constant 0.000000e+00 : f32
    %72 = vector.broadcast %cst_34 : f32 to vector<8x256xf32>
    %73 = arith.maximumf %71, %72 : vector<8x256xf32>
    %74 = arith.truncf %73 : vector<8x256xf32> to vector<8x256xbf16>
    %c0_35 = arith.constant 0 : index
    %c0_36 = arith.constant 0 : index
    %75 = vector.load %arg8[%c0_35, %c0_36] : memref<8x256xbf16, #tpu.memory_space<vmem>>, vector<8x256xbf16>
    tpu.vector_store %arg8[%c0_35, %c0_36], %74 {strides = array<i32>} : memref<8x256xbf16, #tpu.memory_space<vmem>>, vector<8x256xbf16>,
    return
  }
  func.func @transform_0(%arg0: i32) -> (i32, i32) {
    %c0_i32 = arith.constant 0 : i32
    %c0_i32_0 = arith.constant 0 : i32
    return %c0_i32, %arg0 : i32, i32
  }
  func.func @transform_1(%arg0: i32) -> (i32, i32) {
    %c0_i32 = arith.constant 0 : i32
    %c0_i32_0 = arith.constant 0 : i32
    return %c0_i32, %arg0 : i32, i32
  }
  func.func @transform_2(%arg0: i32) -> (i32, i32) {
    %c0_i32 = arith.constant 0 : i32
    %c0_i32_0 = arith.constant 0 : i32
    return %c0_i32, %arg0 : i32, i32
  }
  func.func @transform_3(%arg0: i32) -> (i32, i32) {
    %c0_i32 = arith.constant 0 : i32
    %c0_i32_0 = arith.constant 0 : i32
    %c0_i32_1 = arith.constant 0 : i32
    return %c0_i32, %c0_i32_0 : i32, i32
  }
  func.func @transform_4(%arg0: i32) -> (i32, i32) {
    %c0_i32 = arith.constant 0 : i32
    %c0_i32_0 = arith.constant 0 : i32
    %c0_i32_1 = arith.constant 0 : i32
    return %c0_i32, %c0_i32_0 : i32, i32
  }
  func.func @transform_5(%arg0: i32) -> (i32, i32) {
    %c0_i32 = arith.constant 0 : i32
    %c0_i32_0 = arith.constant 0 : i32
    %c0_i32_1 = arith.constant 0 : i32
    return %c0_i32, %c0_i32_0 : i32, i32
  }
  func.func @transform_6(%arg0: i32) -> (i32, i32) {
    %c0_i32 = arith.constant 0 : i32
    %c0_i32_0 = arith.constant 0 : i32
    %c0_i32_1 = arith.constant 0 : i32
    return %c0_i32, %c0_i32_0 : i32, i32
  }
  func.func @transform_7(%arg0: i32) -> (i32, i32) {
    %c0_i32 = arith.constant 0 : i32
    %c0_i32_0 = arith.constant 0 : i32
    return %c0_i32, %arg0 : i32, i32
  }
}

module attributes {stable_mosaic.version = 11 : i64} {
  func.func @_in_local_kernel(%arg0: i32, %arg1: memref<8x256xbf16, #tpu.memory_space<vmem>>, %arg2: memref<8x256xbf16, #tpu.memory_space<vmem>>, %arg3: memref<1x256xi32, #tpu.memory_space<vmem>>, %arg4: memref<4x8xbf16, #tpu.memory_space<vmem>>, %arg5: memref<4x1xf32, #tpu.memory_space<vmem>>, %arg6: memref<4x8xbf16, #tpu.memory_space<vmem>>, %arg7: memref<4x1xf32, #tpu.memory_space<vmem>>, %arg8: memref<2x4xf32, #tpu.memory_space<vmem>>, %arg9: memref<2x1xf32, #tpu.memory_space<vmem>>, %arg10: memref<8x72xf32, #tpu.memory_space<vmem>>, %arg11: memref<8x1xf32, #tpu.memory_space<vmem>>, %arg12: memref<8x256xbf16, #tpu.memory_space<vmem>>, %arg13: memref<8x256xbf16, #tpu.memory_space<vmem>>, %arg14: memref<4x256xbf16, #tpu.memory_space<vmem>>, %arg15: memref<2x256xf32, #tpu.memory_space<vmem>>, %arg16: memref<72x256xf32, #tpu.memory_space<vmem>>) attributes {dimension_semantics = [#tpu.dimension_semantics<parallel>], iteration_bounds = array<i64: 2>, scalar_prefetch = 0 : i64, scratch_operands = 1 : i64, tpu.core_type = #tpu.core_type<tc>, window_params = [{transform_indices = @transform_0, window_bounds = array<i64: 8, 256>}, {transform_indices = @transform_1, window_bounds = array<i64: 8, 256>}, {pipeline_mode = #tpu.pipeline_mode<synchronous>, transform_indices = @transform_2, window_bounds = array<i64: 1, 256>}, {pipeline_mode = #tpu.pipeline_mode<synchronous>, transform_indices = @transform_3, window_bounds = array<i64: 4, 8>}, {pipeline_mode = #tpu.pipeline_mode<synchronous>, transform_indices = @transform_4, window_bounds = array<i64: 4, 1>}, {pipeline_mode = #tpu.pipeline_mode<synchronous>, transform_indices = @transform_5, window_bounds = array<i64: 4, 8>}, {pipeline_mode = #tpu.pipeline_mode<synchronous>, transform_indices = @transform_6, window_bounds = array<i64: 4, 1>}, {pipeline_mode = #tpu.pipeline_mode<synchronous>, transform_indices = @transform_7, window_bounds = array<i64: 2, 4>}, {pipeline_mode = #tpu.pipeline_mode<synchronous>, transform_indices = @transform_8, window_bounds = array<i64: 2, 1>}, {pipeline_mode = #tpu.pipeline_mode<synchronous>, transform_indices = @transform_9, window_bounds = array<i64: 8, 72>}, {pipeline_mode = #tpu.pipeline_mode<synchronous>, transform_indices = @transform_10, window_bounds = array<i64: 8, 1>}, {transform_indices = @transform_11, window_bounds = array<i64: 8, 256>}, {transform_indices = @transform_12, window_bounds = array<i64: 8, 256>}, {transform_indices = @transform_13, window_bounds = array<i64: 4, 256>}, {transform_indices = @transform_14, window_bounds = array<i64: 2, 256>}]} {
    %c0 = arith.constant 0 : index
    %c0_0 = arith.constant 0 : index
    %0 = vector.load %arg4[%c0, %c0_0] : memref<4x8xbf16, #tpu.memory_space<vmem>>, vector<4x8xbf16>
    %c0_1 = arith.constant 0 : index
    %c0_2 = arith.constant 0 : index
    %1 = vector.load %arg1[%c0_1, %c0_2] : memref<8x256xbf16, #tpu.memory_space<vmem>>, vector<8x256xbf16>
    %cst = arith.constant dense<0.000000e+00> : vector<4x256xf32>
    %2 = tpu.matmul %0, %1, %cst {dimension_numbers = #tpu.dot_dimension_numbers<[1], [0], [0], [1], [0, 0, 1, 1], [], []>} : vector<4x8xbf16>, vector<8x256xbf16>, vector<4x256xf32> -> vector<4x256xf32>
    %c0_3 = arith.constant 0 : index
    %c0_4 = arith.constant 0 : index
    %3 = vector.load %arg5[%c0_3, %c0_4] : memref<4x1xf32, #tpu.memory_space<vmem>>, vector<4x1xf32>
    %4 = vector.broadcast %3 : vector<4x1xf32> to vector<4x256xf32>
    %5 = arith.addf %2, %4 : vector<4x256xf32>
    %cst_5 = arith.constant 0.000000e+00 : f32
    %6 = vector.broadcast %cst_5 : f32 to vector<4x256xf32>
    %7 = arith.maximumf %5, %6 : vector<4x256xf32>
    %c0_6 = arith.constant 0 : index
    %c0_7 = arith.constant 0 : index
    %8 = vector.load %arg6[%c0_6, %c0_7] : memref<4x8xbf16, #tpu.memory_space<vmem>>, vector<4x8xbf16>
    %c0_8 = arith.constant 0 : index
    %c0_9 = arith.constant 0 : index
    %9 = vector.load %arg2[%c0_8, %c0_9] : memref<8x256xbf16, #tpu.memory_space<vmem>>, vector<8x256xbf16>
    %cst_10 = arith.constant dense<0.000000e+00> : vector<4x256xf32>
    %10 = tpu.matmul %8, %9, %cst_10 {dimension_numbers = #tpu.dot_dimension_numbers<[1], [0], [0], [1], [0, 0, 1, 1], [], []>} : vector<4x8xbf16>, vector<8x256xbf16>, vector<4x256xf32> -> vector<4x256xf32>
    %c0_11 = arith.constant 0 : index
    %c0_12 = arith.constant 0 : index
    %11 = vector.load %arg7[%c0_11, %c0_12] : memref<4x1xf32, #tpu.memory_space<vmem>>, vector<4x1xf32>
    %12 = vector.broadcast %11 : vector<4x1xf32> to vector<4x256xf32>
    %13 = arith.addf %10, %12 : vector<4x256xf32>
    %cst_13 = arith.constant 0.000000e+00 : f32
    %14 = vector.broadcast %cst_13 : f32 to vector<4x256xf32>
    %15 = arith.maximumf %13, %14 : vector<4x256xf32>
    %c0_14 = arith.constant 0 : index
    %c0_15 = arith.constant 0 : index
    %16 = vector.load %arg8[%c0_14, %c0_15] : memref<2x4xf32, #tpu.memory_space<vmem>>, vector<2x4xf32>
    %cst_16 = arith.constant dense<0.000000e+00> : vector<2x256xf32>
    %17 = tpu.matmul %16, %15, %cst_16 {dimension_numbers = #tpu.dot_dimension_numbers<[1], [0], [0], [1], [0, 0, 1, 1], [], []>} : vector<2x4xf32>, vector<4x256xf32>, vector<2x256xf32> -> vector<2x256xf32>
    %c0_17 = arith.constant 0 : index
    %c0_18 = arith.constant 0 : index
    %18 = vector.load %arg9[%c0_17, %c0_18] : memref<2x1xf32, #tpu.memory_space<vmem>>, vector<2x1xf32>
    %19 = vector.broadcast %18 : vector<2x1xf32> to vector<2x256xf32>
    %20 = arith.addf %17, %19 : vector<2x256xf32>
    %cst_19 = arith.constant 0.000000e+00 : f32
    %21 = vector.broadcast %cst_19 : f32 to vector<2x256xf32>
    %22 = arith.maximumf %20, %21 : vector<2x256xf32>
    %c0_20 = arith.constant 0 : index
    %c0_21 = arith.constant 0 : index
    %23 = vector.load %arg3[%c0_20, %c0_21] : memref<1x256xi32, #tpu.memory_space<vmem>>, vector<1x256xi32>
    %c1_i32 = arith.constant 1 : i32
    %24 = vector.broadcast %c1_i32 : i32 to vector<1x256xi32>
    %25 = arith.andi %23, %24 : vector<1x256xi32>
    %c0_i32 = arith.constant 0 : i32
    %26 = vector.broadcast %c0_i32 : i32 to vector<1x256xi32>
    %27 = arith.cmpi ne, %25, %26 : vector<1x256xi32>
    %c2_i32 = arith.constant 2 : i32
    %28 = vector.broadcast %c2_i32 : i32 to vector<1x256xi32>
    %29 = arith.andi %23, %28 : vector<1x256xi32>
    %c0_i32_22 = arith.constant 0 : i32
    %30 = vector.broadcast %c0_i32_22 : i32 to vector<1x256xi32>
    %31 = arith.cmpi ne, %29, %30 : vector<1x256xi32>
    %c4_i32 = arith.constant 4 : i32
    %32 = vector.broadcast %c4_i32 : i32 to vector<1x256xi32>
    %33 = arith.andi %23, %32 : vector<1x256xi32>
    %c0_i32_23 = arith.constant 0 : i32
    %34 = vector.broadcast %c0_i32_23 : i32 to vector<1x256xi32>
    %35 = arith.cmpi ne, %33, %34 : vector<1x256xi32>
    %c8_i32 = arith.constant 8 : i32
    %36 = vector.broadcast %c8_i32 : i32 to vector<1x256xi32>
    %37 = arith.andi %23, %36 : vector<1x256xi32>
    %c0_i32_24 = arith.constant 0 : i32
    %38 = vector.broadcast %c0_i32_24 : i32 to vector<1x256xi32>
    %39 = arith.cmpi ne, %37, %38 : vector<1x256xi32>
    %c255_i32 = arith.constant 255 : i32
    %40 = tpu.dynamic_rotate %7 by %c255_i32 dim 1 : vector<4x256xf32>, i32 -> vector<4x256xf32>
    %c1_i32_25 = arith.constant 1 : i32
    %41 = tpu.dynamic_rotate %7 by %c1_i32_25 dim 1 : vector<4x256xf32>, i32 -> vector<4x256xf32>
    %42 = vector.shape_cast %27 : vector<1x256xi1> to vector<1x256xi1>
    %43 = vector.broadcast %42 : vector<1x256xi1> to vector<4x256xi1>
    %44 = arith.select %43, %40, %41 : vector<4x256xi1>, vector<4x256xf32>
    %45 = vector.shape_cast %31 : vector<1x256xi1> to vector<1x256xi1>
    %46 = vector.broadcast %45 : vector<1x256xi1> to vector<4x256xi1>
    %47 = arith.select %46, %41, %40 : vector<4x256xi1>, vector<4x256xf32>
    %c240_i32 = arith.constant 240 : i32
    %48 = tpu.dynamic_rotate %44 by %c240_i32 dim 1 : vector<4x256xf32>, i32 -> vector<4x256xf32>
    %c16_i32 = arith.constant 16 : i32
    %49 = tpu.dynamic_rotate %44 by %c16_i32 dim 1 : vector<4x256xf32>, i32 -> vector<4x256xf32>
    %50 = vector.shape_cast %35 : vector<1x256xi1> to vector<1x256xi1>
    %51 = vector.broadcast %50 : vector<1x256xi1> to vector<4x256xi1>
    %52 = arith.select %51, %48, %49 : vector<4x256xi1>, vector<4x256xf32>
    %53 = vector.shape_cast %39 : vector<1x256xi1> to vector<1x256xi1>
    %54 = vector.broadcast %53 : vector<1x256xi1> to vector<4x256xi1>
    %55 = arith.select %54, %49, %48 : vector<4x256xi1>, vector<4x256xf32>
    %c0_26 = arith.constant 0 : index
    %c0_27 = arith.constant 0 : index
    %56 = vector.load %arg16[%c0_26, %c0_27] : memref<72x256xf32, #tpu.memory_space<vmem>>, vector<4x256xf32>
    tpu.vector_store %arg16[%c0_26, %c0_27], %52 {strides = array<i32>} : memref<72x256xf32, #tpu.memory_space<vmem>>, vector<4x256xf32>,
    %c12 = arith.constant 12 : index
    %c0_28 = arith.constant 0 : index
    %57 = vector.load %arg16[%c12, %c0_28] : memref<72x256xf32, #tpu.memory_space<vmem>>, vector<4x256xf32>
    tpu.vector_store %arg16[%c12, %c0_28], %44 {strides = array<i32>} : memref<72x256xf32, #tpu.memory_space<vmem>>, vector<4x256xf32>,
    %c24 = arith.constant 24 : index
    %c0_29 = arith.constant 0 : index
    %58 = vector.load %arg16[%c24, %c0_29] : memref<72x256xf32, #tpu.memory_space<vmem>>, vector<4x256xf32>
    tpu.vector_store %arg16[%c24, %c0_29], %55 {strides = array<i32>} : memref<72x256xf32, #tpu.memory_space<vmem>>, vector<4x256xf32>,
    %c240_i32_30 = arith.constant 240 : i32
    %59 = tpu.dynamic_rotate %7 by %c240_i32_30 dim 1 : vector<4x256xf32>, i32 -> vector<4x256xf32>
    %c16_i32_31 = arith.constant 16 : i32
    %60 = tpu.dynamic_rotate %7 by %c16_i32_31 dim 1 : vector<4x256xf32>, i32 -> vector<4x256xf32>
    %61 = vector.shape_cast %35 : vector<1x256xi1> to vector<1x256xi1>
    %62 = vector.broadcast %61 : vector<1x256xi1> to vector<4x256xi1>
    %63 = arith.select %62, %59, %60 : vector<4x256xi1>, vector<4x256xf32>
    %64 = vector.shape_cast %39 : vector<1x256xi1> to vector<1x256xi1>
    %65 = vector.broadcast %64 : vector<1x256xi1> to vector<4x256xi1>
    %66 = arith.select %65, %60, %59 : vector<4x256xi1>, vector<4x256xf32>
    %c4 = arith.constant 4 : index
    %c0_32 = arith.constant 0 : index
    %67 = vector.load %arg16[%c4, %c0_32] : memref<72x256xf32, #tpu.memory_space<vmem>>, vector<4x256xf32>
    tpu.vector_store %arg16[%c4, %c0_32], %63 {strides = array<i32>} : memref<72x256xf32, #tpu.memory_space<vmem>>, vector<4x256xf32>,
    %c16 = arith.constant 16 : index
    %c0_33 = arith.constant 0 : index
    %68 = vector.load %arg16[%c16, %c0_33] : memref<72x256xf32, #tpu.memory_space<vmem>>, vector<4x256xf32>
    tpu.vector_store %arg16[%c16, %c0_33], %7 {strides = array<i32>} : memref<72x256xf32, #tpu.memory_space<vmem>>, vector<4x256xf32>,
    %c28 = arith.constant 28 : index
    %c0_34 = arith.constant 0 : index
    %69 = vector.load %arg16[%c28, %c0_34] : memref<72x256xf32, #tpu.memory_space<vmem>>, vector<4x256xf32>
    tpu.vector_store %arg16[%c28, %c0_34], %66 {strides = array<i32>} : memref<72x256xf32, #tpu.memory_space<vmem>>, vector<4x256xf32>,
    %c240_i32_35 = arith.constant 240 : i32
    %70 = tpu.dynamic_rotate %47 by %c240_i32_35 dim 1 : vector<4x256xf32>, i32 -> vector<4x256xf32>
    %c16_i32_36 = arith.constant 16 : i32
    %71 = tpu.dynamic_rotate %47 by %c16_i32_36 dim 1 : vector<4x256xf32>, i32 -> vector<4x256xf32>
    %72 = vector.shape_cast %35 : vector<1x256xi1> to vector<1x256xi1>
    %73 = vector.broadcast %72 : vector<1x256xi1> to vector<4x256xi1>
    %74 = arith.select %73, %70, %71 : vector<4x256xi1>, vector<4x256xf32>
    %75 = vector.shape_cast %39 : vector<1x256xi1> to vector<1x256xi1>
    %76 = vector.broadcast %75 : vector<1x256xi1> to vector<4x256xi1>
    %77 = arith.select %76, %71, %70 : vector<4x256xi1>, vector<4x256xf32>
    %c8 = arith.constant 8 : index
    %c0_37 = arith.constant 0 : index
    %78 = vector.load %arg16[%c8, %c0_37] : memref<72x256xf32, #tpu.memory_space<vmem>>, vector<4x256xf32>
    tpu.vector_store %arg16[%c8, %c0_37], %74 {strides = array<i32>} : memref<72x256xf32, #tpu.memory_space<vmem>>, vector<4x256xf32>,
    %c20 = arith.constant 20 : index
    %c0_38 = arith.constant 0 : index
    %79 = vector.load %arg16[%c20, %c0_38] : memref<72x256xf32, #tpu.memory_space<vmem>>, vector<4x256xf32>
    tpu.vector_store %arg16[%c20, %c0_38], %47 {strides = array<i32>} : memref<72x256xf32, #tpu.memory_space<vmem>>, vector<4x256xf32>,
    %c32 = arith.constant 32 : index
    %c0_39 = arith.constant 0 : index
    %80 = vector.load %arg16[%c32, %c0_39] : memref<72x256xf32, #tpu.memory_space<vmem>>, vector<4x256xf32>
    tpu.vector_store %arg16[%c32, %c0_39], %77 {strides = array<i32>} : memref<72x256xf32, #tpu.memory_space<vmem>>, vector<4x256xf32>,
    %c255_i32_40 = arith.constant 255 : i32
    %81 = tpu.dynamic_rotate %15 by %c255_i32_40 dim 1 : vector<4x256xf32>, i32 -> vector<4x256xf32>
    %c1_i32_41 = arith.constant 1 : i32
    %82 = tpu.dynamic_rotate %15 by %c1_i32_41 dim 1 : vector<4x256xf32>, i32 -> vector<4x256xf32>
    %83 = vector.shape_cast %27 : vector<1x256xi1> to vector<1x256xi1>
    %84 = vector.broadcast %83 : vector<1x256xi1> to vector<4x256xi1>
    %85 = arith.select %84, %81, %82 : vector<4x256xi1>, vector<4x256xf32>
    %86 = vector.shape_cast %31 : vector<1x256xi1> to vector<1x256xi1>
    %87 = vector.broadcast %86 : vector<1x256xi1> to vector<4x256xi1>
    %88 = arith.select %87, %82, %81 : vector<4x256xi1>, vector<4x256xf32>
    %c240_i32_42 = arith.constant 240 : i32
    %89 = tpu.dynamic_rotate %85 by %c240_i32_42 dim 1 : vector<4x256xf32>, i32 -> vector<4x256xf32>
    %c16_i32_43 = arith.constant 16 : i32
    %90 = tpu.dynamic_rotate %85 by %c16_i32_43 dim 1 : vector<4x256xf32>, i32 -> vector<4x256xf32>
    %91 = vector.shape_cast %35 : vector<1x256xi1> to vector<1x256xi1>
    %92 = vector.broadcast %91 : vector<1x256xi1> to vector<4x256xi1>
    %93 = arith.select %92, %89, %90 : vector<4x256xi1>, vector<4x256xf32>
    %94 = vector.shape_cast %39 : vector<1x256xi1> to vector<1x256xi1>
    %95 = vector.broadcast %94 : vector<1x256xi1> to vector<4x256xi1>
    %96 = arith.select %95, %90, %89 : vector<4x256xi1>, vector<4x256xf32>
    %c36 = arith.constant 36 : index
    %c0_44 = arith.constant 0 : index
    %97 = vector.load %arg16[%c36, %c0_44] : memref<72x256xf32, #tpu.memory_space<vmem>>, vector<4x256xf32>
    tpu.vector_store %arg16[%c36, %c0_44], %93 {strides = array<i32>} : memref<72x256xf32, #tpu.memory_space<vmem>>, vector<4x256xf32>,
    %c48 = arith.constant 48 : index
    %c0_45 = arith.constant 0 : index
    %98 = vector.load %arg16[%c48, %c0_45] : memref<72x256xf32, #tpu.memory_space<vmem>>, vector<4x256xf32>
    tpu.vector_store %arg16[%c48, %c0_45], %85 {strides = array<i32>} : memref<72x256xf32, #tpu.memory_space<vmem>>, vector<4x256xf32>,
    %c60 = arith.constant 60 : index
    %c0_46 = arith.constant 0 : index
    %99 = vector.load %arg16[%c60, %c0_46] : memref<72x256xf32, #tpu.memory_space<vmem>>, vector<4x256xf32>
    tpu.vector_store %arg16[%c60, %c0_46], %96 {strides = array<i32>} : memref<72x256xf32, #tpu.memory_space<vmem>>, vector<4x256xf32>,
    %c240_i32_47 = arith.constant 240 : i32
    %100 = tpu.dynamic_rotate %15 by %c240_i32_47 dim 1 : vector<4x256xf32>, i32 -> vector<4x256xf32>
    %c16_i32_48 = arith.constant 16 : i32
    %101 = tpu.dynamic_rotate %15 by %c16_i32_48 dim 1 : vector<4x256xf32>, i32 -> vector<4x256xf32>
    %102 = vector.shape_cast %35 : vector<1x256xi1> to vector<1x256xi1>
    %103 = vector.broadcast %102 : vector<1x256xi1> to vector<4x256xi1>
    %104 = arith.select %103, %100, %101 : vector<4x256xi1>, vector<4x256xf32>
    %105 = vector.shape_cast %39 : vector<1x256xi1> to vector<1x256xi1>
    %106 = vector.broadcast %105 : vector<1x256xi1> to vector<4x256xi1>
    %107 = arith.select %106, %101, %100 : vector<4x256xi1>, vector<4x256xf32>
    %c40 = arith.constant 40 : index
    %c0_49 = arith.constant 0 : index
    %108 = vector.load %arg16[%c40, %c0_49] : memref<72x256xf32, #tpu.memory_space<vmem>>, vector<4x256xf32>
    tpu.vector_store %arg16[%c40, %c0_49], %104 {strides = array<i32>} : memref<72x256xf32, #tpu.memory_space<vmem>>, vector<4x256xf32>,
    %c52 = arith.constant 52 : index
    %c0_50 = arith.constant 0 : index
    %109 = vector.load %arg16[%c52, %c0_50] : memref<72x256xf32, #tpu.memory_space<vmem>>, vector<4x256xf32>
    tpu.vector_store %arg16[%c52, %c0_50], %15 {strides = array<i32>} : memref<72x256xf32, #tpu.memory_space<vmem>>, vector<4x256xf32>,
    %c64 = arith.constant 64 : index
    %c0_51 = arith.constant 0 : index
    %110 = vector.load %arg16[%c64, %c0_51] : memref<72x256xf32, #tpu.memory_space<vmem>>, vector<4x256xf32>
    tpu.vector_store %arg16[%c64, %c0_51], %107 {strides = array<i32>} : memref<72x256xf32, #tpu.memory_space<vmem>>, vector<4x256xf32>,
    %c240_i32_52 = arith.constant 240 : i32
    %111 = tpu.dynamic_rotate %88 by %c240_i32_52 dim 1 : vector<4x256xf32>, i32 -> vector<4x256xf32>
    %c16_i32_53 = arith.constant 16 : i32
    %112 = tpu.dynamic_rotate %88 by %c16_i32_53 dim 1 : vector<4x256xf32>, i32 -> vector<4x256xf32>
    %113 = vector.shape_cast %35 : vector<1x256xi1> to vector<1x256xi1>
    %114 = vector.broadcast %113 : vector<1x256xi1> to vector<4x256xi1>
    %115 = arith.select %114, %111, %112 : vector<4x256xi1>, vector<4x256xf32>
    %116 = vector.shape_cast %39 : vector<1x256xi1> to vector<1x256xi1>
    %117 = vector.broadcast %116 : vector<1x256xi1> to vector<4x256xi1>
    %118 = arith.select %117, %112, %111 : vector<4x256xi1>, vector<4x256xf32>
    %c44 = arith.constant 44 : index
    %c0_54 = arith.constant 0 : index
    %119 = vector.load %arg16[%c44, %c0_54] : memref<72x256xf32, #tpu.memory_space<vmem>>, vector<4x256xf32>
    tpu.vector_store %arg16[%c44, %c0_54], %115 {strides = array<i32>} : memref<72x256xf32, #tpu.memory_space<vmem>>, vector<4x256xf32>,
    %c56 = arith.constant 56 : index
    %c0_55 = arith.constant 0 : index
    %120 = vector.load %arg16[%c56, %c0_55] : memref<72x256xf32, #tpu.memory_space<vmem>>, vector<4x256xf32>
    tpu.vector_store %arg16[%c56, %c0_55], %88 {strides = array<i32>} : memref<72x256xf32, #tpu.memory_space<vmem>>, vector<4x256xf32>,
    %c68 = arith.constant 68 : index
    %c0_56 = arith.constant 0 : index
    %121 = vector.load %arg16[%c68, %c0_56] : memref<72x256xf32, #tpu.memory_space<vmem>>, vector<4x256xf32>
    tpu.vector_store %arg16[%c68, %c0_56], %118 {strides = array<i32>} : memref<72x256xf32, #tpu.memory_space<vmem>>, vector<4x256xf32>,
    %c0_57 = arith.constant 0 : index
    %c0_58 = arith.constant 0 : index
    %122 = vector.load %arg10[%c0_57, %c0_58] : memref<8x72xf32, #tpu.memory_space<vmem>>, vector<8x72xf32>
    %c0_59 = arith.constant 0 : index
    %c0_60 = arith.constant 0 : index
    %123 = vector.load %arg16[%c0_59, %c0_60] : memref<72x256xf32, #tpu.memory_space<vmem>>, vector<72x256xf32>
    %cst_61 = arith.constant dense<0.000000e+00> : vector<8x256xf32>
    %124 = tpu.matmul %122, %123, %cst_61 {dimension_numbers = #tpu.dot_dimension_numbers<[1], [0], [0], [1], [0, 0, 1, 1], [], []>} : vector<8x72xf32>, vector<72x256xf32>, vector<8x256xf32> -> vector<8x256xf32>
    %c0_62 = arith.constant 0 : index
    %c0_63 = arith.constant 0 : index
    %125 = vector.load %arg11[%c0_62, %c0_63] : memref<8x1xf32, #tpu.memory_space<vmem>>, vector<8x1xf32>
    %126 = vector.broadcast %125 : vector<8x1xf32> to vector<8x256xf32>
    %127 = arith.addf %124, %126 : vector<8x256xf32>
    %c0_64 = arith.constant 0 : index
    %c0_65 = arith.constant 0 : index
    %128 = vector.load %arg12[%c0_64, %c0_65] : memref<8x256xbf16, #tpu.memory_space<vmem>>, vector<8x256xbf16>
    %129 = arith.extf %128 : vector<8x256xbf16> to vector<8x256xf32>
    %130 = arith.addf %127, %129 : vector<8x256xf32>
    %131 = arith.truncf %130 : vector<8x256xf32> to vector<8x256xbf16>
    %c0_66 = arith.constant 0 : index
    %c0_67 = arith.constant 0 : index
    %132 = vector.load %arg13[%c0_66, %c0_67] : memref<8x256xbf16, #tpu.memory_space<vmem>>, vector<8x256xbf16>
    tpu.vector_store %arg13[%c0_66, %c0_67], %131 {strides = array<i32>} : memref<8x256xbf16, #tpu.memory_space<vmem>>, vector<8x256xbf16>,
    %133 = arith.truncf %7 : vector<4x256xf32> to vector<4x256xbf16>
    %c0_68 = arith.constant 0 : index
    %c0_69 = arith.constant 0 : index
    %134 = vector.load %arg14[%c0_68, %c0_69] : memref<4x256xbf16, #tpu.memory_space<vmem>>, vector<4x256xbf16>
    tpu.vector_store %arg14[%c0_68, %c0_69], %133 {strides = array<i32>} : memref<4x256xbf16, #tpu.memory_space<vmem>>, vector<4x256xbf16>,
    %c0_70 = arith.constant 0 : index
    %c0_71 = arith.constant 0 : index
    %135 = vector.load %arg15[%c0_70, %c0_71] : memref<2x256xf32, #tpu.memory_space<vmem>>, vector<2x256xf32>
    tpu.vector_store %arg15[%c0_70, %c0_71], %22 {strides = array<i32>} : memref<2x256xf32, #tpu.memory_space<vmem>>, vector<2x256xf32>,
    return
  }
  func.func @transform_0(%arg0: i32) -> (i32, i32) {
    %c0_i32 = arith.constant 0 : i32
    %c0_i32_0 = arith.constant 0 : i32
    return %c0_i32, %arg0 : i32, i32
  }
  func.func @transform_1(%arg0: i32) -> (i32, i32) {
    %c0_i32 = arith.constant 0 : i32
    %c0_i32_0 = arith.constant 0 : i32
    return %c0_i32, %arg0 : i32, i32
  }
  func.func @transform_2(%arg0: i32) -> (i32, i32) {
    %c0_i32 = arith.constant 0 : i32
    %c0_i32_0 = arith.constant 0 : i32
    %c0_i32_1 = arith.constant 0 : i32
    return %c0_i32, %c0_i32_0 : i32, i32
  }
  func.func @transform_3(%arg0: i32) -> (i32, i32) {
    %c0_i32 = arith.constant 0 : i32
    %c0_i32_0 = arith.constant 0 : i32
    %c0_i32_1 = arith.constant 0 : i32
    return %c0_i32, %c0_i32_0 : i32, i32
  }
  func.func @transform_4(%arg0: i32) -> (i32, i32) {
    %c0_i32 = arith.constant 0 : i32
    %c0_i32_0 = arith.constant 0 : i32
    %c0_i32_1 = arith.constant 0 : i32
    return %c0_i32, %c0_i32_0 : i32, i32
  }
  func.func @transform_5(%arg0: i32) -> (i32, i32) {
    %c0_i32 = arith.constant 0 : i32
    %c0_i32_0 = arith.constant 0 : i32
    %c0_i32_1 = arith.constant 0 : i32
    return %c0_i32, %c0_i32_0 : i32, i32
  }
  func.func @transform_6(%arg0: i32) -> (i32, i32) {
    %c0_i32 = arith.constant 0 : i32
    %c0_i32_0 = arith.constant 0 : i32
    %c0_i32_1 = arith.constant 0 : i32
    return %c0_i32, %c0_i32_0 : i32, i32
  }
  func.func @transform_7(%arg0: i32) -> (i32, i32) {
    %c0_i32 = arith.constant 0 : i32
    %c0_i32_0 = arith.constant 0 : i32
    %c0_i32_1 = arith.constant 0 : i32
    return %c0_i32, %c0_i32_0 : i32, i32
  }
  func.func @transform_8(%arg0: i32) -> (i32, i32) {
    %c0_i32 = arith.constant 0 : i32
    %c0_i32_0 = arith.constant 0 : i32
    %c0_i32_1 = arith.constant 0 : i32
    return %c0_i32, %c0_i32_0 : i32, i32
  }
  func.func @transform_9(%arg0: i32) -> (i32, i32) {
    %c0_i32 = arith.constant 0 : i32
    %c0_i32_0 = arith.constant 0 : i32
    %c0_i32_1 = arith.constant 0 : i32
    return %c0_i32, %c0_i32_0 : i32, i32
  }
  func.func @transform_10(%arg0: i32) -> (i32, i32) {
    %c0_i32 = arith.constant 0 : i32
    %c0_i32_0 = arith.constant 0 : i32
    %c0_i32_1 = arith.constant 0 : i32
    return %c0_i32, %c0_i32_0 : i32, i32
  }
  func.func @transform_11(%arg0: i32) -> (i32, i32) {
    %c0_i32 = arith.constant 0 : i32
    %c0_i32_0 = arith.constant 0 : i32
    return %c0_i32, %arg0 : i32, i32
  }
  func.func @transform_12(%arg0: i32) -> (i32, i32) {
    %c0_i32 = arith.constant 0 : i32
    %c0_i32_0 = arith.constant 0 : i32
    return %c0_i32, %arg0 : i32, i32
  }
  func.func @transform_13(%arg0: i32) -> (i32, i32) {
    %c0_i32 = arith.constant 0 : i32
    %c0_i32_0 = arith.constant 0 : i32
    return %c0_i32, %arg0 : i32, i32
  }
  func.func @transform_14(%arg0: i32) -> (i32, i32) {
    %c0_i32 = arith.constant 0 : i32
    %c0_i32_0 = arith.constant 0 : i32
    return %c0_i32, %arg0 : i32, i32
  }
}

module attributes {stable_mosaic.version = 11 : i64} {
  func.func @_out_global_kernel(%arg0: i32, %arg1: memref<4x256xbf16, #tpu.memory_space<vmem>>, %arg2: memref<2x256xf32, #tpu.memory_space<vmem>>, %arg3: memref<2x256xf32, #tpu.memory_space<vmem>>, %arg4: memref<1x256xi32, #tpu.memory_space<vmem>>, %arg5: memref<8x36xf32, #tpu.memory_space<vmem>>, %arg6: memref<8x2xf32, #tpu.memory_space<vmem>>, %arg7: memref<8x1xf32, #tpu.memory_space<vmem>>, %arg8: memref<8x256xbf16, #tpu.memory_space<vmem>>, %arg9: memref<8x256xbf16, #tpu.memory_space<vmem>>, %arg10: memref<36x256xf32, #tpu.memory_space<vmem>>) attributes {dimension_semantics = [#tpu.dimension_semantics<parallel>], iteration_bounds = array<i64: 2>, scalar_prefetch = 0 : i64, scratch_operands = 1 : i64, tpu.core_type = #tpu.core_type<tc>, window_params = [{transform_indices = @transform_0, window_bounds = array<i64: 4, 256>}, {transform_indices = @transform_1, window_bounds = array<i64: 2, 256>}, {transform_indices = @transform_2, window_bounds = array<i64: 2, 256>}, {pipeline_mode = #tpu.pipeline_mode<synchronous>, transform_indices = @transform_3, window_bounds = array<i64: 1, 256>}, {pipeline_mode = #tpu.pipeline_mode<synchronous>, transform_indices = @transform_4, window_bounds = array<i64: 8, 36>}, {pipeline_mode = #tpu.pipeline_mode<synchronous>, transform_indices = @transform_5, window_bounds = array<i64: 8, 2>}, {pipeline_mode = #tpu.pipeline_mode<synchronous>, transform_indices = @transform_6, window_bounds = array<i64: 8, 1>}, {transform_indices = @transform_7, window_bounds = array<i64: 8, 256>}, {transform_indices = @transform_8, window_bounds = array<i64: 8, 256>}]} {
    %c0 = arith.constant 0 : index
    %c0_0 = arith.constant 0 : index
    %0 = vector.load %arg1[%c0, %c0_0] : memref<4x256xbf16, #tpu.memory_space<vmem>>, vector<4x256xbf16>
    %1 = arith.extf %0 : vector<4x256xbf16> to vector<4x256xf32>
    %c0_1 = arith.constant 0 : index
    %c0_2 = arith.constant 0 : index
    %2 = vector.load %arg4[%c0_1, %c0_2] : memref<1x256xi32, #tpu.memory_space<vmem>>, vector<1x256xi32>
    %c1_i32 = arith.constant 1 : i32
    %3 = vector.broadcast %c1_i32 : i32 to vector<1x256xi32>
    %4 = arith.andi %2, %3 : vector<1x256xi32>
    %c0_i32 = arith.constant 0 : i32
    %5 = vector.broadcast %c0_i32 : i32 to vector<1x256xi32>
    %6 = arith.cmpi ne, %4, %5 : vector<1x256xi32>
    %c2_i32 = arith.constant 2 : i32
    %7 = vector.broadcast %c2_i32 : i32 to vector<1x256xi32>
    %8 = arith.andi %2, %7 : vector<1x256xi32>
    %c0_i32_3 = arith.constant 0 : i32
    %9 = vector.broadcast %c0_i32_3 : i32 to vector<1x256xi32>
    %10 = arith.cmpi ne, %8, %9 : vector<1x256xi32>
    %c4_i32 = arith.constant 4 : i32
    %11 = vector.broadcast %c4_i32 : i32 to vector<1x256xi32>
    %12 = arith.andi %2, %11 : vector<1x256xi32>
    %c0_i32_4 = arith.constant 0 : i32
    %13 = vector.broadcast %c0_i32_4 : i32 to vector<1x256xi32>
    %14 = arith.cmpi ne, %12, %13 : vector<1x256xi32>
    %c8_i32 = arith.constant 8 : i32
    %15 = vector.broadcast %c8_i32 : i32 to vector<1x256xi32>
    %16 = arith.andi %2, %15 : vector<1x256xi32>
    %c0_i32_5 = arith.constant 0 : i32
    %17 = vector.broadcast %c0_i32_5 : i32 to vector<1x256xi32>
    %18 = arith.cmpi ne, %16, %17 : vector<1x256xi32>
    %c255_i32 = arith.constant 255 : i32
    %19 = tpu.dynamic_rotate %1 by %c255_i32 dim 1 : vector<4x256xf32>, i32 -> vector<4x256xf32>
    %c1_i32_6 = arith.constant 1 : i32
    %20 = tpu.dynamic_rotate %1 by %c1_i32_6 dim 1 : vector<4x256xf32>, i32 -> vector<4x256xf32>
    %21 = vector.shape_cast %6 : vector<1x256xi1> to vector<1x256xi1>
    %22 = vector.broadcast %21 : vector<1x256xi1> to vector<4x256xi1>
    %23 = arith.select %22, %19, %20 : vector<4x256xi1>, vector<4x256xf32>
    %24 = vector.shape_cast %10 : vector<1x256xi1> to vector<1x256xi1>
    %25 = vector.broadcast %24 : vector<1x256xi1> to vector<4x256xi1>
    %26 = arith.select %25, %20, %19 : vector<4x256xi1>, vector<4x256xf32>
    %c240_i32 = arith.constant 240 : i32
    %27 = tpu.dynamic_rotate %23 by %c240_i32 dim 1 : vector<4x256xf32>, i32 -> vector<4x256xf32>
    %c16_i32 = arith.constant 16 : i32
    %28 = tpu.dynamic_rotate %23 by %c16_i32 dim 1 : vector<4x256xf32>, i32 -> vector<4x256xf32>
    %29 = vector.shape_cast %14 : vector<1x256xi1> to vector<1x256xi1>
    %30 = vector.broadcast %29 : vector<1x256xi1> to vector<4x256xi1>
    %31 = arith.select %30, %27, %28 : vector<4x256xi1>, vector<4x256xf32>
    %32 = vector.shape_cast %18 : vector<1x256xi1> to vector<1x256xi1>
    %33 = vector.broadcast %32 : vector<1x256xi1> to vector<4x256xi1>
    %34 = arith.select %33, %28, %27 : vector<4x256xi1>, vector<4x256xf32>
    %c0_7 = arith.constant 0 : index
    %c0_8 = arith.constant 0 : index
    %35 = vector.load %arg10[%c0_7, %c0_8] : memref<36x256xf32, #tpu.memory_space<vmem>>, vector<4x256xf32>
    tpu.vector_store %arg10[%c0_7, %c0_8], %31 {strides = array<i32>} : memref<36x256xf32, #tpu.memory_space<vmem>>, vector<4x256xf32>,
    %c12 = arith.constant 12 : index
    %c0_9 = arith.constant 0 : index
    %36 = vector.load %arg10[%c12, %c0_9] : memref<36x256xf32, #tpu.memory_space<vmem>>, vector<4x256xf32>
    tpu.vector_store %arg10[%c12, %c0_9], %23 {strides = array<i32>} : memref<36x256xf32, #tpu.memory_space<vmem>>, vector<4x256xf32>,
    %c24 = arith.constant 24 : index
    %c0_10 = arith.constant 0 : index
    %37 = vector.load %arg10[%c24, %c0_10] : memref<36x256xf32, #tpu.memory_space<vmem>>, vector<4x256xf32>
    tpu.vector_store %arg10[%c24, %c0_10], %34 {strides = array<i32>} : memref<36x256xf32, #tpu.memory_space<vmem>>, vector<4x256xf32>,
    %c240_i32_11 = arith.constant 240 : i32
    %38 = tpu.dynamic_rotate %1 by %c240_i32_11 dim 1 : vector<4x256xf32>, i32 -> vector<4x256xf32>
    %c16_i32_12 = arith.constant 16 : i32
    %39 = tpu.dynamic_rotate %1 by %c16_i32_12 dim 1 : vector<4x256xf32>, i32 -> vector<4x256xf32>
    %40 = vector.shape_cast %14 : vector<1x256xi1> to vector<1x256xi1>
    %41 = vector.broadcast %40 : vector<1x256xi1> to vector<4x256xi1>
    %42 = arith.select %41, %38, %39 : vector<4x256xi1>, vector<4x256xf32>
    %43 = vector.shape_cast %18 : vector<1x256xi1> to vector<1x256xi1>
    %44 = vector.broadcast %43 : vector<1x256xi1> to vector<4x256xi1>
    %45 = arith.select %44, %39, %38 : vector<4x256xi1>, vector<4x256xf32>
    %c4 = arith.constant 4 : index
    %c0_13 = arith.constant 0 : index
    %46 = vector.load %arg10[%c4, %c0_13] : memref<36x256xf32, #tpu.memory_space<vmem>>, vector<4x256xf32>
    tpu.vector_store %arg10[%c4, %c0_13], %42 {strides = array<i32>} : memref<36x256xf32, #tpu.memory_space<vmem>>, vector<4x256xf32>,
    %c16 = arith.constant 16 : index
    %c0_14 = arith.constant 0 : index
    %47 = vector.load %arg10[%c16, %c0_14] : memref<36x256xf32, #tpu.memory_space<vmem>>, vector<4x256xf32>
    tpu.vector_store %arg10[%c16, %c0_14], %1 {strides = array<i32>} : memref<36x256xf32, #tpu.memory_space<vmem>>, vector<4x256xf32>,
    %c28 = arith.constant 28 : index
    %c0_15 = arith.constant 0 : index
    %48 = vector.load %arg10[%c28, %c0_15] : memref<36x256xf32, #tpu.memory_space<vmem>>, vector<4x256xf32>
    tpu.vector_store %arg10[%c28, %c0_15], %45 {strides = array<i32>} : memref<36x256xf32, #tpu.memory_space<vmem>>, vector<4x256xf32>,
    %c240_i32_16 = arith.constant 240 : i32
    %49 = tpu.dynamic_rotate %26 by %c240_i32_16 dim 1 : vector<4x256xf32>, i32 -> vector<4x256xf32>
    %c16_i32_17 = arith.constant 16 : i32
    %50 = tpu.dynamic_rotate %26 by %c16_i32_17 dim 1 : vector<4x256xf32>, i32 -> vector<4x256xf32>
    %51 = vector.shape_cast %14 : vector<1x256xi1> to vector<1x256xi1>
    %52 = vector.broadcast %51 : vector<1x256xi1> to vector<4x256xi1>
    %53 = arith.select %52, %49, %50 : vector<4x256xi1>, vector<4x256xf32>
    %54 = vector.shape_cast %18 : vector<1x256xi1> to vector<1x256xi1>
    %55 = vector.broadcast %54 : vector<1x256xi1> to vector<4x256xi1>
    %56 = arith.select %55, %50, %49 : vector<4x256xi1>, vector<4x256xf32>
    %c8 = arith.constant 8 : index
    %c0_18 = arith.constant 0 : index
    %57 = vector.load %arg10[%c8, %c0_18] : memref<36x256xf32, #tpu.memory_space<vmem>>, vector<4x256xf32>
    tpu.vector_store %arg10[%c8, %c0_18], %53 {strides = array<i32>} : memref<36x256xf32, #tpu.memory_space<vmem>>, vector<4x256xf32>,
    %c20 = arith.constant 20 : index
    %c0_19 = arith.constant 0 : index
    %58 = vector.load %arg10[%c20, %c0_19] : memref<36x256xf32, #tpu.memory_space<vmem>>, vector<4x256xf32>
    tpu.vector_store %arg10[%c20, %c0_19], %26 {strides = array<i32>} : memref<36x256xf32, #tpu.memory_space<vmem>>, vector<4x256xf32>,
    %c32 = arith.constant 32 : index
    %c0_20 = arith.constant 0 : index
    %59 = vector.load %arg10[%c32, %c0_20] : memref<36x256xf32, #tpu.memory_space<vmem>>, vector<4x256xf32>
    tpu.vector_store %arg10[%c32, %c0_20], %56 {strides = array<i32>} : memref<36x256xf32, #tpu.memory_space<vmem>>, vector<4x256xf32>,
    %c0_21 = arith.constant 0 : index
    %c0_22 = arith.constant 0 : index
    %60 = vector.load %arg5[%c0_21, %c0_22] : memref<8x36xf32, #tpu.memory_space<vmem>>, vector<8x36xf32>
    %c0_23 = arith.constant 0 : index
    %c0_24 = arith.constant 0 : index
    %61 = vector.load %arg10[%c0_23, %c0_24] : memref<36x256xf32, #tpu.memory_space<vmem>>, vector<36x256xf32>
    %cst = arith.constant dense<0.000000e+00> : vector<8x256xf32>
    %62 = tpu.matmul %60, %61, %cst {dimension_numbers = #tpu.dot_dimension_numbers<[1], [0], [0], [1], [0, 0, 1, 1], [], []>} : vector<8x36xf32>, vector<36x256xf32>, vector<8x256xf32> -> vector<8x256xf32>
    %c0_25 = arith.constant 0 : index
    %c0_26 = arith.constant 0 : index
    %63 = vector.load %arg6[%c0_25, %c0_26] : memref<8x2xf32, #tpu.memory_space<vmem>>, vector<8x2xf32>
    %c0_27 = arith.constant 0 : index
    %c0_28 = arith.constant 0 : index
    %64 = vector.load %arg2[%c0_27, %c0_28] : memref<2x256xf32, #tpu.memory_space<vmem>>, vector<2x256xf32>
    %c0_29 = arith.constant 0 : index
    %c0_30 = arith.constant 0 : index
    %65 = vector.load %arg3[%c0_29, %c0_30] : memref<2x256xf32, #tpu.memory_space<vmem>>, vector<2x256xf32>
    %66 = arith.addf %64, %65 : vector<2x256xf32>
    %cst_31 = arith.constant dense<0.000000e+00> : vector<8x256xf32>
    %67 = tpu.matmul %63, %66, %cst_31 {dimension_numbers = #tpu.dot_dimension_numbers<[1], [0], [0], [1], [0, 0, 1, 1], [], []>} : vector<8x2xf32>, vector<2x256xf32>, vector<8x256xf32> -> vector<8x256xf32>
    %68 = arith.addf %62, %67 : vector<8x256xf32>
    %c0_32 = arith.constant 0 : index
    %c0_33 = arith.constant 0 : index
    %69 = vector.load %arg7[%c0_32, %c0_33] : memref<8x1xf32, #tpu.memory_space<vmem>>, vector<8x1xf32>
    %70 = vector.broadcast %69 : vector<8x1xf32> to vector<8x256xf32>
    %71 = arith.addf %68, %70 : vector<8x256xf32>
    %c0_34 = arith.constant 0 : index
    %c0_35 = arith.constant 0 : index
    %72 = vector.load %arg8[%c0_34, %c0_35] : memref<8x256xbf16, #tpu.memory_space<vmem>>, vector<8x256xbf16>
    %73 = arith.extf %72 : vector<8x256xbf16> to vector<8x256xf32>
    %74 = arith.addf %71, %73 : vector<8x256xf32>
    %75 = arith.truncf %74 : vector<8x256xf32> to vector<8x256xbf16>
    %c0_36 = arith.constant 0 : index
    %c0_37 = arith.constant 0 : index
    %76 = vector.load %arg9[%c0_36, %c0_37] : memref<8x256xbf16, #tpu.memory_space<vmem>>, vector<8x256xbf16>
    tpu.vector_store %arg9[%c0_36, %c0_37], %75 {strides = array<i32>} : memref<8x256xbf16, #tpu.memory_space<vmem>>, vector<8x256xbf16>,
    return
  }
  func.func @transform_0(%arg0: i32) -> (i32, i32) {
    %c0_i32 = arith.constant 0 : i32
    %c0_i32_0 = arith.constant 0 : i32
    return %c0_i32, %arg0 : i32, i32
  }
  func.func @transform_1(%arg0: i32) -> (i32, i32) {
    %c0_i32 = arith.constant 0 : i32
    %c0_i32_0 = arith.constant 0 : i32
    return %c0_i32, %arg0 : i32, i32
  }
  func.func @transform_2(%arg0: i32) -> (i32, i32) {
    %c0_i32 = arith.constant 0 : i32
    %c0_i32_0 = arith.constant 0 : i32
    return %c0_i32, %arg0 : i32, i32
  }
  func.func @transform_3(%arg0: i32) -> (i32, i32) {
    %c0_i32 = arith.constant 0 : i32
    %c0_i32_0 = arith.constant 0 : i32
    %c0_i32_1 = arith.constant 0 : i32
    return %c0_i32, %c0_i32_0 : i32, i32
  }
  func.func @transform_4(%arg0: i32) -> (i32, i32) {
    %c0_i32 = arith.constant 0 : i32
    %c0_i32_0 = arith.constant 0 : i32
    %c0_i32_1 = arith.constant 0 : i32
    return %c0_i32, %c0_i32_0 : i32, i32
  }
  func.func @transform_5(%arg0: i32) -> (i32, i32) {
    %c0_i32 = arith.constant 0 : i32
    %c0_i32_0 = arith.constant 0 : i32
    %c0_i32_1 = arith.constant 0 : i32
    return %c0_i32, %c0_i32_0 : i32, i32
  }
  func.func @transform_6(%arg0: i32) -> (i32, i32) {
    %c0_i32 = arith.constant 0 : i32
    %c0_i32_0 = arith.constant 0 : i32
    %c0_i32_1 = arith.constant 0 : i32
    return %c0_i32, %c0_i32_0 : i32, i32
  }
  func.func @transform_7(%arg0: i32) -> (i32, i32) {
    %c0_i32 = arith.constant 0 : i32
    %c0_i32_0 = arith.constant 0 : i32
    return %c0_i32, %arg0 : i32, i32
  }
  func.func @transform_8(%arg0: i32) -> (i32, i32) {
    %c0_i32 = arith.constant 0 : i32
    %c0_i32_0 = arith.constant 0 : i32
    return %c0_i32, %arg0 : i32, i32
  }
}

</mosaic_0001>

<llo_original>
// kernel: two_stream_lffc_resnet_block.6
$region0: #{two_stream_lffc_resnet_block.6}
  #allocation0 [shape = 'u32[]', space=smem, size = 0x4, offset = 0x4, fixed_abs, tag = 'smem constant byte address 0x4 - core index']
  #allocation1 [shape = 'u32[144,128]{1,0:T(1,128)}', space=vmem, size = 0x12000, scoped, tag = 'internal scratch']
  #allocation2 [shape = 'f32[72,256]{1,0:T(8,128)}', space=vmem, size = 0x12000, scoped, tag = 'scratch operand']
  %s0 = inlined_call_operand.vmem [shape: bf16[8,512], index: 0, kind: input, shape index: {}]
  %s1 = inlined_call_operand.vmem [shape: bf16[8,512], index: 1, kind: input, shape index: {}]
  %s2 = inlined_call_operand.vmem [shape: s32[1,256], index: 2, kind: input, shape index: {}]
  %s3 = inlined_call_operand.vmem [shape: bf16[4,8], index: 3, kind: input, shape index: {}]
  %s4 = inlined_call_operand.vmem [shape: f32[4,1], index: 4, kind: input, shape index: {}]
  %s5 = inlined_call_operand.vmem [shape: bf16[4,8], index: 5, kind: input, shape index: {}]
  %s6 = inlined_call_operand.vmem [shape: f32[4,1], index: 6, kind: input, shape index: {}]
  %s7 = inlined_call_operand.vmem [shape: f32[2,4], index: 7, kind: input, shape index: {}]
  %s8 = inlined_call_operand.vmem [shape: f32[2,1], index: 8, kind: input, shape index: {}]
  %s9 = inlined_call_operand.vmem [shape: f32[8,72], index: 9, kind: input, shape index: {}]
  %s10 = inlined_call_operand.vmem [shape: f32[8,1], index: 10, kind: input, shape index: {}]
  %s11 = inlined_call_operand.vmem [shape: bf16[8,512], index: 11, kind: output, shape index: {0}]
  %s12 = inlined_call_operand.vmem [shape: bf16[4,512], index: 12, kind: output, shape index: {1}]
  %s13 = inlined_call_operand.vmem [shape: f32[2,512], index: 13, kind: output, shape index: {2}]
  %14 = xla_tuple %s11, %s12, %s13
  %s15 = sld [smem:[#allocation0]]
  $region93: #{two_stream_lffc_resnet_block.6} parent=0
    _
  %s17 = ssub.s32 1, %s15
  %s18 = scalar_select 0, %s17, %s15
  loop: start=0, step=1, limit=4
  $region2: #{two_stream_lffc_resnet_block.6} parent=0 // loop_pre_header
    _
  $region3: #{two_stream_lffc_resnet_block.6} parent=0 // loop_header
    %s20 = sphi 0, %s24
    %p21 = scmp.ge.s32.totalorder %s20, 4
    %s30 = sphi 0, %s32
    %s33 = sphi 0, %s30
    %s34 = sphi 0, %s33
    %s50 = sphi 0, %s34
    %s56 = sphi 0, %s58
    %s59 = sphi 0, %s56
    %s60 = sphi 0, %s59
    %s76 = sphi 0, %s60
    %s80 = sphi 0, %s80
    %s82 = sphi 0, %s80
    %s83 = sphi 0, %s82
    %s97 = sphi 0, %s83
    %s101 = sphi 0, %s101
    %s103 = sphi 0, %s101
    %s104 = sphi 0, %s103
    %s118 = sphi 0, %s104
    %s122 = sphi 0, %s122
    %s124 = sphi 0, %s122
    %s125 = sphi 0, %s124
    %s139 = sphi 0, %s125
    %s143 = sphi 0, %s143
    %s145 = sphi 0, %s143
    %s146 = sphi 0, %s145
    %s160 = sphi 0, %s146
    %s164 = sphi 0, %s164
    %s166 = sphi 0, %s164
    %s167 = sphi 0, %s166
    %s181 = sphi 0, %s167
    %s185 = sphi 0, %s185
    %s187 = sphi 0, %s185
    %s188 = sphi 0, %s187
    %s202 = sphi 0, %s188
    %s206 = sphi 0, %s206
    %s208 = sphi 0, %s206
    %s209 = sphi 0, %s208
    %s223 = sphi 0, %s209
    %s227 = sphi 0, %s227
    %s229 = sphi 0, %s227
    %s230 = sphi 0, %s229
    %s244 = sphi 0, %s230
    %s248 = sphi 0, %s248
    %s250 = sphi 0, %s248
    %s251 = sphi 0, %s250
    %s265 = sphi 0, %s251
    %s271 = sphi 0, %s273
    %s274 = sphi 0, %s271
    %s275 = sphi 0, %s274
    %s291 = sphi 0, %s275
    %s297 = sphi 0, %s299
    %s300 = sphi 0, %s297
    %s301 = sphi 0, %s300
    %s317 = sphi 0, %s301
    %s323 = sphi 0, %s325
    %s326 = sphi 0, %s323
    %s327 = sphi 0, %s326
    %s343 = sphi 0, %s327
  $region4: #{two_stream_lffc_resnet_block.6} parent=0 // loop_header_branch
    %23 = sbr.rel (%p21) target = $region8
  $region5: #{two_stream_lffc_resnet_block.6} parent=0 // loop_body
    %s25 = ssub.s32 %s20, 1
    %s26 = ssub.s32 %s20, 2
    %s27 = sadd.s32 %s20, 1
    %s28 = ssub.s32 %s20, %s27
    %p29 = scmp.eq.s32.totalorder %s28, 0
    %s31 = sadd.s32 %s30, 1
    %s32 = scalar_select %p29, %s30, %s31
    %p35 = pneg %p29
    %p36 = scmp.eq.s32.totalorder %s20, 1
    %p37 = por %p35, %p36
    %p38 = scmp.ne.s32.totalorder %s30, %s33
    %p39 = scmp.eq.s32.totalorder %s20, 0
    %p40 = por %p38, %p39
    %p41 = scmp.ne.s32.totalorder %s30, %s33
    %p42 = scmp.eq.s32.totalorder %s25, 1
    %p43 = por %p41, %p42
    %p44 = scmp.ne.s32.totalorder %s33, %s34
    %p45 = scmp.eq.s32.totalorder %s25, 0
    %p46 = por %p44, %p45
    %p47 = scmp.ne.s32.totalorder %s33, %s34
    %p48 = scmp.eq.s32.totalorder %s26, 1
    %p49 = por %p47, %p48
    %p51 = scmp.ne.s32.totalorder %s34, %s50
    %p52 = scmp.eq.s32.totalorder %s26, 0
    %p53 = por %p51, %p52
    %s54 = ssub.s32 %s20, %s27
    %p55 = scmp.eq.s32.totalorder %s54, 0
    %s57 = sadd.s32 %s56, 1
    %s58 = scalar_select %p55, %s56, %s57
    %p61 = pneg %p55
    %p62 = scmp.eq.s32.totalorder %s20, 1
    %p63 = por %p61, %p62
    %p64 = scmp.ne.s32.totalorder %s56, %s59
    %p65 = scmp.eq.s32.totalorder %s20, 0
    %p66 = por %p64, %p65
    %p67 = scmp.ne.s32.totalorder %s56, %s59
    %p68 = scmp.eq.s32.totalorder %s25, 1
    %p69 = por %p67, %p68
    %p70 = scmp.ne.s32.totalorder %s59, %s60
    %p71 = scmp.eq.s32.totalorder %s25, 0
    %p72 = por %p70, %p71
    %p73 = scmp.ne.s32.totalorder %s59, %s60
    %p74 = scmp.eq.s32.totalorder %s26, 1
    %p75 = por %p73, %p74
    %p77 = scmp.ne.s32.totalorder %s60, %s76
    %p78 = scmp.eq.s32.totalorder %s26, 0
    %p79 = por %p77, %p78
    %s81 = sadd.s32 %s80, 1
    %p84 = scmp.eq.s32.totalorder %s20, 1
    %p85 = scmp.ne.s32.totalorder %s80, %s82
    %p86 = scmp.eq.s32.totalorder %s20, 0
    %p87 = por %p85, %p86
    %p88 = scmp.ne.s32.totalorder %s80, %s82
    %p89 = scmp.eq.s32.totalorder %s25, 1
    %p90 = por %p88, %p89
    %p91 = scmp.ne.s32.totalorder %s82, %s83
    %p92 = scmp.eq.s32.totalorder %s25, 0
    %p93 = por %p91, %p92
    %p94 = scmp.ne.s32.totalorder %s82, %s83
    %p95 = scmp.eq.s32.totalorder %s26, 1
    %p96 = por %p94, %p95
    %p98 = scmp.ne.s32.totalorder %s83, %s97
    %p99 = scmp.eq.s32.totalorder %s26, 0
    %p100 = por %p98, %p99
    %s102 = sadd.s32 %s101, 1
    %p105 = scmp.eq.s32.totalorder %s20, 1
    %p106 = scmp.ne.s32.totalorder %s101, %s103
    %p107 = scmp.eq.s32.totalorder %s20, 0
    %p108 = por %p106, %p107
    %p109 = scmp.ne.s32.totalorder %s101, %s103
    %p110 = scmp.eq.s32.totalorder %s25, 1
    %p111 = por %p109, %p110
    %p112 = scmp.ne.s32.totalorder %s103, %s104
    %p113 = scmp.eq.s32.totalorder %s25, 0
    %p114 = por %p112, %p113
    %p115 = scmp.ne.s32.totalorder %s103, %s104
    %p116 = scmp.eq.s32.totalorder %s26, 1
    %p117 = por %p115, %p116
    %p119 = scmp.ne.s32.totalorder %s104, %s118
    %p120 = scmp.eq.s32.totalorder %s26, 0
    %p121 = por %p119, %p120
    %s123 = sadd.s32 %s122, 1
    %p126 = scmp.eq.s32.totalorder %s20, 1
    %p127 = scmp.ne.s32.totalorder %s122, %s124
    %p128 = scmp.eq.s32.totalorder %s20, 0
    %p129 = por %p127, %p128
    %p130 = scmp.ne.s32.totalorder %s122, %s124
    %p131 = scmp.eq.s32.totalorder %s25, 1
    %p132 = por %p130, %p131
    %p133 = scmp.ne.s32.totalorder %s124, %s125
    %p134 = scmp.eq.s32.totalorder %s25, 0
    %p135 = por %p133, %p134
    %p136 = scmp.ne.s32.totalorder %s124, %s125
    %p137 = scmp.eq.s32.totalorder %s26, 1
    %p138 = por %p136, %p137
    %p140 = scmp.ne.s32.totalorder %s125, %s139
    %p141 = scmp.eq.s32.totalorder %s26, 0
    %p142 = por %p140, %p141
    %s144 = sadd.s32 %s143, 1
    %p147 = scmp.eq.s32.totalorder %s20, 1
    %p148 = scmp.ne.s32.totalorder %s143, %s145
    %p149 = scmp.eq.s32.totalorder %s20, 0
    %p150 = por %p148, %p149
    %p151 = scmp.ne.s32.totalorder %s143, %s145
    %p152 = scmp.eq.s32.totalorder %s25, 1
    %p153 = por %p151, %p152
    %p154 = scmp.ne.s32.totalorder %s145, %s146
    %p155 = scmp.eq.s32.totalorder %s25, 0
    %p156 = por %p154, %p155
    %p157 = scmp.ne.s32.totalorder %s145, %s146
    %p158 = scmp.eq.s32.totalorder %s26, 1
    %p159 = por %p157, %p158
    %p161 = scmp.ne.s32.totalorder %s146, %s160
    %p162 = scmp.eq.s32.totalorder %s26, 0
    %p163 = por %p161, %p162
    %s165 = sadd.s32 %s164, 1
    %p168 = scmp.eq.s32.totalorder %s20, 1
    %p169 = scmp.ne.s32.totalorder %s164, %s166
    %p170 = scmp.eq.s32.totalorder %s20, 0
    %p171 = por %p169, %p170
    %p172 = scmp.ne.s32.totalorder %s164, %s166
    %p173 = scmp.eq.s32.totalorder %s25, 1
    %p174 = por %p172, %p173
    %p175 = scmp.ne.s32.totalorder %s166, %s167
    %p176 = scmp.eq.s32.totalorder %s25, 0
    %p177 = por %p175, %p176
    %p178 = scmp.ne.s32.totalorder %s166, %s167
    %p179 = scmp.eq.s32.totalorder %s26, 1
    %p180 = por %p178, %p179
    %p182 = scmp.ne.s32.totalorder %s167, %s181
    %p183 = scmp.eq.s32.totalorder %s26, 0
    %p184 = por %p182, %p183
    %s186 = sadd.s32 %s185, 1
    %p189 = scmp.eq.s32.totalorder %s20, 1
    %p190 = scmp.ne.s32.totalorder %s185, %s187
    %p191 = scmp.eq.s32.totalorder %s20, 0
    %p192 = por %p190, %p191
    %p193 = scmp.ne.s32.totalorder %s185, %s187
    %p194 = scmp.eq.s32.totalorder %s25, 1
    %p195 = por %p193, %p194
    %p196 = scmp.ne.s32.totalorder %s187, %s188
    %p197 = scmp.eq.s32.totalorder %s25, 0
    %p198 = por %p196, %p197
    %p199 = scmp.ne.s32.totalorder %s187, %s188
    %p200 = scmp.eq.s32.totalorder %s26, 1
    %p201 = por %p199, %p200
    %p203 = scmp.ne.s32.totalorder %s188, %s202
    %p204 = scmp.eq.s32.totalorder %s26, 0
    %p205 = por %p203, %p204
    %s207 = sadd.s32 %s206, 1
    %p210 = scmp.eq.s32.totalorder %s20, 1
    %p211 = scmp.ne.s32.totalorder %s206, %s208
    %p212 = scmp.eq.s32.totalorder %s20, 0
    %p213 = por %p211, %p212
    %p214 = scmp.ne.s32.totalorder %s206, %s208
    %p215 = scmp.eq.s32.totalorder %s25, 1
    %p216 = por %p214, %p215
    %p217 = scmp.ne.s32.totalorder %s208, %s209
    %p218 = scmp.eq.s32.totalorder %s25, 0
    %p219 = por %p217, %p218
    %p220 = scmp.ne.s32.totalorder %s208, %s209
    %p221 = scmp.eq.s32.totalorder %s26, 1
    %p222 = por %p220, %p221
    %p224 = scmp.ne.s32.totalorder %s209, %s223
    %p225 = scmp.eq.s32.totalorder %s26, 0
    %p226 = por %p224, %p225
    %s228 = sadd.s32 %s227, 1
    %p231 = scmp.eq.s32.totalorder %s20, 1
    %p232 = scmp.ne.s32.totalorder %s227, %s229
    %p233 = scmp.eq.s32.totalorder %s20, 0
    %p234 = por %p232, %p233
    %p235 = scmp.ne.s32.totalorder %s227, %s229
    %p236 = scmp.eq.s32.totalorder %s25, 1
    %p237 = por %p235, %p236
    %p238 = scmp.ne.s32.totalorder %s229, %s230
    %p239 = scmp.eq.s32.totalorder %s25, 0
    %p240 = por %p238, %p239
    %p241 = scmp.ne.s32.totalorder %s229, %s230
    %p242 = scmp.eq.s32.totalorder %s26, 1
    %p243 = por %p241, %p242
    %p245 = scmp.ne.s32.totalorder %s230, %s244
    %p246 = scmp.eq.s32.totalorder %s26, 0
    %p247 = por %p245, %p246
    %s249 = sadd.s32 %s248, 1
    %p252 = scmp.eq.s32.totalorder %s20, 1
    %p253 = scmp.ne.s32.totalorder %s248, %s250
    %p254 = scmp.eq.s32.totalorder %s20, 0
    %p255 = por %p253, %p254
    %p256 = scmp.ne.s32.totalorder %s248, %s250
    %p257 = scmp.eq.s32.totalorder %s25, 1
    %p258 = por %p256, %p257
    %p259 = scmp.ne.s32.totalorder %s250, %s251
    %p260 = scmp.eq.s32.totalorder %s25, 0
    %p261 = por %p259, %p260
    %p262 = scmp.ne.s32.totalorder %s250, %s251
    %p263 = scmp.eq.s32.totalorder %s26, 1
    %p264 = por %p262, %p263
    %p266 = scmp.ne.s32.totalorder %s251, %s265
    %p267 = scmp.eq.s32.totalorder %s26, 0
    %p268 = por %p266, %p267
    %s269 = ssub.s32 %s20, %s27
    %p270 = scmp.eq.s32.totalorder %s269, 0
    %s272 = sadd.s32 %s271, 1
    %s273 = scalar_select %p270, %s271, %s272
    %p276 = pneg %p270
    %p277 = scmp.eq.s32.totalorder %s20, 1
    %p278 = por %p276, %p277
    %p279 = scmp.ne.s32.totalorder %s271, %s274
    %p280 = scmp.eq.s32.totalorder %s20, 0
    %p281 = por %p279, %p280
    %p282 = scmp.ne.s32.totalorder %s271, %s274
    %p283 = scmp.eq.s32.totalorder %s25, 1
    %p284 = por %p282, %p283
    %p285 = scmp.ne.s32.totalorder %s274, %s275
    %p286 = scmp.eq.s32.totalorder %s25, 0
    %p287 = por %p285, %p286
    %p288 = scmp.ne.s32.totalorder %s274, %s275
    %p289 = scmp.eq.s32.totalorder %s26, 1
    %p290 = por %p288, %p289
    %p292 = scmp.ne.s32.totalorder %s275, %s291
    %p293 = scmp.eq.s32.totalorder %s26, 0
    %p294 = por %p292, %p293
    %s295 = ssub.s32 %s20, %s27
    %p296 = scmp.eq.s32.totalorder %s295, 0
    %s298 = sadd.s32 %s297, 1
    %s299 = scalar_select %p296, %s297, %s298
    %p302 = pneg %p296
    %p303 = scmp.eq.s32.totalorder %s20, 1
    %p304 = por %p302, %p303
    %p305 = scmp.ne.s32.totalorder %s297, %s300
    %p306 = scmp.eq.s32.totalorder %s20, 0
    %p307 = por %p305, %p306
    %p308 = scmp.ne.s32.totalorder %s297, %s300
    %p309 = scmp.eq.s32.totalorder %s25, 1
    %p310 = por %p308, %p309
    %p311 = scmp.ne.s32.totalorder %s300, %s301
    %p312 = scmp.eq.s32.totalorder %s25, 0
    %p313 = por %p311, %p312
    %p314 = scmp.ne.s32.totalorder %s300, %s301
    %p315 = scmp.eq.s32.totalorder %s26, 1
    %p316 = por %p314, %p315
    %p318 = scmp.ne.s32.totalorder %s301, %s317
    %p319 = scmp.eq.s32.totalorder %s26, 0
    %p320 = por %p318, %p319
    %s321 = ssub.s32 %s20, %s27
    %p322 = scmp.eq.s32.totalorder %s321, 0
    %s324 = sadd.s32 %s323, 1
    %s325 = scalar_select %p322, %s323, %s324
    %p328 = pneg %p322
    %p329 = scmp.eq.s32.totalorder %s20, 1
    %p330 = por %p328, %p329
    %p331 = scmp.ne.s32.totalorder %s323, %s326
    %p332 = scmp.eq.s32.totalorder %s20, 0
    %p333 = por %p331, %p332
    %p334 = scmp.ne.s32.totalorder %s323, %s326
    %p335 = scmp.eq.s32.totalorder %s25, 1
    %p336 = por %p334, %p335
    %p337 = scmp.ne.s32.totalorder %s326, %s327
    %p338 = scmp.eq.s32.totalorder %s25, 0
    %p339 = por %p337, %p338
    %p340 = scmp.ne.s32.totalorder %s326, %s327
    %p341 = scmp.eq.s32.totalorder %s26, 1
    %p342 = por %p340, %p341
    %p344 = scmp.ne.s32.totalorder %s327, %s343
    %p345 = scmp.eq.s32.totalorder %s26, 0
    %p346 = por %p344, %p345
    %p347 = scmp.le.s32.totalorder 1, %s20
    %p348 = scmp.lt.s32.totalorder %s20, 3
    %p349 = pnand %p347, %p348
    %p350 = pneg %p349
    // Predicated region
    $region9: #{two_stream_lffc_resnet_block.6} parent=5 // pred_check
      _
    $region10: #{two_stream_lffc_resnet_block.6} parent=5 // pred_check_branch
      %352 = sbr.rel (%p349) target = $region12
    $region11: #{two_stream_lffc_resnet_block.6} parent=5 // pred_region
      %s353 = ssub.s32 %s20, 1
      // Predicated region
      $region13: #{two_stream_lffc_resnet_block.6} parent=11 // pred_check
        %p354 = pneg %p93
      $region14: #{two_stream_lffc_resnet_block.6} parent=11 // pred_check_branch
        %356 = sbr.rel (%p354) target = $region16
      $region15: #{two_stream_lffc_resnet_block.6} parent=11 // pred_region
        _
      $region16: #{two_stream_lffc_resnet_block.6} parent=11 // pred_fallthru
        _
      // Predicated region
      $region17: #{two_stream_lffc_resnet_block.6} parent=11 // pred_check
        %p357 = pneg %p114
      $region18: #{two_stream_lffc_resnet_block.6} parent=11 // pred_check_branch
        %359 = sbr.rel (%p357) target = $region20
      $region19: #{two_stream_lffc_resnet_block.6} parent=11 // pred_region
        _
      $region20: #{two_stream_lffc_resnet_block.6} parent=11 // pred_fallthru
        _
      // Predicated region
      $region21: #{two_stream_lffc_resnet_block.6} parent=11 // pred_check
        %p360 = pneg %p135
      $region22: #{two_stream_lffc_resnet_block.6} parent=11 // pred_check_branch
        %362 = sbr.rel (%p360) target = $region24
      $region23: #{two_stream_lffc_resnet_block.6} parent=11 // pred_region
        _
      $region24: #{two_stream_lffc_resnet_block.6} parent=11 // pred_fallthru
        _
      // Predicated region
      $region25: #{two_stream_lffc_resnet_block.6} parent=11 // pred_check
        %p363 = pneg %p156
      $region26: #{two_stream_lffc_resnet_block.6} parent=11 // pred_check_branch
        %365 = sbr.rel (%p363) target = $region28
      $region27: #{two_stream_lffc_resnet_block.6} parent=11 // pred_region
        _
      $region28: #{two_stream_lffc_resnet_block.6} parent=11 // pred_fallthru
        _
      // Predicated region
      $region29: #{two_stream_lffc_resnet_block.6} parent=11 // pred_check
        %p366 = pneg %p177
      $region30: #{two_stream_lffc_resnet_block.6} parent=11 // pred_check_branch
        %368 = sbr.rel (%p366) target = $region32
      $region31: #{two_stream_lffc_resnet_block.6} parent=11 // pred_region
        _
      $region32: #{two_stream_lffc_resnet_block.6} parent=11 // pred_fallthru
        _
      // Predicated region
      $region33: #{two_stream_lffc_resnet_block.6} parent=11 // pred_check
        %p369 = pneg %p198
      $region34: #{two_stream_lffc_resnet_block.6} parent=11 // pred_check_branch
        %371 = sbr.rel (%p369) target = $region36
      $region35: #{two_stream_lffc_resnet_block.6} parent=11 // pred_region
        _
      $region36: #{two_stream_lffc_resnet_block.6} parent=11 // pred_fallthru
        _
      // Predicated region
      $region37: #{two_stream_lffc_resnet_block.6} parent=11 // pred_check
        %p372 = pneg %p219
      $region38: #{two_stream_lffc_resnet_block.6} parent=11 // pred_check_branch
        %374 = sbr.rel (%p372) target = $region40
      $region39: #{two_stream_lffc_resnet_block.6} parent=11 // pred_region
        _
      $region40: #{two_stream_lffc_resnet_block.6} parent=11 // pred_fallthru
        _
      // Predicated region
      $region41: #{two_stream_lffc_resnet_block.6} parent=11 // pred_check
        %p375 = pneg %p240
      $region42: #{two_stream_lffc_resnet_block.6} parent=11 // pred_check_branch
        %377 = sbr.rel (%p375) target = $region44
      $region43: #{two_stream_lffc_resnet_block.6} parent=11 // pred_region
        _
      $region44: #{two_stream_lffc_resnet_block.6} parent=11 // pred_fallthru
        _
      // Predicated region
      $region45: #{two_stream_lffc_resnet_block.6} parent=11 // pred_check
        %p378 = pneg %p261
      $region46: #{two_stream_lffc_resnet_block.6} parent=11 // pred_check_branch
        %380 = sbr.rel (%p378) target = $region48
      $region47: #{two_stream_lffc_resnet_block.6} parent=11 // pred_region
        _
      $region48: #{two_stream_lffc_resnet_block.6} parent=11 // pred_fallthru
        _
    $region12: #{two_stream_lffc_resnet_block.6} parent=5 // pred_fallthru
      _
    %p381 = scmp.lt.s32.totalorder %s20, 2
    // Predicated region
    $region49: #{two_stream_lffc_resnet_block.6} parent=5 // pred_check
      %p382 = pneg %p381
    $region50: #{two_stream_lffc_resnet_block.6} parent=5 // pred_check_branch
      %384 = sbr.rel (%p382) target = $region52
    $region51: #{two_stream_lffc_resnet_block.6} parent=5 // pred_region
      // Predicated region
      $region53: #{two_stream_lffc_resnet_block.6} parent=51 // pred_check
        %p385 = pneg %p40
      $region54: #{two_stream_lffc_resnet_block.6} parent=51 // pred_check_branch
        %387 = sbr.rel (%p385) target = $region56
      $region55: #{two_stream_lffc_resnet_block.6} parent=51 // pred_region
        %s388 = smul.u32 2, %s20
        %p389 = scmp.lt.s32.totalorder %s388, 3
        %s390 = scalar_select %p389, %s388, 3
        %s391 = smul.addr %s390, 4
        %s392 = scalar_lea.vmem %s0, %s391
        %s393 = smul.u32 2, %s20
      $region56: #{two_stream_lffc_resnet_block.6} parent=51 // pred_fallthru
        _
      // Predicated region
      $region57: #{two_stream_lffc_resnet_block.6} parent=51 // pred_check
        %p394 = pneg %p66
      $region58: #{two_stream_lffc_resnet_block.6} parent=51 // pred_check_branch
        %396 = sbr.rel (%p394) target = $region60
      $region59: #{two_stream_lffc_resnet_block.6} parent=51 // pred_region
        %s397 = smul.u32 2, %s20
        %p398 = scmp.lt.s32.totalorder %s397, 3
        %s399 = scalar_select %p398, %s397, 3
        %s400 = smul.addr %s399, 4
        %s401 = scalar_lea.vmem %s1, %s400
        %s402 = smul.u32 2, %s20
      $region60: #{two_stream_lffc_resnet_block.6} parent=51 // pred_fallthru
        _
    $region52: #{two_stream_lffc_resnet_block.6} parent=5 // pred_fallthru
      _
    %p403 = scmp.le.s32.totalorder 1, %s20
    %p404 = scmp.lt.s32.totalorder %s20, 3
    %p405 = pnand %p403, %p404
    %p406 = pneg %p405
    // Predicated region
    $region61: #{two_stream_lffc_resnet_block.6} parent=5 // pred_check
      _
    $region62: #{two_stream_lffc_resnet_block.6} parent=5 // pred_check_branch
      %408 = sbr.rel (%p405) target = $region64
    $region63: #{two_stream_lffc_resnet_block.6} parent=5 // pred_region
      %s409 = ssub.s32 %s20, 1
      %s410 = smul.u32 2, %s25
      %p411 = scmp.lt.s32.totalorder %s410, 3
      %s412 = scalar_select %p411, %s410, 3
      %s413 = smul.addr %s412, 4
      %s414 = scalar_lea.vmem %s0, %s413
      %p415 = pneg %p46
      %p416 = pneg %p43
      %s417 = smul.u32 2, %s25
      %p418 = scmp.lt.s32.totalorder %s417, 3
      %s419 = scalar_select %p418, %s417, 3
      %s420 = smul.addr %s419, 4
      %s421 = scalar_lea.vmem %s1, %s420
      %p422 = pneg %p72
      %p423 = pneg %p69
      %p424 = pneg %p93
      %p425 = pneg %p90
      %p426 = pneg %p114
      %p427 = pneg %p111
      %p428 = pneg %p135
      %p429 = pneg %p132
      %p430 = pneg %p156
      %p431 = pneg %p153
      %p432 = pneg %p177
      %p433 = pneg %p174
      %p434 = pneg %p198
      %p435 = pneg %p195
      %p436 = pneg %p219
      %p437 = pneg %p216
      %p438 = pneg %p240
      %p439 = pneg %p237
      %p440 = pneg %p261
      %p441 = pneg %p258
      %p442 = pneg %p287
      %p443 = pneg %p284
      %s444 = smul.u32 2, %s25
      %p445 = scmp.lt.s32.totalorder %s444, 3
      %s446 = scalar_select %p445, %s444, 3
      %s447 = smul.addr %s446, 4
      %s448 = scalar_lea.vmem %s11, %s447
      %p449 = pneg %p313
      %p450 = pneg %p310
      %s451 = smul.u32 2, %s25
      %p452 = scmp.lt.s32.totalorder %s451, 3
      %s453 = scalar_select %p452, %s451, 3
      %s454 = smul.addr %s453, 2
      %s455 = scalar_lea.vmem %s12, %s454
      %p456 = pneg %p339
      %p457 = pneg %p336
      %s458 = smul.u32 2, %s25
      %p459 = scmp.lt.s32.totalorder %s458, 3
      %s460 = scalar_select %p459, %s458, 3
      %s461 = smul.addr %s460, 2
      %s462 = scalar_lea.vmem %s13, %s461
      %s463 = smul.u32 2, %s25
      %p464 = scmp.lt.s32.totalorder %s463, 3
      %s465 = scalar_select %p464, %s463, 3
      %s466 = smul.addr %s465, 4
      %s467 = scalar_lea.vmem %s0, %s466
      %s468 = smul.u32 2, %s25
      %s469 = smul.u32 2, %s25
      %p470 = scmp.lt.s32.totalorder %s469, 3
      %s471 = scalar_select %p470, %s469, 3
      %s472 = smul.addr %s471, 4
      %s473 = scalar_lea.vmem %s1, %s472
      %s474 = smul.u32 2, %s25
      %s475 = smul.u32 2, %s25
      %p476 = scmp.lt.s32.totalorder %s475, 3
      %s477 = scalar_select %p476, %s475, 3
      %s478 = smul.addr %s477, 4
      %s479 = scalar_lea.vmem %s11, %s478
      %s480 = smul.u32 2, %s25
      %s481 = smul.u32 2, %s25
      %p482 = scmp.lt.s32.totalorder %s481, 3
      %s483 = scalar_select %p482, %s481, 3
      %s484 = smul.addr %s483, 2
      %s485 = scalar_lea.vmem %s12, %s484
      %s486 = smul.u32 2, %s25
      %s487 = smul.u32 2, %s25
      %p488 = scmp.lt.s32.totalorder %s487, 3
      %s489 = scalar_select %p488, %s487, 3
      %s490 = smul.addr %s489, 2
      %s491 = scalar_lea.vmem %s13, %s490
      %s492 = smul.u32 2, %s25
      %v494 = vld [vmem:[%s3] sm:$0x3]
      %v495 = vld [vmem:[%s467] sm:$0xff]
      %v496 = vld [vmem:[%s4] sm:$0xf]
      %498 = vset.pattern.permute.xlu0 0
      %499 = vperm.xlu0 %498, %v496
      %v500 = vpop.permute.xlu0 %499
      %v503 = vunpack.c.l.b16 %v495
      %v504 = vunpack.c.h.b16 %v495
      %v505 = vpack.c.b16 %v503, %v503
      %v506 = vpack.c.b16 %v504, %v504
      %vm507 = vcmask 64512
      %v509 = vsel %vm507, %v494, 0
      %vm511 = vcmask 1043456
      %v513 = vsel %vm511, %v505, 0
      %v516 = vsel %vm511, %v506, 0
      %518 = vmatprep.subr.bf16.mxu0 %v516
      %519 = vmatpush1.bf16.msra.mxu0 %v513
      %520 = vmatprep.subr.bf16.mxu0 0
      %521 = vmatpush1.bf16.msra.mxu0 0
      %522 = vmatprep.subr.bf16.mxu0 0
      %523 = vmatpush1.bf16.msra.mxu0 0
      %524 = vmatprep.subr.bf16.mxu0 0
      %525 = vmatpush1.bf16.msra.mxu0 0
      %526 = vmatprep.subr.bf16.mxu0 0
      %527 = vmatpush1.bf16.msra.mxu0 0
      %528 = vmatprep.subr.bf16.mxu0 0
      %529 = vmatpush1.bf16.msra.mxu0 0
      %530 = vmatprep.subr.bf16.mxu0 0
      %531 = vmatpush1.bf16.msra.mxu0 0
      %532 = vmatprep.subr.bf16.mxu0 0
      %533 = vmatpush1.bf16.msra.mxu0 0
      %534 = vmatprep.subr.bf16.mxu0 0
      %535 = vmatpush1.bf16.msra.mxu0 0
      %536 = vmatprep.subr.bf16.mxu0 0
      %537 = vmatpush1.bf16.msra.mxu0 0
      %538 = vmatprep.subr.bf16.mxu0 0
      %539 = vmatpush1.bf16.msra.mxu0 0
      %540 = vmatprep.subr.bf16.mxu0 0
      %541 = vmatpush1.bf16.msra.mxu0 0
      %542 = vmatprep.subr.bf16.mxu0 0
      %543 = vmatpush1.bf16.msra.mxu0 0
      %544 = vmatprep.subr.bf16.mxu0 0
      %545 = vmatpush1.bf16.msra.mxu0 0
      %546 = vmatprep.subr.bf16.mxu0 0
      %547 = vmatpush1.bf16.msra.mxu0 0
      %548 = vmatprep.subr.bf16.mxu0 0
      %549 = vmatpush1.bf16.msra.mxu0 0
      %550 = vmatprep.mubr.bf16.mxu0 0
      %551 = vmatmul.mubr.bf16.gmra.mrb[0].mxu0 %v509
      %v552 = vpop.f32.mrb[0].mxu0
      %v553 = vadd.f32 %v500, %v552
      %v554 = vpop.f32.mrb[0].mxu0
      %v555 = vadd.f32 %v500, %v554
      %v556 = vpop.f32.mrb[0].mxu0
      %v557 = vpop.f32.mrb[0].mxu0
      %558 = vdwg.mxu0
      %v559 = vmax.f32 %v553, 0.0
      %v560 = vmax.f32 %v555, 0.0
      %v561 = vld [vmem:[%s5] sm:$0x3]
      %v562 = vld [vmem:[%s473] sm:$0xff]
      %v563 = vld [vmem:[%s6] sm:$0xf]
      %565 = vset.pattern.permute.xlu0 0
      %566 = vperm.xlu0 %565, %v563
      %v567 = vpop.permute.xlu0 %566
      %v570 = vunpack.c.l.b16 %v562
      %v571 = vunpack.c.h.b16 %v562
      %v572 = vpack.c.b16 %v570, %v570
      %v573 = vpack.c.b16 %v571, %v571
      %v575 = vsel %vm507, %v561, 0
      %v578 = vsel %vm511, %v572, 0
      %v581 = vsel %vm511, %v573, 0
      %583 = vmatprep.subr.bf16.mxu0 %v581
      %584 = vmatpush1.bf16.msra.mxu0 %v578
      %585 = vmatprep.subr.bf16.mxu0 0
      %586 = vmatpush1.bf16.msra.mxu0 0
      %587 = vmatprep.subr.bf16.mxu0 0
      %588 = vmatpush1.bf16.msra.mxu0 0
      %589 = vmatprep.subr.bf16.mxu0 0
      %590 = vmatpush1.bf16.msra.mxu0 0
      %591 = vmatprep.subr.bf16.mxu0 0
      %592 = vmatpush1.bf16.msra.mxu0 0
      %593 = vmatprep.subr.bf16.mxu0 0
      %594 = vmatpush1.bf16.msra.mxu0 0
      %595 = vmatprep.subr.bf16.mxu0 0
      %596 = vmatpush1.bf16.msra.mxu0 0
      %597 = vmatprep.subr.bf16.mxu0 0
      %598 = vmatpush1.bf16.msra.mxu0 0
      %599 = vmatprep.subr.bf16.mxu0 0
      %600 = vmatpush1.bf16.msra.mxu0 0
      %601 = vmatprep.subr.bf16.mxu0 0
      %602 = vmatpush1.bf16.msra.mxu0 0
      %603 = vmatprep.subr.bf16.mxu0 0
      %604 = vmatpush1.bf16.msra.mxu0 0
      %605 = vmatprep.subr.bf16.mxu0 0
      %606 = vmatpush1.bf16.msra.mxu0 0
      %607 = vmatprep.subr.bf16.mxu0 0
      %608 = vmatpush1.bf16.msra.mxu0 0
      %609 = vmatprep.subr.bf16.mxu0 0
      %610 = vmatpush1.bf16.msra.mxu0 0
      %611 = vmatprep.subr.bf16.mxu0 0
      %612 = vmatpush1.bf16.msra.mxu0 0
      %613 = vmatprep.subr.bf16.mxu0 0
      %614 = vmatpush1.bf16.msra.mxu0 0
      %615 = vmatprep.mubr.bf16.mxu0 0
      %616 = vmatmul.mubr.bf16.gmra.mrb[0].mxu0 %v575
      %v617 = vpop.f32.mrb[0].mxu0
      %v618 = vadd.f32 %v567, %v617
      %v619 = vpop.f32.mrb[0].mxu0
      %v620 = vadd.f32 %v567, %v619
      %v621 = vpop.f32.mrb[0].mxu0
      %v622 = vpop.f32.mrb[0].mxu0
      %623 = vdwg.mxu0
      %v624 = vmax.f32 %v618, 0.0
      %v625 = vmax.f32 %v620, 0.0
      %v626 = vld [vmem:[%s7] sm:$0x3]
      %v627 = vld [vmem:[%s8] sm:$0x3]
      %629 = vset.pattern.permute.xlu0 0
      %630 = vperm.xlu0 %629, %v627
      %v631 = vpop.permute.xlu0 %630
      %vm633 = vcmask 31744
      %v635 = vsel %vm633, %v626, 0
      %v638 = vsel %vm511, %v624, 0
      %v641 = vsel %vm511, %v625, 0
      %643 = vmatprep.subr.mxu0 %v641
      %644 = vmatpush1.msra.mxu0 %v638
      %645 = vmatprep.subr.mxu0 0.0
      %646 = vmatpush1.msra.mxu0 0.0
      %647 = vmatprep.subr.mxu0 0.0
      %648 = vmatpush1.msra.mxu0 0.0
      %649 = vmatprep.subr.mxu0 0.0
      %650 = vmatpush1.msra.mxu0 0.0
      %651 = vmatprep.subr.mxu0 0.0
      %652 = vmatpush1.msra.mxu0 0.0
      %653 = vmatprep.subr.mxu0 0.0
      %654 = vmatpush1.msra.mxu0 0.0
      %655 = vmatprep.subr.mxu0 0.0
      %656 = vmatpush1.msra.mxu0 0.0
      %657 = vmatprep.subr.mxu0 0.0
      %658 = vmatpush1.msra.mxu0 0.0
      %659 = vmatprep.subr.mxu0 0.0
      %660 = vmatpush1.msra.mxu0 0.0
      %661 = vmatprep.subr.mxu0 0.0
      %662 = vmatpush1.msra.mxu0 0.0
      %663 = vmatprep.subr.mxu0 0.0
      %664 = vmatpush1.msra.mxu0 0.0
      %665 = vmatprep.subr.mxu0 0.0
      %666 = vmatpush1.msra.mxu0 0.0
      %667 = vmatprep.subr.mxu0 0.0
      %668 = vmatpush1.msra.mxu0 0.0
      %669 = vmatprep.subr.mxu0 0.0
      %670 = vmatpush1.msra.mxu0 0.0
      %671 = vmatprep.subr.mxu0 0.0
      %672 = vmatpush1.msra.mxu0 0.0
      %673 = vmatprep.subr.mxu0 0.0
      %674 = vmatpush1.msra.mxu0 0.0
      %675 = vmatprep.subr.mxu0 0.0
      %676 = vmatpush1.msra.mxu0 0.0
      %677 = vmatprep.subr.mxu0 0.0
      %678 = vmatpush1.msra.mxu0 0.0
      %679 = vmatprep.subr.mxu0 0.0
      %680 = vmatpush1.msra.mxu0 0.0
      %681 = vmatprep.subr.mxu0 0.0
      %682 = vmatpush1.msra.mxu0 0.0
      %683 = vmatprep.subr.mxu0 0.0
      %684 = vmatpush1.msra.mxu0 0.0
      %685 = vmatprep.subr.mxu0 0.0
      %686 = vmatpush1.msra.mxu0 0.0
      %687 = vmatprep.subr.mxu0 0.0
      %688 = vmatpush1.msra.mxu0 0.0
      %689 = vmatprep.subr.mxu0 0.0
      %690 = vmatpush1.msra.mxu0 0.0
      %691 = vmatprep.subr.mxu0 0.0
      %692 = vmatpush1.msra.mxu0 0.0
      %693 = vmatprep.subr.mxu0 0.0
      %694 = vmatpush1.msra.mxu0 0.0
      %695 = vmatprep.subr.mxu0 0.0
      %696 = vmatpush1.msra.mxu0 0.0
      %697 = vmatprep.subr.mxu0 0.0
      %698 = vmatpush1.msra.mxu0 0.0
      %699 = vmatprep.subr.mxu0 0.0
      %700 = vmatpush1.msra.mxu0 0.0
      %701 = vmatprep.subr.mxu0 0.0
      %702 = vmatpush1.msra.mxu0 0.0
      %703 = vmatprep.subr.mxu0 0.0
      %704 = vmatpush1.msra.mxu0 0.0
      %705 = vmatprep.subr.mxu0 0.0
      %706 = vmatpush1.msra.mxu0 0.0
      %707 = vmatprep.mubr.f32.mxu0 0.0
      %708 = vmatmul.mubr.f32.gmra.mrb[0].mxu0 %v635
      %v709 = vpop.f32.mrb[0].mxu0
      %v710 = vadd.f32 %v631, %v709
      %v711 = vpop.f32.mrb[0].mxu0
      %v712 = vadd.f32 %v631, %v711
      %713 = vdwg.mxu0
      %v714 = vmax.f32 %v710, 0.0
      %v715 = vmax.f32 %v712, 0.0
      %v716 = vld [vmem:[%s2] sm:$0x3]
      %v717 = vand.u32 %v716, 1
      %vm718 = vcmp.ne.s32.totalorder %v717, 0
      %v719 = vand.u32 %v716, 2
      %vm720 = vcmp.ne.s32.totalorder %v719, 0
      %v721 = vand.u32 %v716, 4
      %vm722 = vcmp.ne.s32.totalorder %v721, 0
      %v723 = vand.u32 %v716, 8
      %vm724 = vcmp.ne.s32.totalorder %v723, 0
      %725 = vrot.lane.b32.xlu0 %v559, 127
      %v726 = vpop.permute.xlu0 %725
      %727 = vrot.lane.b32.xlu0 %v560, 127
      %v728 = vpop.permute.xlu0 %727
      %v729 = vlaneseq
      %v730 = vand.u32 %v729, 127
      %vm731 = vcmp.lt.s32.totalorder %v730, 127
      %v732 = vsel %vm731, %v726, %v728
      %v733 = vsel %vm731, %v728, %v726
      %734 = vrot.lane.b32.xlu0 %v559, 1
      %v735 = vpop.permute.xlu0 %734
      %736 = vrot.lane.b32.xlu0 %v560, 1
      %v737 = vpop.permute.xlu0 %736
      %vm738 = vcmp.lt.s32.totalorder %v730, 1
      %v739 = vsel %vm738, %v735, %v737
      %v740 = vsel %vm738, %v737, %v735
      %v741 = vsel %vm718, 1, 0
      %v742 = vlaneseq
      %v743 = vshrl.u32 %v742, 7
      %v744 = vsub.s32 0, %v743
      %v745 = vrot.slane %v741, %v744
      %v746 = vlaneseq
      %v747 = vshrl.u32 %v746, 7
      %v748 = vsub.s32 1, %v747
      %v749 = vrot.slane %v741, %v748
      %vm750 = vcmp.eq.s32.totalorder %v745, 1
      %vm751 = vcmp.eq.s32.totalorder %v749, 1
      %v752 = vsel %vm750, %v732, %v740
      %v753 = vsel %vm751, %v733, %v739
      %v754 = vsel %vm720, 1, 0
      %v755 = vlaneseq
      %v756 = vshrl.u32 %v755, 7
      %v757 = vsub.s32 0, %v756
      %v758 = vrot.slane %v754, %v757
      %v759 = vlaneseq
      %v760 = vshrl.u32 %v759, 7
      %v761 = vsub.s32 1, %v760
      %v762 = vrot.slane %v754, %v761
      %vm763 = vcmp.eq.s32.totalorder %v758, 1
      %vm764 = vcmp.eq.s32.totalorder %v762, 1
      %v765 = vsel %vm763, %v740, %v732
      %v766 = vsel %vm764, %v739, %v733
      %767 = vrot.lane.b32.xlu0 %v752, 112
      %v768 = vpop.permute.xlu0 %767
      %769 = vrot.lane.b32.xlu0 %v753, 112
      %v770 = vpop.permute.xlu0 %769
      %vm771 = vcmp.lt.s32.totalorder %v730, 112
      %v772 = vsel %vm771, %v768, %v770
      %v773 = vsel %vm771, %v770, %v768
      %774 = vrot.lane.b32.xlu0 %v752, 16
      %v775 = vpop.permute.xlu0 %774
      %776 = vrot.lane.b32.xlu0 %v753, 16
      %v777 = vpop.permute.xlu0 %776
      %vm778 = vcmp.lt.s32.totalorder %v730, 16
      %v779 = vsel %vm778, %v775, %v777
      %v780 = vsel %vm778, %v777, %v775
      %v781 = vsel %vm722, 1, 0
      %v782 = vlaneseq
      %v783 = vshrl.u32 %v782, 7
      %v784 = vsub.s32 0, %v783
      %v785 = vrot.slane %v781, %v784
      %v786 = vlaneseq
      %v787 = vshrl.u32 %v786, 7
      %v788 = vsub.s32 1, %v787
      %v789 = vrot.slane %v781, %v788
      %vm790 = vcmp.eq.s32.totalorder %v785, 1
      %vm791 = vcmp.eq.s32.totalorder %v789, 1
      %v792 = vsel %vm790, %v772, %v780
      %v793 = vsel %vm791, %v773, %v779
      %v794 = vsel %vm724, 1, 0
      %v795 = vlaneseq
      %v796 = vshrl.u32 %v795, 7
      %v797 = vsub.s32 0, %v796
      %v798 = vrot.slane %v794, %v797
      %v799 = vlaneseq
      %v800 = vshrl.u32 %v799, 7
      %v801 = vsub.s32 1, %v800
      %v802 = vrot.slane %v794, %v801
      %vm803 = vcmp.eq.s32.totalorder %v798, 1
      %vm804 = vcmp.eq.s32.totalorder %v802, 1
      %v805 = vsel %vm803, %v780, %v772
      %v806 = vsel %vm804, %v779, %v773
      %807 = vst [vmem:[#allocation2] sm:$0xf] %v792
      %808 = vst [vmem:[#allocation2 + $0x8] sm:$0xf] %v793
      %v811 = vrot.slane %v752, 4
      %v812 = vrot.slane %v753, 4
      %815 = vst [vmem:[#allocation2 + $0x10] sm:$0xf0] %v811
      %816 = vst [vmem:[#allocation2 + $0x18] sm:$0xf0] %v812
      %817 = vst [vmem:[#allocation2 + $0x30] sm:$0xf] %v805
      %818 = vst [vmem:[#allocation2 + $0x38] sm:$0xf] %v806
      %819 = vrot.lane.b32.xlu0 %v559, 112
      %v820 = vpop.permute.xlu0 %819
      %821 = vrot.lane.b32.xlu0 %v560, 112
      %v822 = vpop.permute.xlu0 %821
      %v823 = vsel %vm771, %v820, %v822
      %v824 = vsel %vm771, %v822, %v820
      %825 = vrot.lane.b32.xlu0 %v559, 16
      %v826 = vpop.permute.xlu0 %825
      %827 = vrot.lane.b32.xlu0 %v560, 16
      %v828 = vpop.permute.xlu0 %827
      %v829 = vsel %vm778, %v826, %v828
      %v830 = vsel %vm778, %v828, %v826
      %v831 = vsel %vm790, %v823, %v830
      %v832 = vsel %vm791, %v824, %v829
      %v833 = vsel %vm803, %v830, %v823
      %v834 = vsel %vm804, %v829, %v824
      %v837 = vrot.slane %v831, 4
      %v838 = vrot.slane %v832, 4
      %841 = vst [vmem:[#allocation2] sm:$0xf0] %v837
      %842 = vst [vmem:[#allocation2 + $0x8] sm:$0xf0] %v838
      %843 = vst [vmem:[#allocation2 + $0x20] sm:$0xf] %v559
      %844 = vst [vmem:[#allocation2 + $0x28] sm:$0xf] %v560
      %v847 = vrot.slane %v833, 4
      %v848 = vrot.slane %v834, 4
      %851 = vst [vmem:[#allocation2 + $0x30] sm:$0xf0] %v847
      %852 = vst [vmem:[#allocation2 + $0x38] sm:$0xf0] %v848
      %853 = vrot.lane.b32.xlu0 %v765, 112
      %v854 = vpop.permute.xlu0 %853
      %855 = vrot.lane.b32.xlu0 %v766, 112
      %v856 = vpop.permute.xlu0 %855
      %v857 = vsel %vm771, %v854, %v856
      %v858 = vsel %vm771, %v856, %v854
      %859 = vrot.lane.b32.xlu0 %v765, 16
      %v860 = vpop.permute.xlu0 %859
      %861 = vrot.lane.b32.xlu0 %v766, 16
      %v862 = vpop.permute.xlu0 %861
      %v863 = vsel %vm778, %v860, %v862
      %v864 = vsel %vm778, %v862, %v860
      %v865 = vsel %vm790, %v857, %v864
      %v866 = vsel %vm791, %v858, %v863
      %v867 = vsel %vm803, %v864, %v857
      %v868 = vsel %vm804, %v863, %v858
      %869 = vst [vmem:[#allocation2 + $0x10] sm:$0xf] %v865
      %870 = vst [vmem:[#allocation2 + $0x18] sm:$0xf] %v866
      %v873 = vrot.slane %v765, 4
      %v874 = vrot.slane %v766, 4
      %877 = vst [vmem:[#allocation2 + $0x20] sm:$0xf0] %v873
      %878 = vst [vmem:[#allocation2 + $0x28] sm:$0xf0] %v874
      %879 = vst [vmem:[#allocation2 + $0x40] sm:$0xf] %v867
      %880 = vst [vmem:[#allocation2 + $0x48] sm:$0xf] %v868
      %881 = vrot.lane.b32.xlu0 %v624, 127
      %v882 = vpop.permute.xlu0 %881
      %883 = vrot.lane.b32.xlu0 %v625, 127
      %v884 = vpop.permute.xlu0 %883
      %v885 = vsel %vm731, %v882, %v884
      %v886 = vsel %vm731, %v884, %v882
      %887 = vrot.lane.b32.xlu0 %v624, 1
      %v888 = vpop.permute.xlu0 %887
      %889 = vrot.lane.b32.xlu0 %v625, 1
      %v890 = vpop.permute.xlu0 %889
      %v891 = vsel %vm738, %v888, %v890
      %v892 = vsel %vm738, %v890, %v888
      %v893 = vsel %vm750, %v885, %v892
      %v894 = vsel %vm751, %v886, %v891
      %v895 = vsel %vm763, %v892, %v885
      %v896 = vsel %vm764, %v891, %v886
      %897 = vrot.lane.b32.xlu0 %v893, 112
      %v898 = vpop.permute.xlu0 %897
      %899 = vrot.lane.b32.xlu0 %v894, 112
      %v900 = vpop.permute.xlu0 %899
      %v901 = vsel %vm771, %v898, %v900
      %v902 = vsel %vm771, %v900, %v898
      %903 = vrot.lane.b32.xlu0 %v893, 16
      %v904 = vpop.permute.xlu0 %903
      %905 = vrot.lane.b32.xlu0 %v894, 16
      %v906 = vpop.permute.xlu0 %905
      %v907 = vsel %vm778, %v904, %v906
      %v908 = vsel %vm778, %v906, %v904
      %v909 = vsel %vm790, %v901, %v908
      %v910 = vsel %vm791, %v902, %v907
      %v911 = vsel %vm803, %v908, %v901
      %v912 = vsel %vm804, %v907, %v902
      %v915 = vrot.slane %v909, 4
      %v916 = vrot.slane %v910, 4
      %919 = vst [vmem:[#allocation2 + $0x40] sm:$0xf0] %v915
      %920 = vst [vmem:[#allocation2 + $0x48] sm:$0xf0] %v916
      %921 = vst [vmem:[#allocation2 + $0x60] sm:$0xf] %v893
      %922 = vst [vmem:[#allocation2 + $0x68] sm:$0xf] %v894
      %v925 = vrot.slane %v911, 4
      %v926 = vrot.slane %v912, 4
      %929 = vst [vmem:[#allocation2 + $0x70] sm:$0xf0] %v925
      %930 = vst [vmem:[#allocation2 + $0x78] sm:$0xf0] %v926
      %931 = vrot.lane.b32.xlu0 %v624, 112
      %v932 = vpop.permute.xlu0 %931
      %933 = vrot.lane.b32.xlu0 %v625, 112
      %v934 = vpop.permute.xlu0 %933
      %v935 = vsel %vm771, %v932, %v934
      %v936 = vsel %vm771, %v934, %v932
      %937 = vrot.lane.b32.xlu0 %v624, 16
      %v938 = vpop.permute.xlu0 %937
      %939 = vrot.lane.b32.xlu0 %v625, 16
      %v940 = vpop.permute.xlu0 %939
      %v941 = vsel %vm778, %v938, %v940
      %v942 = vsel %vm778, %v940, %v938
      %v943 = vsel %vm790, %v935, %v942
      %v944 = vsel %vm791, %v936, %v941
      %v945 = vsel %vm803, %v942, %v935
      %v946 = vsel %vm804, %v941, %v936
      %947 = vst [vmem:[#allocation2 + $0x50] sm:$0xf] %v943
      %948 = vst [vmem:[#allocation2 + $0x58] sm:$0xf] %v944
      %v949 = vrot.slane %v624, 4
      %v950 = vrot.slane %v625, 4
      %953 = vst [vmem:[#allocation2 + $0x60] sm:$0xf0] %v949
      %954 = vst [vmem:[#allocation2 + $0x68] sm:$0xf0] %v950
      %955 = vst [vmem:[#allocation2 + $0x80] sm:$0xf] %v945
      %956 = vst [vmem:[#allocation2 + $0x88] sm:$0xf] %v946
      %957 = vrot.lane.b32.xlu0 %v895, 112
      %v958 = vpop.permute.xlu0 %957
      %959 = vrot.lane.b32.xlu0 %v896, 112
      %v960 = vpop.permute.xlu0 %959
      %v961 = vsel %vm771, %v958, %v960
      %v962 = vsel %vm771, %v960, %v958
      %963 = vrot.lane.b32.xlu0 %v895, 16
      %v964 = vpop.permute.xlu0 %963
      %965 = vrot.lane.b32.xlu0 %v896, 16
      %v966 = vpop.permute.xlu0 %965
      %v967 = vsel %vm778, %v964, %v966
      %v968 = vsel %vm778, %v966, %v964
      %v969 = vsel %vm790, %v961, %v968
      %v970 = vsel %vm791, %v962, %v967
      %v971 = vsel %vm803, %v968, %v961
      %v972 = vsel %vm804, %v967, %v962
      %v975 = vrot.slane %v969, 4
      %v976 = vrot.slane %v970, 4
      %979 = vst [vmem:[#allocation2 + $0x50] sm:$0xf0] %v975
      %980 = vst [vmem:[#allocation2 + $0x58] sm:$0xf0] %v976
      %981 = vst [vmem:[#allocation2 + $0x70] sm:$0xf] %v895
      %982 = vst [vmem:[#allocation2 + $0x78] sm:$0xf] %v896
      %v985 = vrot.slane %v971, 4
      %v986 = vrot.slane %v972, 4
      %989 = vst [vmem:[#allocation2 + $0x80] sm:$0xf0] %v985
      %990 = vst [vmem:[#allocation2 + $0x88] sm:$0xf0] %v986
      %v991 = vld [vmem:[%s9] sm:$0xff]
      %v992 = vld [vmem:[#allocation2] sm:$0xff]
      %v993 = vld [vmem:[#allocation2 + $0x8] sm:$0xff]
      %v994 = vld [vmem:[#allocation2 + $0x10] sm:$0xff]
      %v995 = vld [vmem:[#allocation2 + $0x18] sm:$0xff]
      %v996 = vld [vmem:[#allocation2 + $0x20] sm:$0xff]
      %v997 = vld [vmem:[#allocation2 + $0x28] sm:$0xff]
      %v998 = vld [vmem:[#allocation2 + $0x30] sm:$0xff]
      %v999 = vld [vmem:[#allocation2 + $0x38] sm:$0xff]
      %v1000 = vld [vmem:[#allocation2 + $0x40] sm:$0xff]
      %v1001 = vld [vmem:[#allocation2 + $0x48] sm:$0xff]
      %v1002 = vld [vmem:[#allocation2 + $0x50] sm:$0xff]
      %v1003 = vld [vmem:[#allocation2 + $0x58] sm:$0xff]
      %v1004 = vld [vmem:[#allocation2 + $0x60] sm:$0xff]
      %v1005 = vld [vmem:[#allocation2 + $0x68] sm:$0xff]
      %v1006 = vld [vmem:[#allocation2 + $0x70] sm:$0xff]
      %v1007 = vld [vmem:[#allocation2 + $0x78] sm:$0xff]
      %v1008 = vld [vmem:[#allocation2 + $0x80] sm:$0xff]
      %v1009 = vld [vmem:[#allocation2 + $0x88] sm:$0xff]
      %v1010 = vld [vmem:[%s10] sm:$0xff]
      %1012 = vset.pattern.permute.xlu0 0
      %1013 = vperm.xlu0 %1012, %v1010
      %v1014 = vpop.permute.xlu0 %1013
      %vm1016 = vcmask 588800
      %v1018 = vsel %vm1016, %v991, 0
      %1020 = vmatprep.subr.mxu0 %v993
      %1021 = vmatpush1.msra.mxu0 %v992
      %1022 = vmatprep.subr.mxu0 %v995
      %1023 = vmatpush1.msra.mxu0 %v994
      %1024 = vmatprep.subr.mxu0 %v997
      %1025 = vmatpush1.msra.mxu0 %v996
      %1026 = vmatprep.subr.mxu0 %v999
      %1027 = vmatpush1.msra.mxu0 %v998
      %1028 = vmatprep.subr.mxu0 %v1001
      %1029 = vmatpush1.msra.mxu0 %v1000
      %1030 = vmatprep.subr.mxu0 %v1003
      %1031 = vmatpush1.msra.mxu0 %v1002
      %1032 = vmatprep.subr.mxu0 %v1005
      %1033 = vmatpush1.msra.mxu0 %v1004
      %1034 = vmatprep.subr.mxu0 %v1007
      %1035 = vmatpush1.msra.mxu0 %v1006
      %1036 = vmatprep.subr.mxu0 %v1009
      %1037 = vmatpush1.msra.mxu0 %v1008
      %1038 = vmatprep.subr.mxu0 0.0
      %1039 = vmatpush1.msra.mxu0 0.0
      %1040 = vmatprep.subr.mxu0 0.0
      %1041 = vmatpush1.msra.mxu0 0.0
      %1042 = vmatprep.subr.mxu0 0.0
      %1043 = vmatpush1.msra.mxu0 0.0
      %1044 = vmatprep.subr.mxu0 0.0
      %1045 = vmatpush1.msra.mxu0 0.0
      %1046 = vmatprep.subr.mxu0 0.0
      %1047 = vmatpush1.msra.mxu0 0.0
      %1048 = vmatprep.subr.mxu0 0.0
      %1049 = vmatpush1.msra.mxu0 0.0
      %1050 = vmatprep.subr.mxu0 0.0
      %1051 = vmatpush1.msra.mxu0 0.0
      %1052 = vmatprep.subr.mxu0 0.0
      %1053 = vmatpush1.msra.mxu0 0.0
      %1054 = vmatprep.subr.mxu0 0.0
      %1055 = vmatpush1.msra.mxu0 0.0
      %1056 = vmatprep.subr.mxu0 0.0
      %1057 = vmatpush1.msra.mxu0 0.0
      %1058 = vmatprep.subr.mxu0 0.0
      %1059 = vmatpush1.msra.mxu0 0.0
      %1060 = vmatprep.subr.mxu0 0.0
      %1061 = vmatpush1.msra.mxu0 0.0
      %1062 = vmatprep.subr.mxu0 0.0
      %1063 = vmatpush1.msra.mxu0 0.0
      %1064 = vmatprep.subr.mxu0 0.0
      %1065 = vmatpush1.msra.mxu0 0.0
      %1066 = vmatprep.subr.mxu0 0.0
      %1067 = vmatpush1.msra.mxu0 0.0
      %1068 = vmatprep.subr.mxu0 0.0
      %1069 = vmatpush1.msra.mxu0 0.0
      %1070 = vmatprep.subr.mxu0 0.0
      %1071 = vmatpush1.msra.mxu0 0.0
      %1072 = vmatprep.subr.mxu0 0.0
      %1073 = vmatpush1.msra.mxu0 0.0
      %1074 = vmatprep.subr.mxu0 0.0
      %1075 = vmatpush1.msra.mxu0 0.0
      %1076 = vmatprep.subr.mxu0 0.0
      %1077 = vmatpush1.msra.mxu0 0.0
      %1078 = vmatprep.subr.mxu0 0.0
      %1079 = vmatpush1.msra.mxu0 0.0
      %1080 = vmatprep.subr.mxu0 0.0
      %1081 = vmatpush1.msra.mxu0 0.0
      %1082 = vmatprep.subr.mxu0 0.0
      %1083 = vmatpush1.msra.mxu0 0.0
      %1084 = vmatprep.mubr.f32.mxu0 0.0
      %1085 = vmatmul.mubr.f32.gmra.mrb[0].mxu0 %v1018
      %v1086 = vpop.f32.mrb[0].mxu0
      %v1087 = vadd.f32 %v1014, %v1086
      %v1088 = vpop.f32.mrb[0].mxu0
      %v1089 = vadd.f32 %v1014, %v1088
      %1090 = vdwg.mxu0
      %v1091 = vmax.f32 %v1087, 0.0
      %v1092 = vmax.f32 %v1089, 0.0
      %v1093 = vpack.c.bf16 %v1091, %v1091
      %v1094 = vpack.c.bf16 %v1092, %v1092
      %v1097 = vunpack.c.l.b16 %v1093
      %v1098 = vunpack.c.l.b16 %v1094
      %v1099 = vpack.c.b16 %v1098, %v1097
      %1101 = vst [vmem:[%s479] sm:$0xff] %v1099
      %v1102 = vpack.c.bf16 %v559, %v559
      %v1103 = vpack.c.bf16 %v560, %v560
      %v1106 = vcombine.low %v1102, %v1103
      %v1108 = vunpack.c.l.s4 1983009808
      %v1109 = vunpack.c.0.s8 %v1108
      %v1110 = vlaneseq
      %v1111 = vshrl.u32 %v1110, 7
      %v1112 = vsub.s32 %v1109, %v1111
      %v1113 = vrot.slane %v1106, %v1112
      %1115 = vst [vmem:[%s485] sm:$0xf] %v1113
      %v1118 = vcombine.low %v714, %v715
      %v1120 = vunpack.c.l.s4 1983009808
      %v1121 = vunpack.c.0.s8 %v1120
      %v1122 = vlaneseq
      %v1123 = vshrl.u32 %v1122, 7
      %v1124 = vsub.s32 %v1121, %v1123
      %v1125 = vrot.slane %v1118, %v1124
      %1127 = vst [vmem:[%s491] sm:$0xf] %v1125
      %s1128 = smul.u32 2, %s25
      %p1129 = scmp.lt.s32.totalorder %s1128, 3
      %s1130 = scalar_select %p1129, %s1128, 3
      %s1131 = smul.addr %s1130, 4
      %s1132 = scalar_lea.vmem %s11, %s1131
      %s1133 = smul.u32 2, %s25
      %p1134 = scmp.lt.s32.totalorder %s1133, 3
      %s1135 = scalar_select %p1134, %s1133, 3
      %s1136 = smul.addr %s1135, 2
      %s1137 = scalar_lea.vmem %s12, %s1136
      %s1138 = smul.u32 2, %s25
      %p1139 = scmp.lt.s32.totalorder %s1138, 3
      %s1140 = scalar_select %p1139, %s1138, 3
      %s1141 = smul.addr %s1140, 2
      %s1142 = scalar_lea.vmem %s13, %s1141
      // Predicated region
      $region65: #{two_stream_lffc_resnet_block.6} parent=63 // pred_check
        %p1143 = pneg %p284
      $region66: #{two_stream_lffc_resnet_block.6} parent=63 // pred_check_branch
        %1145 = sbr.rel (%p1143) target = $region68
      $region67: #{two_stream_lffc_resnet_block.6} parent=63 // pred_region
        %s1146 = smul.u32 2, %s25
      $region68: #{two_stream_lffc_resnet_block.6} parent=63 // pred_fallthru
        _
      // Predicated region
      $region69: #{two_stream_lffc_resnet_block.6} parent=63 // pred_check
        %p1147 = pneg %p310
      $region70: #{two_stream_lffc_resnet_block.6} parent=63 // pred_check_branch
        %1149 = sbr.rel (%p1147) target = $region72
      $region71: #{two_stream_lffc_resnet_block.6} parent=63 // pred_region
        %s1150 = smul.u32 2, %s25
      $region72: #{two_stream_lffc_resnet_block.6} parent=63 // pred_fallthru
        _
      // Predicated region
      $region73: #{two_stream_lffc_resnet_block.6} parent=63 // pred_check
        %p1151 = pneg %p336
      $region74: #{two_stream_lffc_resnet_block.6} parent=63 // pred_check_branch
        %1153 = sbr.rel (%p1151) target = $region76
      $region75: #{two_stream_lffc_resnet_block.6} parent=63 // pred_region
        %s1154 = smul.u32 2, %s25
      $region76: #{two_stream_lffc_resnet_block.6} parent=63 // pred_fallthru
        _
    $region64: #{two_stream_lffc_resnet_block.6} parent=5 // pred_fallthru
      _
    %p1155 = scmp.le.s32.totalorder 2, %s20
    // Predicated region
    $region77: #{two_stream_lffc_resnet_block.6} parent=5 // pred_check
      %p1156 = pneg %p1155
    $region78: #{two_stream_lffc_resnet_block.6} parent=5 // pred_check_branch
      %1158 = sbr.rel (%p1156) target = $region80
    $region79: #{two_stream_lffc_resnet_block.6} parent=5 // pred_region
      %s1159 = ssub.s32 %s20, 2
      // Predicated region
      $region81: #{two_stream_lffc_resnet_block.6} parent=79 // pred_check
        %p1160 = pneg %p290
      $region82: #{two_stream_lffc_resnet_block.6} parent=79 // pred_check_branch
        %1162 = sbr.rel (%p1160) target = $region84
      $region83: #{two_stream_lffc_resnet_block.6} parent=79 // pred_region
        %s1163 = smul.u32 2, %s26
        %p1164 = scmp.lt.s32.totalorder %s1163, 3
        %s1165 = scalar_select %p1164, %s1163, 3
        %s1166 = smul.addr %s1165, 4
        %s1167 = scalar_lea.vmem %s11, %s1166
      $region84: #{two_stream_lffc_resnet_block.6} parent=79 // pred_fallthru
        _
      // Predicated region
      $region85: #{two_stream_lffc_resnet_block.6} parent=79 // pred_check
        %p1168 = pneg %p316
      $region86: #{two_stream_lffc_resnet_block.6} parent=79 // pred_check_branch
        %1170 = sbr.rel (%p1168) target = $region88
      $region87: #{two_stream_lffc_resnet_block.6} parent=79 // pred_region
        %s1171 = smul.u32 2, %s26
        %p1172 = scmp.lt.s32.totalorder %s1171, 3
        %s1173 = scalar_select %p1172, %s1171, 3
        %s1174 = smul.addr %s1173, 2
        %s1175 = scalar_lea.vmem %s12, %s1174
      $region88: #{two_stream_lffc_resnet_block.6} parent=79 // pred_fallthru
        _
      // Predicated region
      $region89: #{two_stream_lffc_resnet_block.6} parent=79 // pred_check
        %p1176 = pneg %p342
      $region90: #{two_stream_lffc_resnet_block.6} parent=79 // pred_check_branch
        %1178 = sbr.rel (%p1176) target = $region92
      $region91: #{two_stream_lffc_resnet_block.6} parent=79 // pred_region
        %s1179 = smul.u32 2, %s26
        %p1180 = scmp.lt.s32.totalorder %s1179, 3
        %s1181 = scalar_select %p1180, %s1179, 3
        %s1182 = smul.addr %s1181, 2
        %s1183 = scalar_lea.vmem %s13, %s1182
      $region92: #{two_stream_lffc_resnet_block.6} parent=79 // pred_fallthru
        _
    $region80: #{two_stream_lffc_resnet_block.6} parent=5 // pred_fallthru
      _
  $region6: #{two_stream_lffc_resnet_block.6} parent=0 // loop_footer
    %s24 = sadd.s32 1, %s20
  $region7: #{two_stream_lffc_resnet_block.6} parent=0 // loop_footer_branch
    %19 = sbr.rel target = $region3
  $region8: #{two_stream_lffc_resnet_block.6} parent=0 // loop_exit
    _

// kernel: reverse.4
$region0: #{reverse.4}
  %s0 = inlined_call_operand.vmem [shape: f32[2,2,16,7], index: 0, kind: input, shape index: {}]
  %s1 = inlined_call_operand.vmem [shape: f32[2,2,16,7], index: 1, kind: output, shape index: {}]
  $region1: #{reverse.4} parent=0
    #allocation0 [shape = 'u8[32768]{0}', space=vmem, size = 0x8000, scoped, tag = 'operand span for operand 0']
    #allocation1 [shape = 'u8[16384]{0}', space=vmem, size = 0x4000, scoped, tag = 'operand span for operand 1']
    %s2 = scalar_lea.vmem [#allocation0], 8
    // Predicated region
    $region2: #{reverse.4} parent=1 // pred_check
      _
    $region3: #{reverse.4} parent=1 // pred_check_branch
      %4 = sbr.rel (0) target = $region5
    $region4: #{reverse.4} parent=1 // pred_region
      // Predicated region
      $region6: #{reverse.4} parent=4 // pred_check
        _
      $region7: #{reverse.4} parent=4 // pred_check_branch
        %6 = sbr.rel (0) target = $region9
      $region8: #{reverse.4} parent=4 // pred_region
        // Predicated region
        $region21: #{reverse.4} parent=8 // pred_check
          _
        $region22: #{reverse.4} parent=8 // pred_check_branch
          %27 = sbr.rel (0) target = $region24
        $region23: #{reverse.4} parent=8 // pred_region
          loop: start=0, step=1, limit=1
          $region25: #{reverse.4} parent=23 // loop_pre_header
            _
          $region26: #{reverse.4} parent=23 // loop_header
            %s29 = sphi 0, %s33
            %p30 = scmp.ge.s32.totalorder %s29, 1
            %s34 = sphi %s0, %s0
            %s35 = sphi %s2, %s2
          $region27: #{reverse.4} parent=23 // loop_header_branch
            %32 = sbr.rel (%p30) target = $region31
          $region28: #{reverse.4} parent=23 // loop_body
            %v36 = vld [vmem:[%s34] sm:$0xff]
            %37 = vst [vmem:[%s35] sm:$0xff] %v36
            %v38 = vld [vmem:[%s34 + $0x8] sm:$0xff]
            %39 = vst [vmem:[%s35 + $0x10] sm:$0xff] %v38
            %v40 = vld [vmem:[%s34 + $0x10] sm:$0xff]
            %41 = vst [vmem:[%s35 + $0x20] sm:$0xff] %v40
            %v42 = vld [vmem:[%s34 + $0x18] sm:$0xff]
            %43 = vst [vmem:[%s35 + $0x30] sm:$0xff] %v42
          $region29: #{reverse.4} parent=23 // loop_footer
            %s33 = sadd.s32 1, %s29
          $region30: #{reverse.4} parent=23 // loop_footer_branch
            %28 = sbr.rel target = $region26
          $region31: #{reverse.4} parent=23 // loop_exit
            _
        $region24: #{reverse.4} parent=8 // pred_fallthru
          _
        // Predicated region
        $region32: #{reverse.4} parent=8 // pred_check
          _
        $region33: #{reverse.4} parent=8 // pred_check_branch
          %45 = sbr.rel target = $region35
        $region34: #{reverse.4} parent=8 // pred_region
          _
        $region35: #{reverse.4} parent=8 // pred_fallthru
          _
      $region9: #{reverse.4} parent=4 // pred_fallthru
        _
      // Predicated region
      $region10: #{reverse.4} parent=4 // pred_check
        _
      $region11: #{reverse.4} parent=4 // pred_check_branch
        %8 = sbr.rel target = $region13
      $region12: #{reverse.4} parent=4 // pred_region
        loop: start=0, step=1, limit=1
        $region14: #{reverse.4} parent=12 // loop_pre_header
          _
        $region15: #{reverse.4} parent=12 // loop_header
          %s11 = sphi 0, %s15
          %p12 = scmp.ge.s32.totalorder %s11, 1
          %s16 = sphi %s0, %s0
          %s17 = sphi %s2, %s2
        $region16: #{reverse.4} parent=12 // loop_header_branch
          %14 = sbr.rel (%p12) target = $region20
        $region17: #{reverse.4} parent=12 // loop_body
          %v18 = vld [vmem:[%s16] sm:$0xff]
          %19 = vst [vmem:[%s17] sm:$0xff] %v18
          %v20 = vld [vmem:[%s16 + $0x8] sm:$0xff]
          %21 = vst [vmem:[%s17 + $0x10] sm:$0xff] %v20
          %v22 = vld [vmem:[%s16 + $0x10] sm:$0xff]
          %23 = vst [vmem:[%s17 + $0x20] sm:$0xff] %v22
          %v24 = vld [vmem:[%s16 + $0x18] sm:$0xff]
          %25 = vst [vmem:[%s17 + $0x30] sm:$0xff] %v24
        $region18: #{reverse.4} parent=12 // loop_footer
          %s15 = sadd.s32 1, %s11
        $region19: #{reverse.4} parent=12 // loop_footer_branch
          %10 = sbr.rel target = $region15
        $region20: #{reverse.4} parent=12 // loop_exit
          _
      $region13: #{reverse.4} parent=4 // pred_fallthru
        _
    $region5: #{reverse.4} parent=1 // pred_fallthru
      _
    %46 = vnop
    %s47 = scalar_lea.vmem [#allocation0], 7
    %v48 = vld [vmem:[%s47] ss:$-1 sm:$0xff]
    %v49 = vrot.slane %v48, 1
    %50 = vst [vmem:[#allocation1] sm:$0xff] %v49
    %s51 = scalar_lea.vmem [#allocation0], 8
    %s52 = scalar_lea.vmem %s51, 7 [#allocation0]
    %v53 = vld [vmem:[%s52] ss:$-1 sm:$0xff]
    %v54 = vrot.slane %v53, 1
    %v55 = vlaneseq
    %v56 = vshrl.u32 %v55, 7
    %vm57 = vcmp.lt.s32.totalorder %v56, 7
    %58 = vst.msk [vmem:[#allocation1] sm:$0xff] %vm57, %v54
    %s59 = scalar_lea.vmem [#allocation1], 8
    %s60 = scalar_lea.vmem [#allocation0], 16
    %s61 = scalar_lea.vmem %s60, 7 [#allocation0]
    %v62 = vld [vmem:[%s61] ss:$-1 sm:$0xff]
    %v63 = vrot.slane %v62, 1
    %64 = vst [vmem:[%s59] sm:$0xff] %v63
    %s65 = scalar_lea.vmem %s60, 8 [#allocation0]
    %s66 = scalar_lea.vmem %s65, 7 [#allocation0]
    %v67 = vld [vmem:[%s66] ss:$-1 sm:$0xff]
    %v68 = vrot.slane %v67, 1
    %v69 = vlaneseq
    %v70 = vshrl.u32 %v69, 7
    %vm71 = vcmp.lt.s32.totalorder %v70, 7
    %72 = vst.msk [vmem:[%s59] sm:$0xff] %vm71, %v68
    %s73 = scalar_lea.vmem [#allocation1], 16
    %s74 = scalar_lea.vmem [#allocation0], 32
    %s75 = scalar_lea.vmem %s74, 7 [#allocation0]
    %v76 = vld [vmem:[%s75] ss:$-1 sm:$0xff]
    %v77 = vrot.slane %v76, 1
    %78 = vst [vmem:[%s73] sm:$0xff] %v77
    %s79 = scalar_lea.vmem %s74, 8 [#allocation0]
    %s80 = scalar_lea.vmem %s79, 7 [#allocation0]
    %v81 = vld [vmem:[%s80] ss:$-1 sm:$0xff]
    %v82 = vrot.slane %v81, 1
    %v83 = vlaneseq
    %v84 = vshrl.u32 %v83, 7
    %vm85 = vcmp.lt.s32.totalorder %v84, 7
    %86 = vst.msk [vmem:[%s73] sm:$0xff] %vm85, %v82
    %s87 = scalar_lea.vmem [#allocation1], 24
    %s88 = scalar_lea.vmem [#allocation0], 48
    %s89 = scalar_lea.vmem %s88, 7 [#allocation0]
    %v90 = vld [vmem:[%s89] ss:$-1 sm:$0xff]
    %v91 = vrot.slane %v90, 1
    %92 = vst [vmem:[%s87] sm:$0xff] %v91
    %s93 = scalar_lea.vmem %s88, 8 [#allocation0]
    %s94 = scalar_lea.vmem %s93, 7 [#allocation0]
    %v95 = vld [vmem:[%s94] ss:$-1 sm:$0xff]
    %v96 = vrot.slane %v95, 1
    %v97 = vlaneseq
    %v98 = vshrl.u32 %v97, 7
    %vm99 = vcmp.lt.s32.totalorder %v98, 7
    %100 = vst.msk [vmem:[%s87] sm:$0xff] %vm99, %v96
    // Predicated region
    $region36: #{reverse.4} parent=1 // pred_check
      _
    $region37: #{reverse.4} parent=1 // pred_check_branch
      %102 = sbr.rel (0) target = $region39
    $region38: #{reverse.4} parent=1 // pred_region
      // Predicated region
      $region40: #{reverse.4} parent=38 // pred_check
        _
      $region41: #{reverse.4} parent=38 // pred_check_branch
        %104 = sbr.rel (0) target = $region43
      $region42: #{reverse.4} parent=38 // pred_region
        // Predicated region
        $region55: #{reverse.4} parent=42 // pred_check
          _
        $region56: #{reverse.4} parent=42 // pred_check_branch
          %125 = sbr.rel (0) target = $region58
        $region57: #{reverse.4} parent=42 // pred_region
          loop: start=0, step=1, limit=1
          $region59: #{reverse.4} parent=57 // loop_pre_header
            _
          $region60: #{reverse.4} parent=57 // loop_header
            %s127 = sphi 0, %s131
            %p128 = scmp.ge.s32.totalorder %s127, 1
            %s132 = sphi [#allocation1], [#allocation1]
            %s133 = sphi %s1, %s1
          $region61: #{reverse.4} parent=57 // loop_header_branch
            %130 = sbr.rel (%p128) target = $region65
          $region62: #{reverse.4} parent=57 // loop_body
            %v134 = vld [vmem:[%s132] sm:$0xff]
            %135 = vst [vmem:[%s133] sm:$0xff] %v134
            %v136 = vld [vmem:[%s132 + $0x8] sm:$0xff]
            %137 = vst [vmem:[%s133 + $0x8] sm:$0xff] %v136
            %v138 = vld [vmem:[%s132 + $0x10] sm:$0xff]
            %139 = vst [vmem:[%s133 + $0x10] sm:$0xff] %v138
            %v140 = vld [vmem:[%s132 + $0x18] sm:$0xff]
            %141 = vst [vmem:[%s133 + $0x18] sm:$0xff] %v140
          $region63: #{reverse.4} parent=57 // loop_footer
            %s131 = sadd.s32 1, %s127
          $region64: #{reverse.4} parent=57 // loop_footer_branch
            %126 = sbr.rel target = $region60
          $region65: #{reverse.4} parent=57 // loop_exit
            _
        $region58: #{reverse.4} parent=42 // pred_fallthru
          _
        // Predicated region
        $region66: #{reverse.4} parent=42 // pred_check
          _
        $region67: #{reverse.4} parent=42 // pred_check_branch
          %143 = sbr.rel target = $region69
        $region68: #{reverse.4} parent=42 // pred_region
          _
        $region69: #{reverse.4} parent=42 // pred_fallthru
          _
      $region43: #{reverse.4} parent=38 // pred_fallthru
        _
      // Predicated region
      $region44: #{reverse.4} parent=38 // pred_check
        _
      $region45: #{reverse.4} parent=38 // pred_check_branch
        %106 = sbr.rel target = $region47
      $region46: #{reverse.4} parent=38 // pred_region
        loop: start=0, step=1, limit=1
        $region48: #{reverse.4} parent=46 // loop_pre_header
          _
        $region49: #{reverse.4} parent=46 // loop_header
          %s109 = sphi 0, %s113
          %p110 = scmp.ge.s32.totalorder %s109, 1
          %s114 = sphi [#allocation1], [#allocation1]
          %s115 = sphi %s1, %s1
        $region50: #{reverse.4} parent=46 // loop_header_branch
          %112 = sbr.rel (%p110) target = $region54
        $region51: #{reverse.4} parent=46 // loop_body
          %v116 = vld [vmem:[%s114] sm:$0xff]
          %117 = vst [vmem:[%s115] sm:$0xff] %v116
          %v118 = vld [vmem:[%s114 + $0x8] sm:$0xff]
          %119 = vst [vmem:[%s115 + $0x8] sm:$0xff] %v118
          %v120 = vld [vmem:[%s114 + $0x10] sm:$0xff]
          %121 = vst [vmem:[%s115 + $0x10] sm:$0xff] %v120
          %v122 = vld [vmem:[%s114 + $0x18] sm:$0xff]
          %123 = vst [vmem:[%s115 + $0x18] sm:$0xff] %v122
        $region52: #{reverse.4} parent=46 // loop_footer
          %s113 = sadd.s32 1, %s109
        $region53: #{reverse.4} parent=46 // loop_footer_branch
          %108 = sbr.rel target = $region49
        $region54: #{reverse.4} parent=46 // loop_exit
          _
      $region47: #{reverse.4} parent=38 // pred_fallthru
        _
    $region39: #{reverse.4} parent=1 // pred_fallthru
      _
    %144 = vnop

// kernel: two_stream_lffc_resnet_block.7
$region0: #{two_stream_lffc_resnet_block.7}
  #allocation0 [shape = 'u32[]', space=smem, size = 0x4, offset = 0x4, fixed_abs, tag = 'smem constant byte address 0x4 - core index']
  #allocation1 [shape = 'u32[144,128]{1,0:T(1,128)}', space=vmem, size = 0x12000, scoped, tag = 'internal scratch']
  %s0 = inlined_call_operand.vmem [shape: f32[2,384], index: 0, kind: input, shape index: {}]
  %s1 = inlined_call_operand.vmem [shape: f32[2,384], index: 1, kind: input, shape index: {}]
  %s2 = inlined_call_operand.vmem [shape: f32[2,2], index: 2, kind: input, shape index: {}]
  %s3 = inlined_call_operand.vmem [shape: f32[2,2], index: 3, kind: input, shape index: {}]
  %s4 = inlined_call_operand.vmem [shape: f32[2,2], index: 4, kind: input, shape index: {}]
  %s5 = inlined_call_operand.vmem [shape: f32[2,2], index: 5, kind: input, shape index: {}]
  %s6 = inlined_call_operand.vmem [shape: f32[2,1], index: 6, kind: input, shape index: {}]
  %s7 = inlined_call_operand.vmem [shape: f32[2,1], index: 7, kind: input, shape index: {}]
  %s8 = inlined_call_operand.vmem [shape: f32[2,384], index: 8, kind: output, shape index: {0}]
  %s9 = inlined_call_operand.vmem [shape: f32[2,384], index: 9, kind: output, shape index: {1}]
  %10 = xla_tuple %s8, %s9
  %s11 = sld [smem:[#allocation0]]
  $region73: #{two_stream_lffc_resnet_block.7} parent=0
    _
  %s13 = ssub.s32 1, %s11
  %s14 = scalar_select 0, %s13, %s11
  loop: start=0, step=1, limit=5
  $region2: #{two_stream_lffc_resnet_block.7} parent=0 // loop_pre_header
    _
  $region3: #{two_stream_lffc_resnet_block.7} parent=0 // loop_header
    %s16 = sphi 0, %s20
    %p17 = scmp.ge.s32.totalorder %s16, 5
    %s26 = sphi 0, %s28
    %s29 = sphi 0, %s26
    %s30 = sphi 0, %s29
    %s46 = sphi 0, %s30
    %s52 = sphi 0, %s54
    %s55 = sphi 0, %s52
    %s56 = sphi 0, %s55
    %s72 = sphi 0, %s56
    %s76 = sphi 0, %s76
    %s78 = sphi 0, %s76
    %s79 = sphi 0, %s78
    %s93 = sphi 0, %s79
    %s97 = sphi 0, %s97
    %s99 = sphi 0, %s97
    %s100 = sphi 0, %s99
    %s114 = sphi 0, %s100
    %s118 = sphi 0, %s118
    %s120 = sphi 0, %s118
    %s121 = sphi 0, %s120
    %s135 = sphi 0, %s121
    %s139 = sphi 0, %s139
    %s141 = sphi 0, %s139
    %s142 = sphi 0, %s141
    %s156 = sphi 0, %s142
    %s160 = sphi 0, %s160
    %s162 = sphi 0, %s160
    %s163 = sphi 0, %s162
    %s177 = sphi 0, %s163
    %s181 = sphi 0, %s181
    %s183 = sphi 0, %s181
    %s184 = sphi 0, %s183
    %s198 = sphi 0, %s184
    %s204 = sphi 0, %s206
    %s207 = sphi 0, %s204
    %s208 = sphi 0, %s207
    %s224 = sphi 0, %s208
    %s230 = sphi 0, %s232
    %s233 = sphi 0, %s230
    %s234 = sphi 0, %s233
    %s250 = sphi 0, %s234
  $region4: #{two_stream_lffc_resnet_block.7} parent=0 // loop_header_branch
    %19 = sbr.rel (%p17) target = $region8
  $region5: #{two_stream_lffc_resnet_block.7} parent=0 // loop_body
    %s21 = ssub.s32 %s16, 1
    %s22 = ssub.s32 %s16, 2
    %s23 = sadd.s32 %s16, 1
    %s24 = ssub.s32 %s16, %s23
    %p25 = scmp.eq.s32.totalorder %s24, 0
    %s27 = sadd.s32 %s26, 1
    %s28 = scalar_select %p25, %s26, %s27
    %p31 = pneg %p25
    %p32 = scmp.eq.s32.totalorder %s16, 2
    %p33 = por %p31, %p32
    %p34 = scmp.ne.s32.totalorder %s26, %s29
    %p35 = scmp.eq.s32.totalorder %s16, 0
    %p36 = por %p34, %p35
    %p37 = scmp.ne.s32.totalorder %s26, %s29
    %p38 = scmp.eq.s32.totalorder %s21, 2
    %p39 = por %p37, %p38
    %p40 = scmp.ne.s32.totalorder %s29, %s30
    %p41 = scmp.eq.s32.totalorder %s21, 0
    %p42 = por %p40, %p41
    %p43 = scmp.ne.s32.totalorder %s29, %s30
    %p44 = scmp.eq.s32.totalorder %s22, 2
    %p45 = por %p43, %p44
    %p47 = scmp.ne.s32.totalorder %s30, %s46
    %p48 = scmp.eq.s32.totalorder %s22, 0
    %p49 = por %p47, %p48
    %s50 = ssub.s32 %s16, %s23
    %p51 = scmp.eq.s32.totalorder %s50, 0
    %s53 = sadd.s32 %s52, 1
    %s54 = scalar_select %p51, %s52, %s53
    %p57 = pneg %p51
    %p58 = scmp.eq.s32.totalorder %s16, 2
    %p59 = por %p57, %p58
    %p60 = scmp.ne.s32.totalorder %s52, %s55
    %p61 = scmp.eq.s32.totalorder %s16, 0
    %p62 = por %p60, %p61
    %p63 = scmp.ne.s32.totalorder %s52, %s55
    %p64 = scmp.eq.s32.totalorder %s21, 2
    %p65 = por %p63, %p64
    %p66 = scmp.ne.s32.totalorder %s55, %s56
    %p67 = scmp.eq.s32.totalorder %s21, 0
    %p68 = por %p66, %p67
    %p69 = scmp.ne.s32.totalorder %s55, %s56
    %p70 = scmp.eq.s32.totalorder %s22, 2
    %p71 = por %p69, %p70
    %p73 = scmp.ne.s32.totalorder %s56, %s72
    %p74 = scmp.eq.s32.totalorder %s22, 0
    %p75 = por %p73, %p74
    %s77 = sadd.s32 %s76, 1
    %p80 = scmp.eq.s32.totalorder %s16, 2
    %p81 = scmp.ne.s32.totalorder %s76, %s78
    %p82 = scmp.eq.s32.totalorder %s16, 0
    %p83 = por %p81, %p82
    %p84 = scmp.ne.s32.totalorder %s76, %s78
    %p85 = scmp.eq.s32.totalorder %s21, 2
    %p86 = por %p84, %p85
    %p87 = scmp.ne.s32.totalorder %s78, %s79
    %p88 = scmp.eq.s32.totalorder %s21, 0
    %p89 = por %p87, %p88
    %p90 = scmp.ne.s32.totalorder %s78, %s79
    %p91 = scmp.eq.s32.totalorder %s22, 2
    %p92 = por %p90, %p91
    %p94 = scmp.ne.s32.totalorder %s79, %s93
    %p95 = scmp.eq.s32.totalorder %s22, 0
    %p96 = por %p94, %p95
    %s98 = sadd.s32 %s97, 1
    %p101 = scmp.eq.s32.totalorder %s16, 2
    %p102 = scmp.ne.s32.totalorder %s97, %s99
    %p103 = scmp.eq.s32.totalorder %s16, 0
    %p104 = por %p102, %p103
    %p105 = scmp.ne.s32.totalorder %s97, %s99
    %p106 = scmp.eq.s32.totalorder %s21, 2
    %p107 = por %p105, %p106
    %p108 = scmp.ne.s32.totalorder %s99, %s100
    %p109 = scmp.eq.s32.totalorder %s21, 0
    %p110 = por %p108, %p109
    %p111 = scmp.ne.s32.totalorder %s99, %s100
    %p112 = scmp.eq.s32.totalorder %s22, 2
    %p113 = por %p111, %p112
    %p115 = scmp.ne.s32.totalorder %s100, %s114
    %p116 = scmp.eq.s32.totalorder %s22, 0
    %p117 = por %p115, %p116
    %s119 = sadd.s32 %s118, 1
    %p122 = scmp.eq.s32.totalorder %s16, 2
    %p123 = scmp.ne.s32.totalorder %s118, %s120
    %p124 = scmp.eq.s32.totalorder %s16, 0
    %p125 = por %p123, %p124
    %p126 = scmp.ne.s32.totalorder %s118, %s120
    %p127 = scmp.eq.s32.totalorder %s21, 2
    %p128 = por %p126, %p127
    %p129 = scmp.ne.s32.totalorder %s120, %s121
    %p130 = scmp.eq.s32.totalorder %s21, 0
    %p131 = por %p129, %p130
    %p132 = scmp.ne.s32.totalorder %s120, %s121
    %p133 = scmp.eq.s32.totalorder %s22, 2
    %p134 = por %p132, %p133
    %p136 = scmp.ne.s32.totalorder %s121, %s135
    %p137 = scmp.eq.s32.totalorder %s22, 0
    %p138 = por %p136, %p137
    %s140 = sadd.s32 %s139, 1
    %p143 = scmp.eq.s32.totalorder %s16, 2
    %p144 = scmp.ne.s32.totalorder %s139, %s141
    %p145 = scmp.eq.s32.totalorder %s16, 0
    %p146 = por %p144, %p145
    %p147 = scmp.ne.s32.totalorder %s139, %s141
    %p148 = scmp.eq.s32.totalorder %s21, 2
    %p149 = por %p147, %p148
    %p150 = scmp.ne.s32.totalorder %s141, %s142
    %p151 = scmp.eq.s32.totalorder %s21, 0
    %p152 = por %p150, %p151
    %p153 = scmp.ne.s32.totalorder %s141, %s142
    %p154 = scmp.eq.s32.totalorder %s22, 2
    %p155 = por %p153, %p154
    %p157 = scmp.ne.s32.totalorder %s142, %s156
    %p158 = scmp.eq.s32.totalorder %s22, 0
    %p159 = por %p157, %p158
    %s161 = sadd.s32 %s160, 1
    %p164 = scmp.eq.s32.totalorder %s16, 2
    %p165 = scmp.ne.s32.totalorder %s160, %s162
    %p166 = scmp.eq.s32.totalorder %s16, 0
    %p167 = por %p165, %p166
    %p168 = scmp.ne.s32.totalorder %s160, %s162
    %p169 = scmp.eq.s32.totalorder %s21, 2
    %p170 = por %p168, %p169
    %p171 = scmp.ne.s32.totalorder %s162, %s163
    %p172 = scmp.eq.s32.totalorder %s21, 0
    %p173 = por %p171, %p172
    %p174 = scmp.ne.s32.totalorder %s162, %s163
    %p175 = scmp.eq.s32.totalorder %s22, 2
    %p176 = por %p174, %p175
    %p178 = scmp.ne.s32.totalorder %s163, %s177
    %p179 = scmp.eq.s32.totalorder %s22, 0
    %p180 = por %p178, %p179
    %s182 = sadd.s32 %s181, 1
    %p185 = scmp.eq.s32.totalorder %s16, 2
    %p186 = scmp.ne.s32.totalorder %s181, %s183
    %p187 = scmp.eq.s32.totalorder %s16, 0
    %p188 = por %p186, %p187
    %p189 = scmp.ne.s32.totalorder %s181, %s183
    %p190 = scmp.eq.s32.totalorder %s21, 2
    %p191 = por %p189, %p190
    %p192 = scmp.ne.s32.totalorder %s183, %s184
    %p193 = scmp.eq.s32.totalorder %s21, 0
    %p194 = por %p192, %p193
    %p195 = scmp.ne.s32.totalorder %s183, %s184
    %p196 = scmp.eq.s32.totalorder %s22, 2
    %p197 = por %p195, %p196
    %p199 = scmp.ne.s32.totalorder %s184, %s198
    %p200 = scmp.eq.s32.totalorder %s22, 0
    %p201 = por %p199, %p200
    %s202 = ssub.s32 %s16, %s23
    %p203 = scmp.eq.s32.totalorder %s202, 0
    %s205 = sadd.s32 %s204, 1
    %s206 = scalar_select %p203, %s204, %s205
    %p209 = pneg %p203
    %p210 = scmp.eq.s32.totalorder %s16, 2
    %p211 = por %p209, %p210
    %p212 = scmp.ne.s32.totalorder %s204, %s207
    %p213 = scmp.eq.s32.totalorder %s16, 0
    %p214 = por %p212, %p213
    %p215 = scmp.ne.s32.totalorder %s204, %s207
    %p216 = scmp.eq.s32.totalorder %s21, 2
    %p217 = por %p215, %p216
    %p218 = scmp.ne.s32.totalorder %s207, %s208
    %p219 = scmp.eq.s32.totalorder %s21, 0
    %p220 = por %p218, %p219
    %p221 = scmp.ne.s32.totalorder %s207, %s208
    %p222 = scmp.eq.s32.totalorder %s22, 2
    %p223 = por %p221, %p222
    %p225 = scmp.ne.s32.totalorder %s208, %s224
    %p226 = scmp.eq.s32.totalorder %s22, 0
    %p227 = por %p225, %p226
    %s228 = ssub.s32 %s16, %s23
    %p229 = scmp.eq.s32.totalorder %s228, 0
    %s231 = sadd.s32 %s230, 1
    %s232 = scalar_select %p229, %s230, %s231
    %p235 = pneg %p229
    %p236 = scmp.eq.s32.totalorder %s16, 2
    %p237 = por %p235, %p236
    %p238 = scmp.ne.s32.totalorder %s230, %s233
    %p239 = scmp.eq.s32.totalorder %s16, 0
    %p240 = por %p238, %p239
    %p241 = scmp.ne.s32.totalorder %s230, %s233
    %p242 = scmp.eq.s32.totalorder %s21, 2
    %p243 = por %p241, %p242
    %p244 = scmp.ne.s32.totalorder %s233, %s234
    %p245 = scmp.eq.s32.totalorder %s21, 0
    %p246 = por %p244, %p245
    %p247 = scmp.ne.s32.totalorder %s233, %s234
    %p248 = scmp.eq.s32.totalorder %s22, 2
    %p249 = por %p247, %p248
    %p251 = scmp.ne.s32.totalorder %s234, %s250
    %p252 = scmp.eq.s32.totalorder %s22, 0
    %p253 = por %p251, %p252
    %p254 = scmp.le.s32.totalorder 1, %s16
    %p255 = scmp.lt.s32.totalorder %s16, 4
    %p256 = pnand %p254, %p255
    %p257 = pneg %p256
    // Predicated region
    $region9: #{two_stream_lffc_resnet_block.7} parent=5 // pred_check
      _
    $region10: #{two_stream_lffc_resnet_block.7} parent=5 // pred_check_branch
      %259 = sbr.rel (%p256) target = $region12
    $region11: #{two_stream_lffc_resnet_block.7} parent=5 // pred_region
      %s260 = ssub.s32 %s16, 1
      // Predicated region
      $region13: #{two_stream_lffc_resnet_block.7} parent=11 // pred_check
        %p261 = pneg %p89
      $region14: #{two_stream_lffc_resnet_block.7} parent=11 // pred_check_branch
        %263 = sbr.rel (%p261) target = $region16
      $region15: #{two_stream_lffc_resnet_block.7} parent=11 // pred_region
        _
      $region16: #{two_stream_lffc_resnet_block.7} parent=11 // pred_fallthru
        _
      // Predicated region
      $region17: #{two_stream_lffc_resnet_block.7} parent=11 // pred_check
        %p264 = pneg %p110
      $region18: #{two_stream_lffc_resnet_block.7} parent=11 // pred_check_branch
        %266 = sbr.rel (%p264) target = $region20
      $region19: #{two_stream_lffc_resnet_block.7} parent=11 // pred_region
        _
      $region20: #{two_stream_lffc_resnet_block.7} parent=11 // pred_fallthru
        _
      // Predicated region
      $region21: #{two_stream_lffc_resnet_block.7} parent=11 // pred_check
        %p267 = pneg %p131
      $region22: #{two_stream_lffc_resnet_block.7} parent=11 // pred_check_branch
        %269 = sbr.rel (%p267) target = $region24
      $region23: #{two_stream_lffc_resnet_block.7} parent=11 // pred_region
        _
      $region24: #{two_stream_lffc_resnet_block.7} parent=11 // pred_fallthru
        _
      // Predicated region
      $region25: #{two_stream_lffc_resnet_block.7} parent=11 // pred_check
        %p270 = pneg %p152
      $region26: #{two_stream_lffc_resnet_block.7} parent=11 // pred_check_branch
        %272 = sbr.rel (%p270) target = $region28
      $region27: #{two_stream_lffc_resnet_block.7} parent=11 // pred_region
        _
      $region28: #{two_stream_lffc_resnet_block.7} parent=11 // pred_fallthru
        _
      // Predicated region
      $region29: #{two_stream_lffc_resnet_block.7} parent=11 // pred_check
        %p273 = pneg %p173
      $region30: #{two_stream_lffc_resnet_block.7} parent=11 // pred_check_branch
        %275 = sbr.rel (%p273) target = $region32
      $region31: #{two_stream_lffc_resnet_block.7} parent=11 // pred_region
        _
      $region32: #{two_stream_lffc_resnet_block.7} parent=11 // pred_fallthru
        _
      // Predicated region
      $region33: #{two_stream_lffc_resnet_block.7} parent=11 // pred_check
        %p276 = pneg %p194
      $region34: #{two_stream_lffc_resnet_block.7} parent=11 // pred_check_branch
        %278 = sbr.rel (%p276) target = $region36
      $region35: #{two_stream_lffc_resnet_block.7} parent=11 // pred_region
        _
      $region36: #{two_stream_lffc_resnet_block.7} parent=11 // pred_fallthru
        _
    $region12: #{two_stream_lffc_resnet_block.7} parent=5 // pred_fallthru
      _
    %p279 = scmp.lt.s32.totalorder %s16, 3
    // Predicated region
    $region37: #{two_stream_lffc_resnet_block.7} parent=5 // pred_check
      %p280 = pneg %p279
    $region38: #{two_stream_lffc_resnet_block.7} parent=5 // pred_check_branch
      %282 = sbr.rel (%p280) target = $region40
    $region39: #{two_stream_lffc_resnet_block.7} parent=5 // pred_region
      // Predicated region
      $region41: #{two_stream_lffc_resnet_block.7} parent=39 // pred_check
        %p283 = pneg %p36
      $region42: #{two_stream_lffc_resnet_block.7} parent=39 // pred_check_branch
        %285 = sbr.rel (%p283) target = $region44
      $region43: #{two_stream_lffc_resnet_block.7} parent=39 // pred_region
        %p286 = scmp.lt.s32.totalorder %s16, 2
        %s287 = scalar_select %p286, %s16, 2
        %s288 = smul.addr %s287, 2
        %s289 = scalar_lea.vmem %s0, %s288
      $region44: #{two_stream_lffc_resnet_block.7} parent=39 // pred_fallthru
        _
      // Predicated region
      $region45: #{two_stream_lffc_resnet_block.7} parent=39 // pred_check
        %p290 = pneg %p62
      $region46: #{two_stream_lffc_resnet_block.7} parent=39 // pred_check_branch
        %292 = sbr.rel (%p290) target = $region48
      $region47: #{two_stream_lffc_resnet_block.7} parent=39 // pred_region
        %p293 = scmp.lt.s32.totalorder %s16, 2
        %s294 = scalar_select %p293, %s16, 2
        %s295 = smul.addr %s294, 2
        %s296 = scalar_lea.vmem %s1, %s295
      $region48: #{two_stream_lffc_resnet_block.7} parent=39 // pred_fallthru
        _
    $region40: #{two_stream_lffc_resnet_block.7} parent=5 // pred_fallthru
      _
    %p297 = scmp.le.s32.totalorder 1, %s16
    %p298 = scmp.lt.s32.totalorder %s16, 4
    %p299 = pnand %p297, %p298
    %p300 = pneg %p299
    // Predicated region
    $region49: #{two_stream_lffc_resnet_block.7} parent=5 // pred_check
      _
    $region50: #{two_stream_lffc_resnet_block.7} parent=5 // pred_check_branch
      %302 = sbr.rel (%p299) target = $region52
    $region51: #{two_stream_lffc_resnet_block.7} parent=5 // pred_region
      %s303 = ssub.s32 %s16, 1
      %p304 = scmp.lt.s32.totalorder %s21, 2
      %s305 = scalar_select %p304, %s21, 2
      %s306 = smul.addr %s305, 2
      %s307 = scalar_lea.vmem %s0, %s306
      %p308 = pneg %p42
      %p309 = pneg %p39
      %p310 = scmp.lt.s32.totalorder %s21, 2
      %s311 = scalar_select %p310, %s21, 2
      %s312 = smul.addr %s311, 2
      %s313 = scalar_lea.vmem %s1, %s312
      %p314 = pneg %p68
      %p315 = pneg %p65
      %p316 = pneg %p89
      %p317 = pneg %p86
      %p318 = pneg %p110
      %p319 = pneg %p107
      %p320 = pneg %p131
      %p321 = pneg %p128
      %p322 = pneg %p152
      %p323 = pneg %p149
      %p324 = pneg %p173
      %p325 = pneg %p170
      %p326 = pneg %p194
      %p327 = pneg %p191
      %p328 = pneg %p220
      %p329 = pneg %p217
      %p330 = scmp.lt.s32.totalorder %s21, 2
      %s331 = scalar_select %p330, %s21, 2
      %s332 = smul.addr %s331, 2
      %s333 = scalar_lea.vmem %s8, %s332
      %p334 = pneg %p246
      %p335 = pneg %p243
      %p336 = scmp.lt.s32.totalorder %s21, 2
      %s337 = scalar_select %p336, %s21, 2
      %s338 = smul.addr %s337, 2
      %s339 = scalar_lea.vmem %s9, %s338
      %p340 = scmp.lt.s32.totalorder %s21, 2
      %s341 = scalar_select %p340, %s21, 2
      %s342 = smul.addr %s341, 2
      %s343 = scalar_lea.vmem %s0, %s342
      %p344 = scmp.lt.s32.totalorder %s21, 2
      %s345 = scalar_select %p344, %s21, 2
      %s346 = smul.addr %s345, 2
      %s347 = scalar_lea.vmem %s1, %s346
      %p348 = scmp.lt.s32.totalorder %s21, 2
      %s349 = scalar_select %p348, %s21, 2
      %s350 = smul.addr %s349, 2
      %s351 = scalar_lea.vmem %s8, %s350
      %p352 = scmp.lt.s32.totalorder %s21, 2
      %s353 = scalar_select %p352, %s21, 2
      %s354 = smul.addr %s353, 2
      %s355 = scalar_lea.vmem %s9, %s354
      %v356 = vld [vmem:[%s343] sm:$0x3]
      %v357 = vld [vmem:[%s347] sm:$0x3]
      %v358 = vld [vmem:[%s2] sm:$0x3]
      %v359 = vld [vmem:[%s3] sm:$0x3]
      %vm360 = vcmask 15360
      %v362 = vsel %vm360, %v359, 0
      %vm364 = vcmask 1041408
      %v366 = vsel %vm364, %v357, 0
      %368 = vmatprep.subr.mxu0 0.0
      %369 = vmatpush1.msra.mxu0 %v366
      %370 = vmatprep.subr.mxu0 0.0
      %371 = vmatpush1.msra.mxu0 0.0
      %372 = vmatprep.subr.mxu0 0.0
      %373 = vmatpush1.msra.mxu0 0.0
      %374 = vmatprep.subr.mxu0 0.0
      %375 = vmatpush1.msra.mxu0 0.0
      %376 = vmatprep.subr.mxu0 0.0
      %377 = vmatpush1.msra.mxu0 0.0
      %378 = vmatprep.subr.mxu0 0.0
      %379 = vmatpush1.msra.mxu0 0.0
      %380 = vmatprep.subr.mxu0 0.0
      %381 = vmatpush1.msra.mxu0 0.0
      %382 = vmatprep.subr.mxu0 0.0
      %383 = vmatpush1.msra.mxu0 0.0
      %384 = vmatprep.subr.mxu0 0.0
      %385 = vmatpush1.msra.mxu0 0.0
      %386 = vmatprep.subr.mxu0 0.0
      %387 = vmatpush1.msra.mxu0 0.0
      %388 = vmatprep.subr.mxu0 0.0
      %389 = vmatpush1.msra.mxu0 0.0
      %390 = vmatprep.subr.mxu0 0.0
      %391 = vmatpush1.msra.mxu0 0.0
      %392 = vmatprep.subr.mxu0 0.0
      %393 = vmatpush1.msra.mxu0 0.0
      %394 = vmatprep.subr.mxu0 0.0
      %395 = vmatpush1.msra.mxu0 0.0
      %396 = vmatprep.subr.mxu0 0.0
      %397 = vmatpush1.msra.mxu0 0.0
      %398 = vmatprep.subr.mxu0 0.0
      %399 = vmatpush1.msra.mxu0 0.0
      %400 = vmatprep.subr.mxu0 0.0
      %401 = vmatpush1.msra.mxu0 0.0
      %402 = vmatprep.subr.mxu0 0.0
      %403 = vmatpush1.msra.mxu0 0.0
      %404 = vmatprep.subr.mxu0 0.0
      %405 = vmatpush1.msra.mxu0 0.0
      %406 = vmatprep.subr.mxu0 0.0
      %407 = vmatpush1.msra.mxu0 0.0
      %408 = vmatprep.subr.mxu0 0.0
      %409 = vmatpush1.msra.mxu0 0.0
      %410 = vmatprep.subr.mxu0 0.0
      %411 = vmatpush1.msra.mxu0 0.0
      %412 = vmatprep.subr.mxu0 0.0
      %413 = vmatpush1.msra.mxu0 0.0
      %414 = vmatprep.subr.mxu0 0.0
      %415 = vmatpush1.msra.mxu0 0.0
      %416 = vmatprep.subr.mxu0 0.0
      %417 = vmatpush1.msra.mxu0 0.0
      %418 = vmatprep.subr.mxu0 0.0
      %419 = vmatpush1.msra.mxu0 0.0
      %420 = vmatprep.subr.mxu0 0.0
      %421 = vmatpush1.msra.mxu0 0.0
      %422 = vmatprep.subr.mxu0 0.0
      %423 = vmatpush1.msra.mxu0 0.0
      %424 = vmatprep.subr.mxu0 0.0
      %425 = vmatpush1.msra.mxu0 0.0
      %426 = vmatprep.subr.mxu0 0.0
      %427 = vmatpush1.msra.mxu0 0.0
      %428 = vmatprep.subr.mxu0 0.0
      %429 = vmatpush1.msra.mxu0 0.0
      %430 = vmatprep.subr.mxu0 0.0
      %431 = vmatpush1.msra.mxu0 0.0
      %432 = vmatprep.mubr.f32.mxu0 0.0
      %433 = vmatmul.mubr.f32.gmra.mrb[0].mxu0 %v362
      %v434 = vpop.f32.mrb[0].mxu0
      %v435 = vadd.f32 0.0, %v434
      %v436 = vpop.f32.mrb[0].mxu0
      %437 = vdwg.mxu0
      %v439 = vsel %vm360, %v358, 0
      %v442 = vsel %vm364, %v356, 0
      %444 = vmatprep.subr.mxu0 0.0
      %445 = vmatpush1.msra.mxu0 %v442
      %446 = vmatprep.subr.mxu0 0.0
      %447 = vmatpush1.msra.mxu0 0.0
      %448 = vmatprep.subr.mxu0 0.0
      %449 = vmatpush1.msra.mxu0 0.0
      %450 = vmatprep.subr.mxu0 0.0
      %451 = vmatpush1.msra.mxu0 0.0
      %452 = vmatprep.subr.mxu0 0.0
      %453 = vmatpush1.msra.mxu0 0.0
      %454 = vmatprep.subr.mxu0 0.0
      %455 = vmatpush1.msra.mxu0 0.0
      %456 = vmatprep.subr.mxu0 0.0
      %457 = vmatpush1.msra.mxu0 0.0
      %458 = vmatprep.subr.mxu0 0.0
      %459 = vmatpush1.msra.mxu0 0.0
      %460 = vmatprep.subr.mxu0 0.0
      %461 = vmatpush1.msra.mxu0 0.0
      %462 = vmatprep.subr.mxu0 0.0
      %463 = vmatpush1.msra.mxu0 0.0
      %464 = vmatprep.subr.mxu0 0.0
      %465 = vmatpush1.msra.mxu0 0.0
      %466 = vmatprep.subr.mxu0 0.0
      %467 = vmatpush1.msra.mxu0 0.0
      %468 = vmatprep.subr.mxu0 0.0
      %469 = vmatpush1.msra.mxu0 0.0
      %470 = vmatprep.subr.mxu0 0.0
      %471 = vmatpush1.msra.mxu0 0.0
      %472 = vmatprep.subr.mxu0 0.0
      %473 = vmatpush1.msra.mxu0 0.0
      %474 = vmatprep.subr.mxu0 0.0
      %475 = vmatpush1.msra.mxu0 0.0
      %476 = vmatprep.subr.mxu0 0.0
      %477 = vmatpush1.msra.mxu0 0.0
      %478 = vmatprep.subr.mxu0 0.0
      %479 = vmatpush1.msra.mxu0 0.0
      %480 = vmatprep.subr.mxu0 0.0
      %481 = vmatpush1.msra.mxu0 0.0
      %482 = vmatprep.subr.mxu0 0.0
      %483 = vmatpush1.msra.mxu0 0.0
      %484 = vmatprep.subr.mxu0 0.0
      %485 = vmatpush1.msra.mxu0 0.0
      %486 = vmatprep.subr.mxu0 0.0
      %487 = vmatpush1.msra.mxu0 0.0
      %488 = vmatprep.subr.mxu0 0.0
      %489 = vmatpush1.msra.mxu0 0.0
      %490 = vmatprep.subr.mxu0 0.0
      %491 = vmatpush1.msra.mxu0 0.0
      %492 = vmatprep.subr.mxu0 0.0
      %493 = vmatpush1.msra.mxu0 0.0
      %494 = vmatprep.subr.mxu0 0.0
      %495 = vmatpush1.msra.mxu0 0.0
      %496 = vmatprep.subr.mxu0 0.0
      %497 = vmatpush1.msra.mxu0 0.0
      %498 = vmatprep.subr.mxu0 0.0
      %499 = vmatpush1.msra.mxu0 0.0
      %500 = vmatprep.subr.mxu0 0.0
      %501 = vmatpush1.msra.mxu0 0.0
      %502 = vmatprep.subr.mxu0 0.0
      %503 = vmatpush1.msra.mxu0 0.0
      %504 = vmatprep.subr.mxu0 0.0
      %505 = vmatpush1.msra.mxu0 0.0
      %506 = vmatprep.subr.mxu0 0.0
      %507 = vmatpush1.msra.mxu0 0.0
      %508 = vmatprep.mubr.f32.mxu0 0.0
      %509 = vmatmul.mubr.f32.gmra.mrb[0].mxu0 %v439
      %v510 = vpop.f32.mrb[0].mxu0
      %v511 = vadd.f32 %v435, %v510
      %v512 = vpop.f32.mrb[0].mxu0
      %513 = vdwg.mxu0
      %v514 = vld [vmem:[%s6] sm:$0x3]
      %516 = vset.pattern.permute.xlu0 0
      %517 = vperm.xlu0 %516, %v514
      %v518 = vpop.permute.xlu0 %517
      %v520 = vadd.f32 %v511, %v518
      %v521 = vld [vmem:[%s4] sm:$0x3]
      %v522 = vld [vmem:[%s5] sm:$0x3]
      %v524 = vsel %vm360, %v522, 0
      %526 = vmatprep.subr.mxu0 0.0
      %527 = vmatpush1.msra.mxu0 %v366
      %528 = vmatprep.subr.mxu0 0.0
      %529 = vmatpush1.msra.mxu0 0.0
      %530 = vmatprep.subr.mxu0 0.0
      %531 = vmatpush1.msra.mxu0 0.0
      %532 = vmatprep.subr.mxu0 0.0
      %533 = vmatpush1.msra.mxu0 0.0
      %534 = vmatprep.subr.mxu0 0.0
      %535 = vmatpush1.msra.mxu0 0.0
      %536 = vmatprep.subr.mxu0 0.0
      %537 = vmatpush1.msra.mxu0 0.0
      %538 = vmatprep.subr.mxu0 0.0
      %539 = vmatpush1.msra.mxu0 0.0
      %540 = vmatprep.subr.mxu0 0.0
      %541 = vmatpush1.msra.mxu0 0.0
      %542 = vmatprep.subr.mxu0 0.0
      %543 = vmatpush1.msra.mxu0 0.0
      %544 = vmatprep.subr.mxu0 0.0
      %545 = vmatpush1.msra.mxu0 0.0
      %546 = vmatprep.subr.mxu0 0.0
      %547 = vmatpush1.msra.mxu0 0.0
      %548 = vmatprep.subr.mxu0 0.0
      %549 = vmatpush1.msra.mxu0 0.0
      %550 = vmatprep.subr.mxu0 0.0
      %551 = vmatpush1.msra.mxu0 0.0
      %552 = vmatprep.subr.mxu0 0.0
      %553 = vmatpush1.msra.mxu0 0.0
      %554 = vmatprep.subr.mxu0 0.0
      %555 = vmatpush1.msra.mxu0 0.0
      %556 = vmatprep.subr.mxu0 0.0
      %557 = vmatpush1.msra.mxu0 0.0
      %558 = vmatprep.subr.mxu0 0.0
      %559 = vmatpush1.msra.mxu0 0.0
      %560 = vmatprep.subr.mxu0 0.0
      %561 = vmatpush1.msra.mxu0 0.0
      %562 = vmatprep.subr.mxu0 0.0
      %563 = vmatpush1.msra.mxu0 0.0
      %564 = vmatprep.subr.mxu0 0.0
      %565 = vmatpush1.msra.mxu0 0.0
      %566 = vmatprep.subr.mxu0 0.0
      %567 = vmatpush1.msra.mxu0 0.0
      %568 = vmatprep.subr.mxu0 0.0
      %569 = vmatpush1.msra.mxu0 0.0
      %570 = vmatprep.subr.mxu0 0.0
      %571 = vmatpush1.msra.mxu0 0.0
      %572 = vmatprep.subr.mxu0 0.0
      %573 = vmatpush1.msra.mxu0 0.0
      %574 = vmatprep.subr.mxu0 0.0
      %575 = vmatpush1.msra.mxu0 0.0
      %576 = vmatprep.subr.mxu0 0.0
      %577 = vmatpush1.msra.mxu0 0.0
      %578 = vmatprep.subr.mxu0 0.0
      %579 = vmatpush1.msra.mxu0 0.0
      %580 = vmatprep.subr.mxu0 0.0
      %581 = vmatpush1.msra.mxu0 0.0
      %582 = vmatprep.subr.mxu0 0.0
      %583 = vmatpush1.msra.mxu0 0.0
      %584 = vmatprep.subr.mxu0 0.0
      %585 = vmatpush1.msra.mxu0 0.0
      %586 = vmatprep.subr.mxu0 0.0
      %587 = vmatpush1.msra.mxu0 0.0
      %588 = vmatprep.subr.mxu0 0.0
      %589 = vmatpush1.msra.mxu0 0.0
      %590 = vmatprep.mubr.f32.mxu0 0.0
      %591 = vmatmul.mubr.f32.gmra.mrb[0].mxu0 %v524
      %v592 = vpop.f32.mrb[0].mxu0
      %v593 = vadd.f32 0.0, %v592
      %v594 = vpop.f32.mrb[0].mxu0
      %595 = vdwg.mxu0
      %v597 = vsel %vm360, %v521, 0
      %599 = vmatprep.subr.mxu0 0.0
      %600 = vmatpush1.msra.mxu0 %v442
      %601 = vmatprep.subr.mxu0 0.0
      %602 = vmatpush1.msra.mxu0 0.0
      %603 = vmatprep.subr.mxu0 0.0
      %604 = vmatpush1.msra.mxu0 0.0
      %605 = vmatprep.subr.mxu0 0.0
      %606 = vmatpush1.msra.mxu0 0.0
      %607 = vmatprep.subr.mxu0 0.0
      %608 = vmatpush1.msra.mxu0 0.0
      %609 = vmatprep.subr.mxu0 0.0
      %610 = vmatpush1.msra.mxu0 0.0
      %611 = vmatprep.subr.mxu0 0.0
      %612 = vmatpush1.msra.mxu0 0.0
      %613 = vmatprep.subr.mxu0 0.0
      %614 = vmatpush1.msra.mxu0 0.0
      %615 = vmatprep.subr.mxu0 0.0
      %616 = vmatpush1.msra.mxu0 0.0
      %617 = vmatprep.subr.mxu0 0.0
      %618 = vmatpush1.msra.mxu0 0.0
      %619 = vmatprep.subr.mxu0 0.0
      %620 = vmatpush1.msra.mxu0 0.0
      %621 = vmatprep.subr.mxu0 0.0
      %622 = vmatpush1.msra.mxu0 0.0
      %623 = vmatprep.subr.mxu0 0.0
      %624 = vmatpush1.msra.mxu0 0.0
      %625 = vmatprep.subr.mxu0 0.0
      %626 = vmatpush1.msra.mxu0 0.0
      %627 = vmatprep.subr.mxu0 0.0
      %628 = vmatpush1.msra.mxu0 0.0
      %629 = vmatprep.subr.mxu0 0.0
      %630 = vmatpush1.msra.mxu0 0.0
      %631 = vmatprep.subr.mxu0 0.0
      %632 = vmatpush1.msra.mxu0 0.0
      %633 = vmatprep.subr.mxu0 0.0
      %634 = vmatpush1.msra.mxu0 0.0
      %635 = vmatprep.subr.mxu0 0.0
      %636 = vmatpush1.msra.mxu0 0.0
      %637 = vmatprep.subr.mxu0 0.0
      %638 = vmatpush1.msra.mxu0 0.0
      %639 = vmatprep.subr.mxu0 0.0
      %640 = vmatpush1.msra.mxu0 0.0
      %641 = vmatprep.subr.mxu0 0.0
      %642 = vmatpush1.msra.mxu0 0.0
      %643 = vmatprep.subr.mxu0 0.0
      %644 = vmatpush1.msra.mxu0 0.0
      %645 = vmatprep.subr.mxu0 0.0
      %646 = vmatpush1.msra.mxu0 0.0
      %647 = vmatprep.subr.mxu0 0.0
      %648 = vmatpush1.msra.mxu0 0.0
      %649 = vmatprep.subr.mxu0 0.0
      %650 = vmatpush1.msra.mxu0 0.0
      %651 = vmatprep.subr.mxu0 0.0
      %652 = vmatpush1.msra.mxu0 0.0
      %653 = vmatprep.subr.mxu0 0.0
      %654 = vmatpush1.msra.mxu0 0.0
      %655 = vmatprep.subr.mxu0 0.0
      %656 = vmatpush1.msra.mxu0 0.0
      %657 = vmatprep.subr.mxu0 0.0
      %658 = vmatpush1.msra.mxu0 0.0
      %659 = vmatprep.subr.mxu0 0.0
      %660 = vmatpush1.msra.mxu0 0.0
      %661 = vmatprep.subr.mxu0 0.0
      %662 = vmatpush1.msra.mxu0 0.0
      %663 = vmatprep.mubr.f32.mxu0 0.0
      %664 = vmatmul.mubr.f32.gmra.mrb[0].mxu0 %v597
      %v665 = vpop.f32.mrb[0].mxu0
      %v666 = vadd.f32 %v593, %v665
      %v667 = vpop.f32.mrb[0].mxu0
      %668 = vdwg.mxu0
      %v669 = vld [vmem:[%s7] sm:$0x3]
      %671 = vset.pattern.permute.xlu0 0
      %672 = vperm.xlu0 %671, %v669
      %v673 = vpop.permute.xlu0 %672
      %v675 = vadd.f32 %v666, %v673
      %v676 = vmax.f32 %v520, 0.0
      %677 = vst [vmem:[%s351] sm:$0x3] %v676
      %v678 = vmax.f32 %v675, 0.0
      %679 = vst [vmem:[%s355] sm:$0x3] %v678
      %p680 = scmp.lt.s32.totalorder %s21, 2
      %s681 = scalar_select %p680, %s21, 2
      %s682 = smul.addr %s681, 2
      %s683 = scalar_lea.vmem %s8, %s682
      %p684 = scmp.lt.s32.totalorder %s21, 2
      %s685 = scalar_select %p684, %s21, 2
      %s686 = smul.addr %s685, 2
      %s687 = scalar_lea.vmem %s9, %s686
      // Predicated region
      $region53: #{two_stream_lffc_resnet_block.7} parent=51 // pred_check
        %p688 = pneg %p217
      $region54: #{two_stream_lffc_resnet_block.7} parent=51 // pred_check_branch
        %690 = sbr.rel (%p688) target = $region56
      $region55: #{two_stream_lffc_resnet_block.7} parent=51 // pred_region
        _
      $region56: #{two_stream_lffc_resnet_block.7} parent=51 // pred_fallthru
        _
      // Predicated region
      $region57: #{two_stream_lffc_resnet_block.7} parent=51 // pred_check
        %p691 = pneg %p243
      $region58: #{two_stream_lffc_resnet_block.7} parent=51 // pred_check_branch
        %693 = sbr.rel (%p691) target = $region60
      $region59: #{two_stream_lffc_resnet_block.7} parent=51 // pred_region
        _
      $region60: #{two_stream_lffc_resnet_block.7} parent=51 // pred_fallthru
        _
    $region52: #{two_stream_lffc_resnet_block.7} parent=5 // pred_fallthru
      _
    %p694 = scmp.le.s32.totalorder 2, %s16
    // Predicated region
    $region61: #{two_stream_lffc_resnet_block.7} parent=5 // pred_check
      %p695 = pneg %p694
    $region62: #{two_stream_lffc_resnet_block.7} parent=5 // pred_check_branch
      %697 = sbr.rel (%p695) target = $region64
    $region63: #{two_stream_lffc_resnet_block.7} parent=5 // pred_region
      %s698 = ssub.s32 %s16, 2
      // Predicated region
      $region65: #{two_stream_lffc_resnet_block.7} parent=63 // pred_check
        %p699 = pneg %p223
      $region66: #{two_stream_lffc_resnet_block.7} parent=63 // pred_check_branch
        %701 = sbr.rel (%p699) target = $region68
      $region67: #{two_stream_lffc_resnet_block.7} parent=63 // pred_region
        %p702 = scmp.lt.s32.totalorder %s22, 2
        %s703 = scalar_select %p702, %s22, 2
        %s704 = smul.addr %s703, 2
        %s705 = scalar_lea.vmem %s8, %s704
      $region68: #{two_stream_lffc_resnet_block.7} parent=63 // pred_fallthru
        _
      // Predicated region
      $region69: #{two_stream_lffc_resnet_block.7} parent=63 // pred_check
        %p706 = pneg %p249
      $region70: #{two_stream_lffc_resnet_block.7} parent=63 // pred_check_branch
        %708 = sbr.rel (%p706) target = $region72
      $region71: #{two_stream_lffc_resnet_block.7} parent=63 // pred_region
        %p709 = scmp.lt.s32.totalorder %s22, 2
        %s710 = scalar_select %p709, %s22, 2
        %s711 = smul.addr %s710, 2
        %s712 = scalar_lea.vmem %s9, %s711
      $region72: #{two_stream_lffc_resnet_block.7} parent=63 // pred_fallthru
        _
    $region64: #{two_stream_lffc_resnet_block.7} parent=5 // pred_fallthru
      _
  $region6: #{two_stream_lffc_resnet_block.7} parent=0 // loop_footer
    %s20 = sadd.s32 1, %s16
  $region7: #{two_stream_lffc_resnet_block.7} parent=0 // loop_footer_branch
    %15 = sbr.rel target = $region3
  $region8: #{two_stream_lffc_resnet_block.7} parent=0 // loop_exit
    _

// kernel: two_stream_lffc_resnet_block.8
$region0: #{two_stream_lffc_resnet_block.8}
  #allocation0 [shape = 'u32[]', space=smem, size = 0x4, offset = 0x4, fixed_abs, tag = 'smem constant byte address 0x4 - core index']
  #allocation1 [shape = 'u32[144,128]{1,0:T(1,128)}', space=vmem, size = 0x12000, scoped, tag = 'internal scratch']
  #allocation2 [shape = 'f32[36,256]{1,0:T(8,128)}', space=vmem, size = 0xa000, scoped, tag = 'scratch operand']
  %s0 = inlined_call_operand.vmem [shape: bf16[4,512], index: 0, kind: input, shape index: {}]
  %s1 = inlined_call_operand.vmem [shape: f32[2,512], index: 1, kind: input, shape index: {}]
  %s2 = inlined_call_operand.vmem [shape: f32[2,512], index: 2, kind: input, shape index: {}]
  %s3 = inlined_call_operand.vmem [shape: s32[1,256], index: 3, kind: input, shape index: {}]
  %s4 = inlined_call_operand.vmem [shape: f32[8,36], index: 4, kind: input, shape index: {}]
  %s5 = inlined_call_operand.vmem [shape: f32[8,2], index: 5, kind: input, shape index: {}]
  %s6 = inlined_call_operand.vmem [shape: f32[8,1], index: 6, kind: input, shape index: {}]
  %s7 = inlined_call_operand.vmem [shape: bf16[8,512], index: 7, kind: output, shape index: {}]
  %s8 = sld [smem:[#allocation0]]
  $region61: #{two_stream_lffc_resnet_block.8} parent=0
    _
  %s10 = ssub.s32 1, %s8
  %s11 = scalar_select 0, %s10, %s8
  loop: start=0, step=1, limit=4
  $region2: #{two_stream_lffc_resnet_block.8} parent=0 // loop_pre_header
    _
  $region3: #{two_stream_lffc_resnet_block.8} parent=0 // loop_header
    %s13 = sphi 0, %s17
    %p14 = scmp.ge.s32.totalorder %s13, 4
    %s23 = sphi 0, %s25
    %s26 = sphi 0, %s23
    %s27 = sphi 0, %s26
    %s43 = sphi 0, %s27
    %s49 = sphi 0, %s51
    %s52 = sphi 0, %s49
    %s53 = sphi 0, %s52
    %s69 = sphi 0, %s53
    %s75 = sphi 0, %s77
    %s78 = sphi 0, %s75
    %s79 = sphi 0, %s78
    %s95 = sphi 0, %s79
    %s99 = sphi 0, %s99
    %s101 = sphi 0, %s99
    %s102 = sphi 0, %s101
    %s116 = sphi 0, %s102
    %s120 = sphi 0, %s120
    %s122 = sphi 0, %s120
    %s123 = sphi 0, %s122
    %s137 = sphi 0, %s123
    %s141 = sphi 0, %s141
    %s143 = sphi 0, %s141
    %s144 = sphi 0, %s143
    %s158 = sphi 0, %s144
    %s162 = sphi 0, %s162
    %s164 = sphi 0, %s162
    %s165 = sphi 0, %s164
    %s179 = sphi 0, %s165
    %s185 = sphi 0, %s187
    %s188 = sphi 0, %s185
    %s189 = sphi 0, %s188
    %s205 = sphi 0, %s189
  $region4: #{two_stream_lffc_resnet_block.8} parent=0 // loop_header_branch
    %16 = sbr.rel (%p14) target = $region8
  $region5: #{two_stream_lffc_resnet_block.8} parent=0 // loop_body
    %s18 = ssub.s32 %s13, 1
    %s19 = ssub.s32 %s13, 2
    %s20 = sadd.s32 %s13, 1
    %s21 = ssub.s32 %s13, %s20
    %p22 = scmp.eq.s32.totalorder %s21, 0
    %s24 = sadd.s32 %s23, 1
    %s25 = scalar_select %p22, %s23, %s24
    %p28 = pneg %p22
    %p29 = scmp.eq.s32.totalorder %s13, 1
    %p30 = por %p28, %p29
    %p31 = scmp.ne.s32.totalorder %s23, %s26
    %p32 = scmp.eq.s32.totalorder %s13, 0
    %p33 = por %p31, %p32
    %p34 = scmp.ne.s32.totalorder %s23, %s26
    %p35 = scmp.eq.s32.totalorder %s18, 1
    %p36 = por %p34, %p35
    %p37 = scmp.ne.s32.totalorder %s26, %s27
    %p38 = scmp.eq.s32.totalorder %s18, 0
    %p39 = por %p37, %p38
    %p40 = scmp.ne.s32.totalorder %s26, %s27
    %p41 = scmp.eq.s32.totalorder %s19, 1
    %p42 = por %p40, %p41
    %p44 = scmp.ne.s32.totalorder %s27, %s43
    %p45 = scmp.eq.s32.totalorder %s19, 0
    %p46 = por %p44, %p45
    %s47 = ssub.s32 %s13, %s20
    %p48 = scmp.eq.s32.totalorder %s47, 0
    %s50 = sadd.s32 %s49, 1
    %s51 = scalar_select %p48, %s49, %s50
    %p54 = pneg %p48
    %p55 = scmp.eq.s32.totalorder %s13, 1
    %p56 = por %p54, %p55
    %p57 = scmp.ne.s32.totalorder %s49, %s52
    %p58 = scmp.eq.s32.totalorder %s13, 0
    %p59 = por %p57, %p58
    %p60 = scmp.ne.s32.totalorder %s49, %s52
    %p61 = scmp.eq.s32.totalorder %s18, 1
    %p62 = por %p60, %p61
    %p63 = scmp.ne.s32.totalorder %s52, %s53
    %p64 = scmp.eq.s32.totalorder %s18, 0
    %p65 = por %p63, %p64
    %p66 = scmp.ne.s32.totalorder %s52, %s53
    %p67 = scmp.eq.s32.totalorder %s19, 1
    %p68 = por %p66, %p67
    %p70 = scmp.ne.s32.totalorder %s53, %s69
    %p71 = scmp.eq.s32.totalorder %s19, 0
    %p72 = por %p70, %p71
    %s73 = ssub.s32 %s13, %s20
    %p74 = scmp.eq.s32.totalorder %s73, 0
    %s76 = sadd.s32 %s75, 1
    %s77 = scalar_select %p74, %s75, %s76
    %p80 = pneg %p74
    %p81 = scmp.eq.s32.totalorder %s13, 1
    %p82 = por %p80, %p81
    %p83 = scmp.ne.s32.totalorder %s75, %s78
    %p84 = scmp.eq.s32.totalorder %s13, 0
    %p85 = por %p83, %p84
    %p86 = scmp.ne.s32.totalorder %s75, %s78
    %p87 = scmp.eq.s32.totalorder %s18, 1
    %p88 = por %p86, %p87
    %p89 = scmp.ne.s32.totalorder %s78, %s79
    %p90 = scmp.eq.s32.totalorder %s18, 0
    %p91 = por %p89, %p90
    %p92 = scmp.ne.s32.totalorder %s78, %s79
    %p93 = scmp.eq.s32.totalorder %s19, 1
    %p94 = por %p92, %p93
    %p96 = scmp.ne.s32.totalorder %s79, %s95
    %p97 = scmp.eq.s32.totalorder %s19, 0
    %p98 = por %p96, %p97
    %s100 = sadd.s32 %s99, 1
    %p103 = scmp.eq.s32.totalorder %s13, 1
    %p104 = scmp.ne.s32.totalorder %s99, %s101
    %p105 = scmp.eq.s32.totalorder %s13, 0
    %p106 = por %p104, %p105
    %p107 = scmp.ne.s32.totalorder %s99, %s101
    %p108 = scmp.eq.s32.totalorder %s18, 1
    %p109 = por %p107, %p108
    %p110 = scmp.ne.s32.totalorder %s101, %s102
    %p111 = scmp.eq.s32.totalorder %s18, 0
    %p112 = por %p110, %p111
    %p113 = scmp.ne.s32.totalorder %s101, %s102
    %p114 = scmp.eq.s32.totalorder %s19, 1
    %p115 = por %p113, %p114
    %p117 = scmp.ne.s32.totalorder %s102, %s116
    %p118 = scmp.eq.s32.totalorder %s19, 0
    %p119 = por %p117, %p118
    %s121 = sadd.s32 %s120, 1
    %p124 = scmp.eq.s32.totalorder %s13, 1
    %p125 = scmp.ne.s32.totalorder %s120, %s122
    %p126 = scmp.eq.s32.totalorder %s13, 0
    %p127 = por %p125, %p126
    %p128 = scmp.ne.s32.totalorder %s120, %s122
    %p129 = scmp.eq.s32.totalorder %s18, 1
    %p130 = por %p128, %p129
    %p131 = scmp.ne.s32.totalorder %s122, %s123
    %p132 = scmp.eq.s32.totalorder %s18, 0
    %p133 = por %p131, %p132
    %p134 = scmp.ne.s32.totalorder %s122, %s123
    %p135 = scmp.eq.s32.totalorder %s19, 1
    %p136 = por %p134, %p135
    %p138 = scmp.ne.s32.totalorder %s123, %s137
    %p139 = scmp.eq.s32.totalorder %s19, 0
    %p140 = por %p138, %p139
    %s142 = sadd.s32 %s141, 1
    %p145 = scmp.eq.s32.totalorder %s13, 1
    %p146 = scmp.ne.s32.totalorder %s141, %s143
    %p147 = scmp.eq.s32.totalorder %s13, 0
    %p148 = por %p146, %p147
    %p149 = scmp.ne.s32.totalorder %s141, %s143
    %p150 = scmp.eq.s32.totalorder %s18, 1
    %p151 = por %p149, %p150
    %p152 = scmp.ne.s32.totalorder %s143, %s144
    %p153 = scmp.eq.s32.totalorder %s18, 0
    %p154 = por %p152, %p153
    %p155 = scmp.ne.s32.totalorder %s143, %s144
    %p156 = scmp.eq.s32.totalorder %s19, 1
    %p157 = por %p155, %p156
    %p159 = scmp.ne.s32.totalorder %s144, %s158
    %p160 = scmp.eq.s32.totalorder %s19, 0
    %p161 = por %p159, %p160
    %s163 = sadd.s32 %s162, 1
    %p166 = scmp.eq.s32.totalorder %s13, 1
    %p167 = scmp.ne.s32.totalorder %s162, %s164
    %p168 = scmp.eq.s32.totalorder %s13, 0
    %p169 = por %p167, %p168
    %p170 = scmp.ne.s32.totalorder %s162, %s164
    %p171 = scmp.eq.s32.totalorder %s18, 1
    %p172 = por %p170, %p171
    %p173 = scmp.ne.s32.totalorder %s164, %s165
    %p174 = scmp.eq.s32.totalorder %s18, 0
    %p175 = por %p173, %p174
    %p176 = scmp.ne.s32.totalorder %s164, %s165
    %p177 = scmp.eq.s32.totalorder %s19, 1
    %p178 = por %p176, %p177
    %p180 = scmp.ne.s32.totalorder %s165, %s179
    %p181 = scmp.eq.s32.totalorder %s19, 0
    %p182 = por %p180, %p181
    %s183 = ssub.s32 %s13, %s20
    %p184 = scmp.eq.s32.totalorder %s183, 0
    %s186 = sadd.s32 %s185, 1
    %s187 = scalar_select %p184, %s185, %s186
    %p190 = pneg %p184
    %p191 = scmp.eq.s32.totalorder %s13, 1
    %p192 = por %p190, %p191
    %p193 = scmp.ne.s32.totalorder %s185, %s188
    %p194 = scmp.eq.s32.totalorder %s13, 0
    %p195 = por %p193, %p194
    %p196 = scmp.ne.s32.totalorder %s185, %s188
    %p197 = scmp.eq.s32.totalorder %s18, 1
    %p198 = por %p196, %p197
    %p199 = scmp.ne.s32.totalorder %s188, %s189
    %p200 = scmp.eq.s32.totalorder %s18, 0
    %p201 = por %p199, %p200
    %p202 = scmp.ne.s32.totalorder %s188, %s189
    %p203 = scmp.eq.s32.totalorder %s19, 1
    %p204 = por %p202, %p203
    %p206 = scmp.ne.s32.totalorder %s189, %s205
    %p207 = scmp.eq.s32.totalorder %s19, 0
    %p208 = por %p206, %p207
    %p209 = scmp.le.s32.totalorder 1, %s13
    %p210 = scmp.lt.s32.totalorder %s13, 3
    %p211 = pnand %p209, %p210
    %p212 = pneg %p211
    // Predicated region
    $region9: #{two_stream_lffc_resnet_block.8} parent=5 // pred_check
      _
    $region10: #{two_stream_lffc_resnet_block.8} parent=5 // pred_check_branch
      %214 = sbr.rel (%p211) target = $region12
    $region11: #{two_stream_lffc_resnet_block.8} parent=5 // pred_region
      %s215 = ssub.s32 %s13, 1
      // Predicated region
      $region13: #{two_stream_lffc_resnet_block.8} parent=11 // pred_check
        %p216 = pneg %p112
      $region14: #{two_stream_lffc_resnet_block.8} parent=11 // pred_check_branch
        %218 = sbr.rel (%p216) target = $region16
      $region15: #{two_stream_lffc_resnet_block.8} parent=11 // pred_region
        _
      $region16: #{two_stream_lffc_resnet_block.8} parent=11 // pred_fallthru
        _
      // Predicated region
      $region17: #{two_stream_lffc_resnet_block.8} parent=11 // pred_check
        %p219 = pneg %p133
      $region18: #{two_stream_lffc_resnet_block.8} parent=11 // pred_check_branch
        %221 = sbr.rel (%p219) target = $region20
      $region19: #{two_stream_lffc_resnet_block.8} parent=11 // pred_region
        _
      $region20: #{two_stream_lffc_resnet_block.8} parent=11 // pred_fallthru
        _
      // Predicated region
      $region21: #{two_stream_lffc_resnet_block.8} parent=11 // pred_check
        %p222 = pneg %p154
      $region22: #{two_stream_lffc_resnet_block.8} parent=11 // pred_check_branch
        %224 = sbr.rel (%p222) target = $region24
      $region23: #{two_stream_lffc_resnet_block.8} parent=11 // pred_region
        _
      $region24: #{two_stream_lffc_resnet_block.8} parent=11 // pred_fallthru
        _
      // Predicated region
      $region25: #{two_stream_lffc_resnet_block.8} parent=11 // pred_check
        %p225 = pneg %p175
      $region26: #{two_stream_lffc_resnet_block.8} parent=11 // pred_check_branch
        %227 = sbr.rel (%p225) target = $region28
      $region27: #{two_stream_lffc_resnet_block.8} parent=11 // pred_region
        _
      $region28: #{two_stream_lffc_resnet_block.8} parent=11 // pred_fallthru
        _
    $region12: #{two_stream_lffc_resnet_block.8} parent=5 // pred_fallthru
      _
    %p228 = scmp.lt.s32.totalorder %s13, 2
    // Predicated region
    $region29: #{two_stream_lffc_resnet_block.8} parent=5 // pred_check
      %p229 = pneg %p228
    $region30: #{two_stream_lffc_resnet_block.8} parent=5 // pred_check_branch
      %231 = sbr.rel (%p229) target = $region32
    $region31: #{two_stream_lffc_resnet_block.8} parent=5 // pred_region
      // Predicated region
      $region33: #{two_stream_lffc_resnet_block.8} parent=31 // pred_check
        %p232 = pneg %p33
      $region34: #{two_stream_lffc_resnet_block.8} parent=31 // pred_check_branch
        %234 = sbr.rel (%p232) target = $region36
      $region35: #{two_stream_lffc_resnet_block.8} parent=31 // pred_region
        %s235 = smul.u32 2, %s13
        %p236 = scmp.lt.s32.totalorder %s235, 3
        %s237 = scalar_select %p236, %s235, 3
        %s238 = smul.addr %s237, 2
        %s239 = scalar_lea.vmem %s0, %s238
        %s240 = smul.u32 2, %s13
      $region36: #{two_stream_lffc_resnet_block.8} parent=31 // pred_fallthru
        _
      // Predicated region
      $region37: #{two_stream_lffc_resnet_block.8} parent=31 // pred_check
        %p241 = pneg %p59
      $region38: #{two_stream_lffc_resnet_block.8} parent=31 // pred_check_branch
        %243 = sbr.rel (%p241) target = $region40
      $region39: #{two_stream_lffc_resnet_block.8} parent=31 // pred_region
        %s244 = smul.u32 2, %s13
        %p245 = scmp.lt.s32.totalorder %s244, 3
        %s246 = scalar_select %p245, %s244, 3
        %s247 = smul.addr %s246, 2
        %s248 = scalar_lea.vmem %s1, %s247
        %s249 = smul.u32 2, %s13
      $region40: #{two_stream_lffc_resnet_block.8} parent=31 // pred_fallthru
        _
      // Predicated region
      $region41: #{two_stream_lffc_resnet_block.8} parent=31 // pred_check
        %p250 = pneg %p85
      $region42: #{two_stream_lffc_resnet_block.8} parent=31 // pred_check_branch
        %252 = sbr.rel (%p250) target = $region44
      $region43: #{two_stream_lffc_resnet_block.8} parent=31 // pred_region
        %s253 = smul.u32 2, %s13
        %p254 = scmp.lt.s32.totalorder %s253, 3
        %s255 = scalar_select %p254, %s253, 3
        %s256 = smul.addr %s255, 2
        %s257 = scalar_lea.vmem %s2, %s256
        %s258 = smul.u32 2, %s13
      $region44: #{two_stream_lffc_resnet_block.8} parent=31 // pred_fallthru
        _
    $region32: #{two_stream_lffc_resnet_block.8} parent=5 // pred_fallthru
      _
    %p259 = scmp.le.s32.totalorder 1, %s13
    %p260 = scmp.lt.s32.totalorder %s13, 3
    %p261 = pnand %p259, %p260
    %p262 = pneg %p261
    // Predicated region
    $region45: #{two_stream_lffc_resnet_block.8} parent=5 // pred_check
      _
    $region46: #{two_stream_lffc_resnet_block.8} parent=5 // pred_check_branch
      %264 = sbr.rel (%p261) target = $region48
    $region47: #{two_stream_lffc_resnet_block.8} parent=5 // pred_region
      %s265 = ssub.s32 %s13, 1
      %s266 = smul.u32 2, %s18
      %p267 = scmp.lt.s32.totalorder %s266, 3
      %s268 = scalar_select %p267, %s266, 3
      %s269 = smul.addr %s268, 2
      %s270 = scalar_lea.vmem %s0, %s269
      %p271 = pneg %p39
      %p272 = pneg %p36
      %s273 = smul.u32 2, %s18
      %p274 = scmp.lt.s32.totalorder %s273, 3
      %s275 = scalar_select %p274, %s273, 3
      %s276 = smul.addr %s275, 2
      %s277 = scalar_lea.vmem %s1, %s276
      %p278 = pneg %p65
      %p279 = pneg %p62
      %s280 = smul.u32 2, %s18
      %p281 = scmp.lt.s32.totalorder %s280, 3
      %s282 = scalar_select %p281, %s280, 3
      %s283 = smul.addr %s282, 2
      %s284 = scalar_lea.vmem %s2, %s283
      %p285 = pneg %p91
      %p286 = pneg %p88
      %p287 = pneg %p112
      %p288 = pneg %p109
      %p289 = pneg %p133
      %p290 = pneg %p130
      %p291 = pneg %p154
      %p292 = pneg %p151
      %p293 = pneg %p175
      %p294 = pneg %p172
      %p295 = pneg %p201
      %p296 = pneg %p198
      %s297 = smul.u32 2, %s18
      %p298 = scmp.lt.s32.totalorder %s297, 3
      %s299 = scalar_select %p298, %s297, 3
      %s300 = smul.addr %s299, 4
      %s301 = scalar_lea.vmem %s7, %s300
      %s302 = smul.u32 2, %s18
      %p303 = scmp.lt.s32.totalorder %s302, 3
      %s304 = scalar_select %p303, %s302, 3
      %s305 = smul.addr %s304, 2
      %s306 = scalar_lea.vmem %s0, %s305
      %s307 = smul.u32 2, %s18
      %s308 = smul.u32 2, %s18
      %p309 = scmp.lt.s32.totalorder %s308, 3
      %s310 = scalar_select %p309, %s308, 3
      %s311 = smul.addr %s310, 2
      %s312 = scalar_lea.vmem %s1, %s311
      %s313 = smul.u32 2, %s18
      %s314 = smul.u32 2, %s18
      %p315 = scmp.lt.s32.totalorder %s314, 3
      %s316 = scalar_select %p315, %s314, 3
      %s317 = smul.addr %s316, 2
      %s318 = scalar_lea.vmem %s2, %s317
      %s319 = smul.u32 2, %s18
      %s320 = smul.u32 2, %s18
      %p321 = scmp.lt.s32.totalorder %s320, 3
      %s322 = scalar_select %p321, %s320, 3
      %s323 = smul.addr %s322, 4
      %s324 = scalar_lea.vmem %s7, %s323
      %s325 = smul.u32 2, %s18
      %v326 = vld [vmem:[%s306] sm:$0xf]
      %v327 = vunpack.c.l.bf16 %v326
      %v328 = vld [vmem:[%s3] sm:$0x3]
      %v329 = vand.u32 %v328, 1
      %vm330 = vcmp.ne.s32.totalorder %v329, 0
      %v331 = vand.u32 %v328, 2
      %vm332 = vcmp.ne.s32.totalorder %v331, 0
      %v333 = vand.u32 %v328, 4
      %vm334 = vcmp.ne.s32.totalorder %v333, 0
      %v335 = vand.u32 %v328, 8
      %vm336 = vcmp.ne.s32.totalorder %v335, 0
      %v338 = vcombine.high %v327, %v327
      %340 = vrot.lane.b32.xlu0 %v327, 127
      %v341 = vpop.permute.xlu0 %340
      %342 = vrot.lane.b32.xlu0 %v338, 127
      %v343 = vpop.permute.xlu0 %342
      %v344 = vlaneseq
      %v345 = vand.u32 %v344, 127
      %vm346 = vcmp.lt.s32.totalorder %v345, 127
      %v347 = vsel %vm346, %v341, %v343
      %v348 = vsel %vm346, %v343, %v341
      %349 = vrot.lane.b32.xlu0 %v327, 1
      %v350 = vpop.permute.xlu0 %349
      %351 = vrot.lane.b32.xlu0 %v338, 1
      %v352 = vpop.permute.xlu0 %351
      %vm353 = vcmp.lt.s32.totalorder %v345, 1
      %v354 = vsel %vm353, %v350, %v352
      %v355 = vsel %vm353, %v352, %v350
      %v356 = vsel %vm330, 1, 0
      %v357 = vlaneseq
      %v358 = vshrl.u32 %v357, 7
      %v359 = vsub.s32 0, %v358
      %v360 = vrot.slane %v356, %v359
      %v361 = vlaneseq
      %v362 = vshrl.u32 %v361, 7
      %v363 = vsub.s32 1, %v362
      %v364 = vrot.slane %v356, %v363
      %vm365 = vcmp.eq.s32.totalorder %v360, 1
      %vm366 = vcmp.eq.s32.totalorder %v364, 1
      %v367 = vsel %vm365, %v347, %v355
      %v368 = vsel %vm366, %v348, %v354
      %v369 = vsel %vm332, 1, 0
      %v370 = vlaneseq
      %v371 = vshrl.u32 %v370, 7
      %v372 = vsub.s32 0, %v371
      %v373 = vrot.slane %v369, %v372
      %v374 = vlaneseq
      %v375 = vshrl.u32 %v374, 7
      %v376 = vsub.s32 1, %v375
      %v377 = vrot.slane %v369, %v376
      %vm378 = vcmp.eq.s32.totalorder %v373, 1
      %vm379 = vcmp.eq.s32.totalorder %v377, 1
      %v380 = vsel %vm378, %v355, %v347
      %v381 = vsel %vm379, %v354, %v348
      %382 = vrot.lane.b32.xlu0 %v367, 112
      %v383 = vpop.permute.xlu0 %382
      %384 = vrot.lane.b32.xlu0 %v368, 112
      %v385 = vpop.permute.xlu0 %384
      %vm386 = vcmp.lt.s32.totalorder %v345, 112
      %v387 = vsel %vm386, %v383, %v385
      %v388 = vsel %vm386, %v385, %v383
      %389 = vrot.lane.b32.xlu0 %v367, 16
      %v390 = vpop.permute.xlu0 %389
      %391 = vrot.lane.b32.xlu0 %v368, 16
      %v392 = vpop.permute.xlu0 %391
      %vm393 = vcmp.lt.s32.totalorder %v345, 16
      %v394 = vsel %vm393, %v390, %v392
      %v395 = vsel %vm393, %v392, %v390
      %v396 = vsel %vm334, 1, 0
      %v397 = vlaneseq
      %v398 = vshrl.u32 %v397, 7
      %v399 = vsub.s32 0, %v398
      %v400 = vrot.slane %v396, %v399
      %v401 = vlaneseq
      %v402 = vshrl.u32 %v401, 7
      %v403 = vsub.s32 1, %v402
      %v404 = vrot.slane %v396, %v403
      %vm405 = vcmp.eq.s32.totalorder %v400, 1
      %vm406 = vcmp.eq.s32.totalorder %v404, 1
      %v407 = vsel %vm405, %v387, %v395
      %v408 = vsel %vm406, %v388, %v394
      %v409 = vsel %vm336, 1, 0
      %v410 = vlaneseq
      %v411 = vshrl.u32 %v410, 7
      %v412 = vsub.s32 0, %v411
      %v413 = vrot.slane %v409, %v412
      %v414 = vlaneseq
      %v415 = vshrl.u32 %v414, 7
      %v416 = vsub.s32 1, %v415
      %v417 = vrot.slane %v409, %v416
      %vm418 = vcmp.eq.s32.totalorder %v413, 1
      %vm419 = vcmp.eq.s32.totalorder %v417, 1
      %v420 = vsel %vm418, %v395, %v387
      %v421 = vsel %vm419, %v394, %v388
      %422 = vst [vmem:[#allocation2] sm:$0xf] %v407
      %423 = vst [vmem:[#allocation2 + $0x8] sm:$0xf] %v408
      %v426 = vrot.slane %v367, 4
      %v427 = vrot.slane %v368, 4
      %430 = vst [vmem:[#allocation2 + $0x10] sm:$0xf0] %v426
      %431 = vst [vmem:[#allocation2 + $0x18] sm:$0xf0] %v427
      %432 = vst [vmem:[#allocation2 + $0x30] sm:$0xf] %v420
      %433 = vst [vmem:[#allocation2 + $0x38] sm:$0xf] %v421
      %434 = vrot.lane.b32.xlu0 %v327, 112
      %v435 = vpop.permute.xlu0 %434
      %436 = vrot.lane.b32.xlu0 %v338, 112
      %v437 = vpop.permute.xlu0 %436
      %v438 = vsel %vm386, %v435, %v437
      %v439 = vsel %vm386, %v437, %v435
      %440 = vrot.lane.b32.xlu0 %v327, 16
      %v441 = vpop.permute.xlu0 %440
      %442 = vrot.lane.b32.xlu0 %v338, 16
      %v443 = vpop.permute.xlu0 %442
      %v444 = vsel %vm393, %v441, %v443
      %v445 = vsel %vm393, %v443, %v441
      %v446 = vsel %vm405, %v438, %v445
      %v447 = vsel %vm406, %v439, %v444
      %v448 = vsel %vm418, %v445, %v438
      %v449 = vsel %vm419, %v444, %v439
      %v452 = vrot.slane %v446, 4
      %v453 = vrot.slane %v447, 4
      %456 = vst [vmem:[#allocation2] sm:$0xf0] %v452
      %457 = vst [vmem:[#allocation2 + $0x8] sm:$0xf0] %v453
      %458 = vst [vmem:[#allocation2 + $0x20] sm:$0xf] %v327
      %459 = vst [vmem:[#allocation2 + $0x28] sm:$0xf] %v338
      %v462 = vrot.slane %v448, 4
      %v463 = vrot.slane %v449, 4
      %466 = vst [vmem:[#allocation2 + $0x30] sm:$0xf0] %v462
      %467 = vst [vmem:[#allocation2 + $0x38] sm:$0xf0] %v463
      %468 = vrot.lane.b32.xlu0 %v380, 112
      %v469 = vpop.permute.xlu0 %468
      %470 = vrot.lane.b32.xlu0 %v381, 112
      %v471 = vpop.permute.xlu0 %470
      %v472 = vsel %vm386, %v469, %v471
      %v473 = vsel %vm386, %v471, %v469
      %474 = vrot.lane.b32.xlu0 %v380, 16
      %v475 = vpop.permute.xlu0 %474
      %476 = vrot.lane.b32.xlu0 %v381, 16
      %v477 = vpop.permute.xlu0 %476
      %v478 = vsel %vm393, %v475, %v477
      %v479 = vsel %vm393, %v477, %v475
      %v480 = vsel %vm405, %v472, %v479
      %v481 = vsel %vm406, %v473, %v478
      %v482 = vsel %vm418, %v479, %v472
      %v483 = vsel %vm419, %v478, %v473
      %484 = vst [vmem:[#allocation2 + $0x10] sm:$0xf] %v480
      %485 = vst [vmem:[#allocation2 + $0x18] sm:$0xf] %v481
      %v488 = vrot.slane %v380, 4
      %v489 = vrot.slane %v381, 4
      %492 = vst [vmem:[#allocation2 + $0x20] sm:$0xf0] %v488
      %493 = vst [vmem:[#allocation2 + $0x28] sm:$0xf0] %v489
      %494 = vst [vmem:[#allocation2 + $0x40] sm:$0xf] %v482
      %495 = vst [vmem:[#allocation2 + $0x48] sm:$0xf] %v483
      %v496 = vld [vmem:[%s4] sm:$0xff]
      %v497 = vld [vmem:[#allocation2] sm:$0xff]
      %v498 = vld [vmem:[#allocation2 + $0x8] sm:$0xff]
      %v499 = vld [vmem:[#allocation2 + $0x10] sm:$0xff]
      %v500 = vld [vmem:[#allocation2 + $0x18] sm:$0xff]
      %v501 = vld [vmem:[#allocation2 + $0x20] sm:$0xff]
      %v502 = vld [vmem:[#allocation2 + $0x28] sm:$0xff]
      %v503 = vld [vmem:[#allocation2 + $0x30] sm:$0xff]
      %v504 = vld [vmem:[#allocation2 + $0x38] sm:$0xff]
      %v505 = vld [vmem:[#allocation2 + $0x40] sm:$0xf]
      %v506 = vld [vmem:[#allocation2 + $0x48] sm:$0xf]
      %v507 = vld [vmem:[%s5] sm:$0xff]
      %v508 = vld [vmem:[%s312] sm:$0xf]
      %v509 = vld [vmem:[%s318] sm:$0xf]
      %v510 = vadd.f32 %v508, %v509
      %v513 = vunpack.c.l.s4 1983009808
      %v514 = vunpack.c.0.s8 %v513
      %v515 = vlaneseq
      %v516 = vshrl.u32 %v515, 7
      %v517 = vsub.s32 %v514, %v516
      %v518 = vrot.slane %v510, %v517
      %v519 = vcombine.high %v518, %v518
      %vm520 = vcmask 15360
      %v522 = vsel %vm520, %v507, 0
      %vm524 = vcmask 1041408
      %v525 = vsel %vm524, %v518, 0
      %v527 = vsel %vm524, %v519, 0
      %529 = vmatprep.subr.mxu0 %v527
      %530 = vmatpush1.msra.mxu0 %v525
      %531 = vmatprep.subr.mxu0 0.0
      %532 = vmatpush1.msra.mxu0 0.0
      %533 = vmatprep.subr.mxu0 0.0
      %534 = vmatpush1.msra.mxu0 0.0
      %535 = vmatprep.subr.mxu0 0.0
      %536 = vmatpush1.msra.mxu0 0.0
      %537 = vmatprep.subr.mxu0 0.0
      %538 = vmatpush1.msra.mxu0 0.0
      %539 = vmatprep.subr.mxu0 0.0
      %540 = vmatpush1.msra.mxu0 0.0
      %541 = vmatprep.subr.mxu0 0.0
      %542 = vmatpush1.msra.mxu0 0.0
      %543 = vmatprep.subr.mxu0 0.0
      %544 = vmatpush1.msra.mxu0 0.0
      %545 = vmatprep.subr.mxu0 0.0
      %546 = vmatpush1.msra.mxu0 0.0
      %547 = vmatprep.subr.mxu0 0.0
      %548 = vmatpush1.msra.mxu0 0.0
      %549 = vmatprep.subr.mxu0 0.0
      %550 = vmatpush1.msra.mxu0 0.0
      %551 = vmatprep.subr.mxu0 0.0
      %552 = vmatpush1.msra.mxu0 0.0
      %553 = vmatprep.subr.mxu0 0.0
      %554 = vmatpush1.msra.mxu0 0.0
      %555 = vmatprep.subr.mxu0 0.0
      %556 = vmatpush1.msra.mxu0 0.0
      %557 = vmatprep.subr.mxu0 0.0
      %558 = vmatpush1.msra.mxu0 0.0
      %559 = vmatprep.subr.mxu0 0.0
      %560 = vmatpush1.msra.mxu0 0.0
      %561 = vmatprep.subr.mxu0 0.0
      %562 = vmatpush1.msra.mxu0 0.0
      %563 = vmatprep.subr.mxu0 0.0
      %564 = vmatpush1.msra.mxu0 0.0
      %565 = vmatprep.subr.mxu0 0.0
      %566 = vmatpush1.msra.mxu0 0.0
      %567 = vmatprep.subr.mxu0 0.0
      %568 = vmatpush1.msra.mxu0 0.0
      %569 = vmatprep.subr.mxu0 0.0
      %570 = vmatpush1.msra.mxu0 0.0
      %571 = vmatprep.subr.mxu0 0.0
      %572 = vmatpush1.msra.mxu0 0.0
      %573 = vmatprep.subr.mxu0 0.0
      %574 = vmatpush1.msra.mxu0 0.0
      %575 = vmatprep.subr.mxu0 0.0
      %576 = vmatpush1.msra.mxu0 0.0
      %577 = vmatprep.subr.mxu0 0.0
      %578 = vmatpush1.msra.mxu0 0.0
      %579 = vmatprep.subr.mxu0 0.0
      %580 = vmatpush1.msra.mxu0 0.0
      %581 = vmatprep.subr.mxu0 0.0
      %582 = vmatpush1.msra.mxu0 0.0
      %583 = vmatprep.subr.mxu0 0.0
      %584 = vmatpush1.msra.mxu0 0.0
      %585 = vmatprep.subr.mxu0 0.0
      %586 = vmatpush1.msra.mxu0 0.0
      %587 = vmatprep.subr.mxu0 0.0
      %588 = vmatpush1.msra.mxu0 0.0
      %589 = vmatprep.subr.mxu0 0.0
      %590 = vmatpush1.msra.mxu0 0.0
      %591 = vmatprep.subr.mxu0 0.0
      %592 = vmatpush1.msra.mxu0 0.0
      %593 = vmatprep.mubr.f32.mxu0 0.0
      %594 = vmatmul.mubr.f32.gmra.mrb[0].mxu0 %v522
      %v595 = vpop.f32.mrb[0].mxu0
      %v596 = vadd.f32 0.0, %v595
      %v597 = vpop.f32.mrb[0].mxu0
      %v598 = vadd.f32 0.0, %v597
      %599 = vdwg.mxu0
      %vm600 = vcmask 293888
      %v602 = vsel %vm600, %v496, 0
      %vm604 = vcmask 1043456
      %v606 = vsel %vm604, %v505, 0
      %v609 = vsel %vm604, %v506, 0
      %611 = vmatprep.subr.mxu0 %v498
      %612 = vmatpush1.msra.mxu0 %v497
      %613 = vmatprep.subr.mxu0 %v500
      %614 = vmatpush1.msra.mxu0 %v499
      %615 = vmatprep.subr.mxu0 %v502
      %616 = vmatpush1.msra.mxu0 %v501
      %617 = vmatprep.subr.mxu0 %v504
      %618 = vmatpush1.msra.mxu0 %v503
      %619 = vmatprep.subr.mxu0 %v609
      %620 = vmatpush1.msra.mxu0 %v606
      %621 = vmatprep.subr.mxu0 0.0
      %622 = vmatpush1.msra.mxu0 0.0
      %623 = vmatprep.subr.mxu0 0.0
      %624 = vmatpush1.msra.mxu0 0.0
      %625 = vmatprep.subr.mxu0 0.0
      %626 = vmatpush1.msra.mxu0 0.0
      %627 = vmatprep.subr.mxu0 0.0
      %628 = vmatpush1.msra.mxu0 0.0
      %629 = vmatprep.subr.mxu0 0.0
      %630 = vmatpush1.msra.mxu0 0.0
      %631 = vmatprep.subr.mxu0 0.0
      %632 = vmatpush1.msra.mxu0 0.0
      %633 = vmatprep.subr.mxu0 0.0
      %634 = vmatpush1.msra.mxu0 0.0
      %635 = vmatprep.subr.mxu0 0.0
      %636 = vmatpush1.msra.mxu0 0.0
      %637 = vmatprep.subr.mxu0 0.0
      %638 = vmatpush1.msra.mxu0 0.0
      %639 = vmatprep.subr.mxu0 0.0
      %640 = vmatpush1.msra.mxu0 0.0
      %641 = vmatprep.subr.mxu0 0.0
      %642 = vmatpush1.msra.mxu0 0.0
      %643 = vmatprep.subr.mxu0 0.0
      %644 = vmatpush1.msra.mxu0 0.0
      %645 = vmatprep.subr.mxu0 0.0
      %646 = vmatpush1.msra.mxu0 0.0
      %647 = vmatprep.subr.mxu0 0.0
      %648 = vmatpush1.msra.mxu0 0.0
      %649 = vmatprep.subr.mxu0 0.0
      %650 = vmatpush1.msra.mxu0 0.0
      %651 = vmatprep.subr.mxu0 0.0
      %652 = vmatpush1.msra.mxu0 0.0
      %653 = vmatprep.subr.mxu0 0.0
      %654 = vmatpush1.msra.mxu0 0.0
      %655 = vmatprep.subr.mxu0 0.0
      %656 = vmatpush1.msra.mxu0 0.0
      %657 = vmatprep.subr.mxu0 0.0
      %658 = vmatpush1.msra.mxu0 0.0
      %659 = vmatprep.subr.mxu0 0.0
      %660 = vmatpush1.msra.mxu0 0.0
      %661 = vmatprep.subr.mxu0 0.0
      %662 = vmatpush1.msra.mxu0 0.0
      %663 = vmatprep.subr.mxu0 0.0
      %664 = vmatpush1.msra.mxu0 0.0
      %665 = vmatprep.subr.mxu0 0.0
      %666 = vmatpush1.msra.mxu0 0.0
      %667 = vmatprep.subr.mxu0 0.0
      %668 = vmatpush1.msra.mxu0 0.0
      %669 = vmatprep.subr.mxu0 0.0
      %670 = vmatpush1.msra.mxu0 0.0
      %671 = vmatprep.subr.mxu0 0.0
      %672 = vmatpush1.msra.mxu0 0.0
      %673 = vmatprep.subr.mxu0 0.0
      %674 = vmatpush1.msra.mxu0 0.0
      %675 = vmatprep.mubr.f32.mxu0 0.0
      %676 = vmatmul.mubr.f32.gmra.mrb[0].mxu0 %v602
      %v677 = vpop.f32.mrb[0].mxu0
      %v678 = vadd.f32 %v596, %v677
      %v679 = vpop.f32.mrb[0].mxu0
      %v680 = vadd.f32 %v598, %v679
      %681 = vdwg.mxu0
      %v682 = vld [vmem:[%s6] sm:$0xff]
      %684 = vset.pattern.permute.xlu0 0
      %685 = vperm.xlu0 %684, %v682
      %v686 = vpop.permute.xlu0 %685
      %v688 = vadd.f32 %v678, %v686
      %v689 = vadd.f32 %v680, %v686
      %v690 = vmax.f32 %v688, 0.0
      %v691 = vmax.f32 %v689, 0.0
      %v692 = vpack.c.bf16 %v690, %v690
      %v693 = vpack.c.bf16 %v691, %v691
      %v696 = vunpack.c.l.b16 %v692
      %v697 = vunpack.c.l.b16 %v693
      %v698 = vpack.c.b16 %v697, %v696
      %700 = vst [vmem:[%s324] sm:$0xff] %v698
      %s701 = smul.u32 2, %s18
      %p702 = scmp.lt.s32.totalorder %s701, 3
      %s703 = scalar_select %p702, %s701, 3
      %s704 = smul.addr %s703, 4
      %s705 = scalar_lea.vmem %s7, %s704
      // Predicated region
      $region49: #{two_stream_lffc_resnet_block.8} parent=47 // pred_check
        %p706 = pneg %p198
      $region50: #{two_stream_lffc_resnet_block.8} parent=47 // pred_check_branch
        %708 = sbr.rel (%p706) target = $region52
      $region51: #{two_stream_lffc_resnet_block.8} parent=47 // pred_region
        %s709 = smul.u32 2, %s18
      $region52: #{two_stream_lffc_resnet_block.8} parent=47 // pred_fallthru
        _
    $region48: #{two_stream_lffc_resnet_block.8} parent=5 // pred_fallthru
      _
    %p710 = scmp.le.s32.totalorder 2, %s13
    // Predicated region
    $region53: #{two_stream_lffc_resnet_block.8} parent=5 // pred_check
      %p711 = pneg %p710
    $region54: #{two_stream_lffc_resnet_block.8} parent=5 // pred_check_branch
      %713 = sbr.rel (%p711) target = $region56
    $region55: #{two_stream_lffc_resnet_block.8} parent=5 // pred_region
      %s714 = ssub.s32 %s13, 2
      // Predicated region
      $region57: #{two_stream_lffc_resnet_block.8} parent=55 // pred_check
        %p715 = pneg %p204
      $region58: #{two_stream_lffc_resnet_block.8} parent=55 // pred_check_branch
        %717 = sbr.rel (%p715) target = $region60
      $region59: #{two_stream_lffc_resnet_block.8} parent=55 // pred_region
        %s718 = smul.u32 2, %s19
        %p719 = scmp.lt.s32.totalorder %s718, 3
        %s720 = scalar_select %p719, %s718, 3
        %s721 = smul.addr %s720, 4
        %s722 = scalar_lea.vmem %s7, %s721
      $region60: #{two_stream_lffc_resnet_block.8} parent=55 // pred_fallthru
        _
    $region56: #{two_stream_lffc_resnet_block.8} parent=5 // pred_fallthru
      _
  $region6: #{two_stream_lffc_resnet_block.8} parent=0 // loop_footer
    %s17 = sadd.s32 1, %s13
  $region7: #{two_stream_lffc_resnet_block.8} parent=0 // loop_footer_branch
    %12 = sbr.rel target = $region3
  $region8: #{two_stream_lffc_resnet_block.8} parent=0 // loop_exit
    _

// kernel: two_stream_lffc_resnet_block.11
$region0: #{two_stream_lffc_resnet_block.11}
  #allocation0 [shape = 'u32[]', space=smem, size = 0x4, offset = 0x4, fixed_abs, tag = 'smem constant byte address 0x4 - core index']
  #allocation1 [shape = 'u32[144,128]{1,0:T(1,128)}', space=vmem, size = 0x12000, scoped, tag = 'internal scratch']
  #allocation2 [shape = 'f32[36,256]{1,0:T(8,128)}', space=vmem, size = 0xa000, scoped, tag = 'scratch operand']
  %s0 = inlined_call_operand.vmem [shape: bf16[4,512], index: 0, kind: input, shape index: {}]
  %s1 = inlined_call_operand.vmem [shape: f32[2,512], index: 1, kind: input, shape index: {}]
  %s2 = inlined_call_operand.vmem [shape: f32[2,512], index: 2, kind: input, shape index: {}]
  %s3 = inlined_call_operand.vmem [shape: s32[1,256], index: 3, kind: input, shape index: {}]
  %s4 = inlined_call_operand.vmem [shape: f32[8,36], index: 4, kind: input, shape index: {}]
  %s5 = inlined_call_operand.vmem [shape: f32[8,2], index: 5, kind: input, shape index: {}]
  %s6 = inlined_call_operand.vmem [shape: f32[8,1], index: 6, kind: input, shape index: {}]
  %s7 = inlined_call_operand.vmem [shape: bf16[8,512], index: 7, kind: input, shape index: {}]
  %s8 = inlined_call_operand.vmem [shape: bf16[8,512], index: 8, kind: output, shape index: {}]
  %s9 = sld [smem:[#allocation0]]
  $region65: #{two_stream_lffc_resnet_block.11} parent=0
    _
  %s11 = ssub.s32 1, %s9
  %s12 = scalar_select 0, %s11, %s9
  loop: start=0, step=1, limit=4
  $region2: #{two_stream_lffc_resnet_block.11} parent=0 // loop_pre_header
    _
  $region3: #{two_stream_lffc_resnet_block.11} parent=0 // loop_header
    %s14 = sphi 0, %s18
    %p15 = scmp.ge.s32.totalorder %s14, 4
    %s24 = sphi 0, %s26
    %s27 = sphi 0, %s24
    %s28 = sphi 0, %s27
    %s44 = sphi 0, %s28
    %s50 = sphi 0, %s52
    %s53 = sphi 0, %s50
    %s54 = sphi 0, %s53
    %s70 = sphi 0, %s54
    %s76 = sphi 0, %s78
    %s79 = sphi 0, %s76
    %s80 = sphi 0, %s79
    %s96 = sphi 0, %s80
    %s100 = sphi 0, %s100
    %s102 = sphi 0, %s100
    %s103 = sphi 0, %s102
    %s117 = sphi 0, %s103
    %s121 = sphi 0, %s121
    %s123 = sphi 0, %s121
    %s124 = sphi 0, %s123
    %s138 = sphi 0, %s124
    %s142 = sphi 0, %s142
    %s144 = sphi 0, %s142
    %s145 = sphi 0, %s144
    %s159 = sphi 0, %s145
    %s163 = sphi 0, %s163
    %s165 = sphi 0, %s163
    %s166 = sphi 0, %s165
    %s180 = sphi 0, %s166
    %s186 = sphi 0, %s188
    %s189 = sphi 0, %s186
    %s190 = sphi 0, %s189
    %s206 = sphi 0, %s190
    %s212 = sphi 0, %s214
    %s215 = sphi 0, %s212
    %s216 = sphi 0, %s215
    %s232 = sphi 0, %s216
  $region4: #{two_stream_lffc_resnet_block.11} parent=0 // loop_header_branch
    %17 = sbr.rel (%p15) target = $region8
  $region5: #{two_stream_lffc_resnet_block.11} parent=0 // loop_body
    %s19 = ssub.s32 %s14, 1
    %s20 = ssub.s32 %s14, 2
    %s21 = sadd.s32 %s14, 1
    %s22 = ssub.s32 %s14, %s21
    %p23 = scmp.eq.s32.totalorder %s22, 0
    %s25 = sadd.s32 %s24, 1
    %s26 = scalar_select %p23, %s24, %s25
    %p29 = pneg %p23
    %p30 = scmp.eq.s32.totalorder %s14, 1
    %p31 = por %p29, %p30
    %p32 = scmp.ne.s32.totalorder %s24, %s27
    %p33 = scmp.eq.s32.totalorder %s14, 0
    %p34 = por %p32, %p33
    %p35 = scmp.ne.s32.totalorder %s24, %s27
    %p36 = scmp.eq.s32.totalorder %s19, 1
    %p37 = por %p35, %p36
    %p38 = scmp.ne.s32.totalorder %s27, %s28
    %p39 = scmp.eq.s32.totalorder %s19, 0
    %p40 = por %p38, %p39
    %p41 = scmp.ne.s32.totalorder %s27, %s28
    %p42 = scmp.eq.s32.totalorder %s20, 1
    %p43 = por %p41, %p42
    %p45 = scmp.ne.s32.totalorder %s28, %s44
    %p46 = scmp.eq.s32.totalorder %s20, 0
    %p47 = por %p45, %p46
    %s48 = ssub.s32 %s14, %s21
    %p49 = scmp.eq.s32.totalorder %s48, 0
    %s51 = sadd.s32 %s50, 1
    %s52 = scalar_select %p49, %s50, %s51
    %p55 = pneg %p49
    %p56 = scmp.eq.s32.totalorder %s14, 1
    %p57 = por %p55, %p56
    %p58 = scmp.ne.s32.totalorder %s50, %s53
    %p59 = scmp.eq.s32.totalorder %s14, 0
    %p60 = por %p58, %p59
    %p61 = scmp.ne.s32.totalorder %s50, %s53
    %p62 = scmp.eq.s32.totalorder %s19, 1
    %p63 = por %p61, %p62
    %p64 = scmp.ne.s32.totalorder %s53, %s54
    %p65 = scmp.eq.s32.totalorder %s19, 0
    %p66 = por %p64, %p65
    %p67 = scmp.ne.s32.totalorder %s53, %s54
    %p68 = scmp.eq.s32.totalorder %s20, 1
    %p69 = por %p67, %p68
    %p71 = scmp.ne.s32.totalorder %s54, %s70
    %p72 = scmp.eq.s32.totalorder %s20, 0
    %p73 = por %p71, %p72
    %s74 = ssub.s32 %s14, %s21
    %p75 = scmp.eq.s32.totalorder %s74, 0
    %s77 = sadd.s32 %s76, 1
    %s78 = scalar_select %p75, %s76, %s77
    %p81 = pneg %p75
    %p82 = scmp.eq.s32.totalorder %s14, 1
    %p83 = por %p81, %p82
    %p84 = scmp.ne.s32.totalorder %s76, %s79
    %p85 = scmp.eq.s32.totalorder %s14, 0
    %p86 = por %p84, %p85
    %p87 = scmp.ne.s32.totalorder %s76, %s79
    %p88 = scmp.eq.s32.totalorder %s19, 1
    %p89 = por %p87, %p88
    %p90 = scmp.ne.s32.totalorder %s79, %s80
    %p91 = scmp.eq.s32.totalorder %s19, 0
    %p92 = por %p90, %p91
    %p93 = scmp.ne.s32.totalorder %s79, %s80
    %p94 = scmp.eq.s32.totalorder %s20, 1
    %p95 = por %p93, %p94
    %p97 = scmp.ne.s32.totalorder %s80, %s96
    %p98 = scmp.eq.s32.totalorder %s20, 0
    %p99 = por %p97, %p98
    %s101 = sadd.s32 %s100, 1
    %p104 = scmp.eq.s32.totalorder %s14, 1
    %p105 = scmp.ne.s32.totalorder %s100, %s102
    %p106 = scmp.eq.s32.totalorder %s14, 0
    %p107 = por %p105, %p106
    %p108 = scmp.ne.s32.totalorder %s100, %s102
    %p109 = scmp.eq.s32.totalorder %s19, 1
    %p110 = por %p108, %p109
    %p111 = scmp.ne.s32.totalorder %s102, %s103
    %p112 = scmp.eq.s32.totalorder %s19, 0
    %p113 = por %p111, %p112
    %p114 = scmp.ne.s32.totalorder %s102, %s103
    %p115 = scmp.eq.s32.totalorder %s20, 1
    %p116 = por %p114, %p115
    %p118 = scmp.ne.s32.totalorder %s103, %s117
    %p119 = scmp.eq.s32.totalorder %s20, 0
    %p120 = por %p118, %p119
    %s122 = sadd.s32 %s121, 1
    %p125 = scmp.eq.s32.totalorder %s14, 1
    %p126 = scmp.ne.s32.totalorder %s121, %s123
    %p127 = scmp.eq.s32.totalorder %s14, 0
    %p128 = por %p126, %p127
    %p129 = scmp.ne.s32.totalorder %s121, %s123
    %p130 = scmp.eq.s32.totalorder %s19, 1
    %p131 = por %p129, %p130
    %p132 = scmp.ne.s32.totalorder %s123, %s124
    %p133 = scmp.eq.s32.totalorder %s19, 0
    %p134 = por %p132, %p133
    %p135 = scmp.ne.s32.totalorder %s123, %s124
    %p136 = scmp.eq.s32.totalorder %s20, 1
    %p137 = por %p135, %p136
    %p139 = scmp.ne.s32.totalorder %s124, %s138
    %p140 = scmp.eq.s32.totalorder %s20, 0
    %p141 = por %p139, %p140
    %s143 = sadd.s32 %s142, 1
    %p146 = scmp.eq.s32.totalorder %s14, 1
    %p147 = scmp.ne.s32.totalorder %s142, %s144
    %p148 = scmp.eq.s32.totalorder %s14, 0
    %p149 = por %p147, %p148
    %p150 = scmp.ne.s32.totalorder %s142, %s144
    %p151 = scmp.eq.s32.totalorder %s19, 1
    %p152 = por %p150, %p151
    %p153 = scmp.ne.s32.totalorder %s144, %s145
    %p154 = scmp.eq.s32.totalorder %s19, 0
    %p155 = por %p153, %p154
    %p156 = scmp.ne.s32.totalorder %s144, %s145
    %p157 = scmp.eq.s32.totalorder %s20, 1
    %p158 = por %p156, %p157
    %p160 = scmp.ne.s32.totalorder %s145, %s159
    %p161 = scmp.eq.s32.totalorder %s20, 0
    %p162 = por %p160, %p161
    %s164 = sadd.s32 %s163, 1
    %p167 = scmp.eq.s32.totalorder %s14, 1
    %p168 = scmp.ne.s32.totalorder %s163, %s165
    %p169 = scmp.eq.s32.totalorder %s14, 0
    %p170 = por %p168, %p169
    %p171 = scmp.ne.s32.totalorder %s163, %s165
    %p172 = scmp.eq.s32.totalorder %s19, 1
    %p173 = por %p171, %p172
    %p174 = scmp.ne.s32.totalorder %s165, %s166
    %p175 = scmp.eq.s32.totalorder %s19, 0
    %p176 = por %p174, %p175
    %p177 = scmp.ne.s32.totalorder %s165, %s166
    %p178 = scmp.eq.s32.totalorder %s20, 1
    %p179 = por %p177, %p178
    %p181 = scmp.ne.s32.totalorder %s166, %s180
    %p182 = scmp.eq.s32.totalorder %s20, 0
    %p183 = por %p181, %p182
    %s184 = ssub.s32 %s14, %s21
    %p185 = scmp.eq.s32.totalorder %s184, 0
    %s187 = sadd.s32 %s186, 1
    %s188 = scalar_select %p185, %s186, %s187
    %p191 = pneg %p185
    %p192 = scmp.eq.s32.totalorder %s14, 1
    %p193 = por %p191, %p192
    %p194 = scmp.ne.s32.totalorder %s186, %s189
    %p195 = scmp.eq.s32.totalorder %s14, 0
    %p196 = por %p194, %p195
    %p197 = scmp.ne.s32.totalorder %s186, %s189
    %p198 = scmp.eq.s32.totalorder %s19, 1
    %p199 = por %p197, %p198
    %p200 = scmp.ne.s32.totalorder %s189, %s190
    %p201 = scmp.eq.s32.totalorder %s19, 0
    %p202 = por %p200, %p201
    %p203 = scmp.ne.s32.totalorder %s189, %s190
    %p204 = scmp.eq.s32.totalorder %s20, 1
    %p205 = por %p203, %p204
    %p207 = scmp.ne.s32.totalorder %s190, %s206
    %p208 = scmp.eq.s32.totalorder %s20, 0
    %p209 = por %p207, %p208
    %s210 = ssub.s32 %s14, %s21
    %p211 = scmp.eq.s32.totalorder %s210, 0
    %s213 = sadd.s32 %s212, 1
    %s214 = scalar_select %p211, %s212, %s213
    %p217 = pneg %p211
    %p218 = scmp.eq.s32.totalorder %s14, 1
    %p219 = por %p217, %p218
    %p220 = scmp.ne.s32.totalorder %s212, %s215
    %p221 = scmp.eq.s32.totalorder %s14, 0
    %p222 = por %p220, %p221
    %p223 = scmp.ne.s32.totalorder %s212, %s215
    %p224 = scmp.eq.s32.totalorder %s19, 1
    %p225 = por %p223, %p224
    %p226 = scmp.ne.s32.totalorder %s215, %s216
    %p227 = scmp.eq.s32.totalorder %s19, 0
    %p228 = por %p226, %p227
    %p229 = scmp.ne.s32.totalorder %s215, %s216
    %p230 = scmp.eq.s32.totalorder %s20, 1
    %p231 = por %p229, %p230
    %p233 = scmp.ne.s32.totalorder %s216, %s232
    %p234 = scmp.eq.s32.totalorder %s20, 0
    %p235 = por %p233, %p234
    %p236 = scmp.le.s32.totalorder 1, %s14
    %p237 = scmp.lt.s32.totalorder %s14, 3
    %p238 = pnand %p236, %p237
    %p239 = pneg %p238
    // Predicated region
    $region9: #{two_stream_lffc_resnet_block.11} parent=5 // pred_check
      _
    $region10: #{two_stream_lffc_resnet_block.11} parent=5 // pred_check_branch
      %241 = sbr.rel (%p238) target = $region12
    $region11: #{two_stream_lffc_resnet_block.11} parent=5 // pred_region
      %s242 = ssub.s32 %s14, 1
      // Predicated region
      $region13: #{two_stream_lffc_resnet_block.11} parent=11 // pred_check
        %p243 = pneg %p113
      $region14: #{two_stream_lffc_resnet_block.11} parent=11 // pred_check_branch
        %245 = sbr.rel (%p243) target = $region16
      $region15: #{two_stream_lffc_resnet_block.11} parent=11 // pred_region
        _
      $region16: #{two_stream_lffc_resnet_block.11} parent=11 // pred_fallthru
        _
      // Predicated region
      $region17: #{two_stream_lffc_resnet_block.11} parent=11 // pred_check
        %p246 = pneg %p134
      $region18: #{two_stream_lffc_resnet_block.11} parent=11 // pred_check_branch
        %248 = sbr.rel (%p246) target = $region20
      $region19: #{two_stream_lffc_resnet_block.11} parent=11 // pred_region
        _
      $region20: #{two_stream_lffc_resnet_block.11} parent=11 // pred_fallthru
        _
      // Predicated region
      $region21: #{two_stream_lffc_resnet_block.11} parent=11 // pred_check
        %p249 = pneg %p155
      $region22: #{two_stream_lffc_resnet_block.11} parent=11 // pred_check_branch
        %251 = sbr.rel (%p249) target = $region24
      $region23: #{two_stream_lffc_resnet_block.11} parent=11 // pred_region
        _
      $region24: #{two_stream_lffc_resnet_block.11} parent=11 // pred_fallthru
        _
      // Predicated region
      $region25: #{two_stream_lffc_resnet_block.11} parent=11 // pred_check
        %p252 = pneg %p176
      $region26: #{two_stream_lffc_resnet_block.11} parent=11 // pred_check_branch
        %254 = sbr.rel (%p252) target = $region28
      $region27: #{two_stream_lffc_resnet_block.11} parent=11 // pred_region
        _
      $region28: #{two_stream_lffc_resnet_block.11} parent=11 // pred_fallthru
        _
    $region12: #{two_stream_lffc_resnet_block.11} parent=5 // pred_fallthru
      _
    %p255 = scmp.lt.s32.totalorder %s14, 2
    // Predicated region
    $region29: #{two_stream_lffc_resnet_block.11} parent=5 // pred_check
      %p256 = pneg %p255
    $region30: #{two_stream_lffc_resnet_block.11} parent=5 // pred_check_branch
      %258 = sbr.rel (%p256) target = $region32
    $region31: #{two_stream_lffc_resnet_block.11} parent=5 // pred_region
      // Predicated region
      $region33: #{two_stream_lffc_resnet_block.11} parent=31 // pred_check
        %p259 = pneg %p34
      $region34: #{two_stream_lffc_resnet_block.11} parent=31 // pred_check_branch
        %261 = sbr.rel (%p259) target = $region36
      $region35: #{two_stream_lffc_resnet_block.11} parent=31 // pred_region
        %s262 = smul.u32 2, %s14
        %p263 = scmp.lt.s32.totalorder %s262, 3
        %s264 = scalar_select %p263, %s262, 3
        %s265 = smul.addr %s264, 2
        %s266 = scalar_lea.vmem %s0, %s265
        %s267 = smul.u32 2, %s14
      $region36: #{two_stream_lffc_resnet_block.11} parent=31 // pred_fallthru
        _
      // Predicated region
      $region37: #{two_stream_lffc_resnet_block.11} parent=31 // pred_check
        %p268 = pneg %p60
      $region38: #{two_stream_lffc_resnet_block.11} parent=31 // pred_check_branch
        %270 = sbr.rel (%p268) target = $region40
      $region39: #{two_stream_lffc_resnet_block.11} parent=31 // pred_region
        %s271 = smul.u32 2, %s14
        %p272 = scmp.lt.s32.totalorder %s271, 3
        %s273 = scalar_select %p272, %s271, 3
        %s274 = smul.addr %s273, 2
        %s275 = scalar_lea.vmem %s1, %s274
        %s276 = smul.u32 2, %s14
      $region40: #{two_stream_lffc_resnet_block.11} parent=31 // pred_fallthru
        _
      // Predicated region
      $region41: #{two_stream_lffc_resnet_block.11} parent=31 // pred_check
        %p277 = pneg %p86
      $region42: #{two_stream_lffc_resnet_block.11} parent=31 // pred_check_branch
        %279 = sbr.rel (%p277) target = $region44
      $region43: #{two_stream_lffc_resnet_block.11} parent=31 // pred_region
        %s280 = smul.u32 2, %s14
        %p281 = scmp.lt.s32.totalorder %s280, 3
        %s282 = scalar_select %p281, %s280, 3
        %s283 = smul.addr %s282, 2
        %s284 = scalar_lea.vmem %s2, %s283
        %s285 = smul.u32 2, %s14
      $region44: #{two_stream_lffc_resnet_block.11} parent=31 // pred_fallthru
        _
      // Predicated region
      $region45: #{two_stream_lffc_resnet_block.11} parent=31 // pred_check
        %p286 = pneg %p196
      $region46: #{two_stream_lffc_resnet_block.11} parent=31 // pred_check_branch
        %288 = sbr.rel (%p286) target = $region48
      $region47: #{two_stream_lffc_resnet_block.11} parent=31 // pred_region
        %s289 = smul.u32 2, %s14
        %p290 = scmp.lt.s32.totalorder %s289, 3
        %s291 = scalar_select %p290, %s289, 3
        %s292 = smul.addr %s291, 4
        %s293 = scalar_lea.vmem %s7, %s292
        %s294 = smul.u32 2, %s14
      $region48: #{two_stream_lffc_resnet_block.11} parent=31 // pred_fallthru
        _
    $region32: #{two_stream_lffc_resnet_block.11} parent=5 // pred_fallthru
      _
    %p295 = scmp.le.s32.totalorder 1, %s14
    %p296 = scmp.lt.s32.totalorder %s14, 3
    %p297 = pnand %p295, %p296
    %p298 = pneg %p297
    // Predicated region
    $region49: #{two_stream_lffc_resnet_block.11} parent=5 // pred_check
      _
    $region50: #{two_stream_lffc_resnet_block.11} parent=5 // pred_check_branch
      %300 = sbr.rel (%p297) target = $region52
    $region51: #{two_stream_lffc_resnet_block.11} parent=5 // pred_region
      %s301 = ssub.s32 %s14, 1
      %s302 = smul.u32 2, %s19
      %p303 = scmp.lt.s32.totalorder %s302, 3
      %s304 = scalar_select %p303, %s302, 3
      %s305 = smul.addr %s304, 2
      %s306 = scalar_lea.vmem %s0, %s305
      %p307 = pneg %p40
      %p308 = pneg %p37
      %s309 = smul.u32 2, %s19
      %p310 = scmp.lt.s32.totalorder %s309, 3
      %s311 = scalar_select %p310, %s309, 3
      %s312 = smul.addr %s311, 2
      %s313 = scalar_lea.vmem %s1, %s312
      %p314 = pneg %p66
      %p315 = pneg %p63
      %s316 = smul.u32 2, %s19
      %p317 = scmp.lt.s32.totalorder %s316, 3
      %s318 = scalar_select %p317, %s316, 3
      %s319 = smul.addr %s318, 2
      %s320 = scalar_lea.vmem %s2, %s319
      %p321 = pneg %p92
      %p322 = pneg %p89
      %p323 = pneg %p113
      %p324 = pneg %p110
      %p325 = pneg %p134
      %p326 = pneg %p131
      %p327 = pneg %p155
      %p328 = pneg %p152
      %p329 = pneg %p176
      %p330 = pneg %p173
      %s331 = smul.u32 2, %s19
      %p332 = scmp.lt.s32.totalorder %s331, 3
      %s333 = scalar_select %p332, %s331, 3
      %s334 = smul.addr %s333, 4
      %s335 = scalar_lea.vmem %s7, %s334
      %p336 = pneg %p202
      %p337 = pneg %p199
      %p338 = pneg %p228
      %p339 = pneg %p225
      %s340 = smul.u32 2, %s19
      %p341 = scmp.lt.s32.totalorder %s340, 3
      %s342 = scalar_select %p341, %s340, 3
      %s343 = smul.addr %s342, 4
      %s344 = scalar_lea.vmem %s8, %s343
      %s345 = smul.u32 2, %s19
      %p346 = scmp.lt.s32.totalorder %s345, 3
      %s347 = scalar_select %p346, %s345, 3
      %s348 = smul.addr %s347, 2
      %s349 = scalar_lea.vmem %s0, %s348
      %s350 = smul.u32 2, %s19
      %s351 = smul.u32 2, %s19
      %p352 = scmp.lt.s32.totalorder %s351, 3
      %s353 = scalar_select %p352, %s351, 3
      %s354 = smul.addr %s353, 2
      %s355 = scalar_lea.vmem %s1, %s354
      %s356 = smul.u32 2, %s19
      %s357 = smul.u32 2, %s19
      %p358 = scmp.lt.s32.totalorder %s357, 3
      %s359 = scalar_select %p358, %s357, 3
      %s360 = smul.addr %s359, 2
      %s361 = scalar_lea.vmem %s2, %s360
      %s362 = smul.u32 2, %s19
      %s363 = smul.u32 2, %s19
      %p364 = scmp.lt.s32.totalorder %s363, 3
      %s365 = scalar_select %p364, %s363, 3
      %s366 = smul.addr %s365, 4
      %s367 = scalar_lea.vmem %s7, %s366
      %s368 = smul.u32 2, %s19
      %s369 = smul.u32 2, %s19
      %p370 = scmp.lt.s32.totalorder %s369, 3
      %s371 = scalar_select %p370, %s369, 3
      %s372 = smul.addr %s371, 4
      %s373 = scalar_lea.vmem %s8, %s372
      %s374 = smul.u32 2, %s19
      %v375 = vld [vmem:[%s349] sm:$0xf]
      %v376 = vunpack.c.l.bf16 %v375
      %v377 = vld [vmem:[%s3] sm:$0x3]
      %v378 = vand.u32 %v377, 1
      %vm379 = vcmp.ne.s32.totalorder %v378, 0
      %v380 = vand.u32 %v377, 2
      %vm381 = vcmp.ne.s32.totalorder %v380, 0
      %v382 = vand.u32 %v377, 4
      %vm383 = vcmp.ne.s32.totalorder %v382, 0
      %v384 = vand.u32 %v377, 8
      %vm385 = vcmp.ne.s32.totalorder %v384, 0
      %v387 = vcombine.high %v376, %v376
      %389 = vrot.lane.b32.xlu0 %v376, 127
      %v390 = vpop.permute.xlu0 %389
      %391 = vrot.lane.b32.xlu0 %v387, 127
      %v392 = vpop.permute.xlu0 %391
      %v393 = vlaneseq
      %v394 = vand.u32 %v393, 127
      %vm395 = vcmp.lt.s32.totalorder %v394, 127
      %v396 = vsel %vm395, %v390, %v392
      %v397 = vsel %vm395, %v392, %v390
      %398 = vrot.lane.b32.xlu0 %v376, 1
      %v399 = vpop.permute.xlu0 %398
      %400 = vrot.lane.b32.xlu0 %v387, 1
      %v401 = vpop.permute.xlu0 %400
      %vm402 = vcmp.lt.s32.totalorder %v394, 1
      %v403 = vsel %vm402, %v399, %v401
      %v404 = vsel %vm402, %v401, %v399
      %v405 = vsel %vm379, 1, 0
      %v406 = vlaneseq
      %v407 = vshrl.u32 %v406, 7
      %v408 = vsub.s32 0, %v407
      %v409 = vrot.slane %v405, %v408
      %v410 = vlaneseq
      %v411 = vshrl.u32 %v410, 7
      %v412 = vsub.s32 1, %v411
      %v413 = vrot.slane %v405, %v412
      %vm414 = vcmp.eq.s32.totalorder %v409, 1
      %vm415 = vcmp.eq.s32.totalorder %v413, 1
      %v416 = vsel %vm414, %v396, %v404
      %v417 = vsel %vm415, %v397, %v403
      %v418 = vsel %vm381, 1, 0
      %v419 = vlaneseq
      %v420 = vshrl.u32 %v419, 7
      %v421 = vsub.s32 0, %v420
      %v422 = vrot.slane %v418, %v421
      %v423 = vlaneseq
      %v424 = vshrl.u32 %v423, 7
      %v425 = vsub.s32 1, %v424
      %v426 = vrot.slane %v418, %v425
      %vm427 = vcmp.eq.s32.totalorder %v422, 1
      %vm428 = vcmp.eq.s32.totalorder %v426, 1
      %v429 = vsel %vm427, %v404, %v396
      %v430 = vsel %vm428, %v403, %v397
      %431 = vrot.lane.b32.xlu0 %v416, 112
      %v432 = vpop.permute.xlu0 %431
      %433 = vrot.lane.b32.xlu0 %v417, 112
      %v434 = vpop.permute.xlu0 %433
      %vm435 = vcmp.lt.s32.totalorder %v394, 112
      %v436 = vsel %vm435, %v432, %v434
      %v437 = vsel %vm435, %v434, %v432
      %438 = vrot.lane.b32.xlu0 %v416, 16
      %v439 = vpop.permute.xlu0 %438
      %440 = vrot.lane.b32.xlu0 %v417, 16
      %v441 = vpop.permute.xlu0 %440
      %vm442 = vcmp.lt.s32.totalorder %v394, 16
      %v443 = vsel %vm442, %v439, %v441
      %v444 = vsel %vm442, %v441, %v439
      %v445 = vsel %vm383, 1, 0
      %v446 = vlaneseq
      %v447 = vshrl.u32 %v446, 7
      %v448 = vsub.s32 0, %v447
      %v449 = vrot.slane %v445, %v448
      %v450 = vlaneseq
      %v451 = vshrl.u32 %v450, 7
      %v452 = vsub.s32 1, %v451
      %v453 = vrot.slane %v445, %v452
      %vm454 = vcmp.eq.s32.totalorder %v449, 1
      %vm455 = vcmp.eq.s32.totalorder %v453, 1
      %v456 = vsel %vm454, %v436, %v444
      %v457 = vsel %vm455, %v437, %v443
      %v458 = vsel %vm385, 1, 0
      %v459 = vlaneseq
      %v460 = vshrl.u32 %v459, 7
      %v461 = vsub.s32 0, %v460
      %v462 = vrot.slane %v458, %v461
      %v463 = vlaneseq
      %v464 = vshrl.u32 %v463, 7
      %v465 = vsub.s32 1, %v464
      %v466 = vrot.slane %v458, %v465
      %vm467 = vcmp.eq.s32.totalorder %v462, 1
      %vm468 = vcmp.eq.s32.totalorder %v466, 1
      %v469 = vsel %vm467, %v444, %v436
      %v470 = vsel %vm468, %v443, %v437
      %471 = vst [vmem:[#allocation2] sm:$0xf] %v456
      %472 = vst [vmem:[#allocation2 + $0x8] sm:$0xf] %v457
      %v475 = vrot.slane %v416, 4
      %v476 = vrot.slane %v417, 4
      %479 = vst [vmem:[#allocation2 + $0x10] sm:$0xf0] %v475
      %480 = vst [vmem:[#allocation2 + $0x18] sm:$0xf0] %v476
      %481 = vst [vmem:[#allocation2 + $0x30] sm:$0xf] %v469
      %482 = vst [vmem:[#allocation2 + $0x38] sm:$0xf] %v470
      %483 = vrot.lane.b32.xlu0 %v376, 112
      %v484 = vpop.permute.xlu0 %483
      %485 = vrot.lane.b32.xlu0 %v387, 112
      %v486 = vpop.permute.xlu0 %485
      %v487 = vsel %vm435, %v484, %v486
      %v488 = vsel %vm435, %v486, %v484
      %489 = vrot.lane.b32.xlu0 %v376, 16
      %v490 = vpop.permute.xlu0 %489
      %491 = vrot.lane.b32.xlu0 %v387, 16
      %v492 = vpop.permute.xlu0 %491
      %v493 = vsel %vm442, %v490, %v492
      %v494 = vsel %vm442, %v492, %v490
      %v495 = vsel %vm454, %v487, %v494
      %v496 = vsel %vm455, %v488, %v493
      %v497 = vsel %vm467, %v494, %v487
      %v498 = vsel %vm468, %v493, %v488
      %v501 = vrot.slane %v495, 4
      %v502 = vrot.slane %v496, 4
      %505 = vst [vmem:[#allocation2] sm:$0xf0] %v501
      %506 = vst [vmem:[#allocation2 + $0x8] sm:$0xf0] %v502
      %507 = vst [vmem:[#allocation2 + $0x20] sm:$0xf] %v376
      %508 = vst [vmem:[#allocation2 + $0x28] sm:$0xf] %v387
      %v511 = vrot.slane %v497, 4
      %v512 = vrot.slane %v498, 4
      %515 = vst [vmem:[#allocation2 + $0x30] sm:$0xf0] %v511
      %516 = vst [vmem:[#allocation2 + $0x38] sm:$0xf0] %v512
      %517 = vrot.lane.b32.xlu0 %v429, 112
      %v518 = vpop.permute.xlu0 %517
      %519 = vrot.lane.b32.xlu0 %v430, 112
      %v520 = vpop.permute.xlu0 %519
      %v521 = vsel %vm435, %v518, %v520
      %v522 = vsel %vm435, %v520, %v518
      %523 = vrot.lane.b32.xlu0 %v429, 16
      %v524 = vpop.permute.xlu0 %523
      %525 = vrot.lane.b32.xlu0 %v430, 16
      %v526 = vpop.permute.xlu0 %525
      %v527 = vsel %vm442, %v524, %v526
      %v528 = vsel %vm442, %v526, %v524
      %v529 = vsel %vm454, %v521, %v528
      %v530 = vsel %vm455, %v522, %v527
      %v531 = vsel %vm467, %v528, %v521
      %v532 = vsel %vm468, %v527, %v522
      %533 = vst [vmem:[#allocation2 + $0x10] sm:$0xf] %v529
      %534 = vst [vmem:[#allocation2 + $0x18] sm:$0xf] %v530
      %v537 = vrot.slane %v429, 4
      %v538 = vrot.slane %v430, 4
      %541 = vst [vmem:[#allocation2 + $0x20] sm:$0xf0] %v537
      %542 = vst [vmem:[#allocation2 + $0x28] sm:$0xf0] %v538
      %543 = vst [vmem:[#allocation2 + $0x40] sm:$0xf] %v531
      %544 = vst [vmem:[#allocation2 + $0x48] sm:$0xf] %v532
      %v545 = vld [vmem:[%s4] sm:$0xff]
      %v546 = vld [vmem:[#allocation2] sm:$0xff]
      %v547 = vld [vmem:[#allocation2 + $0x8] sm:$0xff]
      %v548 = vld [vmem:[#allocation2 + $0x10] sm:$0xff]
      %v549 = vld [vmem:[#allocation2 + $0x18] sm:$0xff]
      %v550 = vld [vmem:[#allocation2 + $0x20] sm:$0xff]
      %v551 = vld [vmem:[#allocation2 + $0x28] sm:$0xff]
      %v552 = vld [vmem:[#allocation2 + $0x30] sm:$0xff]
      %v553 = vld [vmem:[#allocation2 + $0x38] sm:$0xff]
      %v554 = vld [vmem:[#allocation2 + $0x40] sm:$0xf]
      %v555 = vld [vmem:[#allocation2 + $0x48] sm:$0xf]
      %v556 = vld [vmem:[%s5] sm:$0xff]
      %v557 = vld [vmem:[%s355] sm:$0xf]
      %v558 = vld [vmem:[%s361] sm:$0xf]
      %v559 = vadd.f32 %v557, %v558
      %v562 = vunpack.c.l.s4 1983009808
      %v563 = vunpack.c.0.s8 %v562
      %v564 = vlaneseq
      %v565 = vshrl.u32 %v564, 7
      %v566 = vsub.s32 %v563, %v565
      %v567 = vrot.slane %v559, %v566
      %v568 = vcombine.high %v567, %v567
      %vm569 = vcmask 15360
      %v571 = vsel %vm569, %v556, 0
      %vm573 = vcmask 1041408
      %v574 = vsel %vm573, %v567, 0
      %v576 = vsel %vm573, %v568, 0
      %578 = vmatprep.subr.mxu0 %v576
      %579 = vmatpush1.msra.mxu0 %v574
      %580 = vmatprep.subr.mxu0 0.0
      %581 = vmatpush1.msra.mxu0 0.0
      %582 = vmatprep.subr.mxu0 0.0
      %583 = vmatpush1.msra.mxu0 0.0
      %584 = vmatprep.subr.mxu0 0.0
      %585 = vmatpush1.msra.mxu0 0.0
      %586 = vmatprep.subr.mxu0 0.0
      %587 = vmatpush1.msra.mxu0 0.0
      %588 = vmatprep.subr.mxu0 0.0
      %589 = vmatpush1.msra.mxu0 0.0
      %590 = vmatprep.subr.mxu0 0.0
      %591 = vmatpush1.msra.mxu0 0.0
      %592 = vmatprep.subr.mxu0 0.0
      %593 = vmatpush1.msra.mxu0 0.0
      %594 = vmatprep.subr.mxu0 0.0
      %595 = vmatpush1.msra.mxu0 0.0
      %596 = vmatprep.subr.mxu0 0.0
      %597 = vmatpush1.msra.mxu0 0.0
      %598 = vmatprep.subr.mxu0 0.0
      %599 = vmatpush1.msra.mxu0 0.0
      %600 = vmatprep.subr.mxu0 0.0
      %601 = vmatpush1.msra.mxu0 0.0
      %602 = vmatprep.subr.mxu0 0.0
      %603 = vmatpush1.msra.mxu0 0.0
      %604 = vmatprep.subr.mxu0 0.0
      %605 = vmatpush1.msra.mxu0 0.0
      %606 = vmatprep.subr.mxu0 0.0
      %607 = vmatpush1.msra.mxu0 0.0
      %608 = vmatprep.subr.mxu0 0.0
      %609 = vmatpush1.msra.mxu0 0.0
      %610 = vmatprep.subr.mxu0 0.0
      %611 = vmatpush1.msra.mxu0 0.0
      %612 = vmatprep.subr.mxu0 0.0
      %613 = vmatpush1.msra.mxu0 0.0
      %614 = vmatprep.subr.mxu0 0.0
      %615 = vmatpush1.msra.mxu0 0.0
      %616 = vmatprep.subr.mxu0 0.0
      %617 = vmatpush1.msra.mxu0 0.0
      %618 = vmatprep.subr.mxu0 0.0
      %619 = vmatpush1.msra.mxu0 0.0
      %620 = vmatprep.subr.mxu0 0.0
      %621 = vmatpush1.msra.mxu0 0.0
      %622 = vmatprep.subr.mxu0 0.0
      %623 = vmatpush1.msra.mxu0 0.0
      %624 = vmatprep.subr.mxu0 0.0
      %625 = vmatpush1.msra.mxu0 0.0
      %626 = vmatprep.subr.mxu0 0.0
      %627 = vmatpush1.msra.mxu0 0.0
      %628 = vmatprep.subr.mxu0 0.0
      %629 = vmatpush1.msra.mxu0 0.0
      %630 = vmatprep.subr.mxu0 0.0
      %631 = vmatpush1.msra.mxu0 0.0
      %632 = vmatprep.subr.mxu0 0.0
      %633 = vmatpush1.msra.mxu0 0.0
      %634 = vmatprep.subr.mxu0 0.0
      %635 = vmatpush1.msra.mxu0 0.0
      %636 = vmatprep.subr.mxu0 0.0
      %637 = vmatpush1.msra.mxu0 0.0
      %638 = vmatprep.subr.mxu0 0.0
      %639 = vmatpush1.msra.mxu0 0.0
      %640 = vmatprep.subr.mxu0 0.0
      %641 = vmatpush1.msra.mxu0 0.0
      %642 = vmatprep.mubr.f32.mxu0 0.0
      %643 = vmatmul.mubr.f32.gmra.mrb[0].mxu0 %v571
      %v644 = vpop.f32.mrb[0].mxu0
      %v645 = vadd.f32 0.0, %v644
      %v646 = vpop.f32.mrb[0].mxu0
      %v647 = vadd.f32 0.0, %v646
      %648 = vdwg.mxu0
      %vm649 = vcmask 293888
      %v651 = vsel %vm649, %v545, 0
      %vm653 = vcmask 1043456
      %v655 = vsel %vm653, %v554, 0
      %v658 = vsel %vm653, %v555, 0
      %660 = vmatprep.subr.mxu0 %v547
      %661 = vmatpush1.msra.mxu0 %v546
      %662 = vmatprep.subr.mxu0 %v549
      %663 = vmatpush1.msra.mxu0 %v548
      %664 = vmatprep.subr.mxu0 %v551
      %665 = vmatpush1.msra.mxu0 %v550
      %666 = vmatprep.subr.mxu0 %v553
      %667 = vmatpush1.msra.mxu0 %v552
      %668 = vmatprep.subr.mxu0 %v658
      %669 = vmatpush1.msra.mxu0 %v655
      %670 = vmatprep.subr.mxu0 0.0
      %671 = vmatpush1.msra.mxu0 0.0
      %672 = vmatprep.subr.mxu0 0.0
      %673 = vmatpush1.msra.mxu0 0.0
      %674 = vmatprep.subr.mxu0 0.0
      %675 = vmatpush1.msra.mxu0 0.0
      %676 = vmatprep.subr.mxu0 0.0
      %677 = vmatpush1.msra.mxu0 0.0
      %678 = vmatprep.subr.mxu0 0.0
      %679 = vmatpush1.msra.mxu0 0.0
      %680 = vmatprep.subr.mxu0 0.0
      %681 = vmatpush1.msra.mxu0 0.0
      %682 = vmatprep.subr.mxu0 0.0
      %683 = vmatpush1.msra.mxu0 0.0
      %684 = vmatprep.subr.mxu0 0.0
      %685 = vmatpush1.msra.mxu0 0.0
      %686 = vmatprep.subr.mxu0 0.0
      %687 = vmatpush1.msra.mxu0 0.0
      %688 = vmatprep.subr.mxu0 0.0
      %689 = vmatpush1.msra.mxu0 0.0
      %690 = vmatprep.subr.mxu0 0.0
      %691 = vmatpush1.msra.mxu0 0.0
      %692 = vmatprep.subr.mxu0 0.0
      %693 = vmatpush1.msra.mxu0 0.0
      %694 = vmatprep.subr.mxu0 0.0
      %695 = vmatpush1.msra.mxu0 0.0
      %696 = vmatprep.subr.mxu0 0.0
      %697 = vmatpush1.msra.mxu0 0.0
      %698 = vmatprep.subr.mxu0 0.0
      %699 = vmatpush1.msra.mxu0 0.0
      %700 = vmatprep.subr.mxu0 0.0
      %701 = vmatpush1.msra.mxu0 0.0
      %702 = vmatprep.subr.mxu0 0.0
      %703 = vmatpush1.msra.mxu0 0.0
      %704 = vmatprep.subr.mxu0 0.0
      %705 = vmatpush1.msra.mxu0 0.0
      %706 = vmatprep.subr.mxu0 0.0
      %707 = vmatpush1.msra.mxu0 0.0
      %708 = vmatprep.subr.mxu0 0.0
      %709 = vmatpush1.msra.mxu0 0.0
      %710 = vmatprep.subr.mxu0 0.0
      %711 = vmatpush1.msra.mxu0 0.0
      %712 = vmatprep.subr.mxu0 0.0
      %713 = vmatpush1.msra.mxu0 0.0
      %714 = vmatprep.subr.mxu0 0.0
      %715 = vmatpush1.msra.mxu0 0.0
      %716 = vmatprep.subr.mxu0 0.0
      %717 = vmatpush1.msra.mxu0 0.0
      %718 = vmatprep.subr.mxu0 0.0
      %719 = vmatpush1.msra.mxu0 0.0
      %720 = vmatprep.subr.mxu0 0.0
      %721 = vmatpush1.msra.mxu0 0.0
      %722 = vmatprep.subr.mxu0 0.0
      %723 = vmatpush1.msra.mxu0 0.0
      %724 = vmatprep.mubr.f32.mxu0 0.0
      %725 = vmatmul.mubr.f32.gmra.mrb[0].mxu0 %v651
      %v726 = vpop.f32.mrb[0].mxu0
      %v727 = vadd.f32 %v645, %v726
      %v728 = vpop.f32.mrb[0].mxu0
      %v729 = vadd.f32 %v647, %v728
      %730 = vdwg.mxu0
      %v731 = vld [vmem:[%s6] sm:$0xff]
      %733 = vset.pattern.permute.xlu0 0
      %734 = vperm.xlu0 %733, %v731
      %v735 = vpop.permute.xlu0 %734
      %v737 = vadd.f32 %v727, %v735
      %v738 = vadd.f32 %v729, %v735
      %v739 = vld [vmem:[%s367] sm:$0xff]
      %v740 = vunpack.c.l.bf16 %v739
      %v741 = vunpack.c.h.bf16 %v739
      %v742 = vadd.f32 %v737, %v740
      %v743 = vadd.f32 %v738, %v741
      %v744 = vpack.c.bf16 %v742, %v742
      %v745 = vpack.c.bf16 %v743, %v743
      %v748 = vunpack.c.l.b16 %v744
      %v749 = vunpack.c.l.b16 %v745
      %v750 = vpack.c.b16 %v749, %v748
      %752 = vst [vmem:[%s373] sm:$0xff] %v750
      %s753 = smul.u32 2, %s19
      %p754 = scmp.lt.s32.totalorder %s753, 3
      %s755 = scalar_select %p754, %s753, 3
      %s756 = smul.addr %s755, 4
      %s757 = scalar_lea.vmem %s8, %s756
      // Predicated region
      $region53: #{two_stream_lffc_resnet_block.11} parent=51 // pred_check
        %p758 = pneg %p225
      $region54: #{two_stream_lffc_resnet_block.11} parent=51 // pred_check_branch
        %760 = sbr.rel (%p758) target = $region56
      $region55: #{two_stream_lffc_resnet_block.11} parent=51 // pred_region
        %s761 = smul.u32 2, %s19
      $region56: #{two_stream_lffc_resnet_block.11} parent=51 // pred_fallthru
        _
    $region52: #{two_stream_lffc_resnet_block.11} parent=5 // pred_fallthru
      _
    %p762 = scmp.le.s32.totalorder 2, %s14
    // Predicated region
    $region57: #{two_stream_lffc_resnet_block.11} parent=5 // pred_check
      %p763 = pneg %p762
    $region58: #{two_stream_lffc_resnet_block.11} parent=5 // pred_check_branch
      %765 = sbr.rel (%p763) target = $region60
    $region59: #{two_stream_lffc_resnet_block.11} parent=5 // pred_region
      %s766 = ssub.s32 %s14, 2
      // Predicated region
      $region61: #{two_stream_lffc_resnet_block.11} parent=59 // pred_check
        %p767 = pneg %p231
      $region62: #{two_stream_lffc_resnet_block.11} parent=59 // pred_check_branch
        %769 = sbr.rel (%p767) target = $region64
      $region63: #{two_stream_lffc_resnet_block.11} parent=59 // pred_region
        %s770 = smul.u32 2, %s20
        %p771 = scmp.lt.s32.totalorder %s770, 3
        %s772 = scalar_select %p771, %s770, 3
        %s773 = smul.addr %s772, 4
        %s774 = scalar_lea.vmem %s8, %s773
      $region64: #{two_stream_lffc_resnet_block.11} parent=59 // pred_fallthru
        _
    $region60: #{two_stream_lffc_resnet_block.11} parent=5 // pred_fallthru
      _
  $region6: #{two_stream_lffc_resnet_block.11} parent=0 // loop_footer
    %s18 = sadd.s32 1, %s14
  $region7: #{two_stream_lffc_resnet_block.11} parent=0 // loop_footer_branch
    %13 = sbr.rel target = $region3
  $region8: #{two_stream_lffc_resnet_block.11} parent=0 // loop_exit
    _

// kernel: two_stream_lffc_resnet_block.9
$region0: #{two_stream_lffc_resnet_block.9}
  #allocation0 [shape = 'u32[]', space=smem, size = 0x4, offset = 0x4, fixed_abs, tag = 'smem constant byte address 0x4 - core index']
  #allocation1 [shape = 'u32[144,128]{1,0:T(1,128)}', space=vmem, size = 0x12000, scoped, tag = 'internal scratch']
  #allocation2 [shape = 'f32[72,256]{1,0:T(8,128)}', space=vmem, size = 0x12000, scoped, tag = 'scratch operand']
  %s0 = inlined_call_operand.vmem [shape: bf16[8,512], index: 0, kind: input, shape index: {}]
  %s1 = inlined_call_operand.vmem [shape: bf16[8,512], index: 1, kind: input, shape index: {}]
  %s2 = inlined_call_operand.vmem [shape: s32[1,256], index: 2, kind: input, shape index: {}]
  %s3 = inlined_call_operand.vmem [shape: bf16[4,8], index: 3, kind: input, shape index: {}]
  %s4 = inlined_call_operand.vmem [shape: f32[4,1], index: 4, kind: input, shape index: {}]
  %s5 = inlined_call_operand.vmem [shape: bf16[4,8], index: 5, kind: input, shape index: {}]
  %s6 = inlined_call_operand.vmem [shape: f32[4,1], index: 6, kind: input, shape index: {}]
  %s7 = inlined_call_operand.vmem [shape: f32[2,4], index: 7, kind: input, shape index: {}]
  %s8 = inlined_call_operand.vmem [shape: f32[2,1], index: 8, kind: input, shape index: {}]
  %s9 = inlined_call_operand.vmem [shape: f32[8,72], index: 9, kind: input, shape index: {}]
  %s10 = inlined_call_operand.vmem [shape: f32[8,1], index: 10, kind: input, shape index: {}]
  %s11 = inlined_call_operand.vmem [shape: bf16[8,512], index: 11, kind: input, shape index: {}]
  %s12 = inlined_call_operand.vmem [shape: bf16[8,512], index: 12, kind: output, shape index: {0}]
  %s13 = inlined_call_operand.vmem [shape: bf16[4,512], index: 13, kind: output, shape index: {1}]
  %s14 = inlined_call_operand.vmem [shape: f32[2,512], index: 14, kind: output, shape index: {2}]
  %15 = xla_tuple %s12, %s13, %s14
  %s16 = sld [smem:[#allocation0]]
  $region97: #{two_stream_lffc_resnet_block.9} parent=0
    _
  %s18 = ssub.s32 1, %s16
  %s19 = scalar_select 0, %s18, %s16
  loop: start=0, step=1, limit=4
  $region2: #{two_stream_lffc_resnet_block.9} parent=0 // loop_pre_header
    _
  $region3: #{two_stream_lffc_resnet_block.9} parent=0 // loop_header
    %s21 = sphi 0, %s25
    %p22 = scmp.ge.s32.totalorder %s21, 4
    %s31 = sphi 0, %s33
    %s34 = sphi 0, %s31
    %s35 = sphi 0, %s34
    %s51 = sphi 0, %s35
    %s57 = sphi 0, %s59
    %s60 = sphi 0, %s57
    %s61 = sphi 0, %s60
    %s77 = sphi 0, %s61
    %s81 = sphi 0, %s81
    %s83 = sphi 0, %s81
    %s84 = sphi 0, %s83
    %s98 = sphi 0, %s84
    %s102 = sphi 0, %s102
    %s104 = sphi 0, %s102
    %s105 = sphi 0, %s104
    %s119 = sphi 0, %s105
    %s123 = sphi 0, %s123
    %s125 = sphi 0, %s123
    %s126 = sphi 0, %s125
    %s140 = sphi 0, %s126
    %s144 = sphi 0, %s144
    %s146 = sphi 0, %s144
    %s147 = sphi 0, %s146
    %s161 = sphi 0, %s147
    %s165 = sphi 0, %s165
    %s167 = sphi 0, %s165
    %s168 = sphi 0, %s167
    %s182 = sphi 0, %s168
    %s186 = sphi 0, %s186
    %s188 = sphi 0, %s186
    %s189 = sphi 0, %s188
    %s203 = sphi 0, %s189
    %s207 = sphi 0, %s207
    %s209 = sphi 0, %s207
    %s210 = sphi 0, %s209
    %s224 = sphi 0, %s210
    %s228 = sphi 0, %s228
    %s230 = sphi 0, %s228
    %s231 = sphi 0, %s230
    %s245 = sphi 0, %s231
    %s249 = sphi 0, %s249
    %s251 = sphi 0, %s249
    %s252 = sphi 0, %s251
    %s266 = sphi 0, %s252
    %s272 = sphi 0, %s274
    %s275 = sphi 0, %s272
    %s276 = sphi 0, %s275
    %s292 = sphi 0, %s276
    %s298 = sphi 0, %s300
    %s301 = sphi 0, %s298
    %s302 = sphi 0, %s301
    %s318 = sphi 0, %s302
    %s324 = sphi 0, %s326
    %s327 = sphi 0, %s324
    %s328 = sphi 0, %s327
    %s344 = sphi 0, %s328
    %s350 = sphi 0, %s352
    %s353 = sphi 0, %s350
    %s354 = sphi 0, %s353
    %s370 = sphi 0, %s354
  $region4: #{two_stream_lffc_resnet_block.9} parent=0 // loop_header_branch
    %24 = sbr.rel (%p22) target = $region8
  $region5: #{two_stream_lffc_resnet_block.9} parent=0 // loop_body
    %s26 = ssub.s32 %s21, 1
    %s27 = ssub.s32 %s21, 2
    %s28 = sadd.s32 %s21, 1
    %s29 = ssub.s32 %s21, %s28
    %p30 = scmp.eq.s32.totalorder %s29, 0
    %s32 = sadd.s32 %s31, 1
    %s33 = scalar_select %p30, %s31, %s32
    %p36 = pneg %p30
    %p37 = scmp.eq.s32.totalorder %s21, 1
    %p38 = por %p36, %p37
    %p39 = scmp.ne.s32.totalorder %s31, %s34
    %p40 = scmp.eq.s32.totalorder %s21, 0
    %p41 = por %p39, %p40
    %p42 = scmp.ne.s32.totalorder %s31, %s34
    %p43 = scmp.eq.s32.totalorder %s26, 1
    %p44 = por %p42, %p43
    %p45 = scmp.ne.s32.totalorder %s34, %s35
    %p46 = scmp.eq.s32.totalorder %s26, 0
    %p47 = por %p45, %p46
    %p48 = scmp.ne.s32.totalorder %s34, %s35
    %p49 = scmp.eq.s32.totalorder %s27, 1
    %p50 = por %p48, %p49
    %p52 = scmp.ne.s32.totalorder %s35, %s51
    %p53 = scmp.eq.s32.totalorder %s27, 0
    %p54 = por %p52, %p53
    %s55 = ssub.s32 %s21, %s28
    %p56 = scmp.eq.s32.totalorder %s55, 0
    %s58 = sadd.s32 %s57, 1
    %s59 = scalar_select %p56, %s57, %s58
    %p62 = pneg %p56
    %p63 = scmp.eq.s32.totalorder %s21, 1
    %p64 = por %p62, %p63
    %p65 = scmp.ne.s32.totalorder %s57, %s60
    %p66 = scmp.eq.s32.totalorder %s21, 0
    %p67 = por %p65, %p66
    %p68 = scmp.ne.s32.totalorder %s57, %s60
    %p69 = scmp.eq.s32.totalorder %s26, 1
    %p70 = por %p68, %p69
    %p71 = scmp.ne.s32.totalorder %s60, %s61
    %p72 = scmp.eq.s32.totalorder %s26, 0
    %p73 = por %p71, %p72
    %p74 = scmp.ne.s32.totalorder %s60, %s61
    %p75 = scmp.eq.s32.totalorder %s27, 1
    %p76 = por %p74, %p75
    %p78 = scmp.ne.s32.totalorder %s61, %s77
    %p79 = scmp.eq.s32.totalorder %s27, 0
    %p80 = por %p78, %p79
    %s82 = sadd.s32 %s81, 1
    %p85 = scmp.eq.s32.totalorder %s21, 1
    %p86 = scmp.ne.s32.totalorder %s81, %s83
    %p87 = scmp.eq.s32.totalorder %s21, 0
    %p88 = por %p86, %p87
    %p89 = scmp.ne.s32.totalorder %s81, %s83
    %p90 = scmp.eq.s32.totalorder %s26, 1
    %p91 = por %p89, %p90
    %p92 = scmp.ne.s32.totalorder %s83, %s84
    %p93 = scmp.eq.s32.totalorder %s26, 0
    %p94 = por %p92, %p93
    %p95 = scmp.ne.s32.totalorder %s83, %s84
    %p96 = scmp.eq.s32.totalorder %s27, 1
    %p97 = por %p95, %p96
    %p99 = scmp.ne.s32.totalorder %s84, %s98
    %p100 = scmp.eq.s32.totalorder %s27, 0
    %p101 = por %p99, %p100
    %s103 = sadd.s32 %s102, 1
    %p106 = scmp.eq.s32.totalorder %s21, 1
    %p107 = scmp.ne.s32.totalorder %s102, %s104
    %p108 = scmp.eq.s32.totalorder %s21, 0
    %p109 = por %p107, %p108
    %p110 = scmp.ne.s32.totalorder %s102, %s104
    %p111 = scmp.eq.s32.totalorder %s26, 1
    %p112 = por %p110, %p111
    %p113 = scmp.ne.s32.totalorder %s104, %s105
    %p114 = scmp.eq.s32.totalorder %s26, 0
    %p115 = por %p113, %p114
    %p116 = scmp.ne.s32.totalorder %s104, %s105
    %p117 = scmp.eq.s32.totalorder %s27, 1
    %p118 = por %p116, %p117
    %p120 = scmp.ne.s32.totalorder %s105, %s119
    %p121 = scmp.eq.s32.totalorder %s27, 0
    %p122 = por %p120, %p121
    %s124 = sadd.s32 %s123, 1
    %p127 = scmp.eq.s32.totalorder %s21, 1
    %p128 = scmp.ne.s32.totalorder %s123, %s125
    %p129 = scmp.eq.s32.totalorder %s21, 0
    %p130 = por %p128, %p129
    %p131 = scmp.ne.s32.totalorder %s123, %s125
    %p132 = scmp.eq.s32.totalorder %s26, 1
    %p133 = por %p131, %p132
    %p134 = scmp.ne.s32.totalorder %s125, %s126
    %p135 = scmp.eq.s32.totalorder %s26, 0
    %p136 = por %p134, %p135
    %p137 = scmp.ne.s32.totalorder %s125, %s126
    %p138 = scmp.eq.s32.totalorder %s27, 1
    %p139 = por %p137, %p138
    %p141 = scmp.ne.s32.totalorder %s126, %s140
    %p142 = scmp.eq.s32.totalorder %s27, 0
    %p143 = por %p141, %p142
    %s145 = sadd.s32 %s144, 1
    %p148 = scmp.eq.s32.totalorder %s21, 1
    %p149 = scmp.ne.s32.totalorder %s144, %s146
    %p150 = scmp.eq.s32.totalorder %s21, 0
    %p151 = por %p149, %p150
    %p152 = scmp.ne.s32.totalorder %s144, %s146
    %p153 = scmp.eq.s32.totalorder %s26, 1
    %p154 = por %p152, %p153
    %p155 = scmp.ne.s32.totalorder %s146, %s147
    %p156 = scmp.eq.s32.totalorder %s26, 0
    %p157 = por %p155, %p156
    %p158 = scmp.ne.s32.totalorder %s146, %s147
    %p159 = scmp.eq.s32.totalorder %s27, 1
    %p160 = por %p158, %p159
    %p162 = scmp.ne.s32.totalorder %s147, %s161
    %p163 = scmp.eq.s32.totalorder %s27, 0
    %p164 = por %p162, %p163
    %s166 = sadd.s32 %s165, 1
    %p169 = scmp.eq.s32.totalorder %s21, 1
    %p170 = scmp.ne.s32.totalorder %s165, %s167
    %p171 = scmp.eq.s32.totalorder %s21, 0
    %p172 = por %p170, %p171
    %p173 = scmp.ne.s32.totalorder %s165, %s167
    %p174 = scmp.eq.s32.totalorder %s26, 1
    %p175 = por %p173, %p174
    %p176 = scmp.ne.s32.totalorder %s167, %s168
    %p177 = scmp.eq.s32.totalorder %s26, 0
    %p178 = por %p176, %p177
    %p179 = scmp.ne.s32.totalorder %s167, %s168
    %p180 = scmp.eq.s32.totalorder %s27, 1
    %p181 = por %p179, %p180
    %p183 = scmp.ne.s32.totalorder %s168, %s182
    %p184 = scmp.eq.s32.totalorder %s27, 0
    %p185 = por %p183, %p184
    %s187 = sadd.s32 %s186, 1
    %p190 = scmp.eq.s32.totalorder %s21, 1
    %p191 = scmp.ne.s32.totalorder %s186, %s188
    %p192 = scmp.eq.s32.totalorder %s21, 0
    %p193 = por %p191, %p192
    %p194 = scmp.ne.s32.totalorder %s186, %s188
    %p195 = scmp.eq.s32.totalorder %s26, 1
    %p196 = por %p194, %p195
    %p197 = scmp.ne.s32.totalorder %s188, %s189
    %p198 = scmp.eq.s32.totalorder %s26, 0
    %p199 = por %p197, %p198
    %p200 = scmp.ne.s32.totalorder %s188, %s189
    %p201 = scmp.eq.s32.totalorder %s27, 1
    %p202 = por %p200, %p201
    %p204 = scmp.ne.s32.totalorder %s189, %s203
    %p205 = scmp.eq.s32.totalorder %s27, 0
    %p206 = por %p204, %p205
    %s208 = sadd.s32 %s207, 1
    %p211 = scmp.eq.s32.totalorder %s21, 1
    %p212 = scmp.ne.s32.totalorder %s207, %s209
    %p213 = scmp.eq.s32.totalorder %s21, 0
    %p214 = por %p212, %p213
    %p215 = scmp.ne.s32.totalorder %s207, %s209
    %p216 = scmp.eq.s32.totalorder %s26, 1
    %p217 = por %p215, %p216
    %p218 = scmp.ne.s32.totalorder %s209, %s210
    %p219 = scmp.eq.s32.totalorder %s26, 0
    %p220 = por %p218, %p219
    %p221 = scmp.ne.s32.totalorder %s209, %s210
    %p222 = scmp.eq.s32.totalorder %s27, 1
    %p223 = por %p221, %p222
    %p225 = scmp.ne.s32.totalorder %s210, %s224
    %p226 = scmp.eq.s32.totalorder %s27, 0
    %p227 = por %p225, %p226
    %s229 = sadd.s32 %s228, 1
    %p232 = scmp.eq.s32.totalorder %s21, 1
    %p233 = scmp.ne.s32.totalorder %s228, %s230
    %p234 = scmp.eq.s32.totalorder %s21, 0
    %p235 = por %p233, %p234
    %p236 = scmp.ne.s32.totalorder %s228, %s230
    %p237 = scmp.eq.s32.totalorder %s26, 1
    %p238 = por %p236, %p237
    %p239 = scmp.ne.s32.totalorder %s230, %s231
    %p240 = scmp.eq.s32.totalorder %s26, 0
    %p241 = por %p239, %p240
    %p242 = scmp.ne.s32.totalorder %s230, %s231
    %p243 = scmp.eq.s32.totalorder %s27, 1
    %p244 = por %p242, %p243
    %p246 = scmp.ne.s32.totalorder %s231, %s245
    %p247 = scmp.eq.s32.totalorder %s27, 0
    %p248 = por %p246, %p247
    %s250 = sadd.s32 %s249, 1
    %p253 = scmp.eq.s32.totalorder %s21, 1
    %p254 = scmp.ne.s32.totalorder %s249, %s251
    %p255 = scmp.eq.s32.totalorder %s21, 0
    %p256 = por %p254, %p255
    %p257 = scmp.ne.s32.totalorder %s249, %s251
    %p258 = scmp.eq.s32.totalorder %s26, 1
    %p259 = por %p257, %p258
    %p260 = scmp.ne.s32.totalorder %s251, %s252
    %p261 = scmp.eq.s32.totalorder %s26, 0
    %p262 = por %p260, %p261
    %p263 = scmp.ne.s32.totalorder %s251, %s252
    %p264 = scmp.eq.s32.totalorder %s27, 1
    %p265 = por %p263, %p264
    %p267 = scmp.ne.s32.totalorder %s252, %s266
    %p268 = scmp.eq.s32.totalorder %s27, 0
    %p269 = por %p267, %p268
    %s270 = ssub.s32 %s21, %s28
    %p271 = scmp.eq.s32.totalorder %s270, 0
    %s273 = sadd.s32 %s272, 1
    %s274 = scalar_select %p271, %s272, %s273
    %p277 = pneg %p271
    %p278 = scmp.eq.s32.totalorder %s21, 1
    %p279 = por %p277, %p278
    %p280 = scmp.ne.s32.totalorder %s272, %s275
    %p281 = scmp.eq.s32.totalorder %s21, 0
    %p282 = por %p280, %p281
    %p283 = scmp.ne.s32.totalorder %s272, %s275
    %p284 = scmp.eq.s32.totalorder %s26, 1
    %p285 = por %p283, %p284
    %p286 = scmp.ne.s32.totalorder %s275, %s276
    %p287 = scmp.eq.s32.totalorder %s26, 0
    %p288 = por %p286, %p287
    %p289 = scmp.ne.s32.totalorder %s275, %s276
    %p290 = scmp.eq.s32.totalorder %s27, 1
    %p291 = por %p289, %p290
    %p293 = scmp.ne.s32.totalorder %s276, %s292
    %p294 = scmp.eq.s32.totalorder %s27, 0
    %p295 = por %p293, %p294
    %s296 = ssub.s32 %s21, %s28
    %p297 = scmp.eq.s32.totalorder %s296, 0
    %s299 = sadd.s32 %s298, 1
    %s300 = scalar_select %p297, %s298, %s299
    %p303 = pneg %p297
    %p304 = scmp.eq.s32.totalorder %s21, 1
    %p305 = por %p303, %p304
    %p306 = scmp.ne.s32.totalorder %s298, %s301
    %p307 = scmp.eq.s32.totalorder %s21, 0
    %p308 = por %p306, %p307
    %p309 = scmp.ne.s32.totalorder %s298, %s301
    %p310 = scmp.eq.s32.totalorder %s26, 1
    %p311 = por %p309, %p310
    %p312 = scmp.ne.s32.totalorder %s301, %s302
    %p313 = scmp.eq.s32.totalorder %s26, 0
    %p314 = por %p312, %p313
    %p315 = scmp.ne.s32.totalorder %s301, %s302
    %p316 = scmp.eq.s32.totalorder %s27, 1
    %p317 = por %p315, %p316
    %p319 = scmp.ne.s32.totalorder %s302, %s318
    %p320 = scmp.eq.s32.totalorder %s27, 0
    %p321 = por %p319, %p320
    %s322 = ssub.s32 %s21, %s28
    %p323 = scmp.eq.s32.totalorder %s322, 0
    %s325 = sadd.s32 %s324, 1
    %s326 = scalar_select %p323, %s324, %s325
    %p329 = pneg %p323
    %p330 = scmp.eq.s32.totalorder %s21, 1
    %p331 = por %p329, %p330
    %p332 = scmp.ne.s32.totalorder %s324, %s327
    %p333 = scmp.eq.s32.totalorder %s21, 0
    %p334 = por %p332, %p333
    %p335 = scmp.ne.s32.totalorder %s324, %s327
    %p336 = scmp.eq.s32.totalorder %s26, 1
    %p337 = por %p335, %p336
    %p338 = scmp.ne.s32.totalorder %s327, %s328
    %p339 = scmp.eq.s32.totalorder %s26, 0
    %p340 = por %p338, %p339
    %p341 = scmp.ne.s32.totalorder %s327, %s328
    %p342 = scmp.eq.s32.totalorder %s27, 1
    %p343 = por %p341, %p342
    %p345 = scmp.ne.s32.totalorder %s328, %s344
    %p346 = scmp.eq.s32.totalorder %s27, 0
    %p347 = por %p345, %p346
    %s348 = ssub.s32 %s21, %s28
    %p349 = scmp.eq.s32.totalorder %s348, 0
    %s351 = sadd.s32 %s350, 1
    %s352 = scalar_select %p349, %s350, %s351
    %p355 = pneg %p349
    %p356 = scmp.eq.s32.totalorder %s21, 1
    %p357 = por %p355, %p356
    %p358 = scmp.ne.s32.totalorder %s350, %s353
    %p359 = scmp.eq.s32.totalorder %s21, 0
    %p360 = por %p358, %p359
    %p361 = scmp.ne.s32.totalorder %s350, %s353
    %p362 = scmp.eq.s32.totalorder %s26, 1
    %p363 = por %p361, %p362
    %p364 = scmp.ne.s32.totalorder %s353, %s354
    %p365 = scmp.eq.s32.totalorder %s26, 0
    %p366 = por %p364, %p365
    %p367 = scmp.ne.s32.totalorder %s353, %s354
    %p368 = scmp.eq.s32.totalorder %s27, 1
    %p369 = por %p367, %p368
    %p371 = scmp.ne.s32.totalorder %s354, %s370
    %p372 = scmp.eq.s32.totalorder %s27, 0
    %p373 = por %p371, %p372
    %p374 = scmp.le.s32.totalorder 1, %s21
    %p375 = scmp.lt.s32.totalorder %s21, 3
    %p376 = pnand %p374, %p375
    %p377 = pneg %p376
    // Predicated region
    $region9: #{two_stream_lffc_resnet_block.9} parent=5 // pred_check
      _
    $region10: #{two_stream_lffc_resnet_block.9} parent=5 // pred_check_branch
      %379 = sbr.rel (%p376) target = $region12
    $region11: #{two_stream_lffc_resnet_block.9} parent=5 // pred_region
      %s380 = ssub.s32 %s21, 1
      // Predicated region
      $region13: #{two_stream_lffc_resnet_block.9} parent=11 // pred_check
        %p381 = pneg %p94
      $region14: #{two_stream_lffc_resnet_block.9} parent=11 // pred_check_branch
        %383 = sbr.rel (%p381) target = $region16
      $region15: #{two_stream_lffc_resnet_block.9} parent=11 // pred_region
        _
      $region16: #{two_stream_lffc_resnet_block.9} parent=11 // pred_fallthru
        _
      // Predicated region
      $region17: #{two_stream_lffc_resnet_block.9} parent=11 // pred_check
        %p384 = pneg %p115
      $region18: #{two_stream_lffc_resnet_block.9} parent=11 // pred_check_branch
        %386 = sbr.rel (%p384) target = $region20
      $region19: #{two_stream_lffc_resnet_block.9} parent=11 // pred_region
        _
      $region20: #{two_stream_lffc_resnet_block.9} parent=11 // pred_fallthru
        _
      // Predicated region
      $region21: #{two_stream_lffc_resnet_block.9} parent=11 // pred_check
        %p387 = pneg %p136
      $region22: #{two_stream_lffc_resnet_block.9} parent=11 // pred_check_branch
        %389 = sbr.rel (%p387) target = $region24
      $region23: #{two_stream_lffc_resnet_block.9} parent=11 // pred_region
        _
      $region24: #{two_stream_lffc_resnet_block.9} parent=11 // pred_fallthru
        _
      // Predicated region
      $region25: #{two_stream_lffc_resnet_block.9} parent=11 // pred_check
        %p390 = pneg %p157
      $region26: #{two_stream_lffc_resnet_block.9} parent=11 // pred_check_branch
        %392 = sbr.rel (%p390) target = $region28
      $region27: #{two_stream_lffc_resnet_block.9} parent=11 // pred_region
        _
      $region28: #{two_stream_lffc_resnet_block.9} parent=11 // pred_fallthru
        _
      // Predicated region
      $region29: #{two_stream_lffc_resnet_block.9} parent=11 // pred_check
        %p393 = pneg %p178
      $region30: #{two_stream_lffc_resnet_block.9} parent=11 // pred_check_branch
        %395 = sbr.rel (%p393) target = $region32
      $region31: #{two_stream_lffc_resnet_block.9} parent=11 // pred_region
        _
      $region32: #{two_stream_lffc_resnet_block.9} parent=11 // pred_fallthru
        _
      // Predicated region
      $region33: #{two_stream_lffc_resnet_block.9} parent=11 // pred_check
        %p396 = pneg %p199
      $region34: #{two_stream_lffc_resnet_block.9} parent=11 // pred_check_branch
        %398 = sbr.rel (%p396) target = $region36
      $region35: #{two_stream_lffc_resnet_block.9} parent=11 // pred_region
        _
      $region36: #{two_stream_lffc_resnet_block.9} parent=11 // pred_fallthru
        _
      // Predicated region
      $region37: #{two_stream_lffc_resnet_block.9} parent=11 // pred_check
        %p399 = pneg %p220
      $region38: #{two_stream_lffc_resnet_block.9} parent=11 // pred_check_branch
        %401 = sbr.rel (%p399) target = $region40
      $region39: #{two_stream_lffc_resnet_block.9} parent=11 // pred_region
        _
      $region40: #{two_stream_lffc_resnet_block.9} parent=11 // pred_fallthru
        _
      // Predicated region
      $region41: #{two_stream_lffc_resnet_block.9} parent=11 // pred_check
        %p402 = pneg %p241
      $region42: #{two_stream_lffc_resnet_block.9} parent=11 // pred_check_branch
        %404 = sbr.rel (%p402) target = $region44
      $region43: #{two_stream_lffc_resnet_block.9} parent=11 // pred_region
        _
      $region44: #{two_stream_lffc_resnet_block.9} parent=11 // pred_fallthru
        _
      // Predicated region
      $region45: #{two_stream_lffc_resnet_block.9} parent=11 // pred_check
        %p405 = pneg %p262
      $region46: #{two_stream_lffc_resnet_block.9} parent=11 // pred_check_branch
        %407 = sbr.rel (%p405) target = $region48
      $region47: #{two_stream_lffc_resnet_block.9} parent=11 // pred_region
        _
      $region48: #{two_stream_lffc_resnet_block.9} parent=11 // pred_fallthru
        _
    $region12: #{two_stream_lffc_resnet_block.9} parent=5 // pred_fallthru
      _
    %p408 = scmp.lt.s32.totalorder %s21, 2
    // Predicated region
    $region49: #{two_stream_lffc_resnet_block.9} parent=5 // pred_check
      %p409 = pneg %p408
    $region50: #{two_stream_lffc_resnet_block.9} parent=5 // pred_check_branch
      %411 = sbr.rel (%p409) target = $region52
    $region51: #{two_stream_lffc_resnet_block.9} parent=5 // pred_region
      // Predicated region
      $region53: #{two_stream_lffc_resnet_block.9} parent=51 // pred_check
        %p412 = pneg %p41
      $region54: #{two_stream_lffc_resnet_block.9} parent=51 // pred_check_branch
        %414 = sbr.rel (%p412) target = $region56
      $region55: #{two_stream_lffc_resnet_block.9} parent=51 // pred_region
        %s415 = smul.u32 2, %s21
        %p416 = scmp.lt.s32.totalorder %s415, 3
        %s417 = scalar_select %p416, %s415, 3
        %s418 = smul.addr %s417, 4
        %s419 = scalar_lea.vmem %s0, %s418
        %s420 = smul.u32 2, %s21
      $region56: #{two_stream_lffc_resnet_block.9} parent=51 // pred_fallthru
        _
      // Predicated region
      $region57: #{two_stream_lffc_resnet_block.9} parent=51 // pred_check
        %p421 = pneg %p67
      $region58: #{two_stream_lffc_resnet_block.9} parent=51 // pred_check_branch
        %423 = sbr.rel (%p421) target = $region60
      $region59: #{two_stream_lffc_resnet_block.9} parent=51 // pred_region
        %s424 = smul.u32 2, %s21
        %p425 = scmp.lt.s32.totalorder %s424, 3
        %s426 = scalar_select %p425, %s424, 3
        %s427 = smul.addr %s426, 4
        %s428 = scalar_lea.vmem %s1, %s427
        %s429 = smul.u32 2, %s21
      $region60: #{two_stream_lffc_resnet_block.9} parent=51 // pred_fallthru
        _
      // Predicated region
      $region61: #{two_stream_lffc_resnet_block.9} parent=51 // pred_check
        %p430 = pneg %p282
      $region62: #{two_stream_lffc_resnet_block.9} parent=51 // pred_check_branch
        %432 = sbr.rel (%p430) target = $region64
      $region63: #{two_stream_lffc_resnet_block.9} parent=51 // pred_region
        %s433 = smul.u32 2, %s21
        %p434 = scmp.lt.s32.totalorder %s433, 3
        %s435 = scalar_select %p434, %s433, 3
        %s436 = smul.addr %s435, 4
        %s437 = scalar_lea.vmem %s11, %s436
        %s438 = smul.u32 2, %s21
      $region64: #{two_stream_lffc_resnet_block.9} parent=51 // pred_fallthru
        _
    $region52: #{two_stream_lffc_resnet_block.9} parent=5 // pred_fallthru
      _
    %p439 = scmp.le.s32.totalorder 1, %s21
    %p440 = scmp.lt.s32.totalorder %s21, 3
    %p441 = pnand %p439, %p440
    %p442 = pneg %p441
    // Predicated region
    $region65: #{two_stream_lffc_resnet_block.9} parent=5 // pred_check
      _
    $region66: #{two_stream_lffc_resnet_block.9} parent=5 // pred_check_branch
      %444 = sbr.rel (%p441) target = $region68
    $region67: #{two_stream_lffc_resnet_block.9} parent=5 // pred_region
      %s445 = ssub.s32 %s21, 1
      %s446 = smul.u32 2, %s26
      %p447 = scmp.lt.s32.totalorder %s446, 3
      %s448 = scalar_select %p447, %s446, 3
      %s449 = smul.addr %s448, 4
      %s450 = scalar_lea.vmem %s0, %s449
      %p451 = pneg %p47
      %p452 = pneg %p44
      %s453 = smul.u32 2, %s26
      %p454 = scmp.lt.s32.totalorder %s453, 3
      %s455 = scalar_select %p454, %s453, 3
      %s456 = smul.addr %s455, 4
      %s457 = scalar_lea.vmem %s1, %s456
      %p458 = pneg %p73
      %p459 = pneg %p70
      %p460 = pneg %p94
      %p461 = pneg %p91
      %p462 = pneg %p115
      %p463 = pneg %p112
      %p464 = pneg %p136
      %p465 = pneg %p133
      %p466 = pneg %p157
      %p467 = pneg %p154
      %p468 = pneg %p178
      %p469 = pneg %p175
      %p470 = pneg %p199
      %p471 = pneg %p196
      %p472 = pneg %p220
      %p473 = pneg %p217
      %p474 = pneg %p241
      %p475 = pneg %p238
      %p476 = pneg %p262
      %p477 = pneg %p259
      %s478 = smul.u32 2, %s26
      %p479 = scmp.lt.s32.totalorder %s478, 3
      %s480 = scalar_select %p479, %s478, 3
      %s481 = smul.addr %s480, 4
      %s482 = scalar_lea.vmem %s11, %s481
      %p483 = pneg %p288
      %p484 = pneg %p285
      %p485 = pneg %p314
      %p486 = pneg %p311
      %s487 = smul.u32 2, %s26
      %p488 = scmp.lt.s32.totalorder %s487, 3
      %s489 = scalar_select %p488, %s487, 3
      %s490 = smul.addr %s489, 4
      %s491 = scalar_lea.vmem %s12, %s490
      %p492 = pneg %p340
      %p493 = pneg %p337
      %s494 = smul.u32 2, %s26
      %p495 = scmp.lt.s32.totalorder %s494, 3
      %s496 = scalar_select %p495, %s494, 3
      %s497 = smul.addr %s496, 2
      %s498 = scalar_lea.vmem %s13, %s497
      %p499 = pneg %p366
      %p500 = pneg %p363
      %s501 = smul.u32 2, %s26
      %p502 = scmp.lt.s32.totalorder %s501, 3
      %s503 = scalar_select %p502, %s501, 3
      %s504 = smul.addr %s503, 2
      %s505 = scalar_lea.vmem %s14, %s504
      %s506 = smul.u32 2, %s26
      %p507 = scmp.lt.s32.totalorder %s506, 3
      %s508 = scalar_select %p507, %s506, 3
      %s509 = smul.addr %s508, 4
      %s510 = scalar_lea.vmem %s0, %s509
      %s511 = smul.u32 2, %s26
      %s512 = smul.u32 2, %s26
      %p513 = scmp.lt.s32.totalorder %s512, 3
      %s514 = scalar_select %p513, %s512, 3
      %s515 = smul.addr %s514, 4
      %s516 = scalar_lea.vmem %s1, %s515
      %s517 = smul.u32 2, %s26
      %s518 = smul.u32 2, %s26
      %p519 = scmp.lt.s32.totalorder %s518, 3
      %s520 = scalar_select %p519, %s518, 3
      %s521 = smul.addr %s520, 4
      %s522 = scalar_lea.vmem %s11, %s521
      %s523 = smul.u32 2, %s26
      %s524 = smul.u32 2, %s26
      %p525 = scmp.lt.s32.totalorder %s524, 3
      %s526 = scalar_select %p525, %s524, 3
      %s527 = smul.addr %s526, 4
      %s528 = scalar_lea.vmem %s12, %s527
      %s529 = smul.u32 2, %s26
      %s530 = smul.u32 2, %s26
      %p531 = scmp.lt.s32.totalorder %s530, 3
      %s532 = scalar_select %p531, %s530, 3
      %s533 = smul.addr %s532, 2
      %s534 = scalar_lea.vmem %s13, %s533
      %s535 = smul.u32 2, %s26
      %s536 = smul.u32 2, %s26
      %p537 = scmp.lt.s32.totalorder %s536, 3
      %s538 = scalar_select %p537, %s536, 3
      %s539 = smul.addr %s538, 2
      %s540 = scalar_lea.vmem %s14, %s539
      %s541 = smul.u32 2, %s26
      %v543 = vld [vmem:[%s3] sm:$0x3]
      %v544 = vld [vmem:[%s510] sm:$0xff]
      %v545 = vld [vmem:[%s4] sm:$0xf]
      %547 = vset.pattern.permute.xlu0 0
      %548 = vperm.xlu0 %547, %v545
      %v549 = vpop.permute.xlu0 %548
      %v552 = vunpack.c.l.b16 %v544
      %v553 = vunpack.c.h.b16 %v544
      %v554 = vpack.c.b16 %v552, %v552
      %v555 = vpack.c.b16 %v553, %v553
      %vm556 = vcmask 64512
      %v558 = vsel %vm556, %v543, 0
      %vm560 = vcmask 1043456
      %v562 = vsel %vm560, %v554, 0
      %v565 = vsel %vm560, %v555, 0
      %567 = vmatprep.subr.bf16.mxu0 %v565
      %568 = vmatpush1.bf16.msra.mxu0 %v562
      %569 = vmatprep.subr.bf16.mxu0 0
      %570 = vmatpush1.bf16.msra.mxu0 0
      %571 = vmatprep.subr.bf16.mxu0 0
      %572 = vmatpush1.bf16.msra.mxu0 0
      %573 = vmatprep.subr.bf16.mxu0 0
      %574 = vmatpush1.bf16.msra.mxu0 0
      %575 = vmatprep.subr.bf16.mxu0 0
      %576 = vmatpush1.bf16.msra.mxu0 0
      %577 = vmatprep.subr.bf16.mxu0 0
      %578 = vmatpush1.bf16.msra.mxu0 0
      %579 = vmatprep.subr.bf16.mxu0 0
      %580 = vmatpush1.bf16.msra.mxu0 0
      %581 = vmatprep.subr.bf16.mxu0 0
      %582 = vmatpush1.bf16.msra.mxu0 0
      %583 = vmatprep.subr.bf16.mxu0 0
      %584 = vmatpush1.bf16.msra.mxu0 0
      %585 = vmatprep.subr.bf16.mxu0 0
      %586 = vmatpush1.bf16.msra.mxu0 0
      %587 = vmatprep.subr.bf16.mxu0 0
      %588 = vmatpush1.bf16.msra.mxu0 0
      %589 = vmatprep.subr.bf16.mxu0 0
      %590 = vmatpush1.bf16.msra.mxu0 0
      %591 = vmatprep.subr.bf16.mxu0 0
      %592 = vmatpush1.bf16.msra.mxu0 0
      %593 = vmatprep.subr.bf16.mxu0 0
      %594 = vmatpush1.bf16.msra.mxu0 0
      %595 = vmatprep.subr.bf16.mxu0 0
      %596 = vmatpush1.bf16.msra.mxu0 0
      %597 = vmatprep.subr.bf16.mxu0 0
      %598 = vmatpush1.bf16.msra.mxu0 0
      %599 = vmatprep.mubr.bf16.mxu0 0
      %600 = vmatmul.mubr.bf16.gmra.mrb[0].mxu0 %v558
      %v601 = vpop.f32.mrb[0].mxu0
      %v602 = vadd.f32 %v549, %v601
      %v603 = vpop.f32.mrb[0].mxu0
      %v604 = vadd.f32 %v549, %v603
      %v605 = vpop.f32.mrb[0].mxu0
      %v606 = vpop.f32.mrb[0].mxu0
      %607 = vdwg.mxu0
      %v608 = vmax.f32 %v602, 0.0
      %v609 = vmax.f32 %v604, 0.0
      %v610 = vld [vmem:[%s5] sm:$0x3]
      %v611 = vld [vmem:[%s516] sm:$0xff]
      %v612 = vld [vmem:[%s6] sm:$0xf]
      %614 = vset.pattern.permute.xlu0 0
      %615 = vperm.xlu0 %614, %v612
      %v616 = vpop.permute.xlu0 %615
      %v619 = vunpack.c.l.b16 %v611
      %v620 = vunpack.c.h.b16 %v611
      %v621 = vpack.c.b16 %v619, %v619
      %v622 = vpack.c.b16 %v620, %v620
      %v624 = vsel %vm556, %v610, 0
      %v627 = vsel %vm560, %v621, 0
      %v630 = vsel %vm560, %v622, 0
      %632 = vmatprep.subr.bf16.mxu0 %v630
      %633 = vmatpush1.bf16.msra.mxu0 %v627
      %634 = vmatprep.subr.bf16.mxu0 0
      %635 = vmatpush1.bf16.msra.mxu0 0
      %636 = vmatprep.subr.bf16.mxu0 0
      %637 = vmatpush1.bf16.msra.mxu0 0
      %638 = vmatprep.subr.bf16.mxu0 0
      %639 = vmatpush1.bf16.msra.mxu0 0
      %640 = vmatprep.subr.bf16.mxu0 0
      %641 = vmatpush1.bf16.msra.mxu0 0
      %642 = vmatprep.subr.bf16.mxu0 0
      %643 = vmatpush1.bf16.msra.mxu0 0
      %644 = vmatprep.subr.bf16.mxu0 0
      %645 = vmatpush1.bf16.msra.mxu0 0
      %646 = vmatprep.subr.bf16.mxu0 0
      %647 = vmatpush1.bf16.msra.mxu0 0
      %648 = vmatprep.subr.bf16.mxu0 0
      %649 = vmatpush1.bf16.msra.mxu0 0
      %650 = vmatprep.subr.bf16.mxu0 0
      %651 = vmatpush1.bf16.msra.mxu0 0
      %652 = vmatprep.subr.bf16.mxu0 0
      %653 = vmatpush1.bf16.msra.mxu0 0
      %654 = vmatprep.subr.bf16.mxu0 0
      %655 = vmatpush1.bf16.msra.mxu0 0
      %656 = vmatprep.subr.bf16.mxu0 0
      %657 = vmatpush1.bf16.msra.mxu0 0
      %658 = vmatprep.subr.bf16.mxu0 0
      %659 = vmatpush1.bf16.msra.mxu0 0
      %660 = vmatprep.subr.bf16.mxu0 0
      %661 = vmatpush1.bf16.msra.mxu0 0
      %662 = vmatprep.subr.bf16.mxu0 0
      %663 = vmatpush1.bf16.msra.mxu0 0
      %664 = vmatprep.mubr.bf16.mxu0 0
      %665 = vmatmul.mubr.bf16.gmra.mrb[0].mxu0 %v624
      %v666 = vpop.f32.mrb[0].mxu0
      %v667 = vadd.f32 %v616, %v666
      %v668 = vpop.f32.mrb[0].mxu0
      %v669 = vadd.f32 %v616, %v668
      %v670 = vpop.f32.mrb[0].mxu0
      %v671 = vpop.f32.mrb[0].mxu0
      %672 = vdwg.mxu0
      %v673 = vmax.f32 %v667, 0.0
      %v674 = vmax.f32 %v669, 0.0
      %v675 = vld [vmem:[%s7] sm:$0x3]
      %v676 = vld [vmem:[%s8] sm:$0x3]
      %678 = vset.pattern.permute.xlu0 0
      %679 = vperm.xlu0 %678, %v676
      %v680 = vpop.permute.xlu0 %679
      %vm682 = vcmask 31744
      %v684 = vsel %vm682, %v675, 0
      %v687 = vsel %vm560, %v673, 0
      %v690 = vsel %vm560, %v674, 0
      %692 = vmatprep.subr.mxu0 %v690
      %693 = vmatpush1.msra.mxu0 %v687
      %694 = vmatprep.subr.mxu0 0.0
      %695 = vmatpush1.msra.mxu0 0.0
      %696 = vmatprep.subr.mxu0 0.0
      %697 = vmatpush1.msra.mxu0 0.0
      %698 = vmatprep.subr.mxu0 0.0
      %699 = vmatpush1.msra.mxu0 0.0
      %700 = vmatprep.subr.mxu0 0.0
      %701 = vmatpush1.msra.mxu0 0.0
      %702 = vmatprep.subr.mxu0 0.0
      %703 = vmatpush1.msra.mxu0 0.0
      %704 = vmatprep.subr.mxu0 0.0
      %705 = vmatpush1.msra.mxu0 0.0
      %706 = vmatprep.subr.mxu0 0.0
      %707 = vmatpush1.msra.mxu0 0.0
      %708 = vmatprep.subr.mxu0 0.0
      %709 = vmatpush1.msra.mxu0 0.0
      %710 = vmatprep.subr.mxu0 0.0
      %711 = vmatpush1.msra.mxu0 0.0
      %712 = vmatprep.subr.mxu0 0.0
      %713 = vmatpush1.msra.mxu0 0.0
      %714 = vmatprep.subr.mxu0 0.0
      %715 = vmatpush1.msra.mxu0 0.0
      %716 = vmatprep.subr.mxu0 0.0
      %717 = vmatpush1.msra.mxu0 0.0
      %718 = vmatprep.subr.mxu0 0.0
      %719 = vmatpush1.msra.mxu0 0.0
      %720 = vmatprep.subr.mxu0 0.0
      %721 = vmatpush1.msra.mxu0 0.0
      %722 = vmatprep.subr.mxu0 0.0
      %723 = vmatpush1.msra.mxu0 0.0
      %724 = vmatprep.subr.mxu0 0.0
      %725 = vmatpush1.msra.mxu0 0.0
      %726 = vmatprep.subr.mxu0 0.0
      %727 = vmatpush1.msra.mxu0 0.0
      %728 = vmatprep.subr.mxu0 0.0
      %729 = vmatpush1.msra.mxu0 0.0
      %730 = vmatprep.subr.mxu0 0.0
      %731 = vmatpush1.msra.mxu0 0.0
      %732 = vmatprep.subr.mxu0 0.0
      %733 = vmatpush1.msra.mxu0 0.0
      %734 = vmatprep.subr.mxu0 0.0
      %735 = vmatpush1.msra.mxu0 0.0
      %736 = vmatprep.subr.mxu0 0.0
      %737 = vmatpush1.msra.mxu0 0.0
      %738 = vmatprep.subr.mxu0 0.0
      %739 = vmatpush1.msra.mxu0 0.0
      %740 = vmatprep.subr.mxu0 0.0
      %741 = vmatpush1.msra.mxu0 0.0
      %742 = vmatprep.subr.mxu0 0.0
      %743 = vmatpush1.msra.mxu0 0.0
      %744 = vmatprep.subr.mxu0 0.0
      %745 = vmatpush1.msra.mxu0 0.0
      %746 = vmatprep.subr.mxu0 0.0
      %747 = vmatpush1.msra.mxu0 0.0
      %748 = vmatprep.subr.mxu0 0.0
      %749 = vmatpush1.msra.mxu0 0.0
      %750 = vmatprep.subr.mxu0 0.0
      %751 = vmatpush1.msra.mxu0 0.0
      %752 = vmatprep.subr.mxu0 0.0
      %753 = vmatpush1.msra.mxu0 0.0
      %754 = vmatprep.subr.mxu0 0.0
      %755 = vmatpush1.msra.mxu0 0.0
      %756 = vmatprep.mubr.f32.mxu0 0.0
      %757 = vmatmul.mubr.f32.gmra.mrb[0].mxu0 %v684
      %v758 = vpop.f32.mrb[0].mxu0
      %v759 = vadd.f32 %v680, %v758
      %v760 = vpop.f32.mrb[0].mxu0
      %v761 = vadd.f32 %v680, %v760
      %762 = vdwg.mxu0
      %v763 = vmax.f32 %v759, 0.0
      %v764 = vmax.f32 %v761, 0.0
      %v765 = vld [vmem:[%s2] sm:$0x3]
      %v766 = vand.u32 %v765, 1
      %vm767 = vcmp.ne.s32.totalorder %v766, 0
      %v768 = vand.u32 %v765, 2
      %vm769 = vcmp.ne.s32.totalorder %v768, 0
      %v770 = vand.u32 %v765, 4
      %vm771 = vcmp.ne.s32.totalorder %v770, 0
      %v772 = vand.u32 %v765, 8
      %vm773 = vcmp.ne.s32.totalorder %v772, 0
      %774 = vrot.lane.b32.xlu0 %v608, 127
      %v775 = vpop.permute.xlu0 %774
      %776 = vrot.lane.b32.xlu0 %v609, 127
      %v777 = vpop.permute.xlu0 %776
      %v778 = vlaneseq
      %v779 = vand.u32 %v778, 127
      %vm780 = vcmp.lt.s32.totalorder %v779, 127
      %v781 = vsel %vm780, %v775, %v777
      %v782 = vsel %vm780, %v777, %v775
      %783 = vrot.lane.b32.xlu0 %v608, 1
      %v784 = vpop.permute.xlu0 %783
      %785 = vrot.lane.b32.xlu0 %v609, 1
      %v786 = vpop.permute.xlu0 %785
      %vm787 = vcmp.lt.s32.totalorder %v779, 1
      %v788 = vsel %vm787, %v784, %v786
      %v789 = vsel %vm787, %v786, %v784
      %v790 = vsel %vm767, 1, 0
      %v791 = vlaneseq
      %v792 = vshrl.u32 %v791, 7
      %v793 = vsub.s32 0, %v792
      %v794 = vrot.slane %v790, %v793
      %v795 = vlaneseq
      %v796 = vshrl.u32 %v795, 7
      %v797 = vsub.s32 1, %v796
      %v798 = vrot.slane %v790, %v797
      %vm799 = vcmp.eq.s32.totalorder %v794, 1
      %vm800 = vcmp.eq.s32.totalorder %v798, 1
      %v801 = vsel %vm799, %v781, %v789
      %v802 = vsel %vm800, %v782, %v788
      %v803 = vsel %vm769, 1, 0
      %v804 = vlaneseq
      %v805 = vshrl.u32 %v804, 7
      %v806 = vsub.s32 0, %v805
      %v807 = vrot.slane %v803, %v806
      %v808 = vlaneseq
      %v809 = vshrl.u32 %v808, 7
      %v810 = vsub.s32 1, %v809
      %v811 = vrot.slane %v803, %v810
      %vm812 = vcmp.eq.s32.totalorder %v807, 1
      %vm813 = vcmp.eq.s32.totalorder %v811, 1
      %v814 = vsel %vm812, %v789, %v781
      %v815 = vsel %vm813, %v788, %v782
      %816 = vrot.lane.b32.xlu0 %v801, 112
      %v817 = vpop.permute.xlu0 %816
      %818 = vrot.lane.b32.xlu0 %v802, 112
      %v819 = vpop.permute.xlu0 %818
      %vm820 = vcmp.lt.s32.totalorder %v779, 112
      %v821 = vsel %vm820, %v817, %v819
      %v822 = vsel %vm820, %v819, %v817
      %823 = vrot.lane.b32.xlu0 %v801, 16
      %v824 = vpop.permute.xlu0 %823
      %825 = vrot.lane.b32.xlu0 %v802, 16
      %v826 = vpop.permute.xlu0 %825
      %vm827 = vcmp.lt.s32.totalorder %v779, 16
      %v828 = vsel %vm827, %v824, %v826
      %v829 = vsel %vm827, %v826, %v824
      %v830 = vsel %vm771, 1, 0
      %v831 = vlaneseq
      %v832 = vshrl.u32 %v831, 7
      %v833 = vsub.s32 0, %v832
      %v834 = vrot.slane %v830, %v833
      %v835 = vlaneseq
      %v836 = vshrl.u32 %v835, 7
      %v837 = vsub.s32 1, %v836
      %v838 = vrot.slane %v830, %v837
      %vm839 = vcmp.eq.s32.totalorder %v834, 1
      %vm840 = vcmp.eq.s32.totalorder %v838, 1
      %v841 = vsel %vm839, %v821, %v829
      %v842 = vsel %vm840, %v822, %v828
      %v843 = vsel %vm773, 1, 0
      %v844 = vlaneseq
      %v845 = vshrl.u32 %v844, 7
      %v846 = vsub.s32 0, %v845
      %v847 = vrot.slane %v843, %v846
      %v848 = vlaneseq
      %v849 = vshrl.u32 %v848, 7
      %v850 = vsub.s32 1, %v849
      %v851 = vrot.slane %v843, %v850
      %vm852 = vcmp.eq.s32.totalorder %v847, 1
      %vm853 = vcmp.eq.s32.totalorder %v851, 1
      %v854 = vsel %vm852, %v829, %v821
      %v855 = vsel %vm853, %v828, %v822
      %856 = vst [vmem:[#allocation2] sm:$0xf] %v841
      %857 = vst [vmem:[#allocation2 + $0x8] sm:$0xf] %v842
      %v860 = vrot.slane %v801, 4
      %v861 = vrot.slane %v802, 4
      %864 = vst [vmem:[#allocation2 + $0x10] sm:$0xf0] %v860
      %865 = vst [vmem:[#allocation2 + $0x18] sm:$0xf0] %v861
      %866 = vst [vmem:[#allocation2 + $0x30] sm:$0xf] %v854
      %867 = vst [vmem:[#allocation2 + $0x38] sm:$0xf] %v855
      %868 = vrot.lane.b32.xlu0 %v608, 112
      %v869 = vpop.permute.xlu0 %868
      %870 = vrot.lane.b32.xlu0 %v609, 112
      %v871 = vpop.permute.xlu0 %870
      %v872 = vsel %vm820, %v869, %v871
      %v873 = vsel %vm820, %v871, %v869
      %874 = vrot.lane.b32.xlu0 %v608, 16
      %v875 = vpop.permute.xlu0 %874
      %876 = vrot.lane.b32.xlu0 %v609, 16
      %v877 = vpop.permute.xlu0 %876
      %v878 = vsel %vm827, %v875, %v877
      %v879 = vsel %vm827, %v877, %v875
      %v880 = vsel %vm839, %v872, %v879
      %v881 = vsel %vm840, %v873, %v878
      %v882 = vsel %vm852, %v879, %v872
      %v883 = vsel %vm853, %v878, %v873
      %v886 = vrot.slane %v880, 4
      %v887 = vrot.slane %v881, 4
      %890 = vst [vmem:[#allocation2] sm:$0xf0] %v886
      %891 = vst [vmem:[#allocation2 + $0x8] sm:$0xf0] %v887
      %892 = vst [vmem:[#allocation2 + $0x20] sm:$0xf] %v608
      %893 = vst [vmem:[#allocation2 + $0x28] sm:$0xf] %v609
      %v896 = vrot.slane %v882, 4
      %v897 = vrot.slane %v883, 4
      %900 = vst [vmem:[#allocation2 + $0x30] sm:$0xf0] %v896
      %901 = vst [vmem:[#allocation2 + $0x38] sm:$0xf0] %v897
      %902 = vrot.lane.b32.xlu0 %v814, 112
      %v903 = vpop.permute.xlu0 %902
      %904 = vrot.lane.b32.xlu0 %v815, 112
      %v905 = vpop.permute.xlu0 %904
      %v906 = vsel %vm820, %v903, %v905
      %v907 = vsel %vm820, %v905, %v903
      %908 = vrot.lane.b32.xlu0 %v814, 16
      %v909 = vpop.permute.xlu0 %908
      %910 = vrot.lane.b32.xlu0 %v815, 16
      %v911 = vpop.permute.xlu0 %910
      %v912 = vsel %vm827, %v909, %v911
      %v913 = vsel %vm827, %v911, %v909
      %v914 = vsel %vm839, %v906, %v913
      %v915 = vsel %vm840, %v907, %v912
      %v916 = vsel %vm852, %v913, %v906
      %v917 = vsel %vm853, %v912, %v907
      %918 = vst [vmem:[#allocation2 + $0x10] sm:$0xf] %v914
      %919 = vst [vmem:[#allocation2 + $0x18] sm:$0xf] %v915
      %v922 = vrot.slane %v814, 4
      %v923 = vrot.slane %v815, 4
      %926 = vst [vmem:[#allocation2 + $0x20] sm:$0xf0] %v922
      %927 = vst [vmem:[#allocation2 + $0x28] sm:$0xf0] %v923
      %928 = vst [vmem:[#allocation2 + $0x40] sm:$0xf] %v916
      %929 = vst [vmem:[#allocation2 + $0x48] sm:$0xf] %v917
      %930 = vrot.lane.b32.xlu0 %v673, 127
      %v931 = vpop.permute.xlu0 %930
      %932 = vrot.lane.b32.xlu0 %v674, 127
      %v933 = vpop.permute.xlu0 %932
      %v934 = vsel %vm780, %v931, %v933
      %v935 = vsel %vm780, %v933, %v931
      %936 = vrot.lane.b32.xlu0 %v673, 1
      %v937 = vpop.permute.xlu0 %936
      %938 = vrot.lane.b32.xlu0 %v674, 1
      %v939 = vpop.permute.xlu0 %938
      %v940 = vsel %vm787, %v937, %v939
      %v941 = vsel %vm787, %v939, %v937
      %v942 = vsel %vm799, %v934, %v941
      %v943 = vsel %vm800, %v935, %v940
      %v944 = vsel %vm812, %v941, %v934
      %v945 = vsel %vm813, %v940, %v935
      %946 = vrot.lane.b32.xlu0 %v942, 112
      %v947 = vpop.permute.xlu0 %946
      %948 = vrot.lane.b32.xlu0 %v943, 112
      %v949 = vpop.permute.xlu0 %948
      %v950 = vsel %vm820, %v947, %v949
      %v951 = vsel %vm820, %v949, %v947
      %952 = vrot.lane.b32.xlu0 %v942, 16
      %v953 = vpop.permute.xlu0 %952
      %954 = vrot.lane.b32.xlu0 %v943, 16
      %v955 = vpop.permute.xlu0 %954
      %v956 = vsel %vm827, %v953, %v955
      %v957 = vsel %vm827, %v955, %v953
      %v958 = vsel %vm839, %v950, %v957
      %v959 = vsel %vm840, %v951, %v956
      %v960 = vsel %vm852, %v957, %v950
      %v961 = vsel %vm853, %v956, %v951
      %v964 = vrot.slane %v958, 4
      %v965 = vrot.slane %v959, 4
      %968 = vst [vmem:[#allocation2 + $0x40] sm:$0xf0] %v964
      %969 = vst [vmem:[#allocation2 + $0x48] sm:$0xf0] %v965
      %970 = vst [vmem:[#allocation2 + $0x60] sm:$0xf] %v942
      %971 = vst [vmem:[#allocation2 + $0x68] sm:$0xf] %v943
      %v974 = vrot.slane %v960, 4
      %v975 = vrot.slane %v961, 4
      %978 = vst [vmem:[#allocation2 + $0x70] sm:$0xf0] %v974
      %979 = vst [vmem:[#allocation2 + $0x78] sm:$0xf0] %v975
      %980 = vrot.lane.b32.xlu0 %v673, 112
      %v981 = vpop.permute.xlu0 %980
      %982 = vrot.lane.b32.xlu0 %v674, 112
      %v983 = vpop.permute.xlu0 %982
      %v984 = vsel %vm820, %v981, %v983
      %v985 = vsel %vm820, %v983, %v981
      %986 = vrot.lane.b32.xlu0 %v673, 16
      %v987 = vpop.permute.xlu0 %986
      %988 = vrot.lane.b32.xlu0 %v674, 16
      %v989 = vpop.permute.xlu0 %988
      %v990 = vsel %vm827, %v987, %v989
      %v991 = vsel %vm827, %v989, %v987
      %v992 = vsel %vm839, %v984, %v991
      %v993 = vsel %vm840, %v985, %v990
      %v994 = vsel %vm852, %v991, %v984
      %v995 = vsel %vm853, %v990, %v985
      %996 = vst [vmem:[#allocation2 + $0x50] sm:$0xf] %v992
      %997 = vst [vmem:[#allocation2 + $0x58] sm:$0xf] %v993
      %v998 = vrot.slane %v673, 4
      %v999 = vrot.slane %v674, 4
      %1002 = vst [vmem:[#allocation2 + $0x60] sm:$0xf0] %v998
      %1003 = vst [vmem:[#allocation2 + $0x68] sm:$0xf0] %v999
      %1004 = vst [vmem:[#allocation2 + $0x80] sm:$0xf] %v994
      %1005 = vst [vmem:[#allocation2 + $0x88] sm:$0xf] %v995
      %1006 = vrot.lane.b32.xlu0 %v944, 112
      %v1007 = vpop.permute.xlu0 %1006
      %1008 = vrot.lane.b32.xlu0 %v945, 112
      %v1009 = vpop.permute.xlu0 %1008
      %v1010 = vsel %vm820, %v1007, %v1009
      %v1011 = vsel %vm820, %v1009, %v1007
      %1012 = vrot.lane.b32.xlu0 %v944, 16
      %v1013 = vpop.permute.xlu0 %1012
      %1014 = vrot.lane.b32.xlu0 %v945, 16
      %v1015 = vpop.permute.xlu0 %1014
      %v1016 = vsel %vm827, %v1013, %v1015
      %v1017 = vsel %vm827, %v1015, %v1013
      %v1018 = vsel %vm839, %v1010, %v1017
      %v1019 = vsel %vm840, %v1011, %v1016
      %v1020 = vsel %vm852, %v1017, %v1010
      %v1021 = vsel %vm853, %v1016, %v1011
      %v1024 = vrot.slane %v1018, 4
      %v1025 = vrot.slane %v1019, 4
      %1028 = vst [vmem:[#allocation2 + $0x50] sm:$0xf0] %v1024
      %1029 = vst [vmem:[#allocation2 + $0x58] sm:$0xf0] %v1025
      %1030 = vst [vmem:[#allocation2 + $0x70] sm:$0xf] %v944
      %1031 = vst [vmem:[#allocation2 + $0x78] sm:$0xf] %v945
      %v1034 = vrot.slane %v1020, 4
      %v1035 = vrot.slane %v1021, 4
      %1038 = vst [vmem:[#allocation2 + $0x80] sm:$0xf0] %v1034
      %1039 = vst [vmem:[#allocation2 + $0x88] sm:$0xf0] %v1035
      %v1040 = vld [vmem:[%s9] sm:$0xff]
      %v1041 = vld [vmem:[#allocation2] sm:$0xff]
      %v1042 = vld [vmem:[#allocation2 + $0x8] sm:$0xff]
      %v1043 = vld [vmem:[#allocation2 + $0x10] sm:$0xff]
      %v1044 = vld [vmem:[#allocation2 + $0x18] sm:$0xff]
      %v1045 = vld [vmem:[#allocation2 + $0x20] sm:$0xff]
      %v1046 = vld [vmem:[#allocation2 + $0x28] sm:$0xff]
      %v1047 = vld [vmem:[#allocation2 + $0x30] sm:$0xff]
      %v1048 = vld [vmem:[#allocation2 + $0x38] sm:$0xff]
      %v1049 = vld [vmem:[#allocation2 + $0x40] sm:$0xff]
      %v1050 = vld [vmem:[#allocation2 + $0x48] sm:$0xff]
      %v1051 = vld [vmem:[#allocation2 + $0x50] sm:$0xff]
      %v1052 = vld [vmem:[#allocation2 + $0x58] sm:$0xff]
      %v1053 = vld [vmem:[#allocation2 + $0x60] sm:$0xff]
      %v1054 = vld [vmem:[#allocation2 + $0x68] sm:$0xff]
      %v1055 = vld [vmem:[#allocation2 + $0x70] sm:$0xff]
      %v1056 = vld [vmem:[#allocation2 + $0x78] sm:$0xff]
      %v1057 = vld [vmem:[#allocation2 + $0x80] sm:$0xff]
      %v1058 = vld [vmem:[#allocation2 + $0x88] sm:$0xff]
      %v1059 = vld [vmem:[%s10] sm:$0xff]
      %1061 = vset.pattern.permute.xlu0 0
      %1062 = vperm.xlu0 %1061, %v1059
      %v1063 = vpop.permute.xlu0 %1062
      %vm1065 = vcmask 588800
      %v1067 = vsel %vm1065, %v1040, 0
      %1069 = vmatprep.subr.mxu0 %v1042
      %1070 = vmatpush1.msra.mxu0 %v1041
      %1071 = vmatprep.subr.mxu0 %v1044
      %1072 = vmatpush1.msra.mxu0 %v1043
      %1073 = vmatprep.subr.mxu0 %v1046
      %1074 = vmatpush1.msra.mxu0 %v1045
      %1075 = vmatprep.subr.mxu0 %v1048
      %1076 = vmatpush1.msra.mxu0 %v1047
      %1077 = vmatprep.subr.mxu0 %v1050
      %1078 = vmatpush1.msra.mxu0 %v1049
      %1079 = vmatprep.subr.mxu0 %v1052
      %1080 = vmatpush1.msra.mxu0 %v1051
      %1081 = vmatprep.subr.mxu0 %v1054
      %1082 = vmatpush1.msra.mxu0 %v1053
      %1083 = vmatprep.subr.mxu0 %v1056
      %1084 = vmatpush1.msra.mxu0 %v1055
      %1085 = vmatprep.subr.mxu0 %v1058
      %1086 = vmatpush1.msra.mxu0 %v1057
      %1087 = vmatprep.subr.mxu0 0.0
      %1088 = vmatpush1.msra.mxu0 0.0
      %1089 = vmatprep.subr.mxu0 0.0
      %1090 = vmatpush1.msra.mxu0 0.0
      %1091 = vmatprep.subr.mxu0 0.0
      %1092 = vmatpush1.msra.mxu0 0.0
      %1093 = vmatprep.subr.mxu0 0.0
      %1094 = vmatpush1.msra.mxu0 0.0
      %1095 = vmatprep.subr.mxu0 0.0
      %1096 = vmatpush1.msra.mxu0 0.0
      %1097 = vmatprep.subr.mxu0 0.0
      %1098 = vmatpush1.msra.mxu0 0.0
      %1099 = vmatprep.subr.mxu0 0.0
      %1100 = vmatpush1.msra.mxu0 0.0
      %1101 = vmatprep.subr.mxu0 0.0
      %1102 = vmatpush1.msra.mxu0 0.0
      %1103 = vmatprep.subr.mxu0 0.0
      %1104 = vmatpush1.msra.mxu0 0.0
      %1105 = vmatprep.subr.mxu0 0.0
      %1106 = vmatpush1.msra.mxu0 0.0
      %1107 = vmatprep.subr.mxu0 0.0
      %1108 = vmatpush1.msra.mxu0 0.0
      %1109 = vmatprep.subr.mxu0 0.0
      %1110 = vmatpush1.msra.mxu0 0.0
      %1111 = vmatprep.subr.mxu0 0.0
      %1112 = vmatpush1.msra.mxu0 0.0
      %1113 = vmatprep.subr.mxu0 0.0
      %1114 = vmatpush1.msra.mxu0 0.0
      %1115 = vmatprep.subr.mxu0 0.0
      %1116 = vmatpush1.msra.mxu0 0.0
      %1117 = vmatprep.subr.mxu0 0.0
      %1118 = vmatpush1.msra.mxu0 0.0
      %1119 = vmatprep.subr.mxu0 0.0
      %1120 = vmatpush1.msra.mxu0 0.0
      %1121 = vmatprep.subr.mxu0 0.0
      %1122 = vmatpush1.msra.mxu0 0.0
      %1123 = vmatprep.subr.mxu0 0.0
      %1124 = vmatpush1.msra.mxu0 0.0
      %1125 = vmatprep.subr.mxu0 0.0
      %1126 = vmatpush1.msra.mxu0 0.0
      %1127 = vmatprep.subr.mxu0 0.0
      %1128 = vmatpush1.msra.mxu0 0.0
      %1129 = vmatprep.subr.mxu0 0.0
      %1130 = vmatpush1.msra.mxu0 0.0
      %1131 = vmatprep.subr.mxu0 0.0
      %1132 = vmatpush1.msra.mxu0 0.0
      %1133 = vmatprep.mubr.f32.mxu0 0.0
      %1134 = vmatmul.mubr.f32.gmra.mrb[0].mxu0 %v1067
      %v1135 = vpop.f32.mrb[0].mxu0
      %v1136 = vadd.f32 %v1063, %v1135
      %v1137 = vpop.f32.mrb[0].mxu0
      %v1138 = vadd.f32 %v1063, %v1137
      %1139 = vdwg.mxu0
      %v1140 = vld [vmem:[%s522] sm:$0xff]
      %v1141 = vunpack.c.l.bf16 %v1140
      %v1142 = vunpack.c.h.bf16 %v1140
      %v1143 = vadd.f32 %v1136, %v1141
      %v1144 = vadd.f32 %v1138, %v1142
      %v1145 = vpack.c.bf16 %v1143, %v1143
      %v1146 = vpack.c.bf16 %v1144, %v1144
      %v1149 = vunpack.c.l.b16 %v1145
      %v1150 = vunpack.c.l.b16 %v1146
      %v1151 = vpack.c.b16 %v1150, %v1149
      %1153 = vst [vmem:[%s528] sm:$0xff] %v1151
      %v1154 = vpack.c.bf16 %v608, %v608
      %v1155 = vpack.c.bf16 %v609, %v609
      %v1158 = vcombine.low %v1154, %v1155
      %v1160 = vunpack.c.l.s4 1983009808
      %v1161 = vunpack.c.0.s8 %v1160
      %v1162 = vlaneseq
      %v1163 = vshrl.u32 %v1162, 7
      %v1164 = vsub.s32 %v1161, %v1163
      %v1165 = vrot.slane %v1158, %v1164
      %1167 = vst [vmem:[%s534] sm:$0xf] %v1165
      %v1170 = vcombine.low %v763, %v764
      %v1172 = vunpack.c.l.s4 1983009808
      %v1173 = vunpack.c.0.s8 %v1172
      %v1174 = vlaneseq
      %v1175 = vshrl.u32 %v1174, 7
      %v1176 = vsub.s32 %v1173, %v1175
      %v1177 = vrot.slane %v1170, %v1176
      %1179 = vst [vmem:[%s540] sm:$0xf] %v1177
      %s1180 = smul.u32 2, %s26
      %p1181 = scmp.lt.s32.totalorder %s1180, 3
      %s1182 = scalar_select %p1181, %s1180, 3
      %s1183 = smul.addr %s1182, 4
      %s1184 = scalar_lea.vmem %s12, %s1183
      %s1185 = smul.u32 2, %s26
      %p1186 = scmp.lt.s32.totalorder %s1185, 3
      %s1187 = scalar_select %p1186, %s1185, 3
      %s1188 = smul.addr %s1187, 2
      %s1189 = scalar_lea.vmem %s13, %s1188
      %s1190 = smul.u32 2, %s26
      %p1191 = scmp.lt.s32.totalorder %s1190, 3
      %s1192 = scalar_select %p1191, %s1190, 3
      %s1193 = smul.addr %s1192, 2
      %s1194 = scalar_lea.vmem %s14, %s1193
      // Predicated region
      $region69: #{two_stream_lffc_resnet_block.9} parent=67 // pred_check
        %p1195 = pneg %p311
      $region70: #{two_stream_lffc_resnet_block.9} parent=67 // pred_check_branch
        %1197 = sbr.rel (%p1195) target = $region72
      $region71: #{two_stream_lffc_resnet_block.9} parent=67 // pred_region
        %s1198 = smul.u32 2, %s26
      $region72: #{two_stream_lffc_resnet_block.9} parent=67 // pred_fallthru
        _
      // Predicated region
      $region73: #{two_stream_lffc_resnet_block.9} parent=67 // pred_check
        %p1199 = pneg %p337
      $region74: #{two_stream_lffc_resnet_block.9} parent=67 // pred_check_branch
        %1201 = sbr.rel (%p1199) target = $region76
      $region75: #{two_stream_lffc_resnet_block.9} parent=67 // pred_region
        %s1202 = smul.u32 2, %s26
      $region76: #{two_stream_lffc_resnet_block.9} parent=67 // pred_fallthru
        _
      // Predicated region
      $region77: #{two_stream_lffc_resnet_block.9} parent=67 // pred_check
        %p1203 = pneg %p363
      $region78: #{two_stream_lffc_resnet_block.9} parent=67 // pred_check_branch
        %1205 = sbr.rel (%p1203) target = $region80
      $region79: #{two_stream_lffc_resnet_block.9} parent=67 // pred_region
        %s1206 = smul.u32 2, %s26
      $region80: #{two_stream_lffc_resnet_block.9} parent=67 // pred_fallthru
        _
    $region68: #{two_stream_lffc_resnet_block.9} parent=5 // pred_fallthru
      _
    %p1207 = scmp.le.s32.totalorder 2, %s21
    // Predicated region
    $region81: #{two_stream_lffc_resnet_block.9} parent=5 // pred_check
      %p1208 = pneg %p1207
    $region82: #{two_stream_lffc_resnet_block.9} parent=5 // pred_check_branch
      %1210 = sbr.rel (%p1208) target = $region84
    $region83: #{two_stream_lffc_resnet_block.9} parent=5 // pred_region
      %s1211 = ssub.s32 %s21, 2
      // Predicated region
      $region85: #{two_stream_lffc_resnet_block.9} parent=83 // pred_check
        %p1212 = pneg %p317
      $region86: #{two_stream_lffc_resnet_block.9} parent=83 // pred_check_branch
        %1214 = sbr.rel (%p1212) target = $region88
      $region87: #{two_stream_lffc_resnet_block.9} parent=83 // pred_region
        %s1215 = smul.u32 2, %s27
        %p1216 = scmp.lt.s32.totalorder %s1215, 3
        %s1217 = scalar_select %p1216, %s1215, 3
        %s1218 = smul.addr %s1217, 4
        %s1219 = scalar_lea.vmem %s12, %s1218
      $region88: #{two_stream_lffc_resnet_block.9} parent=83 // pred_fallthru
        _
      // Predicated region
      $region89: #{two_stream_lffc_resnet_block.9} parent=83 // pred_check
        %p1220 = pneg %p343
      $region90: #{two_stream_lffc_resnet_block.9} parent=83 // pred_check_branch
        %1222 = sbr.rel (%p1220) target = $region92
      $region91: #{two_stream_lffc_resnet_block.9} parent=83 // pred_region
        %s1223 = smul.u32 2, %s27
        %p1224 = scmp.lt.s32.totalorder %s1223, 3
        %s1225 = scalar_select %p1224, %s1223, 3
        %s1226 = smul.addr %s1225, 2
        %s1227 = scalar_lea.vmem %s13, %s1226
      $region92: #{two_stream_lffc_resnet_block.9} parent=83 // pred_fallthru
        _
      // Predicated region
      $region93: #{two_stream_lffc_resnet_block.9} parent=83 // pred_check
        %p1228 = pneg %p369
      $region94: #{two_stream_lffc_resnet_block.9} parent=83 // pred_check_branch
        %1230 = sbr.rel (%p1228) target = $region96
      $region95: #{two_stream_lffc_resnet_block.9} parent=83 // pred_region
        %s1231 = smul.u32 2, %s27
        %p1232 = scmp.lt.s32.totalorder %s1231, 3
        %s1233 = scalar_select %p1232, %s1231, 3
        %s1234 = smul.addr %s1233, 2
        %s1235 = scalar_lea.vmem %s14, %s1234
      $region96: #{two_stream_lffc_resnet_block.9} parent=83 // pred_fallthru
        _
    $region84: #{two_stream_lffc_resnet_block.9} parent=5 // pred_fallthru
      _
  $region6: #{two_stream_lffc_resnet_block.9} parent=0 // loop_footer
    %s25 = sadd.s32 1, %s21
  $region7: #{two_stream_lffc_resnet_block.9} parent=0 // loop_footer_branch
    %20 = sbr.rel target = $region3
  $region8: #{two_stream_lffc_resnet_block.9} parent=0 // loop_exit
    _

</llo_original>
